<compile_context>
chip_gen: v7x
topology: tpu7x:2x2x1
jax: 0.10.0
libtpu: 0.0.40
codegen_flags: <defaults>
</compile_context>

<pallas_src>
import jax
import jax.numpy as jnp
from jax.experimental import pallas as pl
from jax.experimental.pallas import tpu as pltpu


# --------------------------- fully-fused network kernel ---------------------------

def _fused_kernel(h1_ref, gender_ref, taps_ref,
                  a1_ref, a2_ref, a3_ref,
                  w2_ref, b2_ref, w3_ref, b3_ref, w4_ref, b4_ref,
                  wg_ref, bg_ref, w1x_ref, w1g_ref, b1_ref,
                  w2h_ref, b2h_ref, w3h_ref, b3h_ref,
                  o_ref):
    """One batch element end-to-end: ECA1 .. stage4+ECA4, global pool, MLP head.

    h1_ref:     (1, P1, 128) f32  stage-1 output (stem matmul+bias+ReLU from wrapper)
    gender_ref: (N, 1)  f32 SMEM  raw gender scalar per sample
    taps_ref:   (4, 5)  f32 SMEM  per-stage eca_layer Conv1d(k=5, pad=2) taps
    a*_ref:     constant 2x2 average-pooling operators (pool-as-matmul)
    w*_ref:     bf16 matmul weights (BN folded where applicable), b*_ref: f32 biases
    o_ref:      (1, 1, 256) f32   padded classifier logits (sliced to 230 outside)
    """

    def eca_gate(pooled, stage):
        # Conv1d(1, 1, k=5, pad=2, bias=False) over the channel axis as 5 lane
        # rolls + FMA (cross-correlation, zero-padded edges), then EXACT sigmoid.
        c = pooled.shape[1]
        cidx = jax.lax.broadcasted_iota(jnp.int32, (1, c), 1)
        y = taps_ref[stage, 2] * pooled
        for k in (0, 1, 3, 4):
            d = k - 2
            shifted = pltpu.roll(pooled, (-d) % c, axis=1)      # shifted[c] = pooled[c + d]
            valid = jnp.logical_and(cidx + d >= 0, cidx + d < c)
            y = y + taps_ref[stage, k] * jnp.where(valid, shifted, 0.0)
        return 1.0 / (1.0 + jnp.exp(-y))                        # exact sigmoid (torch parity)

    def eca(h, stage):
        return h * eca_gate(jnp.mean(h, axis=0, keepdims=True), stage)

    def mm(a, b_ref):                                           # bf16 MXU operands, f32 acc
        return jnp.dot(a.astype(jnp.bfloat16), b_ref[...],
                       preferred_element_type=jnp.float32)

    def pool(a_ref, x):                                         # 2x2 avg-pool as matmul
        return jnp.dot(a_ref[...], x, preferred_element_type=jnp.float32)

    # stage1 (+ECA1)
    x1 = eca(h1_ref[0], 0)                                                  # (P1, 128)
    # stage2 (+ECA2)
    h2 = jnp.maximum(mm(pool(a1_ref, x1), w2_ref) + b2_ref[...], 0.0)       # (P1/4, 256)
    x2 = eca(h2, 1)
    # stage3 (+ECA3)
    h3 = jnp.maximum(mm(pool(a2_ref, x2), w3_ref) + b3_ref[...], 0.0)       # (P1/16, 512)
    x3 = eca(h3, 2)
    # stage4 (+ECA4) fused with adaptive_avg_pool2d(1):  mean(h*gate) == mean(h)*gate
    h4 = jnp.maximum(mm(pool(a3_ref, x3), w4_ref) + b4_ref[...], 0.0)       # (P1/64, 1024)
    pooled4 = jnp.mean(h4, axis=0, keepdims=True)                           # (1, 1024)
    xvec = pooled4 * eca_gate(pooled4, 3)

    # head: gender Linear(+folded BN)+ReLU, concat as split matmul, fc MLP, classifier
    g = gender_ref[pl.program_id(0), 0]                                     # scalar (SMEM)
    ge = jnp.maximum(g * wg_ref[...] + bg_ref[...], 0.0)                    # (1, 32)
    hh1 = jnp.maximum(mm(xvec, w1x_ref) + mm(ge, w1g_ref) + b1_ref[...], 0.0)   # (1, 1024)
    hh2 = jnp.maximum(mm(hh1, w2h_ref) + b2h_ref[...], 0.0)                     # (1, 512)
    o_ref[0] = (mm(hh2, w3h_ref) + b3h_ref[...]).astype(o_ref.dtype)            # (1, 256)


# ----------------------------------- model -----------------------------------

class MyRes50Pallas:
    """Forward pass of MyRes50.

    TODO(synk): the pretrained ResNet50 `backbone` nn.Sequential is unavailable;
    each stage is a synthetic stand-in (2x2 avg-pool downsample + 1x1 conv + ReLU)
    reproducing the stride (/4,/8,/16,/32) and lane-dense channel contract of
    backbone[0:5], [5], [6], [7].
    """

    STAGE_CHANNELS = (128, 256, 512, 1024)   # lane-dense (multiples of 128)
    STAGE_STRIDES = (4, 2, 2, 2)             # ResNet50 strides
    N_CLASSES = 230
    PAD_CLASSES = 256                        # lane-dense classifier store, sliced to 230
    ECA_K = 5
    INPUT_HW = 64

    def __init__(self, key):
        self.out_channels = self.STAGE_CHANNELS[-1]
        keys = iter(jax.random.split(key, 64))
        nk = lambda: next(keys)

        # backbone stage stand-ins + per-stage ECA conv taps
        cins = (3,) + self.STAGE_CHANNELS[:-1]
        stage_w, stage_b, eca_w = [], [], []
        for cin, cout in zip(cins, self.STAGE_CHANNELS):
            stage_w.append(jax.random.normal(nk(), (cin, cout), jnp.float32)
                           / jnp.sqrt(float(cin)))
            stage_b.append(0.01 * jax.random.normal(nk(), (cout,), jnp.float32))
            eca_w.append(jax.random.normal(nk(), (self.ECA_K,), jnp.float32)
                         / jnp.sqrt(float(self.ECA_K)))

        # Cin=3 stem stays f32 in the XLA wrapper (K=3 would waste MXU / lane axis).
        self.stem_w, self.stem_b = stage_w[0], stage_b[0]
        # stage 2-4: bf16 MXU weights (halves weight DMA), f32 biases
        self.w2, self.b2 = stage_w[1].astype(jnp.bfloat16), stage_b[1].reshape(1, -1)
        self.w3, self.b3 = stage_w[2].astype(jnp.bfloat16), stage_b[2].reshape(1, -1)
        self.w4, self.b4 = stage_w[3].astype(jnp.bfloat16), stage_b[3].reshape(1, -1)
        self.eca_taps = jnp.stack(eca_w, axis=0)                 # (4, 5) f32 -> SMEM

        # constant 2x2 average-pooling operators (pool-as-matmul, no in-kernel reshapes)
        hw1 = self.INPUT_HW // self.STAGE_STRIDES[0]             # 16
        self.p1 = hw1 * hw1
        self.a1 = self._pool_matrix(hw1, hw1)                    # (64, 256)
        self.a2 = self._pool_matrix(hw1 // 2, hw1 // 2)          # (16, 64)
        self.a3 = self._pool_matrix(hw1 // 4, hw1 // 4)          # (4, 16)

        # head parameters (eval-mode BatchNorm1d folded into the preceding Linear)
        c = self.out_channels
        wg = jax.random.normal(nk(), (1, 32), jnp.float32)
        bg = 0.01 * jax.random.normal(nk(), (32,), jnp.float32)
        sg, tg = self._bn_scale_shift(nk(), 32)
        self.wg = wg * sg[None, :]
        self.bg = (bg * sg + tg).reshape(1, 32)

        fan1 = float(c + 32)
        w1x = jax.random.normal(nk(), (c, 1024), jnp.float32) / jnp.sqrt(fan1)
        w1g = jax.random.normal(nk(), (32, 1024), jnp.float32) / jnp.sqrt(fan1)
        b1 = 0.01 * jax.random.normal(nk(), (1024,), jnp.float32)
        s1, t1 = self._bn_scale_shift(nk(), 1024)
        self.w1x = (w1x * s1[None, :]).astype(jnp.bfloat16)
        self.w1g = (w1g * s1[None, :]).astype(jnp.bfloat16)
        self.b1 = (b1 * s1 + t1).reshape(1, 1024)

        w2h = jax.random.normal(nk(), (1024, 512), jnp.float32) / jnp.sqrt(1024.0)
        b2h = 0.01 * jax.random.normal(nk(), (512,), jnp.float32)
        s2, t2 = self._bn_scale_shift(nk(), 512)
        self.w2h = (w2h * s2[None, :]).astype(jnp.bfloat16)
        self.b2h = (b2h * s2 + t2).reshape(1, 512)

        w3h = jax.random.normal(nk(), (512, self.N_CLASSES), jnp.float32) / jnp.sqrt(512.0)
        b3h = 0.01 * jax.random.normal(nk(), (self.N_CLASSES,), jnp.float32)
        pad = self.PAD_CLASSES - self.N_CLASSES
        self.w3h = jnp.pad(w3h, ((0, 0), (0, pad))).astype(jnp.bfloat16)
        self.b3h = jnp.pad(b3h, (0, pad)).reshape(1, self.PAD_CLASSES)

        p1, p2, p3, p4 = self.p1, self.p1 // 4, self.p1 // 16, self.p1 // 64
        self._mm_dims = ((p2, p1, 128), (p2, 128, 256), (p3, p2, 256), (p3, 256, 512),
                         (p4, p3, 512), (p4, 512, 1024),
                         (1, 1024, 1024), (1, 32, 1024), (1, 1024, 512),
                         (1, 512, self.PAD_CLASSES))

    @staticmethod
    def _bn_scale_shift(key, n, eps=1e-5):
        # TODO(synk): BatchNorm1d folded with (synthetic) running statistics, i.e.
        # eval-mode semantics; training-mode batch statistics are not modeled.
        k1, k2, k3, k4 = jax.random.split(key, 4)
        gamma = 1.0 + 0.1 * jax.random.normal(k1, (n,), jnp.float32)
        beta = 0.01 * jax.random.normal(k2, (n,), jnp.float32)
        mean = 0.01 * jax.random.normal(k3, (n,), jnp.float32)
        var = 1.0 + 0.1 * jnp.abs(jax.random.normal(k4, (n,), jnp.float32))
        s = gamma / jnp.sqrt(var + eps)
        return s, beta - mean * s

    @staticmethod
    def _pool_matrix(h, w):
        """(h*w/4, h*w) operator: row-major 2x2 average pooling as a matmul."""
        ho, wo = h // 2, w // 2
        rows = jnp.arange(ho * wo)
        r_h, r_w = rows // wo, rows % wo
        cols = jnp.arange(h * w)
        c_h, c_w = cols // w, cols % w
        hit = (c_h[None, :] // 2 == r_h[:, None]) & (c_w[None, :] // 2 == r_w[:, None])
        return 0.25 * hit.astype(jnp.float32)

    def __call__(self, image, gender):
        n = image.shape[0]
        hgt, wid = image.shape[2], image.shape[3]
        s = self.STAGE_STRIDES[0]
        # single NCHW -> NHWC transpose; channels-last everywhere after this
        x = jnp.transpose(image, (0, 2, 3, 1))
        x = x.reshape(n, hgt // s, s, wid // s, s, 3).mean(axis=(2, 4))   # /4 downsample
        p = (hgt // s) * (wid // s)
        x = x.reshape(n, p, 3)
        # Cin=3 stem contraction kept in XLA (tiny); stage-1 output feeds the fused kernel.
        h1 = jnp.maximum(jnp.einsum('npc,cd->npd', x, self.stem_w) + self.stem_b, 0.0)

        args = (h1, gender, self.eca_taps, self.a1, self.a2, self.a3,
                self.w2, self.b2, self.w3, self.b3, self.w4, self.b4,
                self.wg, self.bg, self.w1x, self.w1g, self.b1,
                self.w2h, self.b2h, self.w3h, self.b3h)

        def const_spec(a):
            nd = a.ndim
            return pl.BlockSpec(a.shape, lambda i, _nd=nd: (0,) * _nd)

        in_specs = ([pl.BlockSpec((1, p, self.STAGE_CHANNELS[0]), lambda i: (i, 0, 0)),
                     pl.BlockSpec(memory_space=pltpu.MemorySpace.SMEM),   # gender scalars
                     pl.BlockSpec(memory_space=pltpu.MemorySpace.SMEM)]   # ECA taps
                    + [const_spec(a) for a in args[3:]])

        weight_bytes = sum(int(a.size) * a.dtype.itemsize for a in args[3:])
        flops = 2 * n * sum(m * k * q for m, k, q in self._mm_dims)

        logits = pl.pallas_call(
            _fused_kernel,
            out_shape=jax.ShapeDtypeStruct((n, 1, self.PAD_CLASSES), jnp.float32),
            grid=(n,),
            in_specs=in_specs,
            out_specs=pl.BlockSpec((1, 1, self.PAD_CLASSES), lambda i: (i, 0, 0)),
            compiler_params=pltpu.CompilerParams(
                dimension_semantics=("parallel",),        # v7x: one full sample per TC
                vmem_limit_bytes=32 * 1024 * 1024,
            ),
            cost_estimate=pl.CostEstimate(
                flops=flops,
                transcendentals=n * sum(self.STAGE_CHANNELS),
                bytes_accessed=weight_bytes + int(h1.size) * 4 + n * self.PAD_CLASSES * 4,
            ),
        )(*args)
        return logits.reshape(n, self.PAD_CLASSES)[:, :self.N_CLASSES]


if __name__ == "__main__":
    key = jax.random.PRNGKey(0)
    k_param, k_img, k_gender = jax.random.split(key, 3)
    model = MyRes50Pallas(k_param)

    image = jax.random.normal(k_img, (2, 3, 64, 64), jnp.float32)    # NCHW like PyTorch
    gender = jax.random.normal(k_gender, (2, 1), jnp.float32)

    logits = jax.jit(model.__call__)(image, gender)
    jax.block_until_ready(logits)

    assert logits.shape == (2, 230), logits.shape
    assert bool(jnp.all(jnp.isfinite(logits)))
    print("KERNEL_OK")
</pallas_src>

<mosaic_0001>
module attributes {stable_mosaic.version = 11 : i64} {
  func.func @_fused_kernel(%arg0: i32, %arg1: memref<1x256x128xf32, #tpu.memory_space<vmem>>, %arg2: memref<2x1xf32, #tpu.memory_space<smem>>, %arg3: memref<4x5xf32, #tpu.memory_space<smem>>, %arg4: memref<64x256xf32, #tpu.memory_space<vmem>>, %arg5: memref<16x64xf32, #tpu.memory_space<vmem>>, %arg6: memref<4x16xf32, #tpu.memory_space<vmem>>, %arg7: memref<128x256xbf16, #tpu.memory_space<vmem>>, %arg8: memref<1x256xf32, #tpu.memory_space<vmem>>, %arg9: memref<256x512xbf16, #tpu.memory_space<vmem>>, %arg10: memref<1x512xf32, #tpu.memory_space<vmem>>, %arg11: memref<512x1024xbf16, #tpu.memory_space<vmem>>, %arg12: memref<1x1024xf32, #tpu.memory_space<vmem>>, %arg13: memref<1x32xf32, #tpu.memory_space<vmem>>, %arg14: memref<1x32xf32, #tpu.memory_space<vmem>>, %arg15: memref<1024x1024xbf16, #tpu.memory_space<vmem>>, %arg16: memref<32x1024xbf16, #tpu.memory_space<vmem>>, %arg17: memref<1x1024xf32, #tpu.memory_space<vmem>>, %arg18: memref<1024x512xbf16, #tpu.memory_space<vmem>>, %arg19: memref<1x512xf32, #tpu.memory_space<vmem>>, %arg20: memref<512x256xbf16, #tpu.memory_space<vmem>>, %arg21: memref<1x256xf32, #tpu.memory_space<vmem>>, %arg22: memref<1x1x256xf32, #tpu.memory_space<vmem>>) attributes {dimension_semantics = [#tpu.dimension_semantics<parallel>], iteration_bounds = array<i64: 2>, scalar_prefetch = 0 : i64, scratch_operands = 0 : i64, tpu.core_type = #tpu.core_type<tc>, window_params = [{transform_indices = @transform_0, window_bounds = array<i64: 1, 256, 128>}, {transform_indices = @transform_1, window_bounds = array<i64: 2, 1>}, {transform_indices = @transform_2, window_bounds = array<i64: 4, 5>}, {pipeline_mode = #tpu.pipeline_mode<synchronous>, transform_indices = @transform_3, window_bounds = array<i64: 64, 256>}, {pipeline_mode = #tpu.pipeline_mode<synchronous>, transform_indices = @transform_4, window_bounds = array<i64: 16, 64>}, {pipeline_mode = #tpu.pipeline_mode<synchronous>, transform_indices = @transform_5, window_bounds = array<i64: 4, 16>}, {pipeline_mode = #tpu.pipeline_mode<synchronous>, transform_indices = @transform_6, window_bounds = array<i64: 128, 256>}, {pipeline_mode = #tpu.pipeline_mode<synchronous>, transform_indices = @transform_7, window_bounds = array<i64: 1, 256>}, {pipeline_mode = #tpu.pipeline_mode<synchronous>, transform_indices = @transform_8, window_bounds = array<i64: 256, 512>}, {pipeline_mode = #tpu.pipeline_mode<synchronous>, transform_indices = @transform_9, window_bounds = array<i64: 1, 512>}, {pipeline_mode = #tpu.pipeline_mode<synchronous>, transform_indices = @transform_10, window_bounds = array<i64: 512, 1024>}, {pipeline_mode = #tpu.pipeline_mode<synchronous>, transform_indices = @transform_11, window_bounds = array<i64: 1, 1024>}, {pipeline_mode = #tpu.pipeline_mode<synchronous>, transform_indices = @transform_12, window_bounds = array<i64: 1, 32>}, {pipeline_mode = #tpu.pipeline_mode<synchronous>, transform_indices = @transform_13, window_bounds = array<i64: 1, 32>}, {pipeline_mode = #tpu.pipeline_mode<synchronous>, transform_indices = @transform_14, window_bounds = array<i64: 1024, 1024>}, {pipeline_mode = #tpu.pipeline_mode<synchronous>, transform_indices = @transform_15, window_bounds = array<i64: 32, 1024>}, {pipeline_mode = #tpu.pipeline_mode<synchronous>, transform_indices = @transform_16, window_bounds = array<i64: 1, 1024>}, {pipeline_mode = #tpu.pipeline_mode<synchronous>, transform_indices = @transform_17, window_bounds = array<i64: 1024, 512>}, {pipeline_mode = #tpu.pipeline_mode<synchronous>, transform_indices = @transform_18, window_bounds = array<i64: 1, 512>}, {pipeline_mode = #tpu.pipeline_mode<synchronous>, transform_indices = @transform_19, window_bounds = array<i64: 512, 256>}, {pipeline_mode = #tpu.pipeline_mode<synchronous>, transform_indices = @transform_20, window_bounds = array<i64: 1, 256>}, {transform_indices = @transform_21, window_bounds = array<i64: 1, 1, 256>}]} {
    %c0 = arith.constant 0 : index
    %c0_0 = arith.constant 0 : index
    %c0_1 = arith.constant 0 : index
    %0 = vector.load %arg1[%c0, %c0_0, %c0_1] : memref<1x256x128xf32, #tpu.memory_space<vmem>>, vector<1x256x128xf32>
    %1 = vector.shape_cast %0 : vector<1x256x128xf32> to vector<256x128xf32>
    %cst = arith.constant dense<0.000000e+00> : vector<128xf32>
    %2 = vector.multi_reduction <add>, %1, %cst [0] : vector<256x128xf32> to vector<128xf32>
    %3 = vector.shape_cast %2 : vector<128xf32> to vector<1x128xf32>
    %cst_2 = arith.constant 2.560000e+02 : f32
    %4 = vector.broadcast %cst_2 : f32 to vector<1x128xf32>
    %5 = arith.divf %3, %4 : vector<1x128xf32>
    %6 = tpu.iota {dimensions = array<i32: 1>} : vector<1x128xi32>
    %c0_3 = arith.constant 0 : index
    %c2 = arith.constant 2 : index
    %7 = memref.load %arg3[%c0_3, %c2] : memref<4x5xf32, #tpu.memory_space<smem>>
    %8 = vector.broadcast %7 : f32 to vector<1x128xf32>
    %9 = arith.mulf %8, %5 : vector<1x128xf32>
    %c2_i32 = arith.constant 2 : i32
    %10 = tpu.dynamic_rotate %5 by %c2_i32 dim 1 : vector<1x128xf32>, i32 -> vector<1x128xf32>
    %c-2_i32 = arith.constant -2 : i32
    %11 = vector.broadcast %c-2_i32 : i32 to vector<1x128xi32>
    %12 = arith.addi %6, %11 : vector<1x128xi32>
    %c0_i32 = arith.constant 0 : i32
    %13 = vector.broadcast %c0_i32 : i32 to vector<1x128xi32>
    %14 = arith.cmpi sge, %12, %13 : vector<1x128xi32>
    %c-2_i32_4 = arith.constant -2 : i32
    %15 = vector.broadcast %c-2_i32_4 : i32 to vector<1x128xi32>
    %16 = arith.addi %6, %15 : vector<1x128xi32>
    %c128_i32 = arith.constant 128 : i32
    %17 = vector.broadcast %c128_i32 : i32 to vector<1x128xi32>
    %18 = arith.cmpi slt, %16, %17 : vector<1x128xi32>
    %19 = arith.andi %14, %18 : vector<1x128xi1>
    %c0_5 = arith.constant 0 : index
    %c0_6 = arith.constant 0 : index
    %20 = memref.load %arg3[%c0_5, %c0_6] : memref<4x5xf32, #tpu.memory_space<smem>>
    %cst_7 = arith.constant 0.000000e+00 : f32
    %21 = vector.broadcast %cst_7 : f32 to vector<1x128xf32>
    %22 = arith.select %19, %10, %21 : vector<1x128xi1>, vector<1x128xf32>
    %23 = vector.broadcast %20 : f32 to vector<1x128xf32>
    %24 = arith.mulf %23, %22 : vector<1x128xf32>
    %25 = arith.addf %9, %24 : vector<1x128xf32>
    %c1_i32 = arith.constant 1 : i32
    %26 = tpu.dynamic_rotate %5 by %c1_i32 dim 1 : vector<1x128xf32>, i32 -> vector<1x128xf32>
    %c-1_i32 = arith.constant -1 : i32
    %27 = vector.broadcast %c-1_i32 : i32 to vector<1x128xi32>
    %28 = arith.addi %6, %27 : vector<1x128xi32>
    %c0_i32_8 = arith.constant 0 : i32
    %29 = vector.broadcast %c0_i32_8 : i32 to vector<1x128xi32>
    %30 = arith.cmpi sge, %28, %29 : vector<1x128xi32>
    %c-1_i32_9 = arith.constant -1 : i32
    %31 = vector.broadcast %c-1_i32_9 : i32 to vector<1x128xi32>
    %32 = arith.addi %6, %31 : vector<1x128xi32>
    %c128_i32_10 = arith.constant 128 : i32
    %33 = vector.broadcast %c128_i32_10 : i32 to vector<1x128xi32>
    %34 = arith.cmpi slt, %32, %33 : vector<1x128xi32>
    %35 = arith.andi %30, %34 : vector<1x128xi1>
    %c0_11 = arith.constant 0 : index
    %c1 = arith.constant 1 : index
    %36 = memref.load %arg3[%c0_11, %c1] : memref<4x5xf32, #tpu.memory_space<smem>>
    %cst_12 = arith.constant 0.000000e+00 : f32
    %37 = vector.broadcast %cst_12 : f32 to vector<1x128xf32>
    %38 = arith.select %35, %26, %37 : vector<1x128xi1>, vector<1x128xf32>
    %39 = vector.broadcast %36 : f32 to vector<1x128xf32>
    %40 = arith.mulf %39, %38 : vector<1x128xf32>
    %41 = arith.addf %25, %40 : vector<1x128xf32>
    %c127_i32 = arith.constant 127 : i32
    %42 = tpu.dynamic_rotate %5 by %c127_i32 dim 1 : vector<1x128xf32>, i32 -> vector<1x128xf32>
    %c1_i32_13 = arith.constant 1 : i32
    %43 = vector.broadcast %c1_i32_13 : i32 to vector<1x128xi32>
    %44 = arith.addi %6, %43 : vector<1x128xi32>
    %c0_i32_14 = arith.constant 0 : i32
    %45 = vector.broadcast %c0_i32_14 : i32 to vector<1x128xi32>
    %46 = arith.cmpi sge, %44, %45 : vector<1x128xi32>
    %c1_i32_15 = arith.constant 1 : i32
    %47 = vector.broadcast %c1_i32_15 : i32 to vector<1x128xi32>
    %48 = arith.addi %6, %47 : vector<1x128xi32>
    %c128_i32_16 = arith.constant 128 : i32
    %49 = vector.broadcast %c128_i32_16 : i32 to vector<1x128xi32>
    %50 = arith.cmpi slt, %48, %49 : vector<1x128xi32>
    %51 = arith.andi %46, %50 : vector<1x128xi1>
    %c0_17 = arith.constant 0 : index
    %c3 = arith.constant 3 : index
    %52 = memref.load %arg3[%c0_17, %c3] : memref<4x5xf32, #tpu.memory_space<smem>>
    %cst_18 = arith.constant 0.000000e+00 : f32
    %53 = vector.broadcast %cst_18 : f32 to vector<1x128xf32>
    %54 = arith.select %51, %42, %53 : vector<1x128xi1>, vector<1x128xf32>
    %55 = vector.broadcast %52 : f32 to vector<1x128xf32>
    %56 = arith.mulf %55, %54 : vector<1x128xf32>
    %57 = arith.addf %41, %56 : vector<1x128xf32>
    %c126_i32 = arith.constant 126 : i32
    %58 = tpu.dynamic_rotate %5 by %c126_i32 dim 1 : vector<1x128xf32>, i32 -> vector<1x128xf32>
    %c2_i32_19 = arith.constant 2 : i32
    %59 = vector.broadcast %c2_i32_19 : i32 to vector<1x128xi32>
    %60 = arith.addi %6, %59 : vector<1x128xi32>
    %c0_i32_20 = arith.constant 0 : i32
    %61 = vector.broadcast %c0_i32_20 : i32 to vector<1x128xi32>
    %62 = arith.cmpi sge, %60, %61 : vector<1x128xi32>
    %c2_i32_21 = arith.constant 2 : i32
    %63 = vector.broadcast %c2_i32_21 : i32 to vector<1x128xi32>
    %64 = arith.addi %6, %63 : vector<1x128xi32>
    %c128_i32_22 = arith.constant 128 : i32
    %65 = vector.broadcast %c128_i32_22 : i32 to vector<1x128xi32>
    %66 = arith.cmpi slt, %64, %65 : vector<1x128xi32>
    %67 = arith.andi %62, %66 : vector<1x128xi1>
    %c0_23 = arith.constant 0 : index
    %c4 = arith.constant 4 : index
    %68 = memref.load %arg3[%c0_23, %c4] : memref<4x5xf32, #tpu.memory_space<smem>>
    %cst_24 = arith.constant 0.000000e+00 : f32
    %69 = vector.broadcast %cst_24 : f32 to vector<1x128xf32>
    %70 = arith.select %67, %58, %69 : vector<1x128xi1>, vector<1x128xf32>
    %71 = vector.broadcast %68 : f32 to vector<1x128xf32>
    %72 = arith.mulf %71, %70 : vector<1x128xf32>
    %73 = arith.addf %57, %72 : vector<1x128xf32>
    %cst_25 = arith.constant 0.000000e+00 : f32
    %74 = vector.broadcast %cst_25 : f32 to vector<1x128xf32>
    %75 = arith.subf %74, %73 : vector<1x128xf32>
    %76 = math.exp %75 : vector<1x128xf32>
    %cst_26 = arith.constant 1.000000e+00 : f32
    %77 = vector.broadcast %cst_26 : f32 to vector<1x128xf32>
    %78 = arith.addf %77, %76 : vector<1x128xf32>
    %cst_27 = arith.constant 1.000000e+00 : f32
    %79 = vector.broadcast %cst_27 : f32 to vector<1x128xf32>
    %80 = arith.divf %79, %78 : vector<1x128xf32>
    %81 = vector.broadcast %80 : vector<1x128xf32> to vector<256x128xf32>
    %82 = arith.mulf %1, %81 : vector<256x128xf32>
    %c0_28 = arith.constant 0 : index
    %c0_29 = arith.constant 0 : index
    %83 = vector.load %arg4[%c0_28, %c0_29] : memref<64x256xf32, #tpu.memory_space<vmem>>, vector<64x256xf32>
    %cst_30 = arith.constant dense<0.000000e+00> : vector<64x128xf32>
    %84 = tpu.matmul %83, %82, %cst_30 {dimension_numbers = #tpu.dot_dimension_numbers<[1], [0], [0], [1], [0, 0, 1, 1], [], []>} : vector<64x256xf32>, vector<256x128xf32>, vector<64x128xf32> -> vector<64x128xf32>
    %85 = arith.truncf %84 : vector<64x128xf32> to vector<64x128xbf16>
    %c0_31 = arith.constant 0 : index
    %c0_32 = arith.constant 0 : index
    %86 = vector.load %arg7[%c0_31, %c0_32] : memref<128x256xbf16, #tpu.memory_space<vmem>>, vector<128x256xbf16>
    %cst_33 = arith.constant dense<0.000000e+00> : vector<64x256xf32>
    %87 = tpu.matmul %85, %86, %cst_33 {dimension_numbers = #tpu.dot_dimension_numbers<[1], [0], [0], [1], [0, 0, 1, 1], [], []>} : vector<64x128xbf16>, vector<128x256xbf16>, vector<64x256xf32> -> vector<64x256xf32>
    %c0_34 = arith.constant 0 : index
    %c0_35 = arith.constant 0 : index
    %88 = vector.load %arg8[%c0_34, %c0_35] : memref<1x256xf32, #tpu.memory_space<vmem>>, vector<1x256xf32>
    %89 = vector.broadcast %88 : vector<1x256xf32> to vector<64x256xf32>
    %90 = arith.addf %87, %89 : vector<64x256xf32>
    %cst_36 = arith.constant 0.000000e+00 : f32
    %91 = vector.broadcast %cst_36 : f32 to vector<64x256xf32>
    %92 = arith.maximumf %90, %91 : vector<64x256xf32>
    %cst_37 = arith.constant dense<0.000000e+00> : vector<256xf32>
    %93 = vector.multi_reduction <add>, %92, %cst_37 [0] : vector<64x256xf32> to vector<256xf32>
    %94 = vector.shape_cast %93 : vector<256xf32> to vector<1x256xf32>
    %cst_38 = arith.constant 6.400000e+01 : f32
    %95 = vector.broadcast %cst_38 : f32 to vector<1x256xf32>
    %96 = arith.divf %94, %95 : vector<1x256xf32>
    %97 = tpu.iota {dimensions = array<i32: 1>} : vector<1x256xi32>
    %c1_39 = arith.constant 1 : index
    %c2_40 = arith.constant 2 : index
    %98 = memref.load %arg3[%c1_39, %c2_40] : memref<4x5xf32, #tpu.memory_space<smem>>
    %99 = vector.broadcast %98 : f32 to vector<1x256xf32>
    %100 = arith.mulf %99, %96 : vector<1x256xf32>
    %c2_i32_41 = arith.constant 2 : i32
    %101 = tpu.dynamic_rotate %96 by %c2_i32_41 dim 1 : vector<1x256xf32>, i32 -> vector<1x256xf32>
    %c-2_i32_42 = arith.constant -2 : i32
    %102 = vector.broadcast %c-2_i32_42 : i32 to vector<1x256xi32>
    %103 = arith.addi %97, %102 : vector<1x256xi32>
    %c0_i32_43 = arith.constant 0 : i32
    %104 = vector.broadcast %c0_i32_43 : i32 to vector<1x256xi32>
    %105 = arith.cmpi sge, %103, %104 : vector<1x256xi32>
    %c-2_i32_44 = arith.constant -2 : i32
    %106 = vector.broadcast %c-2_i32_44 : i32 to vector<1x256xi32>
    %107 = arith.addi %97, %106 : vector<1x256xi32>
    %c256_i32 = arith.constant 256 : i32
    %108 = vector.broadcast %c256_i32 : i32 to vector<1x256xi32>
    %109 = arith.cmpi slt, %107, %108 : vector<1x256xi32>
    %110 = arith.andi %105, %109 : vector<1x256xi1>
    %c1_45 = arith.constant 1 : index
    %c0_46 = arith.constant 0 : index
    %111 = memref.load %arg3[%c1_45, %c0_46] : memref<4x5xf32, #tpu.memory_space<smem>>
    %cst_47 = arith.constant 0.000000e+00 : f32
    %112 = vector.broadcast %cst_47 : f32 to vector<1x256xf32>
    %113 = arith.select %110, %101, %112 : vector<1x256xi1>, vector<1x256xf32>
    %114 = vector.broadcast %111 : f32 to vector<1x256xf32>
    %115 = arith.mulf %114, %113 : vector<1x256xf32>
    %116 = arith.addf %100, %115 : vector<1x256xf32>
    %c1_i32_48 = arith.constant 1 : i32
    %117 = tpu.dynamic_rotate %96 by %c1_i32_48 dim 1 : vector<1x256xf32>, i32 -> vector<1x256xf32>
    %c-1_i32_49 = arith.constant -1 : i32
    %118 = vector.broadcast %c-1_i32_49 : i32 to vector<1x256xi32>
    %119 = arith.addi %97, %118 : vector<1x256xi32>
    %c0_i32_50 = arith.constant 0 : i32
    %120 = vector.broadcast %c0_i32_50 : i32 to vector<1x256xi32>
    %121 = arith.cmpi sge, %119, %120 : vector<1x256xi32>
    %c-1_i32_51 = arith.constant -1 : i32
    %122 = vector.broadcast %c-1_i32_51 : i32 to vector<1x256xi32>
    %123 = arith.addi %97, %122 : vector<1x256xi32>
    %c256_i32_52 = arith.constant 256 : i32
    %124 = vector.broadcast %c256_i32_52 : i32 to vector<1x256xi32>
    %125 = arith.cmpi slt, %123, %124 : vector<1x256xi32>
    %126 = arith.andi %121, %125 : vector<1x256xi1>
    %c1_53 = arith.constant 1 : index
    %c1_54 = arith.constant 1 : index
    %127 = memref.load %arg3[%c1_53, %c1_54] : memref<4x5xf32, #tpu.memory_space<smem>>
    %cst_55 = arith.constant 0.000000e+00 : f32
    %128 = vector.broadcast %cst_55 : f32 to vector<1x256xf32>
    %129 = arith.select %126, %117, %128 : vector<1x256xi1>, vector<1x256xf32>
    %130 = vector.broadcast %127 : f32 to vector<1x256xf32>
    %131 = arith.mulf %130, %129 : vector<1x256xf32>
    %132 = arith.addf %116, %131 : vector<1x256xf32>
    %c255_i32 = arith.constant 255 : i32
    %133 = tpu.dynamic_rotate %96 by %c255_i32 dim 1 : vector<1x256xf32>, i32 -> vector<1x256xf32>
    %c1_i32_56 = arith.constant 1 : i32
    %134 = vector.broadcast %c1_i32_56 : i32 to vector<1x256xi32>
    %135 = arith.addi %97, %134 : vector<1x256xi32>
    %c0_i32_57 = arith.constant 0 : i32
    %136 = vector.broadcast %c0_i32_57 : i32 to vector<1x256xi32>
    %137 = arith.cmpi sge, %135, %136 : vector<1x256xi32>
    %c1_i32_58 = arith.constant 1 : i32
    %138 = vector.broadcast %c1_i32_58 : i32 to vector<1x256xi32>
    %139 = arith.addi %97, %138 : vector<1x256xi32>
    %c256_i32_59 = arith.constant 256 : i32
    %140 = vector.broadcast %c256_i32_59 : i32 to vector<1x256xi32>
    %141 = arith.cmpi slt, %139, %140 : vector<1x256xi32>
    %142 = arith.andi %137, %141 : vector<1x256xi1>
    %c1_60 = arith.constant 1 : index
    %c3_61 = arith.constant 3 : index
    %143 = memref.load %arg3[%c1_60, %c3_61] : memref<4x5xf32, #tpu.memory_space<smem>>
    %cst_62 = arith.constant 0.000000e+00 : f32
    %144 = vector.broadcast %cst_62 : f32 to vector<1x256xf32>
    %145 = arith.select %142, %133, %144 : vector<1x256xi1>, vector<1x256xf32>
    %146 = vector.broadcast %143 : f32 to vector<1x256xf32>
    %147 = arith.mulf %146, %145 : vector<1x256xf32>
    %148 = arith.addf %132, %147 : vector<1x256xf32>
    %c254_i32 = arith.constant 254 : i32
    %149 = tpu.dynamic_rotate %96 by %c254_i32 dim 1 : vector<1x256xf32>, i32 -> vector<1x256xf32>
    %c2_i32_63 = arith.constant 2 : i32
    %150 = vector.broadcast %c2_i32_63 : i32 to vector<1x256xi32>
    %151 = arith.addi %97, %150 : vector<1x256xi32>
    %c0_i32_64 = arith.constant 0 : i32
    %152 = vector.broadcast %c0_i32_64 : i32 to vector<1x256xi32>
    %153 = arith.cmpi sge, %151, %152 : vector<1x256xi32>
    %c2_i32_65 = arith.constant 2 : i32
    %154 = vector.broadcast %c2_i32_65 : i32 to vector<1x256xi32>
    %155 = arith.addi %97, %154 : vector<1x256xi32>
    %c256_i32_66 = arith.constant 256 : i32
    %156 = vector.broadcast %c256_i32_66 : i32 to vector<1x256xi32>
    %157 = arith.cmpi slt, %155, %156 : vector<1x256xi32>
    %158 = arith.andi %153, %157 : vector<1x256xi1>
    %c1_67 = arith.constant 1 : index
    %c4_68 = arith.constant 4 : index
    %159 = memref.load %arg3[%c1_67, %c4_68] : memref<4x5xf32, #tpu.memory_space<smem>>
    %cst_69 = arith.constant 0.000000e+00 : f32
    %160 = vector.broadcast %cst_69 : f32 to vector<1x256xf32>
    %161 = arith.select %158, %149, %160 : vector<1x256xi1>, vector<1x256xf32>
    %162 = vector.broadcast %159 : f32 to vector<1x256xf32>
    %163 = arith.mulf %162, %161 : vector<1x256xf32>
    %164 = arith.addf %148, %163 : vector<1x256xf32>
    %cst_70 = arith.constant 0.000000e+00 : f32
    %165 = vector.broadcast %cst_70 : f32 to vector<1x256xf32>
    %166 = arith.subf %165, %164 : vector<1x256xf32>
    %167 = math.exp %166 : vector<1x256xf32>
    %cst_71 = arith.constant 1.000000e+00 : f32
    %168 = vector.broadcast %cst_71 : f32 to vector<1x256xf32>
    %169 = arith.addf %168, %167 : vector<1x256xf32>
    %cst_72 = arith.constant 1.000000e+00 : f32
    %170 = vector.broadcast %cst_72 : f32 to vector<1x256xf32>
    %171 = arith.divf %170, %169 : vector<1x256xf32>
    %172 = vector.broadcast %171 : vector<1x256xf32> to vector<64x256xf32>
    %173 = arith.mulf %92, %172 : vector<64x256xf32>
    %c0_73 = arith.constant 0 : index
    %c0_74 = arith.constant 0 : index
    %174 = vector.load %arg5[%c0_73, %c0_74] : memref<16x64xf32, #tpu.memory_space<vmem>>, vector<16x64xf32>
    %cst_75 = arith.constant dense<0.000000e+00> : vector<16x256xf32>
    %175 = tpu.matmul %174, %173, %cst_75 {dimension_numbers = #tpu.dot_dimension_numbers<[1], [0], [0], [1], [0, 0, 1, 1], [], []>} : vector<16x64xf32>, vector<64x256xf32>, vector<16x256xf32> -> vector<16x256xf32>
    %176 = arith.truncf %175 : vector<16x256xf32> to vector<16x256xbf16>
    %c0_76 = arith.constant 0 : index
    %c0_77 = arith.constant 0 : index
    %177 = vector.load %arg9[%c0_76, %c0_77] : memref<256x512xbf16, #tpu.memory_space<vmem>>, vector<256x512xbf16>
    %cst_78 = arith.constant dense<0.000000e+00> : vector<16x512xf32>
    %178 = tpu.matmul %176, %177, %cst_78 {dimension_numbers = #tpu.dot_dimension_numbers<[1], [0], [0], [1], [0, 0, 1, 1], [], []>} : vector<16x256xbf16>, vector<256x512xbf16>, vector<16x512xf32> -> vector<16x512xf32>
    %c0_79 = arith.constant 0 : index
    %c0_80 = arith.constant 0 : index
    %179 = vector.load %arg10[%c0_79, %c0_80] : memref<1x512xf32, #tpu.memory_space<vmem>>, vector<1x512xf32>
    %180 = vector.broadcast %179 : vector<1x512xf32> to vector<16x512xf32>
    %181 = arith.addf %178, %180 : vector<16x512xf32>
    %cst_81 = arith.constant 0.000000e+00 : f32
    %182 = vector.broadcast %cst_81 : f32 to vector<16x512xf32>
    %183 = arith.maximumf %181, %182 : vector<16x512xf32>
    %cst_82 = arith.constant dense<0.000000e+00> : vector<512xf32>
    %184 = vector.multi_reduction <add>, %183, %cst_82 [0] : vector<16x512xf32> to vector<512xf32>
    %185 = vector.shape_cast %184 : vector<512xf32> to vector<1x512xf32>
    %cst_83 = arith.constant 1.600000e+01 : f32
    %186 = vector.broadcast %cst_83 : f32 to vector<1x512xf32>
    %187 = arith.divf %185, %186 : vector<1x512xf32>
    %188 = tpu.iota {dimensions = array<i32: 1>} : vector<1x512xi32>
    %c2_84 = arith.constant 2 : index
    %c2_85 = arith.constant 2 : index
    %189 = memref.load %arg3[%c2_84, %c2_85] : memref<4x5xf32, #tpu.memory_space<smem>>
    %190 = vector.broadcast %189 : f32 to vector<1x512xf32>
    %191 = arith.mulf %190, %187 : vector<1x512xf32>
    %c2_i32_86 = arith.constant 2 : i32
    %192 = tpu.dynamic_rotate %187 by %c2_i32_86 dim 1 : vector<1x512xf32>, i32 -> vector<1x512xf32>
    %c-2_i32_87 = arith.constant -2 : i32
    %193 = vector.broadcast %c-2_i32_87 : i32 to vector<1x512xi32>
    %194 = arith.addi %188, %193 : vector<1x512xi32>
    %c0_i32_88 = arith.constant 0 : i32
    %195 = vector.broadcast %c0_i32_88 : i32 to vector<1x512xi32>
    %196 = arith.cmpi sge, %194, %195 : vector<1x512xi32>
    %c-2_i32_89 = arith.constant -2 : i32
    %197 = vector.broadcast %c-2_i32_89 : i32 to vector<1x512xi32>
    %198 = arith.addi %188, %197 : vector<1x512xi32>
    %c512_i32 = arith.constant 512 : i32
    %199 = vector.broadcast %c512_i32 : i32 to vector<1x512xi32>
    %200 = arith.cmpi slt, %198, %199 : vector<1x512xi32>
    %201 = arith.andi %196, %200 : vector<1x512xi1>
    %c2_90 = arith.constant 2 : index
    %c0_91 = arith.constant 0 : index
    %202 = memref.load %arg3[%c2_90, %c0_91] : memref<4x5xf32, #tpu.memory_space<smem>>
    %cst_92 = arith.constant 0.000000e+00 : f32
    %203 = vector.broadcast %cst_92 : f32 to vector<1x512xf32>
    %204 = arith.select %201, %192, %203 : vector<1x512xi1>, vector<1x512xf32>
    %205 = vector.broadcast %202 : f32 to vector<1x512xf32>
    %206 = arith.mulf %205, %204 : vector<1x512xf32>
    %207 = arith.addf %191, %206 : vector<1x512xf32>
    %c1_i32_93 = arith.constant 1 : i32
    %208 = tpu.dynamic_rotate %187 by %c1_i32_93 dim 1 : vector<1x512xf32>, i32 -> vector<1x512xf32>
    %c-1_i32_94 = arith.constant -1 : i32
    %209 = vector.broadcast %c-1_i32_94 : i32 to vector<1x512xi32>
    %210 = arith.addi %188, %209 : vector<1x512xi32>
    %c0_i32_95 = arith.constant 0 : i32
    %211 = vector.broadcast %c0_i32_95 : i32 to vector<1x512xi32>
    %212 = arith.cmpi sge, %210, %211 : vector<1x512xi32>
    %c-1_i32_96 = arith.constant -1 : i32
    %213 = vector.broadcast %c-1_i32_96 : i32 to vector<1x512xi32>
    %214 = arith.addi %188, %213 : vector<1x512xi32>
    %c512_i32_97 = arith.constant 512 : i32
    %215 = vector.broadcast %c512_i32_97 : i32 to vector<1x512xi32>
    %216 = arith.cmpi slt, %214, %215 : vector<1x512xi32>
    %217 = arith.andi %212, %216 : vector<1x512xi1>
    %c2_98 = arith.constant 2 : index
    %c1_99 = arith.constant 1 : index
    %218 = memref.load %arg3[%c2_98, %c1_99] : memref<4x5xf32, #tpu.memory_space<smem>>
    %cst_100 = arith.constant 0.000000e+00 : f32
    %219 = vector.broadcast %cst_100 : f32 to vector<1x512xf32>
    %220 = arith.select %217, %208, %219 : vector<1x512xi1>, vector<1x512xf32>
    %221 = vector.broadcast %218 : f32 to vector<1x512xf32>
    %222 = arith.mulf %221, %220 : vector<1x512xf32>
    %223 = arith.addf %207, %222 : vector<1x512xf32>
    %c511_i32 = arith.constant 511 : i32
    %224 = tpu.dynamic_rotate %187 by %c511_i32 dim 1 : vector<1x512xf32>, i32 -> vector<1x512xf32>
    %c1_i32_101 = arith.constant 1 : i32
    %225 = vector.broadcast %c1_i32_101 : i32 to vector<1x512xi32>
    %226 = arith.addi %188, %225 : vector<1x512xi32>
    %c0_i32_102 = arith.constant 0 : i32
    %227 = vector.broadcast %c0_i32_102 : i32 to vector<1x512xi32>
    %228 = arith.cmpi sge, %226, %227 : vector<1x512xi32>
    %c1_i32_103 = arith.constant 1 : i32
    %229 = vector.broadcast %c1_i32_103 : i32 to vector<1x512xi32>
    %230 = arith.addi %188, %229 : vector<1x512xi32>
    %c512_i32_104 = arith.constant 512 : i32
    %231 = vector.broadcast %c512_i32_104 : i32 to vector<1x512xi32>
    %232 = arith.cmpi slt, %230, %231 : vector<1x512xi32>
    %233 = arith.andi %228, %232 : vector<1x512xi1>
    %c2_105 = arith.constant 2 : index
    %c3_106 = arith.constant 3 : index
    %234 = memref.load %arg3[%c2_105, %c3_106] : memref<4x5xf32, #tpu.memory_space<smem>>
    %cst_107 = arith.constant 0.000000e+00 : f32
    %235 = vector.broadcast %cst_107 : f32 to vector<1x512xf32>
    %236 = arith.select %233, %224, %235 : vector<1x512xi1>, vector<1x512xf32>
    %237 = vector.broadcast %234 : f32 to vector<1x512xf32>
    %238 = arith.mulf %237, %236 : vector<1x512xf32>
    %239 = arith.addf %223, %238 : vector<1x512xf32>
    %c510_i32 = arith.constant 510 : i32
    %240 = tpu.dynamic_rotate %187 by %c510_i32 dim 1 : vector<1x512xf32>, i32 -> vector<1x512xf32>
    %c2_i32_108 = arith.constant 2 : i32
    %241 = vector.broadcast %c2_i32_108 : i32 to vector<1x512xi32>
    %242 = arith.addi %188, %241 : vector<1x512xi32>
    %c0_i32_109 = arith.constant 0 : i32
    %243 = vector.broadcast %c0_i32_109 : i32 to vector<1x512xi32>
    %244 = arith.cmpi sge, %242, %243 : vector<1x512xi32>
    %c2_i32_110 = arith.constant 2 : i32
    %245 = vector.broadcast %c2_i32_110 : i32 to vector<1x512xi32>
    %246 = arith.addi %188, %245 : vector<1x512xi32>
    %c512_i32_111 = arith.constant 512 : i32
    %247 = vector.broadcast %c512_i32_111 : i32 to vector<1x512xi32>
    %248 = arith.cmpi slt, %246, %247 : vector<1x512xi32>
    %249 = arith.andi %244, %248 : vector<1x512xi1>
    %c2_112 = arith.constant 2 : index
    %c4_113 = arith.constant 4 : index
    %250 = memref.load %arg3[%c2_112, %c4_113] : memref<4x5xf32, #tpu.memory_space<smem>>
    %cst_114 = arith.constant 0.000000e+00 : f32
    %251 = vector.broadcast %cst_114 : f32 to vector<1x512xf32>
    %252 = arith.select %249, %240, %251 : vector<1x512xi1>, vector<1x512xf32>
    %253 = vector.broadcast %250 : f32 to vector<1x512xf32>
    %254 = arith.mulf %253, %252 : vector<1x512xf32>
    %255 = arith.addf %239, %254 : vector<1x512xf32>
    %cst_115 = arith.constant 0.000000e+00 : f32
    %256 = vector.broadcast %cst_115 : f32 to vector<1x512xf32>
    %257 = arith.subf %256, %255 : vector<1x512xf32>
    %258 = math.exp %257 : vector<1x512xf32>
    %cst_116 = arith.constant 1.000000e+00 : f32
    %259 = vector.broadcast %cst_116 : f32 to vector<1x512xf32>
    %260 = arith.addf %259, %258 : vector<1x512xf32>
    %cst_117 = arith.constant 1.000000e+00 : f32
    %261 = vector.broadcast %cst_117 : f32 to vector<1x512xf32>
    %262 = arith.divf %261, %260 : vector<1x512xf32>
    %263 = vector.broadcast %262 : vector<1x512xf32> to vector<16x512xf32>
    %264 = arith.mulf %183, %263 : vector<16x512xf32>
    %c0_118 = arith.constant 0 : index
    %c0_119 = arith.constant 0 : index
    %265 = vector.load %arg6[%c0_118, %c0_119] : memref<4x16xf32, #tpu.memory_space<vmem>>, vector<4x16xf32>
    %cst_120 = arith.constant dense<0.000000e+00> : vector<4x512xf32>
    %266 = tpu.matmul %265, %264, %cst_120 {dimension_numbers = #tpu.dot_dimension_numbers<[1], [0], [0], [1], [0, 0, 1, 1], [], []>} : vector<4x16xf32>, vector<16x512xf32>, vector<4x512xf32> -> vector<4x512xf32>
    %267 = arith.truncf %266 : vector<4x512xf32> to vector<4x512xbf16>
    %c0_121 = arith.constant 0 : index
    %c0_122 = arith.constant 0 : index
    %268 = vector.load %arg11[%c0_121, %c0_122] : memref<512x1024xbf16, #tpu.memory_space<vmem>>, vector<512x1024xbf16>
    %cst_123 = arith.constant dense<0.000000e+00> : vector<4x1024xf32>
    %269 = tpu.matmul %267, %268, %cst_123 {dimension_numbers = #tpu.dot_dimension_numbers<[1], [0], [0], [1], [0, 0, 1, 1], [], []>} : vector<4x512xbf16>, vector<512x1024xbf16>, vector<4x1024xf32> -> vector<4x1024xf32>
    %c0_124 = arith.constant 0 : index
    %c0_125 = arith.constant 0 : index
    %270 = vector.load %arg12[%c0_124, %c0_125] : memref<1x1024xf32, #tpu.memory_space<vmem>>, vector<1x1024xf32>
    %271 = vector.broadcast %270 : vector<1x1024xf32> to vector<4x1024xf32>
    %272 = arith.addf %269, %271 : vector<4x1024xf32>
    %cst_126 = arith.constant 0.000000e+00 : f32
    %273 = vector.broadcast %cst_126 : f32 to vector<4x1024xf32>
    %274 = arith.maximumf %272, %273 : vector<4x1024xf32>
    %cst_127 = arith.constant dense<0.000000e+00> : vector<1024xf32>
    %275 = vector.multi_reduction <add>, %274, %cst_127 [0] : vector<4x1024xf32> to vector<1024xf32>
    %276 = vector.shape_cast %275 : vector<1024xf32> to vector<1x1024xf32>
    %cst_128 = arith.constant 4.000000e+00 : f32
    %277 = vector.broadcast %cst_128 : f32 to vector<1x1024xf32>
    %278 = arith.divf %276, %277 : vector<1x1024xf32>
    %279 = tpu.iota {dimensions = array<i32: 1>} : vector<1x1024xi32>
    %c3_129 = arith.constant 3 : index
    %c2_130 = arith.constant 2 : index
    %280 = memref.load %arg3[%c3_129, %c2_130] : memref<4x5xf32, #tpu.memory_space<smem>>
    %281 = vector.broadcast %280 : f32 to vector<1x1024xf32>
    %282 = arith.mulf %281, %278 : vector<1x1024xf32>
    %c2_i32_131 = arith.constant 2 : i32
    %283 = tpu.dynamic_rotate %278 by %c2_i32_131 dim 1 : vector<1x1024xf32>, i32 -> vector<1x1024xf32>
    %c-2_i32_132 = arith.constant -2 : i32
    %284 = vector.broadcast %c-2_i32_132 : i32 to vector<1x1024xi32>
    %285 = arith.addi %279, %284 : vector<1x1024xi32>
    %c0_i32_133 = arith.constant 0 : i32
    %286 = vector.broadcast %c0_i32_133 : i32 to vector<1x1024xi32>
    %287 = arith.cmpi sge, %285, %286 : vector<1x1024xi32>
    %c-2_i32_134 = arith.constant -2 : i32
    %288 = vector.broadcast %c-2_i32_134 : i32 to vector<1x1024xi32>
    %289 = arith.addi %279, %288 : vector<1x1024xi32>
    %c1024_i32 = arith.constant 1024 : i32
    %290 = vector.broadcast %c1024_i32 : i32 to vector<1x1024xi32>
    %291 = arith.cmpi slt, %289, %290 : vector<1x1024xi32>
    %292 = arith.andi %287, %291 : vector<1x1024xi1>
    %c3_135 = arith.constant 3 : index
    %c0_136 = arith.constant 0 : index
    %293 = memref.load %arg3[%c3_135, %c0_136] : memref<4x5xf32, #tpu.memory_space<smem>>
    %cst_137 = arith.constant 0.000000e+00 : f32
    %294 = vector.broadcast %cst_137 : f32 to vector<1x1024xf32>
    %295 = arith.select %292, %283, %294 : vector<1x1024xi1>, vector<1x1024xf32>
    %296 = vector.broadcast %293 : f32 to vector<1x1024xf32>
    %297 = arith.mulf %296, %295 : vector<1x1024xf32>
    %298 = arith.addf %282, %297 : vector<1x1024xf32>
    %c1_i32_138 = arith.constant 1 : i32
    %299 = tpu.dynamic_rotate %278 by %c1_i32_138 dim 1 : vector<1x1024xf32>, i32 -> vector<1x1024xf32>
    %c-1_i32_139 = arith.constant -1 : i32
    %300 = vector.broadcast %c-1_i32_139 : i32 to vector<1x1024xi32>
    %301 = arith.addi %279, %300 : vector<1x1024xi32>
    %c0_i32_140 = arith.constant 0 : i32
    %302 = vector.broadcast %c0_i32_140 : i32 to vector<1x1024xi32>
    %303 = arith.cmpi sge, %301, %302 : vector<1x1024xi32>
    %c-1_i32_141 = arith.constant -1 : i32
    %304 = vector.broadcast %c-1_i32_141 : i32 to vector<1x1024xi32>
    %305 = arith.addi %279, %304 : vector<1x1024xi32>
    %c1024_i32_142 = arith.constant 1024 : i32
    %306 = vector.broadcast %c1024_i32_142 : i32 to vector<1x1024xi32>
    %307 = arith.cmpi slt, %305, %306 : vector<1x1024xi32>
    %308 = arith.andi %303, %307 : vector<1x1024xi1>
    %c3_143 = arith.constant 3 : index
    %c1_144 = arith.constant 1 : index
    %309 = memref.load %arg3[%c3_143, %c1_144] : memref<4x5xf32, #tpu.memory_space<smem>>
    %cst_145 = arith.constant 0.000000e+00 : f32
    %310 = vector.broadcast %cst_145 : f32 to vector<1x1024xf32>
    %311 = arith.select %308, %299, %310 : vector<1x1024xi1>, vector<1x1024xf32>
    %312 = vector.broadcast %309 : f32 to vector<1x1024xf32>
    %313 = arith.mulf %312, %311 : vector<1x1024xf32>
    %314 = arith.addf %298, %313 : vector<1x1024xf32>
    %c1023_i32 = arith.constant 1023 : i32
    %315 = tpu.dynamic_rotate %278 by %c1023_i32 dim 1 : vector<1x1024xf32>, i32 -> vector<1x1024xf32>
    %c1_i32_146 = arith.constant 1 : i32
    %316 = vector.broadcast %c1_i32_146 : i32 to vector<1x1024xi32>
    %317 = arith.addi %279, %316 : vector<1x1024xi32>
    %c0_i32_147 = arith.constant 0 : i32
    %318 = vector.broadcast %c0_i32_147 : i32 to vector<1x1024xi32>
    %319 = arith.cmpi sge, %317, %318 : vector<1x1024xi32>
    %c1_i32_148 = arith.constant 1 : i32
    %320 = vector.broadcast %c1_i32_148 : i32 to vector<1x1024xi32>
    %321 = arith.addi %279, %320 : vector<1x1024xi32>
    %c1024_i32_149 = arith.constant 1024 : i32
    %322 = vector.broadcast %c1024_i32_149 : i32 to vector<1x1024xi32>
    %323 = arith.cmpi slt, %321, %322 : vector<1x1024xi32>
    %324 = arith.andi %319, %323 : vector<1x1024xi1>
    %c3_150 = arith.constant 3 : index
    %c3_151 = arith.constant 3 : index
    %325 = memref.load %arg3[%c3_150, %c3_151] : memref<4x5xf32, #tpu.memory_space<smem>>
    %cst_152 = arith.constant 0.000000e+00 : f32
    %326 = vector.broadcast %cst_152 : f32 to vector<1x1024xf32>
    %327 = arith.select %324, %315, %326 : vector<1x1024xi1>, vector<1x1024xf32>
    %328 = vector.broadcast %325 : f32 to vector<1x1024xf32>
    %329 = arith.mulf %328, %327 : vector<1x1024xf32>
    %330 = arith.addf %314, %329 : vector<1x1024xf32>
    %c1022_i32 = arith.constant 1022 : i32
    %331 = tpu.dynamic_rotate %278 by %c1022_i32 dim 1 : vector<1x1024xf32>, i32 -> vector<1x1024xf32>
    %c2_i32_153 = arith.constant 2 : i32
    %332 = vector.broadcast %c2_i32_153 : i32 to vector<1x1024xi32>
    %333 = arith.addi %279, %332 : vector<1x1024xi32>
    %c0_i32_154 = arith.constant 0 : i32
    %334 = vector.broadcast %c0_i32_154 : i32 to vector<1x1024xi32>
    %335 = arith.cmpi sge, %333, %334 : vector<1x1024xi32>
    %c2_i32_155 = arith.constant 2 : i32
    %336 = vector.broadcast %c2_i32_155 : i32 to vector<1x1024xi32>
    %337 = arith.addi %279, %336 : vector<1x1024xi32>
    %c1024_i32_156 = arith.constant 1024 : i32
    %338 = vector.broadcast %c1024_i32_156 : i32 to vector<1x1024xi32>
    %339 = arith.cmpi slt, %337, %338 : vector<1x1024xi32>
    %340 = arith.andi %335, %339 : vector<1x1024xi1>
    %c3_157 = arith.constant 3 : index
    %c4_158 = arith.constant 4 : index
    %341 = memref.load %arg3[%c3_157, %c4_158] : memref<4x5xf32, #tpu.memory_space<smem>>
    %cst_159 = arith.constant 0.000000e+00 : f32
    %342 = vector.broadcast %cst_159 : f32 to vector<1x1024xf32>
    %343 = arith.select %340, %331, %342 : vector<1x1024xi1>, vector<1x1024xf32>
    %344 = vector.broadcast %341 : f32 to vector<1x1024xf32>
    %345 = arith.mulf %344, %343 : vector<1x1024xf32>
    %346 = arith.addf %330, %345 : vector<1x1024xf32>
    %cst_160 = arith.constant 0.000000e+00 : f32
    %347 = vector.broadcast %cst_160 : f32 to vector<1x1024xf32>
    %348 = arith.subf %347, %346 : vector<1x1024xf32>
    %349 = math.exp %348 : vector<1x1024xf32>
    %cst_161 = arith.constant 1.000000e+00 : f32
    %350 = vector.broadcast %cst_161 : f32 to vector<1x1024xf32>
    %351 = arith.addf %350, %349 : vector<1x1024xf32>
    %cst_162 = arith.constant 1.000000e+00 : f32
    %352 = vector.broadcast %cst_162 : f32 to vector<1x1024xf32>
    %353 = arith.divf %352, %351 : vector<1x1024xf32>
    %354 = arith.mulf %278, %353 : vector<1x1024xf32>
    %355 = arith.index_cast %arg0 : i32 to index
    %c0_163 = arith.constant 0 : index
    %356 = memref.load %arg2[%355, %c0_163] : memref<2x1xf32, #tpu.memory_space<smem>>
    %c0_164 = arith.constant 0 : index
    %c0_165 = arith.constant 0 : index
    %357 = vector.load %arg13[%c0_164, %c0_165] : memref<1x32xf32, #tpu.memory_space<vmem>>, vector<1x32xf32>
    %358 = vector.broadcast %356 : f32 to vector<1x32xf32>
    %359 = arith.mulf %358, %357 : vector<1x32xf32>
    %c0_166 = arith.constant 0 : index
    %c0_167 = arith.constant 0 : index
    %360 = vector.load %arg14[%c0_166, %c0_167] : memref<1x32xf32, #tpu.memory_space<vmem>>, vector<1x32xf32>
    %361 = arith.addf %359, %360 : vector<1x32xf32>
    %cst_168 = arith.constant 0.000000e+00 : f32
    %362 = vector.broadcast %cst_168 : f32 to vector<1x32xf32>
    %363 = arith.maximumf %361, %362 : vector<1x32xf32>
    %364 = arith.truncf %354 : vector<1x1024xf32> to vector<1x1024xbf16>
    %c0_169 = arith.constant 0 : index
    %c0_170 = arith.constant 0 : index
    %365 = vector.load %arg15[%c0_169, %c0_170] : memref<1024x1024xbf16, #tpu.memory_space<vmem>>, vector<1024x1024xbf16>
    %cst_171 = arith.constant dense<0.000000e+00> : vector<1x1024xf32>
    %366 = tpu.matmul %364, %365, %cst_171 {dimension_numbers = #tpu.dot_dimension_numbers<[1], [0], [0], [1], [0, 0, 1, 1], [], []>} : vector<1x1024xbf16>, vector<1024x1024xbf16>, vector<1x1024xf32> -> vector<1x1024xf32>
    %367 = arith.truncf %363 : vector<1x32xf32> to vector<1x32xbf16>
    %c0_172 = arith.constant 0 : index
    %c0_173 = arith.constant 0 : index
    %368 = vector.load %arg16[%c0_172, %c0_173] : memref<32x1024xbf16, #tpu.memory_space<vmem>>, vector<32x1024xbf16>
    %cst_174 = arith.constant dense<0.000000e+00> : vector<1x1024xf32>
    %369 = tpu.matmul %367, %368, %cst_174 {dimension_numbers = #tpu.dot_dimension_numbers<[1], [0], [0], [1], [0, 0, 1, 1], [], []>} : vector<1x32xbf16>, vector<32x1024xbf16>, vector<1x1024xf32> -> vector<1x1024xf32>
    %370 = arith.addf %366, %369 : vector<1x1024xf32>
    %c0_175 = arith.constant 0 : index
    %c0_176 = arith.constant 0 : index
    %371 = vector.load %arg17[%c0_175, %c0_176] : memref<1x1024xf32, #tpu.memory_space<vmem>>, vector<1x1024xf32>
    %372 = arith.addf %370, %371 : vector<1x1024xf32>
    %cst_177 = arith.constant 0.000000e+00 : f32
    %373 = vector.broadcast %cst_177 : f32 to vector<1x1024xf32>
    %374 = arith.maximumf %372, %373 : vector<1x1024xf32>
    %375 = arith.truncf %374 : vector<1x1024xf32> to vector<1x1024xbf16>
    %c0_178 = arith.constant 0 : index
    %c0_179 = arith.constant 0 : index
    %376 = vector.load %arg18[%c0_178, %c0_179] : memref<1024x512xbf16, #tpu.memory_space<vmem>>, vector<1024x512xbf16>
    %cst_180 = arith.constant dense<0.000000e+00> : vector<1x512xf32>
    %377 = tpu.matmul %375, %376, %cst_180 {dimension_numbers = #tpu.dot_dimension_numbers<[1], [0], [0], [1], [0, 0, 1, 1], [], []>} : vector<1x1024xbf16>, vector<1024x512xbf16>, vector<1x512xf32> -> vector<1x512xf32>
    %c0_181 = arith.constant 0 : index
    %c0_182 = arith.constant 0 : index
    %378 = vector.load %arg19[%c0_181, %c0_182] : memref<1x512xf32, #tpu.memory_space<vmem>>, vector<1x512xf32>
    %379 = arith.addf %377, %378 : vector<1x512xf32>
    %cst_183 = arith.constant 0.000000e+00 : f32
    %380 = vector.broadcast %cst_183 : f32 to vector<1x512xf32>
    %381 = arith.maximumf %379, %380 : vector<1x512xf32>
    %382 = arith.truncf %381 : vector<1x512xf32> to vector<1x512xbf16>
    %c0_184 = arith.constant 0 : index
    %c0_185 = arith.constant 0 : index
    %383 = vector.load %arg20[%c0_184, %c0_185] : memref<512x256xbf16, #tpu.memory_space<vmem>>, vector<512x256xbf16>
    %cst_186 = arith.constant dense<0.000000e+00> : vector<1x256xf32>
    %384 = tpu.matmul %382, %383, %cst_186 {dimension_numbers = #tpu.dot_dimension_numbers<[1], [0], [0], [1], [0, 0, 1, 1], [], []>} : vector<1x512xbf16>, vector<512x256xbf16>, vector<1x256xf32> -> vector<1x256xf32>
    %c0_187 = arith.constant 0 : index
    %c0_188 = arith.constant 0 : index
    %385 = vector.load %arg21[%c0_187, %c0_188] : memref<1x256xf32, #tpu.memory_space<vmem>>, vector<1x256xf32>
    %386 = arith.addf %384, %385 : vector<1x256xf32>
    %c0_189 = arith.constant 0 : index
    %c0_190 = arith.constant 0 : index
    %c0_191 = arith.constant 0 : index
    %387 = vector.load %arg22[%c0_189, %c0_190, %c0_191] : memref<1x1x256xf32, #tpu.memory_space<vmem>>, vector<1x1x256xf32>
    %388 = vector.shape_cast %387 : vector<1x1x256xf32> to vector<1x256xf32>
    %389 = vector.shape_cast %386 : vector<1x256xf32> to vector<1x1x256xf32>
    tpu.vector_store %arg22[%c0_189, %c0_190, %c0_191], %389 {strides = array<i32>} : memref<1x1x256xf32, #tpu.memory_space<vmem>>, vector<1x1x256xf32>,
    return
  }
  func.func @transform_0(%arg0: i32) -> (i32, i32, i32) {
    %c0_i32 = arith.constant 0 : i32
    %c0_i32_0 = arith.constant 0 : i32
    %c0_i32_1 = arith.constant 0 : i32
    return %arg0, %c0_i32, %c0_i32_0 : i32, i32, i32
  }
  func.func @transform_1(%arg0: i32) -> (i32, i32) {
    %c0_i32 = arith.constant 0 : i32
    %c0_i32_0 = arith.constant 0 : i32
    %c0_i32_1 = arith.constant 0 : i32
    return %c0_i32, %c0_i32_0 : i32, i32
  }
  func.func @transform_2(%arg0: i32) -> (i32, i32) {
    %c0_i32 = arith.constant 0 : i32
    %c0_i32_0 = arith.constant 0 : i32
    %c0_i32_1 = arith.constant 0 : i32
    return %c0_i32, %c0_i32_0 : i32, i32
  }
  func.func @transform_3(%arg0: i32) -> (i32, i32) {
    %c0_i32 = arith.constant 0 : i32
    %c0_i32_0 = arith.constant 0 : i32
    %c0_i32_1 = arith.constant 0 : i32
    return %c0_i32, %c0_i32_0 : i32, i32
  }
  func.func @transform_4(%arg0: i32) -> (i32, i32) {
    %c0_i32 = arith.constant 0 : i32
    %c0_i32_0 = arith.constant 0 : i32
    %c0_i32_1 = arith.constant 0 : i32
    return %c0_i32, %c0_i32_0 : i32, i32
  }
  func.func @transform_5(%arg0: i32) -> (i32, i32) {
    %c0_i32 = arith.constant 0 : i32
    %c0_i32_0 = arith.constant 0 : i32
    %c0_i32_1 = arith.constant 0 : i32
    return %c0_i32, %c0_i32_0 : i32, i32
  }
  func.func @transform_6(%arg0: i32) -> (i32, i32) {
    %c0_i32 = arith.constant 0 : i32
    %c0_i32_0 = arith.constant 0 : i32
    %c0_i32_1 = arith.constant 0 : i32
    return %c0_i32, %c0_i32_0 : i32, i32
  }
  func.func @transform_7(%arg0: i32) -> (i32, i32) {
    %c0_i32 = arith.constant 0 : i32
    %c0_i32_0 = arith.constant 0 : i32
    %c0_i32_1 = arith.constant 0 : i32
    return %c0_i32, %c0_i32_0 : i32, i32
  }
  func.func @transform_8(%arg0: i32) -> (i32, i32) {
    %c0_i32 = arith.constant 0 : i32
    %c0_i32_0 = arith.constant 0 : i32
    %c0_i32_1 = arith.constant 0 : i32
    return %c0_i32, %c0_i32_0 : i32, i32
  }
  func.func @transform_9(%arg0: i32) -> (i32, i32) {
    %c0_i32 = arith.constant 0 : i32
    %c0_i32_0 = arith.constant 0 : i32
    %c0_i32_1 = arith.constant 0 : i32
    return %c0_i32, %c0_i32_0 : i32, i32
  }
  func.func @transform_10(%arg0: i32) -> (i32, i32) {
    %c0_i32 = arith.constant 0 : i32
    %c0_i32_0 = arith.constant 0 : i32
    %c0_i32_1 = arith.constant 0 : i32
    return %c0_i32, %c0_i32_0 : i32, i32
  }
  func.func @transform_11(%arg0: i32) -> (i32, i32) {
    %c0_i32 = arith.constant 0 : i32
    %c0_i32_0 = arith.constant 0 : i32
    %c0_i32_1 = arith.constant 0 : i32
    return %c0_i32, %c0_i32_0 : i32, i32
  }
  func.func @transform_12(%arg0: i32) -> (i32, i32) {
    %c0_i32 = arith.constant 0 : i32
    %c0_i32_0 = arith.constant 0 : i32
    %c0_i32_1 = arith.constant 0 : i32
    return %c0_i32, %c0_i32_0 : i32, i32
  }
  func.func @transform_13(%arg0: i32) -> (i32, i32) {
    %c0_i32 = arith.constant 0 : i32
    %c0_i32_0 = arith.constant 0 : i32
    %c0_i32_1 = arith.constant 0 : i32
    return %c0_i32, %c0_i32_0 : i32, i32
  }
  func.func @transform_14(%arg0: i32) -> (i32, i32) {
    %c0_i32 = arith.constant 0 : i32
    %c0_i32_0 = arith.constant 0 : i32
    %c0_i32_1 = arith.constant 0 : i32
    return %c0_i32, %c0_i32_0 : i32, i32
  }
  func.func @transform_15(%arg0: i32) -> (i32, i32) {
    %c0_i32 = arith.constant 0 : i32
    %c0_i32_0 = arith.constant 0 : i32
    %c0_i32_1 = arith.constant 0 : i32
    return %c0_i32, %c0_i32_0 : i32, i32
  }
  func.func @transform_16(%arg0: i32) -> (i32, i32) {
    %c0_i32 = arith.constant 0 : i32
    %c0_i32_0 = arith.constant 0 : i32
    %c0_i32_1 = arith.constant 0 : i32
    return %c0_i32, %c0_i32_0 : i32, i32
  }
  func.func @transform_17(%arg0: i32) -> (i32, i32) {
    %c0_i32 = arith.constant 0 : i32
    %c0_i32_0 = arith.constant 0 : i32
    %c0_i32_1 = arith.constant 0 : i32
    return %c0_i32, %c0_i32_0 : i32, i32
  }
  func.func @transform_18(%arg0: i32) -> (i32, i32) {
    %c0_i32 = arith.constant 0 : i32
    %c0_i32_0 = arith.constant 0 : i32
    %c0_i32_1 = arith.constant 0 : i32
    return %c0_i32, %c0_i32_0 : i32, i32
  }
  func.func @transform_19(%arg0: i32) -> (i32, i32) {
    %c0_i32 = arith.constant 0 : i32
    %c0_i32_0 = arith.constant 0 : i32
    %c0_i32_1 = arith.constant 0 : i32
    return %c0_i32, %c0_i32_0 : i32, i32
  }
  func.func @transform_20(%arg0: i32) -> (i32, i32) {
    %c0_i32 = arith.constant 0 : i32
    %c0_i32_0 = arith.constant 0 : i32
    %c0_i32_1 = arith.constant 0 : i32
    return %c0_i32, %c0_i32_0 : i32, i32
  }
  func.func @transform_21(%arg0: i32) -> (i32, i32, i32) {
    %c0_i32 = arith.constant 0 : i32
    %c0_i32_0 = arith.constant 0 : i32
    %c0_i32_1 = arith.constant 0 : i32
    return %arg0, %c0_i32, %c0_i32_0 : i32, i32, i32
  }
}

</mosaic_0001>

<llo_original>
// kernel: a_call__.1
$region0: #{a_call__.1}
  #allocation0 [shape = 'u32[]', space=smem, size = 0x4, offset = 0x4, fixed_abs, tag = 'smem constant byte address 0x4 - core index']
  #allocation1 [shape = 'u32[144,128]{1,0:T(1,128)}', space=vmem, size = 0x12000, scoped, tag = 'internal scratch']
  %s0 = inlined_call_operand.vmem [shape: f32[2,256,128], index: 0, kind: input, shape index: {}]
  %s1 = inlined_call_operand.vmem [shape: f32[2,1], index: 1, kind: input, shape index: {}]
  %s2 = inlined_call_operand.vmem [shape: f32[4,5], index: 2, kind: input, shape index: {}]
  %s3 = inlined_call_operand.vmem [shape: f32[64,256], index: 3, kind: input, shape index: {}]
  %s4 = inlined_call_operand.vmem [shape: f32[16,64], index: 4, kind: input, shape index: {}]
  %s5 = inlined_call_operand.vmem [shape: f32[4,16], index: 5, kind: input, shape index: {}]
  %s6 = inlined_call_operand.vmem [shape: bf16[128,256], index: 6, kind: input, shape index: {}]
  %s7 = inlined_call_operand.vmem [shape: f32[1,256], index: 7, kind: input, shape index: {}]
  %s8 = inlined_call_operand.vmem [shape: bf16[256,512], index: 8, kind: input, shape index: {}]
  %s9 = inlined_call_operand.vmem [shape: f32[1,512], index: 9, kind: input, shape index: {}]
  %s10 = inlined_call_operand.vmem [shape: bf16[512,1024], index: 10, kind: input, shape index: {}]
  %s11 = inlined_call_operand.vmem [shape: f32[1,1024], index: 11, kind: input, shape index: {}]
  %s12 = inlined_call_operand.vmem [shape: f32[1,32], index: 12, kind: input, shape index: {}]
  %s13 = inlined_call_operand.vmem [shape: f32[1,32], index: 13, kind: input, shape index: {}]
  %s14 = inlined_call_operand.vmem [shape: bf16[1024,1024], index: 14, kind: input, shape index: {}]
  %s15 = inlined_call_operand.vmem [shape: bf16[32,1024], index: 15, kind: input, shape index: {}]
  %s16 = inlined_call_operand.vmem [shape: f32[1,1024], index: 16, kind: input, shape index: {}]
  %s17 = inlined_call_operand.vmem [shape: bf16[1024,512], index: 17, kind: input, shape index: {}]
  %s18 = inlined_call_operand.vmem [shape: f32[1,512], index: 18, kind: input, shape index: {}]
  %s19 = inlined_call_operand.vmem [shape: bf16[512,256], index: 19, kind: input, shape index: {}]
  %s20 = inlined_call_operand.vmem [shape: f32[1,256], index: 20, kind: input, shape index: {}]
  %s21 = inlined_call_operand.vmem [shape: f32[2,1,256], index: 21, kind: output, shape index: {}]
  %s22 = sld [smem:[#allocation0]]
  $region125: #{a_call__.1} parent=0
    _
  %s24 = ssub.s32 1, %s22
  %s25 = scalar_select 0, %s24, %s22
  $region1: #{a_call__.1} parent=0
    #allocation2 [shape = 'u8[1024]{0}', space=smem, size = 0x400, scoped, tag = 'input window, operand 1, single buffered']
    #allocation3 [shape = 's32[2]{0}', space=sflag, size = 0x8, scoped, tag = 'scoped memory for a_call__.1']
    #allocation4 [shape = 'u8[2048]{0}', space=smem, size = 0x800, scoped, tag = 'input window, operand 2, single buffered']
    #allocation5 [shape = 's32[1]{0}', space=sflag, size = 0x4, scoped, tag = 'scoped memory for a_call__.1']
    %26 = vsyncpa [#allocation3], 0
    %27 = vsyncpa [#allocation5], 0
    loop: start=0, step=1, limit=4
    $region2: #{a_call__.1} parent=1 // loop_pre_header
      _
    $region3: #{a_call__.1} parent=1 // loop_header
      %s29 = sphi 0, %s33
      %p30 = scmp.ge.s32.totalorder %s29, 4
      %s39 = sphi 0, %s41
      %s42 = sphi 0, %s39
      %s43 = sphi 0, %s42
      %s59 = sphi 0, %s43
      %s63 = sphi 0, %s63
      %s65 = sphi 0, %s63
      %s66 = sphi 0, %s65
      %s80 = sphi 0, %s66
      %s84 = sphi 0, %s84
      %s86 = sphi 0, %s84
      %s87 = sphi 0, %s86
      %s101 = sphi 0, %s87
      %s105 = sphi 0, %s105
      %s107 = sphi 0, %s105
      %s108 = sphi 0, %s107
      %s122 = sphi 0, %s108
      %s126 = sphi 0, %s126
      %s128 = sphi 0, %s126
      %s129 = sphi 0, %s128
      %s143 = sphi 0, %s129
      %s147 = sphi 0, %s147
      %s149 = sphi 0, %s147
      %s150 = sphi 0, %s149
      %s164 = sphi 0, %s150
      %s168 = sphi 0, %s168
      %s170 = sphi 0, %s168
      %s171 = sphi 0, %s170
      %s185 = sphi 0, %s171
      %s189 = sphi 0, %s189
      %s191 = sphi 0, %s189
      %s192 = sphi 0, %s191
      %s206 = sphi 0, %s192
      %s210 = sphi 0, %s210
      %s212 = sphi 0, %s210
      %s213 = sphi 0, %s212
      %s227 = sphi 0, %s213
      %s231 = sphi 0, %s231
      %s233 = sphi 0, %s231
      %s234 = sphi 0, %s233
      %s248 = sphi 0, %s234
      %s252 = sphi 0, %s252
      %s254 = sphi 0, %s252
      %s255 = sphi 0, %s254
      %s269 = sphi 0, %s255
      %s273 = sphi 0, %s273
      %s275 = sphi 0, %s273
      %s276 = sphi 0, %s275
      %s290 = sphi 0, %s276
      %s294 = sphi 0, %s294
      %s296 = sphi 0, %s294
      %s297 = sphi 0, %s296
      %s311 = sphi 0, %s297
      %s315 = sphi 0, %s315
      %s317 = sphi 0, %s315
      %s318 = sphi 0, %s317
      %s332 = sphi 0, %s318
      %s336 = sphi 0, %s336
      %s338 = sphi 0, %s336
      %s339 = sphi 0, %s338
      %s353 = sphi 0, %s339
      %s357 = sphi 0, %s357
      %s359 = sphi 0, %s357
      %s360 = sphi 0, %s359
      %s374 = sphi 0, %s360
      %s378 = sphi 0, %s378
      %s380 = sphi 0, %s378
      %s381 = sphi 0, %s380
      %s395 = sphi 0, %s381
      %s399 = sphi 0, %s399
      %s401 = sphi 0, %s399
      %s402 = sphi 0, %s401
      %s416 = sphi 0, %s402
      %s420 = sphi 0, %s420
      %s422 = sphi 0, %s420
      %s423 = sphi 0, %s422
      %s437 = sphi 0, %s423
      %s441 = sphi 0, %s441
      %s443 = sphi 0, %s441
      %s444 = sphi 0, %s443
      %s458 = sphi 0, %s444
      %s462 = sphi 0, %s462
      %s464 = sphi 0, %s462
      %s465 = sphi 0, %s464
      %s479 = sphi 0, %s465
      %s485 = sphi 0, %s487
      %s488 = sphi 0, %s485
      %s489 = sphi 0, %s488
      %s505 = sphi 0, %s489
    $region4: #{a_call__.1} parent=1 // loop_header_branch
      %32 = sbr.rel (%p30) target = $region8
    $region5: #{a_call__.1} parent=1 // loop_body
      %s34 = ssub.s32 %s29, 1
      %s35 = ssub.s32 %s29, 2
      %s36 = sadd.s32 %s29, 1
      %s37 = ssub.s32 %s29, %s36
      %p38 = scmp.eq.s32.totalorder %s37, 0
      %s40 = sadd.s32 %s39, 1
      %s41 = scalar_select %p38, %s39, %s40
      %p44 = pneg %p38
      %p45 = scmp.eq.s32.totalorder %s29, 1
      %p46 = por %p44, %p45
      %p47 = scmp.ne.s32.totalorder %s39, %s42
      %p48 = scmp.eq.s32.totalorder %s29, 0
      %p49 = por %p47, %p48
      %p50 = scmp.ne.s32.totalorder %s39, %s42
      %p51 = scmp.eq.s32.totalorder %s34, 1
      %p52 = por %p50, %p51
      %p53 = scmp.ne.s32.totalorder %s42, %s43
      %p54 = scmp.eq.s32.totalorder %s34, 0
      %p55 = por %p53, %p54
      %p56 = scmp.ne.s32.totalorder %s42, %s43
      %p57 = scmp.eq.s32.totalorder %s35, 1
      %p58 = por %p56, %p57
      %p60 = scmp.ne.s32.totalorder %s43, %s59
      %p61 = scmp.eq.s32.totalorder %s35, 0
      %p62 = por %p60, %p61
      %s64 = sadd.s32 %s63, 1
      %p67 = scmp.eq.s32.totalorder %s29, 1
      %p68 = scmp.ne.s32.totalorder %s63, %s65
      %p69 = scmp.eq.s32.totalorder %s29, 0
      %p70 = por %p68, %p69
      %p71 = scmp.ne.s32.totalorder %s63, %s65
      %p72 = scmp.eq.s32.totalorder %s34, 1
      %p73 = por %p71, %p72
      %p74 = scmp.ne.s32.totalorder %s65, %s66
      %p75 = scmp.eq.s32.totalorder %s34, 0
      %p76 = por %p74, %p75
      %p77 = scmp.ne.s32.totalorder %s65, %s66
      %p78 = scmp.eq.s32.totalorder %s35, 1
      %p79 = por %p77, %p78
      %p81 = scmp.ne.s32.totalorder %s66, %s80
      %p82 = scmp.eq.s32.totalorder %s35, 0
      %p83 = por %p81, %p82
      %s85 = sadd.s32 %s84, 1
      %p88 = scmp.eq.s32.totalorder %s29, 1
      %p89 = scmp.ne.s32.totalorder %s84, %s86
      %p90 = scmp.eq.s32.totalorder %s29, 0
      %p91 = por %p89, %p90
      %p92 = scmp.ne.s32.totalorder %s84, %s86
      %p93 = scmp.eq.s32.totalorder %s34, 1
      %p94 = por %p92, %p93
      %p95 = scmp.ne.s32.totalorder %s86, %s87
      %p96 = scmp.eq.s32.totalorder %s34, 0
      %p97 = por %p95, %p96
      %p98 = scmp.ne.s32.totalorder %s86, %s87
      %p99 = scmp.eq.s32.totalorder %s35, 1
      %p100 = por %p98, %p99
      %p102 = scmp.ne.s32.totalorder %s87, %s101
      %p103 = scmp.eq.s32.totalorder %s35, 0
      %p104 = por %p102, %p103
      %s106 = sadd.s32 %s105, 1
      %p109 = scmp.eq.s32.totalorder %s29, 1
      %p110 = scmp.ne.s32.totalorder %s105, %s107
      %p111 = scmp.eq.s32.totalorder %s29, 0
      %p112 = por %p110, %p111
      %p113 = scmp.ne.s32.totalorder %s105, %s107
      %p114 = scmp.eq.s32.totalorder %s34, 1
      %p115 = por %p113, %p114
      %p116 = scmp.ne.s32.totalorder %s107, %s108
      %p117 = scmp.eq.s32.totalorder %s34, 0
      %p118 = por %p116, %p117
      %p119 = scmp.ne.s32.totalorder %s107, %s108
      %p120 = scmp.eq.s32.totalorder %s35, 1
      %p121 = por %p119, %p120
      %p123 = scmp.ne.s32.totalorder %s108, %s122
      %p124 = scmp.eq.s32.totalorder %s35, 0
      %p125 = por %p123, %p124
      %s127 = sadd.s32 %s126, 1
      %p130 = scmp.eq.s32.totalorder %s29, 1
      %p131 = scmp.ne.s32.totalorder %s126, %s128
      %p132 = scmp.eq.s32.totalorder %s29, 0
      %p133 = por %p131, %p132
      %p134 = scmp.ne.s32.totalorder %s126, %s128
      %p135 = scmp.eq.s32.totalorder %s34, 1
      %p136 = por %p134, %p135
      %p137 = scmp.ne.s32.totalorder %s128, %s129
      %p138 = scmp.eq.s32.totalorder %s34, 0
      %p139 = por %p137, %p138
      %p140 = scmp.ne.s32.totalorder %s128, %s129
      %p141 = scmp.eq.s32.totalorder %s35, 1
      %p142 = por %p140, %p141
      %p144 = scmp.ne.s32.totalorder %s129, %s143
      %p145 = scmp.eq.s32.totalorder %s35, 0
      %p146 = por %p144, %p145
      %s148 = sadd.s32 %s147, 1
      %p151 = scmp.eq.s32.totalorder %s29, 1
      %p152 = scmp.ne.s32.totalorder %s147, %s149
      %p153 = scmp.eq.s32.totalorder %s29, 0
      %p154 = por %p152, %p153
      %p155 = scmp.ne.s32.totalorder %s147, %s149
      %p156 = scmp.eq.s32.totalorder %s34, 1
      %p157 = por %p155, %p156
      %p158 = scmp.ne.s32.totalorder %s149, %s150
      %p159 = scmp.eq.s32.totalorder %s34, 0
      %p160 = por %p158, %p159
      %p161 = scmp.ne.s32.totalorder %s149, %s150
      %p162 = scmp.eq.s32.totalorder %s35, 1
      %p163 = por %p161, %p162
      %p165 = scmp.ne.s32.totalorder %s150, %s164
      %p166 = scmp.eq.s32.totalorder %s35, 0
      %p167 = por %p165, %p166
      %s169 = sadd.s32 %s168, 1
      %p172 = scmp.eq.s32.totalorder %s29, 1
      %p173 = scmp.ne.s32.totalorder %s168, %s170
      %p174 = scmp.eq.s32.totalorder %s29, 0
      %p175 = por %p173, %p174
      %p176 = scmp.ne.s32.totalorder %s168, %s170
      %p177 = scmp.eq.s32.totalorder %s34, 1
      %p178 = por %p176, %p177
      %p179 = scmp.ne.s32.totalorder %s170, %s171
      %p180 = scmp.eq.s32.totalorder %s34, 0
      %p181 = por %p179, %p180
      %p182 = scmp.ne.s32.totalorder %s170, %s171
      %p183 = scmp.eq.s32.totalorder %s35, 1
      %p184 = por %p182, %p183
      %p186 = scmp.ne.s32.totalorder %s171, %s185
      %p187 = scmp.eq.s32.totalorder %s35, 0
      %p188 = por %p186, %p187
      %s190 = sadd.s32 %s189, 1
      %p193 = scmp.eq.s32.totalorder %s29, 1
      %p194 = scmp.ne.s32.totalorder %s189, %s191
      %p195 = scmp.eq.s32.totalorder %s29, 0
      %p196 = por %p194, %p195
      %p197 = scmp.ne.s32.totalorder %s189, %s191
      %p198 = scmp.eq.s32.totalorder %s34, 1
      %p199 = por %p197, %p198
      %p200 = scmp.ne.s32.totalorder %s191, %s192
      %p201 = scmp.eq.s32.totalorder %s34, 0
      %p202 = por %p200, %p201
      %p203 = scmp.ne.s32.totalorder %s191, %s192
      %p204 = scmp.eq.s32.totalorder %s35, 1
      %p205 = por %p203, %p204
      %p207 = scmp.ne.s32.totalorder %s192, %s206
      %p208 = scmp.eq.s32.totalorder %s35, 0
      %p209 = por %p207, %p208
      %s211 = sadd.s32 %s210, 1
      %p214 = scmp.eq.s32.totalorder %s29, 1
      %p215 = scmp.ne.s32.totalorder %s210, %s212
      %p216 = scmp.eq.s32.totalorder %s29, 0
      %p217 = por %p215, %p216
      %p218 = scmp.ne.s32.totalorder %s210, %s212
      %p219 = scmp.eq.s32.totalorder %s34, 1
      %p220 = por %p218, %p219
      %p221 = scmp.ne.s32.totalorder %s212, %s213
      %p222 = scmp.eq.s32.totalorder %s34, 0
      %p223 = por %p221, %p222
      %p224 = scmp.ne.s32.totalorder %s212, %s213
      %p225 = scmp.eq.s32.totalorder %s35, 1
      %p226 = por %p224, %p225
      %p228 = scmp.ne.s32.totalorder %s213, %s227
      %p229 = scmp.eq.s32.totalorder %s35, 0
      %p230 = por %p228, %p229
      %s232 = sadd.s32 %s231, 1
      %p235 = scmp.eq.s32.totalorder %s29, 1
      %p236 = scmp.ne.s32.totalorder %s231, %s233
      %p237 = scmp.eq.s32.totalorder %s29, 0
      %p238 = por %p236, %p237
      %p239 = scmp.ne.s32.totalorder %s231, %s233
      %p240 = scmp.eq.s32.totalorder %s34, 1
      %p241 = por %p239, %p240
      %p242 = scmp.ne.s32.totalorder %s233, %s234
      %p243 = scmp.eq.s32.totalorder %s34, 0
      %p244 = por %p242, %p243
      %p245 = scmp.ne.s32.totalorder %s233, %s234
      %p246 = scmp.eq.s32.totalorder %s35, 1
      %p247 = por %p245, %p246
      %p249 = scmp.ne.s32.totalorder %s234, %s248
      %p250 = scmp.eq.s32.totalorder %s35, 0
      %p251 = por %p249, %p250
      %s253 = sadd.s32 %s252, 1
      %p256 = scmp.eq.s32.totalorder %s29, 1
      %p257 = scmp.ne.s32.totalorder %s252, %s254
      %p258 = scmp.eq.s32.totalorder %s29, 0
      %p259 = por %p257, %p258
      %p260 = scmp.ne.s32.totalorder %s252, %s254
      %p261 = scmp.eq.s32.totalorder %s34, 1
      %p262 = por %p260, %p261
      %p263 = scmp.ne.s32.totalorder %s254, %s255
      %p264 = scmp.eq.s32.totalorder %s34, 0
      %p265 = por %p263, %p264
      %p266 = scmp.ne.s32.totalorder %s254, %s255
      %p267 = scmp.eq.s32.totalorder %s35, 1
      %p268 = por %p266, %p267
      %p270 = scmp.ne.s32.totalorder %s255, %s269
      %p271 = scmp.eq.s32.totalorder %s35, 0
      %p272 = por %p270, %p271
      %s274 = sadd.s32 %s273, 1
      %p277 = scmp.eq.s32.totalorder %s29, 1
      %p278 = scmp.ne.s32.totalorder %s273, %s275
      %p279 = scmp.eq.s32.totalorder %s29, 0
      %p280 = por %p278, %p279
      %p281 = scmp.ne.s32.totalorder %s273, %s275
      %p282 = scmp.eq.s32.totalorder %s34, 1
      %p283 = por %p281, %p282
      %p284 = scmp.ne.s32.totalorder %s275, %s276
      %p285 = scmp.eq.s32.totalorder %s34, 0
      %p286 = por %p284, %p285
      %p287 = scmp.ne.s32.totalorder %s275, %s276
      %p288 = scmp.eq.s32.totalorder %s35, 1
      %p289 = por %p287, %p288
      %p291 = scmp.ne.s32.totalorder %s276, %s290
      %p292 = scmp.eq.s32.totalorder %s35, 0
      %p293 = por %p291, %p292
      %s295 = sadd.s32 %s294, 1
      %p298 = scmp.eq.s32.totalorder %s29, 1
      %p299 = scmp.ne.s32.totalorder %s294, %s296
      %p300 = scmp.eq.s32.totalorder %s29, 0
      %p301 = por %p299, %p300
      %p302 = scmp.ne.s32.totalorder %s294, %s296
      %p303 = scmp.eq.s32.totalorder %s34, 1
      %p304 = por %p302, %p303
      %p305 = scmp.ne.s32.totalorder %s296, %s297
      %p306 = scmp.eq.s32.totalorder %s34, 0
      %p307 = por %p305, %p306
      %p308 = scmp.ne.s32.totalorder %s296, %s297
      %p309 = scmp.eq.s32.totalorder %s35, 1
      %p310 = por %p308, %p309
      %p312 = scmp.ne.s32.totalorder %s297, %s311
      %p313 = scmp.eq.s32.totalorder %s35, 0
      %p314 = por %p312, %p313
      %s316 = sadd.s32 %s315, 1
      %p319 = scmp.eq.s32.totalorder %s29, 1
      %p320 = scmp.ne.s32.totalorder %s315, %s317
      %p321 = scmp.eq.s32.totalorder %s29, 0
      %p322 = por %p320, %p321
      %p323 = scmp.ne.s32.totalorder %s315, %s317
      %p324 = scmp.eq.s32.totalorder %s34, 1
      %p325 = por %p323, %p324
      %p326 = scmp.ne.s32.totalorder %s317, %s318
      %p327 = scmp.eq.s32.totalorder %s34, 0
      %p328 = por %p326, %p327
      %p329 = scmp.ne.s32.totalorder %s317, %s318
      %p330 = scmp.eq.s32.totalorder %s35, 1
      %p331 = por %p329, %p330
      %p333 = scmp.ne.s32.totalorder %s318, %s332
      %p334 = scmp.eq.s32.totalorder %s35, 0
      %p335 = por %p333, %p334
      %s337 = sadd.s32 %s336, 1
      %p340 = scmp.eq.s32.totalorder %s29, 1
      %p341 = scmp.ne.s32.totalorder %s336, %s338
      %p342 = scmp.eq.s32.totalorder %s29, 0
      %p343 = por %p341, %p342
      %p344 = scmp.ne.s32.totalorder %s336, %s338
      %p345 = scmp.eq.s32.totalorder %s34, 1
      %p346 = por %p344, %p345
      %p347 = scmp.ne.s32.totalorder %s338, %s339
      %p348 = scmp.eq.s32.totalorder %s34, 0
      %p349 = por %p347, %p348
      %p350 = scmp.ne.s32.totalorder %s338, %s339
      %p351 = scmp.eq.s32.totalorder %s35, 1
      %p352 = por %p350, %p351
      %p354 = scmp.ne.s32.totalorder %s339, %s353
      %p355 = scmp.eq.s32.totalorder %s35, 0
      %p356 = por %p354, %p355
      %s358 = sadd.s32 %s357, 1
      %p361 = scmp.eq.s32.totalorder %s29, 1
      %p362 = scmp.ne.s32.totalorder %s357, %s359
      %p363 = scmp.eq.s32.totalorder %s29, 0
      %p364 = por %p362, %p363
      %p365 = scmp.ne.s32.totalorder %s357, %s359
      %p366 = scmp.eq.s32.totalorder %s34, 1
      %p367 = por %p365, %p366
      %p368 = scmp.ne.s32.totalorder %s359, %s360
      %p369 = scmp.eq.s32.totalorder %s34, 0
      %p370 = por %p368, %p369
      %p371 = scmp.ne.s32.totalorder %s359, %s360
      %p372 = scmp.eq.s32.totalorder %s35, 1
      %p373 = por %p371, %p372
      %p375 = scmp.ne.s32.totalorder %s360, %s374
      %p376 = scmp.eq.s32.totalorder %s35, 0
      %p377 = por %p375, %p376
      %s379 = sadd.s32 %s378, 1
      %p382 = scmp.eq.s32.totalorder %s29, 1
      %p383 = scmp.ne.s32.totalorder %s378, %s380
      %p384 = scmp.eq.s32.totalorder %s29, 0
      %p385 = por %p383, %p384
      %p386 = scmp.ne.s32.totalorder %s378, %s380
      %p387 = scmp.eq.s32.totalorder %s34, 1
      %p388 = por %p386, %p387
      %p389 = scmp.ne.s32.totalorder %s380, %s381
      %p390 = scmp.eq.s32.totalorder %s34, 0
      %p391 = por %p389, %p390
      %p392 = scmp.ne.s32.totalorder %s380, %s381
      %p393 = scmp.eq.s32.totalorder %s35, 1
      %p394 = por %p392, %p393
      %p396 = scmp.ne.s32.totalorder %s381, %s395
      %p397 = scmp.eq.s32.totalorder %s35, 0
      %p398 = por %p396, %p397
      %s400 = sadd.s32 %s399, 1
      %p403 = scmp.eq.s32.totalorder %s29, 1
      %p404 = scmp.ne.s32.totalorder %s399, %s401
      %p405 = scmp.eq.s32.totalorder %s29, 0
      %p406 = por %p404, %p405
      %p407 = scmp.ne.s32.totalorder %s399, %s401
      %p408 = scmp.eq.s32.totalorder %s34, 1
      %p409 = por %p407, %p408
      %p410 = scmp.ne.s32.totalorder %s401, %s402
      %p411 = scmp.eq.s32.totalorder %s34, 0
      %p412 = por %p410, %p411
      %p413 = scmp.ne.s32.totalorder %s401, %s402
      %p414 = scmp.eq.s32.totalorder %s35, 1
      %p415 = por %p413, %p414
      %p417 = scmp.ne.s32.totalorder %s402, %s416
      %p418 = scmp.eq.s32.totalorder %s35, 0
      %p419 = por %p417, %p418
      %s421 = sadd.s32 %s420, 1
      %p424 = scmp.eq.s32.totalorder %s29, 1
      %p425 = scmp.ne.s32.totalorder %s420, %s422
      %p426 = scmp.eq.s32.totalorder %s29, 0
      %p427 = por %p425, %p426
      %p428 = scmp.ne.s32.totalorder %s420, %s422
      %p429 = scmp.eq.s32.totalorder %s34, 1
      %p430 = por %p428, %p429
      %p431 = scmp.ne.s32.totalorder %s422, %s423
      %p432 = scmp.eq.s32.totalorder %s34, 0
      %p433 = por %p431, %p432
      %p434 = scmp.ne.s32.totalorder %s422, %s423
      %p435 = scmp.eq.s32.totalorder %s35, 1
      %p436 = por %p434, %p435
      %p438 = scmp.ne.s32.totalorder %s423, %s437
      %p439 = scmp.eq.s32.totalorder %s35, 0
      %p440 = por %p438, %p439
      %s442 = sadd.s32 %s441, 1
      %p445 = scmp.eq.s32.totalorder %s29, 1
      %p446 = scmp.ne.s32.totalorder %s441, %s443
      %p447 = scmp.eq.s32.totalorder %s29, 0
      %p448 = por %p446, %p447
      %p449 = scmp.ne.s32.totalorder %s441, %s443
      %p450 = scmp.eq.s32.totalorder %s34, 1
      %p451 = por %p449, %p450
      %p452 = scmp.ne.s32.totalorder %s443, %s444
      %p453 = scmp.eq.s32.totalorder %s34, 0
      %p454 = por %p452, %p453
      %p455 = scmp.ne.s32.totalorder %s443, %s444
      %p456 = scmp.eq.s32.totalorder %s35, 1
      %p457 = por %p455, %p456
      %p459 = scmp.ne.s32.totalorder %s444, %s458
      %p460 = scmp.eq.s32.totalorder %s35, 0
      %p461 = por %p459, %p460
      %s463 = sadd.s32 %s462, 1
      %p466 = scmp.eq.s32.totalorder %s29, 1
      %p467 = scmp.ne.s32.totalorder %s462, %s464
      %p468 = scmp.eq.s32.totalorder %s29, 0
      %p469 = por %p467, %p468
      %p470 = scmp.ne.s32.totalorder %s462, %s464
      %p471 = scmp.eq.s32.totalorder %s34, 1
      %p472 = por %p470, %p471
      %p473 = scmp.ne.s32.totalorder %s464, %s465
      %p474 = scmp.eq.s32.totalorder %s34, 0
      %p475 = por %p473, %p474
      %p476 = scmp.ne.s32.totalorder %s464, %s465
      %p477 = scmp.eq.s32.totalorder %s35, 1
      %p478 = por %p476, %p477
      %p480 = scmp.ne.s32.totalorder %s465, %s479
      %p481 = scmp.eq.s32.totalorder %s35, 0
      %p482 = por %p480, %p481
      %s483 = ssub.s32 %s29, %s36
      %p484 = scmp.eq.s32.totalorder %s483, 0
      %s486 = sadd.s32 %s485, 1
      %s487 = scalar_select %p484, %s485, %s486
      %p490 = pneg %p484
      %p491 = scmp.eq.s32.totalorder %s29, 1
      %p492 = por %p490, %p491
      %p493 = scmp.ne.s32.totalorder %s485, %s488
      %p494 = scmp.eq.s32.totalorder %s29, 0
      %p495 = por %p493, %p494
      %p496 = scmp.ne.s32.totalorder %s485, %s488
      %p497 = scmp.eq.s32.totalorder %s34, 1
      %p498 = por %p496, %p497
      %p499 = scmp.ne.s32.totalorder %s488, %s489
      %p500 = scmp.eq.s32.totalorder %s34, 0
      %p501 = por %p499, %p500
      %p502 = scmp.ne.s32.totalorder %s488, %s489
      %p503 = scmp.eq.s32.totalorder %s35, 1
      %p504 = por %p502, %p503
      %p506 = scmp.ne.s32.totalorder %s489, %s505
      %p507 = scmp.eq.s32.totalorder %s35, 0
      %p508 = por %p506, %p507
      %p509 = scmp.le.s32.totalorder 1, %s29
      %p510 = scmp.lt.s32.totalorder %s29, 3
      %p511 = pnand %p509, %p510
      %p512 = pneg %p511
      // Predicated region
      $region9: #{a_call__.1} parent=5 // pred_check
        _
      $region10: #{a_call__.1} parent=5 // pred_check_branch
        %514 = sbr.rel (%p511) target = $region12
      $region11: #{a_call__.1} parent=5 // pred_region
        %s515 = ssub.s32 %s29, 1
        // Predicated region
        $region13: #{a_call__.1} parent=11 // pred_check
          %p516 = pneg %p76
        $region14: #{a_call__.1} parent=11 // pred_check_branch
          %518 = sbr.rel (%p516) target = $region16
        $region15: #{a_call__.1} parent=11 // pred_region
          %s520 = ssub.s32 32, 32
          %521 = vsyncadd [#allocation3], %s520
          %s523 = sshll.u32 %s1, 4
          %s524 = int_to_ptr.vmem [resolvable:$true] %s523
          %526 = dma.vmem_to_smem %s524, 32, [#allocation2], [#allocation3]
        $region16: #{a_call__.1} parent=11 // pred_fallthru
          _
        // Predicated region
        $region17: #{a_call__.1} parent=11 // pred_check
          %p527 = pneg %p97
        $region18: #{a_call__.1} parent=11 // pred_check_branch
          %529 = sbr.rel (%p527) target = $region20
        $region19: #{a_call__.1} parent=11 // pred_region
          %s531 = ssub.s32 64, 64
          %532 = vsyncadd [#allocation5], %s531
          %s534 = sshll.u32 %s2, 4
          %s535 = int_to_ptr.vmem [resolvable:$true] %s534
          %537 = dma.vmem_to_smem %s535, 64, [#allocation4], [#allocation5]
        $region20: #{a_call__.1} parent=11 // pred_fallthru
          _
        // Predicated region
        $region21: #{a_call__.1} parent=11 // pred_check
          %p538 = pneg %p118
        $region22: #{a_call__.1} parent=11 // pred_check_branch
          %540 = sbr.rel (%p538) target = $region24
        $region23: #{a_call__.1} parent=11 // pred_region
          _
        $region24: #{a_call__.1} parent=11 // pred_fallthru
          _
        // Predicated region
        $region25: #{a_call__.1} parent=11 // pred_check
          %p541 = pneg %p139
        $region26: #{a_call__.1} parent=11 // pred_check_branch
          %543 = sbr.rel (%p541) target = $region28
        $region27: #{a_call__.1} parent=11 // pred_region
          _
        $region28: #{a_call__.1} parent=11 // pred_fallthru
          _
        // Predicated region
        $region29: #{a_call__.1} parent=11 // pred_check
          %p544 = pneg %p160
        $region30: #{a_call__.1} parent=11 // pred_check_branch
          %546 = sbr.rel (%p544) target = $region32
        $region31: #{a_call__.1} parent=11 // pred_region
          _
        $region32: #{a_call__.1} parent=11 // pred_fallthru
          _
        // Predicated region
        $region33: #{a_call__.1} parent=11 // pred_check
          %p547 = pneg %p181
        $region34: #{a_call__.1} parent=11 // pred_check_branch
          %549 = sbr.rel (%p547) target = $region36
        $region35: #{a_call__.1} parent=11 // pred_region
          _
        $region36: #{a_call__.1} parent=11 // pred_fallthru
          _
        // Predicated region
        $region37: #{a_call__.1} parent=11 // pred_check
          %p550 = pneg %p202
        $region38: #{a_call__.1} parent=11 // pred_check_branch
          %552 = sbr.rel (%p550) target = $region40
        $region39: #{a_call__.1} parent=11 // pred_region
          _
        $region40: #{a_call__.1} parent=11 // pred_fallthru
          _
        // Predicated region
        $region41: #{a_call__.1} parent=11 // pred_check
          %p553 = pneg %p223
        $region42: #{a_call__.1} parent=11 // pred_check_branch
          %555 = sbr.rel (%p553) target = $region44
        $region43: #{a_call__.1} parent=11 // pred_region
          _
        $region44: #{a_call__.1} parent=11 // pred_fallthru
          _
        // Predicated region
        $region45: #{a_call__.1} parent=11 // pred_check
          %p556 = pneg %p244
        $region46: #{a_call__.1} parent=11 // pred_check_branch
          %558 = sbr.rel (%p556) target = $region48
        $region47: #{a_call__.1} parent=11 // pred_region
          _
        $region48: #{a_call__.1} parent=11 // pred_fallthru
          _
        // Predicated region
        $region49: #{a_call__.1} parent=11 // pred_check
          %p559 = pneg %p265
        $region50: #{a_call__.1} parent=11 // pred_check_branch
          %561 = sbr.rel (%p559) target = $region52
        $region51: #{a_call__.1} parent=11 // pred_region
          _
        $region52: #{a_call__.1} parent=11 // pred_fallthru
          _
        // Predicated region
        $region53: #{a_call__.1} parent=11 // pred_check
          %p562 = pneg %p286
        $region54: #{a_call__.1} parent=11 // pred_check_branch
          %564 = sbr.rel (%p562) target = $region56
        $region55: #{a_call__.1} parent=11 // pred_region
          _
        $region56: #{a_call__.1} parent=11 // pred_fallthru
          _
        // Predicated region
        $region57: #{a_call__.1} parent=11 // pred_check
          %p565 = pneg %p307
        $region58: #{a_call__.1} parent=11 // pred_check_branch
          %567 = sbr.rel (%p565) target = $region60
        $region59: #{a_call__.1} parent=11 // pred_region
          _
        $region60: #{a_call__.1} parent=11 // pred_fallthru
          _
        // Predicated region
        $region61: #{a_call__.1} parent=11 // pred_check
          %p568 = pneg %p328
        $region62: #{a_call__.1} parent=11 // pred_check_branch
          %570 = sbr.rel (%p568) target = $region64
        $region63: #{a_call__.1} parent=11 // pred_region
          _
        $region64: #{a_call__.1} parent=11 // pred_fallthru
          _
        // Predicated region
        $region65: #{a_call__.1} parent=11 // pred_check
          %p571 = pneg %p349
        $region66: #{a_call__.1} parent=11 // pred_check_branch
          %573 = sbr.rel (%p571) target = $region68
        $region67: #{a_call__.1} parent=11 // pred_region
          _
        $region68: #{a_call__.1} parent=11 // pred_fallthru
          _
        // Predicated region
        $region69: #{a_call__.1} parent=11 // pred_check
          %p574 = pneg %p370
        $region70: #{a_call__.1} parent=11 // pred_check_branch
          %576 = sbr.rel (%p574) target = $region72
        $region71: #{a_call__.1} parent=11 // pred_region
          _
        $region72: #{a_call__.1} parent=11 // pred_fallthru
          _
        // Predicated region
        $region73: #{a_call__.1} parent=11 // pred_check
          %p577 = pneg %p391
        $region74: #{a_call__.1} parent=11 // pred_check_branch
          %579 = sbr.rel (%p577) target = $region76
        $region75: #{a_call__.1} parent=11 // pred_region
          _
        $region76: #{a_call__.1} parent=11 // pred_fallthru
          _
        // Predicated region
        $region77: #{a_call__.1} parent=11 // pred_check
          %p580 = pneg %p412
        $region78: #{a_call__.1} parent=11 // pred_check_branch
          %582 = sbr.rel (%p580) target = $region80
        $region79: #{a_call__.1} parent=11 // pred_region
          _
        $region80: #{a_call__.1} parent=11 // pred_fallthru
          _
        // Predicated region
        $region81: #{a_call__.1} parent=11 // pred_check
          %p583 = pneg %p433
        $region82: #{a_call__.1} parent=11 // pred_check_branch
          %585 = sbr.rel (%p583) target = $region84
        $region83: #{a_call__.1} parent=11 // pred_region
          _
        $region84: #{a_call__.1} parent=11 // pred_fallthru
          _
        // Predicated region
        $region85: #{a_call__.1} parent=11 // pred_check
          %p586 = pneg %p454
        $region86: #{a_call__.1} parent=11 // pred_check_branch
          %588 = sbr.rel (%p586) target = $region88
        $region87: #{a_call__.1} parent=11 // pred_region
          _
        $region88: #{a_call__.1} parent=11 // pred_fallthru
          _
        // Predicated region
        $region89: #{a_call__.1} parent=11 // pred_check
          %p589 = pneg %p475
        $region90: #{a_call__.1} parent=11 // pred_check_branch
          %591 = sbr.rel (%p589) target = $region92
        $region91: #{a_call__.1} parent=11 // pred_region
          _
        $region92: #{a_call__.1} parent=11 // pred_fallthru
          _
      $region12: #{a_call__.1} parent=5 // pred_fallthru
        _
      %p592 = scmp.lt.s32.totalorder %s29, 2
      // Predicated region
      $region93: #{a_call__.1} parent=5 // pred_check
        %p593 = pneg %p592
      $region94: #{a_call__.1} parent=5 // pred_check_branch
        %595 = sbr.rel (%p593) target = $region96
      $region95: #{a_call__.1} parent=5 // pred_region
        // Predicated region
        $region97: #{a_call__.1} parent=95 // pred_check
          %p596 = pneg %p49
        $region98: #{a_call__.1} parent=95 // pred_check_branch
          %598 = sbr.rel (%p596) target = $region100
        $region99: #{a_call__.1} parent=95 // pred_region
          %p599 = scmp.lt.s32.totalorder %s29, 1
          %s600 = scalar_select %p599, %s29, 1
          %s601 = smul.addr %s600, 32
          %s602 = smul.addr %s601, 8
          %s603 = scalar_lea.vmem %s0, %s602
        $region100: #{a_call__.1} parent=95 // pred_fallthru
          _
      $region96: #{a_call__.1} parent=5 // pred_fallthru
        _
      %p604 = scmp.le.s32.totalorder 1, %s29
      %p605 = scmp.lt.s32.totalorder %s29, 3
      %p606 = pnand %p604, %p605
      %p607 = pneg %p606
      // Predicated region
      $region101: #{a_call__.1} parent=5 // pred_check
        _
      $region102: #{a_call__.1} parent=5 // pred_check_branch
        %609 = sbr.rel (%p606) target = $region104
      $region103: #{a_call__.1} parent=5 // pred_region
        %s610 = ssub.s32 %s29, 1
        // Predicated region
        $region105: #{a_call__.1} parent=103 // pred_check
          %p611 = pneg %p76
        $region106: #{a_call__.1} parent=103 // pred_check_branch
          %613 = sbr.rel (%p611) target = $region108
        $region107: #{a_call__.1} parent=103 // pred_region
          %614 = dma.done [#allocation3], 32
        $region108: #{a_call__.1} parent=103 // pred_fallthru
          _
        // Predicated region
        $region109: #{a_call__.1} parent=103 // pred_check
          %p615 = pneg %p97
        $region110: #{a_call__.1} parent=103 // pred_check_branch
          %617 = sbr.rel (%p615) target = $region112
        $region111: #{a_call__.1} parent=103 // pred_region
          %618 = dma.done [#allocation5], 64
        $region112: #{a_call__.1} parent=103 // pred_fallthru
          _
        %619 = sfence
        %p620 = scmp.lt.s32.totalorder %s34, 1
        %s621 = scalar_select %p620, %s34, 1
        %s622 = smul.addr %s621, 32
        %s623 = smul.addr %s622, 8
        %s624 = scalar_lea.vmem %s0, %s623
        %p625 = pneg %p55
        %p626 = pneg %p52
        %p627 = pneg %p76
        %p628 = pneg %p73
        %p629 = pneg %p97
        %p630 = pneg %p94
        %p631 = pneg %p118
        %p632 = pneg %p115
        %p633 = pneg %p139
        %p634 = pneg %p136
        %p635 = pneg %p160
        %p636 = pneg %p157
        %p637 = pneg %p181
        %p638 = pneg %p178
        %p639 = pneg %p202
        %p640 = pneg %p199
        %p641 = pneg %p223
        %p642 = pneg %p220
        %p643 = pneg %p244
        %p644 = pneg %p241
        %p645 = pneg %p265
        %p646 = pneg %p262
        %p647 = pneg %p286
        %p648 = pneg %p283
        %p649 = pneg %p307
        %p650 = pneg %p304
        %p651 = pneg %p328
        %p652 = pneg %p325
        %p653 = pneg %p349
        %p654 = pneg %p346
        %p655 = pneg %p370
        %p656 = pneg %p367
        %p657 = pneg %p391
        %p658 = pneg %p388
        %p659 = pneg %p412
        %p660 = pneg %p409
        %p661 = pneg %p433
        %p662 = pneg %p430
        %p663 = pneg %p454
        %p664 = pneg %p451
        %p665 = pneg %p475
        %p666 = pneg %p472
        %p667 = pneg %p501
        %p668 = pneg %p498
        %p669 = scmp.lt.s32.totalorder %s34, 1
        %s670 = scalar_select %p669, %s34, 1
        %s671 = smul.addr %s670, 2
        %s672 = scalar_lea.vmem %s21, %s671
        %p673 = scmp.lt.s32.totalorder %s34, 1
        %s674 = scalar_select %p673, %s34, 1
        %s675 = smul.addr %s674, 32
        %s676 = smul.addr %s675, 8
        %s677 = scalar_lea.vmem %s0, %s676
        %p678 = scmp.lt.s32.totalorder %s34, 1
        %s679 = scalar_select %p678, %s34, 1
        %s680 = smul.addr %s679, 2
        %s681 = scalar_lea.vmem %s21, %s680
        %v683 = vld [vmem:[%s677] sm:$0xff]
        %v684 = vld [vmem:[%s677 + $0x8] sm:$0xff]
        %v685 = vld [vmem:[%s677 + $0x10] sm:$0xff]
        %v686 = vld [vmem:[%s677 + $0x18] sm:$0xff]
        %v687 = vld [vmem:[%s677 + $0x20] sm:$0xff]
        %v688 = vld [vmem:[%s677 + $0x28] sm:$0xff]
        %v689 = vld [vmem:[%s677 + $0x30] sm:$0xff]
        %v690 = vld [vmem:[%s677 + $0x38] sm:$0xff]
        %v691 = vld [vmem:[%s677 + $0x40] sm:$0xff]
        %v692 = vld [vmem:[%s677 + $0x48] sm:$0xff]
        %v693 = vld [vmem:[%s677 + $0x50] sm:$0xff]
        %v694 = vld [vmem:[%s677 + $0x58] sm:$0xff]
        %v695 = vld [vmem:[%s677 + $0x60] sm:$0xff]
        %v696 = vld [vmem:[%s677 + $0x68] sm:$0xff]
        %v697 = vld [vmem:[%s677 + $0x70] sm:$0xff]
        %v698 = vld [vmem:[%s677 + $0x78] sm:$0xff]
        %v699 = vld [vmem:[%s677 + $0x80] sm:$0xff]
        %v700 = vld [vmem:[%s677 + $0x88] sm:$0xff]
        %v701 = vld [vmem:[%s677 + $0x90] sm:$0xff]
        %v702 = vld [vmem:[%s677 + $0x98] sm:$0xff]
        %v703 = vld [vmem:[%s677 + $0xa0] sm:$0xff]
        %v704 = vld [vmem:[%s677 + $0xa8] sm:$0xff]
        %v705 = vld [vmem:[%s677 + $0xb0] sm:$0xff]
        %v706 = vld [vmem:[%s677 + $0xb8] sm:$0xff]
        %v707 = vld [vmem:[%s677 + $0xc0] sm:$0xff]
        %v708 = vld [vmem:[%s677 + $0xc8] sm:$0xff]
        %v709 = vld [vmem:[%s677 + $0xd0] sm:$0xff]
        %v710 = vld [vmem:[%s677 + $0xd8] sm:$0xff]
        %v711 = vld [vmem:[%s677 + $0xe0] sm:$0xff]
        %v712 = vld [vmem:[%s677 + $0xe8] sm:$0xff]
        %v713 = vld [vmem:[%s677 + $0xf0] sm:$0xff]
        %v714 = vld [vmem:[%s677 + $0xf8] sm:$0xff]
        %v715 = vadd.f32 %v683, %v684
        %v716 = vadd.f32 %v715, %v685
        %v717 = vadd.f32 %v716, %v686
        %v718 = vadd.f32 %v717, %v687
        %v719 = vadd.f32 %v718, %v688
        %v720 = vadd.f32 %v719, %v689
        %v721 = vadd.f32 %v720, %v690
        %v722 = vadd.f32 %v721, %v691
        %v723 = vadd.f32 %v722, %v692
        %v724 = vadd.f32 %v723, %v693
        %v725 = vadd.f32 %v724, %v694
        %v726 = vadd.f32 %v725, %v695
        %v727 = vadd.f32 %v726, %v696
        %v728 = vadd.f32 %v727, %v697
        %v729 = vadd.f32 %v728, %v698
        %v730 = vadd.f32 %v729, %v699
        %v731 = vadd.f32 %v730, %v700
        %v732 = vadd.f32 %v731, %v701
        %v733 = vadd.f32 %v732, %v702
        %v734 = vadd.f32 %v733, %v703
        %v735 = vadd.f32 %v734, %v704
        %v736 = vadd.f32 %v735, %v705
        %v737 = vadd.f32 %v736, %v706
        %v738 = vadd.f32 %v737, %v707
        %v739 = vadd.f32 %v738, %v708
        %v740 = vadd.f32 %v739, %v709
        %v741 = vadd.f32 %v740, %v710
        %v742 = vadd.f32 %v741, %v711
        %v743 = vadd.f32 %v742, %v712
        %v744 = vadd.f32 %v743, %v713
        %v745 = vadd.f32 %v744, %v714
        %v746 = vrot.slane %v745, 4
        %v747 = vadd.f32 %v745, %v746
        %v748 = vrot.slane %v747, 2
        %v749 = vadd.f32 %v747, %v748
        %v750 = vrot.slane %v749, 1
        %v751 = vadd.f32 %v749, %v750
        %v752 = vrcp.pop 256.0
        %v753 = vmul.f32 %v751, %v752
        %v754 = vlaneseq
        %v755 = vand.u32 %v754, 127
        %s756 = sld [smem:[#allocation4 + $0x2]]
        %v757 = vstv %s756
        %v758 = vmul.f32 %v757, %v753
        %759 = vrot.lane.b32.xlu0 %v753, 2
        %v760 = vpop.permute.xlu0 %759
        %v761 = vadd.s32 %v755, 4294967294
        %vm762 = vcmp.ge.s32.totalorder %v761, 0
        %vm763 = vcmp.lt.s32.totalorder %v761, 128
        %vm764 = vmand %vm762, %vm763
        %s765 = sld [smem:[#allocation4]]
        %v766 = vsel %vm764, %v760, 0.0
        %v767 = vstv %s765
        %v768 = vmul.f32 %v767, %v766
        %v769 = vadd.f32 %v758, %v768
        %770 = vrot.lane.b32.xlu0 %v753, 1
        %v771 = vpop.permute.xlu0 %770
        %v772 = vadd.s32 %v755, 4294967295
        %vm773 = vcmp.ge.s32.totalorder %v772, 0
        %vm774 = vcmp.lt.s32.totalorder %v772, 128
        %vm775 = vmand %vm773, %vm774
        %s776 = sld [smem:[#allocation4 + $0x1]]
        %v777 = vsel %vm775, %v771, 0.0
        %v778 = vstv %s776
        %v779 = vmul.f32 %v778, %v777
        %v780 = vadd.f32 %v769, %v779
        %781 = vrot.lane.b32.xlu0 %v753, 127
        %v782 = vpop.permute.xlu0 %781
        %v783 = vadd.s32 %v755, 1
        %vm784 = vcmp.ge.s32.totalorder %v783, 0
        %vm785 = vcmp.lt.s32.totalorder %v783, 128
        %vm786 = vmand %vm784, %vm785
        %s787 = sld [smem:[#allocation4 + $0x3]]
        %v788 = vsel %vm786, %v782, 0.0
        %v789 = vstv %s787
        %v790 = vmul.f32 %v789, %v788
        %v791 = vadd.f32 %v780, %v790
        %792 = vrot.lane.b32.xlu0 %v753, 126
        %v793 = vpop.permute.xlu0 %792
        %v794 = vadd.s32 %v755, 2
        %vm795 = vcmp.ge.s32.totalorder %v794, 0
        %vm796 = vcmp.lt.s32.totalorder %v794, 128
        %vm797 = vmand %vm795, %vm796
        %s798 = sld [smem:[#allocation4 + $0x4]]
        %v799 = vsel %vm797, %v793, 0.0
        %v800 = vstv %s798
        %v801 = vmul.f32 %v800, %v799
        %v802 = vadd.f32 %v791, %v801
        %v803 = vsub.f32 0.0, %v802
        %v804 = vmul.f32 %v803, 1.442695
        %v805 = vpow.pop %v804
        %v806 = vadd.f32 %v805, 1.0
        %v807 = vrcp.pop %v806
        %v808 = vmul.f32 1.0, %v807
        %v809 = vlaneseq
        %v810 = vshrl.u32 %v809, 7
        %v811 = vsub.s32 0, %v810
        %v812 = vrot.slane %v808, %v811
        %v813 = vmul.f32 %v683, %v812
        %v814 = vmul.f32 %v684, %v812
        %v815 = vmul.f32 %v685, %v812
        %v816 = vmul.f32 %v686, %v812
        %v817 = vmul.f32 %v687, %v812
        %v818 = vmul.f32 %v688, %v812
        %v819 = vmul.f32 %v689, %v812
        %v820 = vmul.f32 %v690, %v812
        %v821 = vmul.f32 %v691, %v812
        %v822 = vmul.f32 %v692, %v812
        %v823 = vmul.f32 %v693, %v812
        %v824 = vmul.f32 %v694, %v812
        %v825 = vmul.f32 %v695, %v812
        %v826 = vmul.f32 %v696, %v812
        %v827 = vmul.f32 %v697, %v812
        %v828 = vmul.f32 %v698, %v812
        %v829 = vmul.f32 %v699, %v812
        %v830 = vmul.f32 %v700, %v812
        %v831 = vmul.f32 %v701, %v812
        %v832 = vmul.f32 %v702, %v812
        %v833 = vmul.f32 %v703, %v812
        %v834 = vmul.f32 %v704, %v812
        %v835 = vmul.f32 %v705, %v812
        %v836 = vmul.f32 %v706, %v812
        %v837 = vmul.f32 %v707, %v812
        %v838 = vmul.f32 %v708, %v812
        %v839 = vmul.f32 %v709, %v812
        %v840 = vmul.f32 %v710, %v812
        %v841 = vmul.f32 %v711, %v812
        %v842 = vmul.f32 %v712, %v812
        %v843 = vmul.f32 %v713, %v812
        %v844 = vmul.f32 %v714, %v812
        %v845 = vld [vmem:[%s3] sm:$0xff]
        %v846 = vld [vmem:[%s3 + $0x8] sm:$0xff]
        %v847 = vld [vmem:[%s3 + $0x10] sm:$0xff]
        %v848 = vld [vmem:[%s3 + $0x18] sm:$0xff]
        %v849 = vld [vmem:[%s3 + $0x20] sm:$0xff]
        %v850 = vld [vmem:[%s3 + $0x28] sm:$0xff]
        %v851 = vld [vmem:[%s3 + $0x30] sm:$0xff]
        %v852 = vld [vmem:[%s3 + $0x38] sm:$0xff]
        %v853 = vld [vmem:[%s3 + $0x40] sm:$0xff]
        %v854 = vld [vmem:[%s3 + $0x48] sm:$0xff]
        %v855 = vld [vmem:[%s3 + $0x50] sm:$0xff]
        %v856 = vld [vmem:[%s3 + $0x58] sm:$0xff]
        %v857 = vld [vmem:[%s3 + $0x60] sm:$0xff]
        %v858 = vld [vmem:[%s3 + $0x68] sm:$0xff]
        %v859 = vld [vmem:[%s3 + $0x70] sm:$0xff]
        %v860 = vld [vmem:[%s3 + $0x78] sm:$0xff]
        %861 = vmatprep.subr.mxu0 0.0
        %862 = vmatpush1.msra.mxu0 %v813
        %863 = vmatprep.subr.mxu0 0.0
        %864 = vmatpush1.msra.mxu0 %v814
        %865 = vmatprep.subr.mxu0 0.0
        %866 = vmatpush1.msra.mxu0 %v815
        %867 = vmatprep.subr.mxu0 0.0
        %868 = vmatpush1.msra.mxu0 %v816
        %869 = vmatprep.subr.mxu0 0.0
        %870 = vmatpush1.msra.mxu0 %v817
        %871 = vmatprep.subr.mxu0 0.0
        %872 = vmatpush1.msra.mxu0 %v818
        %873 = vmatprep.subr.mxu0 0.0
        %874 = vmatpush1.msra.mxu0 %v819
        %875 = vmatprep.subr.mxu0 0.0
        %876 = vmatpush1.msra.mxu0 %v820
        %877 = vmatprep.subr.mxu0 0.0
        %878 = vmatpush1.msra.mxu0 %v821
        %879 = vmatprep.subr.mxu0 0.0
        %880 = vmatpush1.msra.mxu0 %v822
        %881 = vmatprep.subr.mxu0 0.0
        %882 = vmatpush1.msra.mxu0 %v823
        %883 = vmatprep.subr.mxu0 0.0
        %884 = vmatpush1.msra.mxu0 %v824
        %885 = vmatprep.subr.mxu0 0.0
        %886 = vmatpush1.msra.mxu0 %v825
        %887 = vmatprep.subr.mxu0 0.0
        %888 = vmatpush1.msra.mxu0 %v826
        %889 = vmatprep.subr.mxu0 0.0
        %890 = vmatpush1.msra.mxu0 %v827
        %891 = vmatprep.subr.mxu0 0.0
        %892 = vmatpush1.msra.mxu0 %v828
        %893 = vmatprep.subr.mxu0 0.0
        %894 = vmatpush1.msra.mxu0 %v829
        %895 = vmatprep.subr.mxu0 0.0
        %896 = vmatpush1.msra.mxu0 %v830
        %897 = vmatprep.subr.mxu0 0.0
        %898 = vmatpush1.msra.mxu0 %v831
        %899 = vmatprep.subr.mxu0 0.0
        %900 = vmatpush1.msra.mxu0 %v832
        %901 = vmatprep.subr.mxu0 0.0
        %902 = vmatpush1.msra.mxu0 %v833
        %903 = vmatprep.subr.mxu0 0.0
        %904 = vmatpush1.msra.mxu0 %v834
        %905 = vmatprep.subr.mxu0 0.0
        %906 = vmatpush1.msra.mxu0 %v835
        %907 = vmatprep.subr.mxu0 0.0
        %908 = vmatpush1.msra.mxu0 %v836
        %909 = vmatprep.subr.mxu0 0.0
        %910 = vmatpush1.msra.mxu0 %v837
        %911 = vmatprep.subr.mxu0 0.0
        %912 = vmatpush1.msra.mxu0 %v838
        %913 = vmatprep.subr.mxu0 0.0
        %914 = vmatpush1.msra.mxu0 %v839
        %915 = vmatprep.subr.mxu0 0.0
        %916 = vmatpush1.msra.mxu0 %v840
        %917 = vmatprep.subr.mxu0 0.0
        %918 = vmatpush1.msra.mxu0 %v841
        %919 = vmatprep.subr.mxu0 0.0
        %920 = vmatpush1.msra.mxu0 %v842
        %921 = vmatprep.subr.mxu0 0.0
        %922 = vmatpush1.msra.mxu0 %v843
        %923 = vmatprep.subr.mxu0 0.0
        %924 = vmatpush1.msra.mxu0 %v844
        %925 = vmatprep.mubr.f32.mxu0 %v846
        %926 = vmatmul.mubr.f32.gmra.mrb[0].mxu0 %v845
        %v927 = vpop.f32.mrb[0].mxu0
        %v928 = vadd.f32 0.0, %v927
        %v929 = vpop.f32.mrb[0].mxu0
        %930 = vmatprep.mubr.f32.mxu0 %v848
        %931 = vmatmul.mubr.f32.gmra.mrb[0].mxu0 %v847
        %v932 = vpop.f32.mrb[0].mxu0
        %v933 = vadd.f32 0.0, %v932
        %v934 = vpop.f32.mrb[0].mxu0
        %935 = vmatprep.mubr.f32.mxu0 %v850
        %936 = vmatmul.mubr.f32.gmra.mrb[0].mxu0 %v849
        %v937 = vpop.f32.mrb[0].mxu0
        %v938 = vadd.f32 0.0, %v937
        %v939 = vpop.f32.mrb[0].mxu0
        %940 = vmatprep.mubr.f32.mxu0 %v852
        %941 = vmatmul.mubr.f32.gmra.mrb[0].mxu0 %v851
        %v942 = vpop.f32.mrb[0].mxu0
        %v943 = vadd.f32 0.0, %v942
        %v944 = vpop.f32.mrb[0].mxu0
        %945 = vmatprep.mubr.f32.mxu0 %v854
        %946 = vmatmul.mubr.f32.gmra.mrb[0].mxu0 %v853
        %v947 = vpop.f32.mrb[0].mxu0
        %v948 = vadd.f32 0.0, %v947
        %v949 = vpop.f32.mrb[0].mxu0
        %950 = vmatprep.mubr.f32.mxu0 %v856
        %951 = vmatmul.mubr.f32.gmra.mrb[0].mxu0 %v855
        %v952 = vpop.f32.mrb[0].mxu0
        %v953 = vadd.f32 0.0, %v952
        %v954 = vpop.f32.mrb[0].mxu0
        %955 = vmatprep.mubr.f32.mxu0 %v858
        %956 = vmatmul.mubr.f32.gmra.mrb[0].mxu0 %v857
        %v957 = vpop.f32.mrb[0].mxu0
        %v958 = vadd.f32 0.0, %v957
        %v959 = vpop.f32.mrb[0].mxu0
        %960 = vmatprep.mubr.f32.mxu0 %v860
        %961 = vmatmul.mubr.f32.gmra.mrb[0].mxu0 %v859
        %v962 = vpop.f32.mrb[0].mxu0
        %v963 = vadd.f32 0.0, %v962
        %v964 = vpop.f32.mrb[0].mxu0
        %965 = vdwg.mxu0
        %v966 = vpack.c.bf16 %v933, %v928
        %v967 = vpack.c.bf16 %v943, %v938
        %v968 = vpack.c.bf16 %v953, %v948
        %v969 = vpack.c.bf16 %v963, %v958
        %v970 = vld [vmem:[%s6] sm:$0xff]
        %v971 = vld [vmem:[%s6 + $0x8] sm:$0xff]
        %v972 = vld [vmem:[%s6 + $0x10] sm:$0xff]
        %v973 = vld [vmem:[%s6 + $0x18] sm:$0xff]
        %v974 = vld [vmem:[%s6 + $0x20] sm:$0xff]
        %v975 = vld [vmem:[%s6 + $0x28] sm:$0xff]
        %v976 = vld [vmem:[%s6 + $0x30] sm:$0xff]
        %v977 = vld [vmem:[%s6 + $0x38] sm:$0xff]
        %v978 = vld [vmem:[%s6 + $0x40] sm:$0xff]
        %v979 = vld [vmem:[%s6 + $0x48] sm:$0xff]
        %v980 = vld [vmem:[%s6 + $0x50] sm:$0xff]
        %v981 = vld [vmem:[%s6 + $0x58] sm:$0xff]
        %v982 = vld [vmem:[%s6 + $0x60] sm:$0xff]
        %v983 = vld [vmem:[%s6 + $0x68] sm:$0xff]
        %v984 = vld [vmem:[%s6 + $0x70] sm:$0xff]
        %v985 = vld [vmem:[%s6 + $0x78] sm:$0xff]
        %v986 = vld [vmem:[%s7] sm:$0x3]
        %v988 = vlaneseq
        %v989 = vshrl.u32 %v988, 7
        %v990 = vsub.s32 0, %v989
        %v991 = vrot.slane %v986, %v990
        %v992 = vlaneseq
        %v993 = vshrl.u32 %v992, 7
        %v994 = vsub.s32 1, %v993
        %v995 = vrot.slane %v986, %v994
        %v1014 = vunpack.c.l.b16 %v970
        %v1015 = vunpack.c.h.b16 %v970
        %v1016 = vunpack.c.l.b16 %v971
        %v1017 = vunpack.c.h.b16 %v971
        %v1018 = vunpack.c.l.b16 %v972
        %v1019 = vunpack.c.h.b16 %v972
        %v1020 = vunpack.c.l.b16 %v973
        %v1021 = vunpack.c.h.b16 %v973
        %v1022 = vunpack.c.l.b16 %v974
        %v1023 = vunpack.c.h.b16 %v974
        %v1024 = vunpack.c.l.b16 %v975
        %v1025 = vunpack.c.h.b16 %v975
        %v1026 = vunpack.c.l.b16 %v976
        %v1027 = vunpack.c.h.b16 %v976
        %v1028 = vunpack.c.l.b16 %v977
        %v1029 = vunpack.c.h.b16 %v977
        %v1030 = vunpack.c.l.b16 %v978
        %v1031 = vunpack.c.h.b16 %v978
        %v1032 = vunpack.c.l.b16 %v979
        %v1033 = vunpack.c.h.b16 %v979
        %v1034 = vunpack.c.l.b16 %v980
        %v1035 = vunpack.c.h.b16 %v980
        %v1036 = vunpack.c.l.b16 %v981
        %v1037 = vunpack.c.h.b16 %v981
        %v1038 = vunpack.c.l.b16 %v982
        %v1039 = vunpack.c.h.b16 %v982
        %v1040 = vunpack.c.l.b16 %v983
        %v1041 = vunpack.c.h.b16 %v983
        %v1042 = vunpack.c.l.b16 %v984
        %v1043 = vunpack.c.h.b16 %v984
        %v1044 = vunpack.c.l.b16 %v985
        %v1045 = vunpack.c.h.b16 %v985
        %v1046 = vpack.c.b16 %v1016, %v1014
        %v1047 = vpack.c.b16 %v1017, %v1015
        %v1048 = vpack.c.b16 %v1020, %v1018
        %v1049 = vpack.c.b16 %v1021, %v1019
        %v1050 = vpack.c.b16 %v1024, %v1022
        %v1051 = vpack.c.b16 %v1025, %v1023
        %v1052 = vpack.c.b16 %v1028, %v1026
        %v1053 = vpack.c.b16 %v1029, %v1027
        %v1054 = vpack.c.b16 %v1032, %v1030
        %v1055 = vpack.c.b16 %v1033, %v1031
        %v1056 = vpack.c.b16 %v1036, %v1034
        %v1057 = vpack.c.b16 %v1037, %v1035
        %v1058 = vpack.c.b16 %v1040, %v1038
        %v1059 = vpack.c.b16 %v1041, %v1039
        %v1060 = vpack.c.b16 %v1044, %v1042
        %v1061 = vpack.c.b16 %v1045, %v1043
        %1078 = vmatprep.subr.bf16.mxu0 %v1047
        %1079 = vmatpush1.bf16.msra.mxu0 %v1046
        %1080 = vmatprep.subr.bf16.mxu0 %v1049
        %1081 = vmatpush1.bf16.msra.mxu0 %v1048
        %1082 = vmatprep.subr.bf16.mxu0 %v1051
        %1083 = vmatpush1.bf16.msra.mxu0 %v1050
        %1084 = vmatprep.subr.bf16.mxu0 %v1053
        %1085 = vmatpush1.bf16.msra.mxu0 %v1052
        %1086 = vmatprep.subr.bf16.mxu0 %v1055
        %1087 = vmatpush1.bf16.msra.mxu0 %v1054
        %1088 = vmatprep.subr.bf16.mxu0 %v1057
        %1089 = vmatpush1.bf16.msra.mxu0 %v1056
        %1090 = vmatprep.subr.bf16.mxu0 %v1059
        %1091 = vmatpush1.bf16.msra.mxu0 %v1058
        %1092 = vmatprep.subr.bf16.mxu0 %v1061
        %1093 = vmatpush1.bf16.msra.mxu0 %v1060
        %1094 = vmatprep.subr.bf16.mxu0 0
        %1095 = vmatpush1.bf16.msra.mxu0 0
        %1096 = vmatprep.subr.bf16.mxu0 0
        %1097 = vmatpush1.bf16.msra.mxu0 0
        %1098 = vmatprep.subr.bf16.mxu0 0
        %1099 = vmatpush1.bf16.msra.mxu0 0
        %1100 = vmatprep.subr.bf16.mxu0 0
        %1101 = vmatpush1.bf16.msra.mxu0 0
        %1102 = vmatprep.subr.bf16.mxu0 0
        %1103 = vmatpush1.bf16.msra.mxu0 0
        %1104 = vmatprep.subr.bf16.mxu0 0
        %1105 = vmatpush1.bf16.msra.mxu0 0
        %1106 = vmatprep.subr.bf16.mxu0 0
        %1107 = vmatpush1.bf16.msra.mxu0 0
        %1108 = vmatprep.subr.bf16.mxu0 0
        %1109 = vmatpush1.bf16.msra.mxu0 0
        %1110 = vmatprep.mubr.bf16.mxu0 0
        %1111 = vmatmul.mubr.bf16.gmra.mrb[0].mxu0 %v966
        %v1112 = vpop.f32.mrb[0].mxu0
        %v1113 = vadd.f32 %v991, %v1112
        %v1114 = vpop.f32.mrb[0].mxu0
        %v1115 = vadd.f32 %v995, %v1114
        %v1116 = vpop.f32.mrb[0].mxu0
        %v1117 = vadd.f32 %v991, %v1116
        %v1118 = vpop.f32.mrb[0].mxu0
        %v1119 = vadd.f32 %v995, %v1118
        %1120 = vmatprep.mubr.bf16.mxu0 0
        %1121 = vmatmul.mubr.bf16.gmra.mrb[0].mxu0 %v967
        %v1122 = vpop.f32.mrb[0].mxu0
        %v1123 = vadd.f32 %v991, %v1122
        %v1124 = vpop.f32.mrb[0].mxu0
        %v1125 = vadd.f32 %v995, %v1124
        %v1126 = vpop.f32.mrb[0].mxu0
        %v1127 = vadd.f32 %v991, %v1126
        %v1128 = vpop.f32.mrb[0].mxu0
        %v1129 = vadd.f32 %v995, %v1128
        %1130 = vmatprep.mubr.bf16.mxu0 0
        %1131 = vmatmul.mubr.bf16.gmra.mrb[0].mxu0 %v968
        %v1132 = vpop.f32.mrb[0].mxu0
        %v1133 = vadd.f32 %v991, %v1132
        %v1134 = vpop.f32.mrb[0].mxu0
        %v1135 = vadd.f32 %v995, %v1134
        %v1136 = vpop.f32.mrb[0].mxu0
        %v1137 = vadd.f32 %v991, %v1136
        %v1138 = vpop.f32.mrb[0].mxu0
        %v1139 = vadd.f32 %v995, %v1138
        %1140 = vmatprep.mubr.bf16.mxu0 0
        %1141 = vmatmul.mubr.bf16.gmra.mrb[0].mxu0 %v969
        %v1142 = vpop.f32.mrb[0].mxu0
        %v1143 = vadd.f32 %v991, %v1142
        %v1144 = vpop.f32.mrb[0].mxu0
        %v1145 = vadd.f32 %v995, %v1144
        %v1146 = vpop.f32.mrb[0].mxu0
        %v1147 = vadd.f32 %v991, %v1146
        %v1148 = vpop.f32.mrb[0].mxu0
        %v1149 = vadd.f32 %v995, %v1148
        %1150 = vdwg.mxu0
        %v1151 = vmax.f32 %v1113, 0.0
        %v1152 = vmax.f32 %v1115, 0.0
        %v1153 = vmax.f32 %v1117, 0.0
        %v1154 = vmax.f32 %v1119, 0.0
        %v1155 = vmax.f32 %v1123, 0.0
        %v1156 = vmax.f32 %v1125, 0.0
        %v1157 = vmax.f32 %v1127, 0.0
        %v1158 = vmax.f32 %v1129, 0.0
        %v1159 = vmax.f32 %v1133, 0.0
        %v1160 = vmax.f32 %v1135, 0.0
        %v1161 = vmax.f32 %v1137, 0.0
        %v1162 = vmax.f32 %v1139, 0.0
        %v1163 = vmax.f32 %v1143, 0.0
        %v1164 = vmax.f32 %v1145, 0.0
        %v1165 = vmax.f32 %v1147, 0.0
        %v1166 = vmax.f32 %v1149, 0.0
        %v1167 = vadd.f32 %v1151, %v1153
        %v1168 = vadd.f32 %v1167, %v1155
        %v1169 = vadd.f32 %v1168, %v1157
        %v1170 = vadd.f32 %v1169, %v1159
        %v1171 = vadd.f32 %v1170, %v1161
        %v1172 = vadd.f32 %v1171, %v1163
        %v1173 = vadd.f32 %v1172, %v1165
        %v1174 = vrot.slane %v1173, 4
        %v1175 = vadd.f32 %v1173, %v1174
        %v1176 = vrot.slane %v1175, 2
        %v1177 = vadd.f32 %v1175, %v1176
        %v1178 = vrot.slane %v1177, 1
        %v1179 = vadd.f32 %v1177, %v1178
        %v1180 = vadd.f32 %v1152, %v1154
        %v1181 = vadd.f32 %v1180, %v1156
        %v1182 = vadd.f32 %v1181, %v1158
        %v1183 = vadd.f32 %v1182, %v1160
        %v1184 = vadd.f32 %v1183, %v1162
        %v1185 = vadd.f32 %v1184, %v1164
        %v1186 = vadd.f32 %v1185, %v1166
        %v1187 = vrot.slane %v1186, 4
        %v1188 = vadd.f32 %v1186, %v1187
        %v1189 = vrot.slane %v1188, 2
        %v1190 = vadd.f32 %v1188, %v1189
        %v1191 = vrot.slane %v1190, 1
        %v1192 = vadd.f32 %v1190, %v1191
        %v1193 = vrcp.pop 64.0
        %v1194 = vmul.f32 %v1179, %v1193
        %v1195 = vmul.f32 %v1192, %v1193
        %v1196 = vadd.s32 %v755, 128
        %s1197 = sld [smem:[#allocation4 + $0x82]]
        %v1198 = vstv %s1197
        %v1199 = vmul.f32 %v1198, %v1194
        %v1200 = vmul.f32 %v1198, %v1195
        %1201 = vrot.lane.b32.xlu0 %v1194, 2
        %v1202 = vpop.permute.xlu0 %1201
        %1203 = vrot.lane.b32.xlu0 %v1195, 2
        %v1204 = vpop.permute.xlu0 %1203
        %vm1205 = vcmp.lt.s32.totalorder %v755, 2
        %v1206 = vsel %vm1205, %v1202, %v1204
        %v1207 = vsel %vm1205, %v1204, %v1202
        %v1208 = vadd.s32 %v1196, 4294967294
        %vm1209 = vcmp.ge.s32.totalorder %v1208, 0
        %vm1210 = vcmp.lt.s32.totalorder %v761, 256
        %vm1211 = vcmp.lt.s32.totalorder %v1208, 256
        %vm1212 = vmand %vm762, %vm1210
        %vm1213 = vmand %vm1209, %vm1211
        %s1214 = sld [smem:[#allocation4 + $0x80]]
        %v1215 = vsel %vm1212, %v1207, 0.0
        %v1216 = vsel %vm1213, %v1206, 0.0
        %v1217 = vstv %s1214
        %v1218 = vmul.f32 %v1217, %v1215
        %v1219 = vmul.f32 %v1217, %v1216
        %v1220 = vadd.f32 %v1199, %v1218
        %v1221 = vadd.f32 %v1200, %v1219
        %1222 = vrot.lane.b32.xlu0 %v1194, 1
        %v1223 = vpop.permute.xlu0 %1222
        %1224 = vrot.lane.b32.xlu0 %v1195, 1
        %v1225 = vpop.permute.xlu0 %1224
        %vm1226 = vcmp.lt.s32.totalorder %v755, 1
        %v1227 = vsel %vm1226, %v1223, %v1225
        %v1228 = vsel %vm1226, %v1225, %v1223
        %v1229 = vadd.s32 %v1196, 4294967295
        %vm1230 = vcmp.ge.s32.totalorder %v1229, 0
        %vm1231 = vcmp.lt.s32.totalorder %v772, 256
        %vm1232 = vcmp.lt.s32.totalorder %v1229, 256
        %vm1233 = vmand %vm773, %vm1231
        %vm1234 = vmand %vm1230, %vm1232
        %s1235 = sld [smem:[#allocation4 + $0x81]]
        %v1236 = vsel %vm1233, %v1228, 0.0
        %v1237 = vsel %vm1234, %v1227, 0.0
        %v1238 = vstv %s1235
        %v1239 = vmul.f32 %v1238, %v1236
        %v1240 = vmul.f32 %v1238, %v1237
        %v1241 = vadd.f32 %v1220, %v1239
        %v1242 = vadd.f32 %v1221, %v1240
        %1243 = vrot.lane.b32.xlu0 %v1194, 127
        %v1244 = vpop.permute.xlu0 %1243
        %1245 = vrot.lane.b32.xlu0 %v1195, 127
        %v1246 = vpop.permute.xlu0 %1245
        %vm1247 = vcmp.lt.s32.totalorder %v755, 127
        %v1248 = vsel %vm1247, %v1244, %v1246
        %v1249 = vsel %vm1247, %v1246, %v1244
        %v1250 = vadd.s32 %v1196, 1
        %vm1251 = vcmp.ge.s32.totalorder %v1250, 0
        %vm1252 = vcmp.lt.s32.totalorder %v783, 256
        %vm1253 = vcmp.lt.s32.totalorder %v1250, 256
        %vm1254 = vmand %vm784, %vm1252
        %vm1255 = vmand %vm1251, %vm1253
        %s1256 = sld [smem:[#allocation4 + $0x83]]
        %v1257 = vsel %vm1254, %v1248, 0.0
        %v1258 = vsel %vm1255, %v1249, 0.0
        %v1259 = vstv %s1256
        %v1260 = vmul.f32 %v1259, %v1257
        %v1261 = vmul.f32 %v1259, %v1258
        %v1262 = vadd.f32 %v1241, %v1260
        %v1263 = vadd.f32 %v1242, %v1261
        %1264 = vrot.lane.b32.xlu0 %v1194, 126
        %v1265 = vpop.permute.xlu0 %1264
        %1266 = vrot.lane.b32.xlu0 %v1195, 126
        %v1267 = vpop.permute.xlu0 %1266
        %vm1268 = vcmp.lt.s32.totalorder %v755, 126
        %v1269 = vsel %vm1268, %v1265, %v1267
        %v1270 = vsel %vm1268, %v1267, %v1265
        %v1271 = vadd.s32 %v1196, 2
        %vm1272 = vcmp.ge.s32.totalorder %v1271, 0
        %vm1273 = vcmp.lt.s32.totalorder %v794, 256
        %vm1274 = vcmp.lt.s32.totalorder %v1271, 256
        %vm1275 = vmand %vm795, %vm1273
        %vm1276 = vmand %vm1272, %vm1274
        %s1277 = sld [smem:[#allocation4 + $0x84]]
        %v1278 = vsel %vm1275, %v1269, 0.0
        %v1279 = vsel %vm1276, %v1270, 0.0
        %v1280 = vstv %s1277
        %v1281 = vmul.f32 %v1280, %v1278
        %v1282 = vmul.f32 %v1280, %v1279
        %v1283 = vadd.f32 %v1262, %v1281
        %v1284 = vadd.f32 %v1263, %v1282
        %v1285 = vsub.f32 0.0, %v1283
        %v1286 = vsub.f32 0.0, %v1284
        %v1287 = vmul.f32 %v1285, 1.442695
        %v1288 = vpow.pop %v1287
        %v1289 = vmul.f32 %v1286, 1.442695
        %v1290 = vpow.pop %v1289
        %v1291 = vadd.f32 %v1288, 1.0
        %v1292 = vadd.f32 %v1290, 1.0
        %v1293 = vrcp.pop %v1291
        %v1294 = vmul.f32 1.0, %v1293
        %v1295 = vrcp.pop %v1292
        %v1296 = vmul.f32 1.0, %v1295
        %v1297 = vlaneseq
        %v1298 = vshrl.u32 %v1297, 7
        %v1299 = vsub.s32 0, %v1298
        %v1300 = vrot.slane %v1294, %v1299
        %v1301 = vlaneseq
        %v1302 = vshrl.u32 %v1301, 7
        %v1303 = vsub.s32 0, %v1302
        %v1304 = vrot.slane %v1296, %v1303
        %v1305 = vmul.f32 %v1151, %v1300
        %v1306 = vmul.f32 %v1152, %v1304
        %v1307 = vmul.f32 %v1153, %v1300
        %v1308 = vmul.f32 %v1154, %v1304
        %v1309 = vmul.f32 %v1155, %v1300
        %v1310 = vmul.f32 %v1156, %v1304
        %v1311 = vmul.f32 %v1157, %v1300
        %v1312 = vmul.f32 %v1158, %v1304
        %v1313 = vmul.f32 %v1159, %v1300
        %v1314 = vmul.f32 %v1160, %v1304
        %v1315 = vmul.f32 %v1161, %v1300
        %v1316 = vmul.f32 %v1162, %v1304
        %v1317 = vmul.f32 %v1163, %v1300
        %v1318 = vmul.f32 %v1164, %v1304
        %v1319 = vmul.f32 %v1165, %v1300
        %v1320 = vmul.f32 %v1166, %v1304
        %v1321 = vld [vmem:[%s4] sm:$0xff]
        %v1322 = vld [vmem:[%s4 + $0x8] sm:$0xff]
        %vm1323 = vcmask 523264
        %v1325 = vsel %vm1323, %v1321, 0
        %v1328 = vsel %vm1323, %v1322, 0
        %1330 = vmatprep.subr.mxu0 %v1306
        %1331 = vmatpush1.msra.mxu0 %v1305
        %1332 = vmatprep.subr.mxu0 %v1308
        %1333 = vmatpush1.msra.mxu0 %v1307
        %1334 = vmatprep.subr.mxu0 %v1310
        %1335 = vmatpush1.msra.mxu0 %v1309
        %1336 = vmatprep.subr.mxu0 %v1312
        %1337 = vmatpush1.msra.mxu0 %v1311
        %1338 = vmatprep.subr.mxu0 %v1314
        %1339 = vmatpush1.msra.mxu0 %v1313
        %1340 = vmatprep.subr.mxu0 %v1316
        %1341 = vmatpush1.msra.mxu0 %v1315
        %1342 = vmatprep.subr.mxu0 %v1318
        %1343 = vmatpush1.msra.mxu0 %v1317
        %1344 = vmatprep.subr.mxu0 %v1320
        %1345 = vmatpush1.msra.mxu0 %v1319
        %1346 = vmatprep.subr.mxu0 0.0
        %1347 = vmatpush1.msra.mxu0 0.0
        %1348 = vmatprep.subr.mxu0 0.0
        %1349 = vmatpush1.msra.mxu0 0.0
        %1350 = vmatprep.subr.mxu0 0.0
        %1351 = vmatpush1.msra.mxu0 0.0
        %1352 = vmatprep.subr.mxu0 0.0
        %1353 = vmatpush1.msra.mxu0 0.0
        %1354 = vmatprep.subr.mxu0 0.0
        %1355 = vmatpush1.msra.mxu0 0.0
        %1356 = vmatprep.subr.mxu0 0.0
        %1357 = vmatpush1.msra.mxu0 0.0
        %1358 = vmatprep.subr.mxu0 0.0
        %1359 = vmatpush1.msra.mxu0 0.0
        %1360 = vmatprep.subr.mxu0 0.0
        %1361 = vmatpush1.msra.mxu0 0.0
        %1362 = vmatprep.subr.mxu0 0.0
        %1363 = vmatpush1.msra.mxu0 0.0
        %1364 = vmatprep.subr.mxu0 0.0
        %1365 = vmatpush1.msra.mxu0 0.0
        %1366 = vmatprep.subr.mxu0 0.0
        %1367 = vmatpush1.msra.mxu0 0.0
        %1368 = vmatprep.subr.mxu0 0.0
        %1369 = vmatpush1.msra.mxu0 0.0
        %1370 = vmatprep.subr.mxu0 0.0
        %1371 = vmatpush1.msra.mxu0 0.0
        %1372 = vmatprep.subr.mxu0 0.0
        %1373 = vmatpush1.msra.mxu0 0.0
        %1374 = vmatprep.subr.mxu0 0.0
        %1375 = vmatpush1.msra.mxu0 0.0
        %1376 = vmatprep.subr.mxu0 0.0
        %1377 = vmatpush1.msra.mxu0 0.0
        %1378 = vmatprep.subr.mxu0 0.0
        %1379 = vmatpush1.msra.mxu0 0.0
        %1380 = vmatprep.subr.mxu0 0.0
        %1381 = vmatpush1.msra.mxu0 0.0
        %1382 = vmatprep.subr.mxu0 0.0
        %1383 = vmatpush1.msra.mxu0 0.0
        %1384 = vmatprep.subr.mxu0 0.0
        %1385 = vmatpush1.msra.mxu0 0.0
        %1386 = vmatprep.subr.mxu0 0.0
        %1387 = vmatpush1.msra.mxu0 0.0
        %1388 = vmatprep.subr.mxu0 0.0
        %1389 = vmatpush1.msra.mxu0 0.0
        %1390 = vmatprep.subr.mxu0 0.0
        %1391 = vmatpush1.msra.mxu0 0.0
        %1392 = vmatprep.subr.mxu0 0.0
        %1393 = vmatpush1.msra.mxu0 0.0
        %1394 = vmatprep.mubr.f32.mxu0 0.0
        %1395 = vmatmul.mubr.f32.gmra.mrb[0].mxu0 %v1325
        %v1396 = vpop.f32.mrb[0].mxu0
        %v1397 = vadd.f32 0.0, %v1396
        %v1398 = vpop.f32.mrb[0].mxu0
        %v1399 = vadd.f32 0.0, %v1398
        %1400 = vmatprep.mubr.f32.mxu0 0.0
        %1401 = vmatmul.mubr.f32.gmra.mrb[0].mxu0 %v1328
        %v1402 = vpop.f32.mrb[0].mxu0
        %v1403 = vadd.f32 0.0, %v1402
        %v1404 = vpop.f32.mrb[0].mxu0
        %v1405 = vadd.f32 0.0, %v1404
        %1406 = vdwg.mxu0
        %v1407 = vpack.c.bf16 %v1403, %v1397
        %v1408 = vpack.c.bf16 %v1405, %v1399
        %v1409 = vld [vmem:[%s8] sm:$0xff]
        %v1410 = vld [vmem:[%s8 + $0x8] sm:$0xff]
        %v1411 = vld [vmem:[%s8 + $0x10] sm:$0xff]
        %v1412 = vld [vmem:[%s8 + $0x18] sm:$0xff]
        %v1413 = vld [vmem:[%s8 + $0x20] sm:$0xff]
        %v1414 = vld [vmem:[%s8 + $0x28] sm:$0xff]
        %v1415 = vld [vmem:[%s8 + $0x30] sm:$0xff]
        %v1416 = vld [vmem:[%s8 + $0x38] sm:$0xff]
        %v1417 = vld [vmem:[%s8 + $0x40] sm:$0xff]
        %v1418 = vld [vmem:[%s8 + $0x48] sm:$0xff]
        %v1419 = vld [vmem:[%s8 + $0x50] sm:$0xff]
        %v1420 = vld [vmem:[%s8 + $0x58] sm:$0xff]
        %v1421 = vld [vmem:[%s8 + $0x60] sm:$0xff]
        %v1422 = vld [vmem:[%s8 + $0x68] sm:$0xff]
        %v1423 = vld [vmem:[%s8 + $0x70] sm:$0xff]
        %v1424 = vld [vmem:[%s8 + $0x78] sm:$0xff]
        %v1425 = vld [vmem:[%s8 + $0x80] sm:$0xff]
        %v1426 = vld [vmem:[%s8 + $0x88] sm:$0xff]
        %v1427 = vld [vmem:[%s8 + $0x90] sm:$0xff]
        %v1428 = vld [vmem:[%s8 + $0x98] sm:$0xff]
        %v1429 = vld [vmem:[%s8 + $0xa0] sm:$0xff]
        %v1430 = vld [vmem:[%s8 + $0xa8] sm:$0xff]
        %v1431 = vld [vmem:[%s8 + $0xb0] sm:$0xff]
        %v1432 = vld [vmem:[%s8 + $0xb8] sm:$0xff]
        %v1433 = vld [vmem:[%s8 + $0xc0] sm:$0xff]
        %v1434 = vld [vmem:[%s8 + $0xc8] sm:$0xff]
        %v1435 = vld [vmem:[%s8 + $0xd0] sm:$0xff]
        %v1436 = vld [vmem:[%s8 + $0xd8] sm:$0xff]
        %v1437 = vld [vmem:[%s8 + $0xe0] sm:$0xff]
        %v1438 = vld [vmem:[%s8 + $0xe8] sm:$0xff]
        %v1439 = vld [vmem:[%s8 + $0xf0] sm:$0xff]
        %v1440 = vld [vmem:[%s8 + $0xf8] sm:$0xff]
        %v1441 = vld [vmem:[%s8 + $0x100] sm:$0xff]
        %v1442 = vld [vmem:[%s8 + $0x108] sm:$0xff]
        %v1443 = vld [vmem:[%s8 + $0x110] sm:$0xff]
        %v1444 = vld [vmem:[%s8 + $0x118] sm:$0xff]
        %v1445 = vld [vmem:[%s8 + $0x120] sm:$0xff]
        %v1446 = vld [vmem:[%s8 + $0x128] sm:$0xff]
        %v1447 = vld [vmem:[%s8 + $0x130] sm:$0xff]
        %v1448 = vld [vmem:[%s8 + $0x138] sm:$0xff]
        %v1449 = vld [vmem:[%s8 + $0x140] sm:$0xff]
        %v1450 = vld [vmem:[%s8 + $0x148] sm:$0xff]
        %v1451 = vld [vmem:[%s8 + $0x150] sm:$0xff]
        %v1452 = vld [vmem:[%s8 + $0x158] sm:$0xff]
        %v1453 = vld [vmem:[%s8 + $0x160] sm:$0xff]
        %v1454 = vld [vmem:[%s8 + $0x168] sm:$0xff]
        %v1455 = vld [vmem:[%s8 + $0x170] sm:$0xff]
        %v1456 = vld [vmem:[%s8 + $0x178] sm:$0xff]
        %v1457 = vld [vmem:[%s8 + $0x180] sm:$0xff]
        %v1458 = vld [vmem:[%s8 + $0x188] sm:$0xff]
        %v1459 = vld [vmem:[%s8 + $0x190] sm:$0xff]
        %v1460 = vld [vmem:[%s8 + $0x198] sm:$0xff]
        %v1461 = vld [vmem:[%s8 + $0x1a0] sm:$0xff]
        %v1462 = vld [vmem:[%s8 + $0x1a8] sm:$0xff]
        %v1463 = vld [vmem:[%s8 + $0x1b0] sm:$0xff]
        %v1464 = vld [vmem:[%s8 + $0x1b8] sm:$0xff]
        %v1465 = vld [vmem:[%s8 + $0x1c0] sm:$0xff]
        %v1466 = vld [vmem:[%s8 + $0x1c8] sm:$0xff]
        %v1467 = vld [vmem:[%s8 + $0x1d0] sm:$0xff]
        %v1468 = vld [vmem:[%s8 + $0x1d8] sm:$0xff]
        %v1469 = vld [vmem:[%s8 + $0x1e0] sm:$0xff]
        %v1470 = vld [vmem:[%s8 + $0x1e8] sm:$0xff]
        %v1471 = vld [vmem:[%s8 + $0x1f0] sm:$0xff]
        %v1472 = vld [vmem:[%s8 + $0x1f8] sm:$0xff]
        %v1473 = vld [vmem:[%s9] sm:$0xf]
        %v1475 = vlaneseq
        %v1476 = vshrl.u32 %v1475, 7
        %v1477 = vsub.s32 0, %v1476
        %v1478 = vrot.slane %v1473, %v1477
        %v1479 = vlaneseq
        %v1480 = vshrl.u32 %v1479, 7
        %v1481 = vsub.s32 1, %v1480
        %v1482 = vrot.slane %v1473, %v1481
        %v1483 = vlaneseq
        %v1484 = vshrl.u32 %v1483, 7
        %v1485 = vsub.s32 2, %v1484
        %v1486 = vrot.slane %v1473, %v1485
        %v1487 = vlaneseq
        %v1488 = vshrl.u32 %v1487, 7
        %v1489 = vsub.s32 3, %v1488
        %v1490 = vrot.slane %v1473, %v1489
        %v1559 = vunpack.c.l.b16 %v1409
        %v1560 = vunpack.c.h.b16 %v1409
        %v1561 = vunpack.c.l.b16 %v1410
        %v1562 = vunpack.c.h.b16 %v1410
        %v1563 = vunpack.c.l.b16 %v1411
        %v1564 = vunpack.c.h.b16 %v1411
        %v1565 = vunpack.c.l.b16 %v1412
        %v1566 = vunpack.c.h.b16 %v1412
        %v1567 = vunpack.c.l.b16 %v1413
        %v1568 = vunpack.c.h.b16 %v1413
        %v1569 = vunpack.c.l.b16 %v1414
        %v1570 = vunpack.c.h.b16 %v1414
        %v1571 = vunpack.c.l.b16 %v1415
        %v1572 = vunpack.c.h.b16 %v1415
        %v1573 = vunpack.c.l.b16 %v1416
        %v1574 = vunpack.c.h.b16 %v1416
        %v1575 = vunpack.c.l.b16 %v1417
        %v1576 = vunpack.c.h.b16 %v1417
        %v1577 = vunpack.c.l.b16 %v1418
        %v1578 = vunpack.c.h.b16 %v1418
        %v1579 = vunpack.c.l.b16 %v1419
        %v1580 = vunpack.c.h.b16 %v1419
        %v1581 = vunpack.c.l.b16 %v1420
        %v1582 = vunpack.c.h.b16 %v1420
        %v1583 = vunpack.c.l.b16 %v1421
        %v1584 = vunpack.c.h.b16 %v1421
        %v1585 = vunpack.c.l.b16 %v1422
        %v1586 = vunpack.c.h.b16 %v1422
        %v1587 = vunpack.c.l.b16 %v1423
        %v1588 = vunpack.c.h.b16 %v1423
        %v1589 = vunpack.c.l.b16 %v1424
        %v1590 = vunpack.c.h.b16 %v1424
        %v1591 = vunpack.c.l.b16 %v1425
        %v1592 = vunpack.c.h.b16 %v1425
        %v1593 = vunpack.c.l.b16 %v1426
        %v1594 = vunpack.c.h.b16 %v1426
        %v1595 = vunpack.c.l.b16 %v1427
        %v1596 = vunpack.c.h.b16 %v1427
        %v1597 = vunpack.c.l.b16 %v1428
        %v1598 = vunpack.c.h.b16 %v1428
        %v1599 = vunpack.c.l.b16 %v1429
        %v1600 = vunpack.c.h.b16 %v1429
        %v1601 = vunpack.c.l.b16 %v1430
        %v1602 = vunpack.c.h.b16 %v1430
        %v1603 = vunpack.c.l.b16 %v1431
        %v1604 = vunpack.c.h.b16 %v1431
        %v1605 = vunpack.c.l.b16 %v1432
        %v1606 = vunpack.c.h.b16 %v1432
        %v1607 = vunpack.c.l.b16 %v1433
        %v1608 = vunpack.c.h.b16 %v1433
        %v1609 = vunpack.c.l.b16 %v1434
        %v1610 = vunpack.c.h.b16 %v1434
        %v1611 = vunpack.c.l.b16 %v1435
        %v1612 = vunpack.c.h.b16 %v1435
        %v1613 = vunpack.c.l.b16 %v1436
        %v1614 = vunpack.c.h.b16 %v1436
        %v1615 = vunpack.c.l.b16 %v1437
        %v1616 = vunpack.c.h.b16 %v1437
        %v1617 = vunpack.c.l.b16 %v1438
        %v1618 = vunpack.c.h.b16 %v1438
        %v1619 = vunpack.c.l.b16 %v1439
        %v1620 = vunpack.c.h.b16 %v1439
        %v1621 = vunpack.c.l.b16 %v1440
        %v1622 = vunpack.c.h.b16 %v1440
        %v1623 = vunpack.c.l.b16 %v1441
        %v1624 = vunpack.c.h.b16 %v1441
        %v1625 = vunpack.c.l.b16 %v1442
        %v1626 = vunpack.c.h.b16 %v1442
        %v1627 = vunpack.c.l.b16 %v1443
        %v1628 = vunpack.c.h.b16 %v1443
        %v1629 = vunpack.c.l.b16 %v1444
        %v1630 = vunpack.c.h.b16 %v1444
        %v1631 = vunpack.c.l.b16 %v1445
        %v1632 = vunpack.c.h.b16 %v1445
        %v1633 = vunpack.c.l.b16 %v1446
        %v1634 = vunpack.c.h.b16 %v1446
        %v1635 = vunpack.c.l.b16 %v1447
        %v1636 = vunpack.c.h.b16 %v1447
        %v1637 = vunpack.c.l.b16 %v1448
        %v1638 = vunpack.c.h.b16 %v1448
        %v1639 = vunpack.c.l.b16 %v1449
        %v1640 = vunpack.c.h.b16 %v1449
        %v1641 = vunpack.c.l.b16 %v1450
        %v1642 = vunpack.c.h.b16 %v1450
        %v1643 = vunpack.c.l.b16 %v1451
        %v1644 = vunpack.c.h.b16 %v1451
        %v1645 = vunpack.c.l.b16 %v1452
        %v1646 = vunpack.c.h.b16 %v1452
        %v1647 = vunpack.c.l.b16 %v1453
        %v1648 = vunpack.c.h.b16 %v1453
        %v1649 = vunpack.c.l.b16 %v1454
        %v1650 = vunpack.c.h.b16 %v1454
        %v1651 = vunpack.c.l.b16 %v1455
        %v1652 = vunpack.c.h.b16 %v1455
        %v1653 = vunpack.c.l.b16 %v1456
        %v1654 = vunpack.c.h.b16 %v1456
        %v1655 = vunpack.c.l.b16 %v1457
        %v1656 = vunpack.c.h.b16 %v1457
        %v1657 = vunpack.c.l.b16 %v1458
        %v1658 = vunpack.c.h.b16 %v1458
        %v1659 = vunpack.c.l.b16 %v1459
        %v1660 = vunpack.c.h.b16 %v1459
        %v1661 = vunpack.c.l.b16 %v1460
        %v1662 = vunpack.c.h.b16 %v1460
        %v1663 = vunpack.c.l.b16 %v1461
        %v1664 = vunpack.c.h.b16 %v1461
        %v1665 = vunpack.c.l.b16 %v1462
        %v1666 = vunpack.c.h.b16 %v1462
        %v1667 = vunpack.c.l.b16 %v1463
        %v1668 = vunpack.c.h.b16 %v1463
        %v1669 = vunpack.c.l.b16 %v1464
        %v1670 = vunpack.c.h.b16 %v1464
        %v1671 = vunpack.c.l.b16 %v1465
        %v1672 = vunpack.c.h.b16 %v1465
        %v1673 = vunpack.c.l.b16 %v1466
        %v1674 = vunpack.c.h.b16 %v1466
        %v1675 = vunpack.c.l.b16 %v1467
        %v1676 = vunpack.c.h.b16 %v1467
        %v1677 = vunpack.c.l.b16 %v1468
        %v1678 = vunpack.c.h.b16 %v1468
        %v1679 = vunpack.c.l.b16 %v1469
        %v1680 = vunpack.c.h.b16 %v1469
        %v1681 = vunpack.c.l.b16 %v1470
        %v1682 = vunpack.c.h.b16 %v1470
        %v1683 = vunpack.c.l.b16 %v1471
        %v1684 = vunpack.c.h.b16 %v1471
        %v1685 = vunpack.c.l.b16 %v1472
        %v1686 = vunpack.c.h.b16 %v1472
        %v1687 = vpack.c.b16 %v1563, %v1559
        %v1688 = vpack.c.b16 %v1564, %v1560
        %v1689 = vpack.c.b16 %v1565, %v1561
        %v1690 = vpack.c.b16 %v1566, %v1562
        %v1691 = vpack.c.b16 %v1571, %v1567
        %v1692 = vpack.c.b16 %v1572, %v1568
        %v1693 = vpack.c.b16 %v1573, %v1569
        %v1694 = vpack.c.b16 %v1574, %v1570
        %v1695 = vpack.c.b16 %v1579, %v1575
        %v1696 = vpack.c.b16 %v1580, %v1576
        %v1697 = vpack.c.b16 %v1581, %v1577
        %v1698 = vpack.c.b16 %v1582, %v1578
        %v1699 = vpack.c.b16 %v1587, %v1583
        %v1700 = vpack.c.b16 %v1588, %v1584
        %v1701 = vpack.c.b16 %v1589, %v1585
        %v1702 = vpack.c.b16 %v1590, %v1586
        %v1703 = vpack.c.b16 %v1595, %v1591
        %v1704 = vpack.c.b16 %v1596, %v1592
        %v1705 = vpack.c.b16 %v1597, %v1593
        %v1706 = vpack.c.b16 %v1598, %v1594
        %v1707 = vpack.c.b16 %v1603, %v1599
        %v1708 = vpack.c.b16 %v1604, %v1600
        %v1709 = vpack.c.b16 %v1605, %v1601
        %v1710 = vpack.c.b16 %v1606, %v1602
        %v1711 = vpack.c.b16 %v1611, %v1607
        %v1712 = vpack.c.b16 %v1612, %v1608
        %v1713 = vpack.c.b16 %v1613, %v1609
        %v1714 = vpack.c.b16 %v1614, %v1610
        %v1715 = vpack.c.b16 %v1619, %v1615
        %v1716 = vpack.c.b16 %v1620, %v1616
        %v1717 = vpack.c.b16 %v1621, %v1617
        %v1718 = vpack.c.b16 %v1622, %v1618
        %v1719 = vpack.c.b16 %v1627, %v1623
        %v1720 = vpack.c.b16 %v1628, %v1624
        %v1721 = vpack.c.b16 %v1629, %v1625
        %v1722 = vpack.c.b16 %v1630, %v1626
        %v1723 = vpack.c.b16 %v1635, %v1631
        %v1724 = vpack.c.b16 %v1636, %v1632
        %v1725 = vpack.c.b16 %v1637, %v1633
        %v1726 = vpack.c.b16 %v1638, %v1634
        %v1727 = vpack.c.b16 %v1643, %v1639
        %v1728 = vpack.c.b16 %v1644, %v1640
        %v1729 = vpack.c.b16 %v1645, %v1641
        %v1730 = vpack.c.b16 %v1646, %v1642
        %v1731 = vpack.c.b16 %v1651, %v1647
        %v1732 = vpack.c.b16 %v1652, %v1648
        %v1733 = vpack.c.b16 %v1653, %v1649
        %v1734 = vpack.c.b16 %v1654, %v1650
        %v1735 = vpack.c.b16 %v1659, %v1655
        %v1736 = vpack.c.b16 %v1660, %v1656
        %v1737 = vpack.c.b16 %v1661, %v1657
        %v1738 = vpack.c.b16 %v1662, %v1658
        %v1739 = vpack.c.b16 %v1667, %v1663
        %v1740 = vpack.c.b16 %v1668, %v1664
        %v1741 = vpack.c.b16 %v1669, %v1665
        %v1742 = vpack.c.b16 %v1670, %v1666
        %v1743 = vpack.c.b16 %v1675, %v1671
        %v1744 = vpack.c.b16 %v1676, %v1672
        %v1745 = vpack.c.b16 %v1677, %v1673
        %v1746 = vpack.c.b16 %v1678, %v1674
        %v1747 = vpack.c.b16 %v1683, %v1679
        %v1748 = vpack.c.b16 %v1684, %v1680
        %v1749 = vpack.c.b16 %v1685, %v1681
        %v1750 = vpack.c.b16 %v1686, %v1682
        %1815 = vmatprep.subr.bf16.mxu0 %v1688
        %1816 = vmatpush1.bf16.msra.mxu0 %v1687
        %1817 = vmatprep.subr.bf16.mxu0 %v1692
        %1818 = vmatpush1.bf16.msra.mxu0 %v1691
        %1819 = vmatprep.subr.bf16.mxu0 %v1696
        %1820 = vmatpush1.bf16.msra.mxu0 %v1695
        %1821 = vmatprep.subr.bf16.mxu0 %v1700
        %1822 = vmatpush1.bf16.msra.mxu0 %v1699
        %1823 = vmatprep.subr.bf16.mxu0 %v1704
        %1824 = vmatpush1.bf16.msra.mxu0 %v1703
        %1825 = vmatprep.subr.bf16.mxu0 %v1708
        %1826 = vmatpush1.bf16.msra.mxu0 %v1707
        %1827 = vmatprep.subr.bf16.mxu0 %v1712
        %1828 = vmatpush1.bf16.msra.mxu0 %v1711
        %1829 = vmatprep.subr.bf16.mxu0 %v1716
        %1830 = vmatpush1.bf16.msra.mxu0 %v1715
        %1831 = vmatprep.subr.bf16.mxu0 %v1720
        %1832 = vmatpush1.bf16.msra.mxu0 %v1719
        %1833 = vmatprep.subr.bf16.mxu0 %v1724
        %1834 = vmatpush1.bf16.msra.mxu0 %v1723
        %1835 = vmatprep.subr.bf16.mxu0 %v1728
        %1836 = vmatpush1.bf16.msra.mxu0 %v1727
        %1837 = vmatprep.subr.bf16.mxu0 %v1732
        %1838 = vmatpush1.bf16.msra.mxu0 %v1731
        %1839 = vmatprep.subr.bf16.mxu0 %v1736
        %1840 = vmatpush1.bf16.msra.mxu0 %v1735
        %1841 = vmatprep.subr.bf16.mxu0 %v1740
        %1842 = vmatpush1.bf16.msra.mxu0 %v1739
        %1843 = vmatprep.subr.bf16.mxu0 %v1744
        %1844 = vmatpush1.bf16.msra.mxu0 %v1743
        %1845 = vmatprep.subr.bf16.mxu0 %v1748
        %1846 = vmatpush1.bf16.msra.mxu0 %v1747
        %1847 = vmatprep.mubr.bf16.mxu0 %v1408
        %1848 = vmatmul.mubr.bf16.gmra.mrb[0].mxu0 %v1407
        %v1849 = vpop.f32.mrb[0].mxu0
        %v1850 = vadd.f32 %v1478, %v1849
        %v1851 = vpop.f32.mrb[0].mxu0
        %v1852 = vadd.f32 %v1482, %v1851
        %v1853 = vpop.f32.mrb[0].mxu0
        %v1854 = vadd.f32 %v1478, %v1853
        %v1855 = vpop.f32.mrb[0].mxu0
        %v1856 = vadd.f32 %v1482, %v1855
        %1857 = vdwg.mxu0
        %1858 = vmatprep.subr.bf16.mxu0 %v1690
        %1859 = vmatpush1.bf16.msra.mxu0 %v1689
        %1860 = vmatprep.subr.bf16.mxu0 %v1694
        %1861 = vmatpush1.bf16.msra.mxu0 %v1693
        %1862 = vmatprep.subr.bf16.mxu0 %v1698
        %1863 = vmatpush1.bf16.msra.mxu0 %v1697
        %1864 = vmatprep.subr.bf16.mxu0 %v1702
        %1865 = vmatpush1.bf16.msra.mxu0 %v1701
        %1866 = vmatprep.subr.bf16.mxu0 %v1706
        %1867 = vmatpush1.bf16.msra.mxu0 %v1705
        %1868 = vmatprep.subr.bf16.mxu0 %v1710
        %1869 = vmatpush1.bf16.msra.mxu0 %v1709
        %1870 = vmatprep.subr.bf16.mxu0 %v1714
        %1871 = vmatpush1.bf16.msra.mxu0 %v1713
        %1872 = vmatprep.subr.bf16.mxu0 %v1718
        %1873 = vmatpush1.bf16.msra.mxu0 %v1717
        %1874 = vmatprep.subr.bf16.mxu0 %v1722
        %1875 = vmatpush1.bf16.msra.mxu0 %v1721
        %1876 = vmatprep.subr.bf16.mxu0 %v1726
        %1877 = vmatpush1.bf16.msra.mxu0 %v1725
        %1878 = vmatprep.subr.bf16.mxu0 %v1730
        %1879 = vmatpush1.bf16.msra.mxu0 %v1729
        %1880 = vmatprep.subr.bf16.mxu0 %v1734
        %1881 = vmatpush1.bf16.msra.mxu0 %v1733
        %1882 = vmatprep.subr.bf16.mxu0 %v1738
        %1883 = vmatpush1.bf16.msra.mxu0 %v1737
        %1884 = vmatprep.subr.bf16.mxu0 %v1742
        %1885 = vmatpush1.bf16.msra.mxu0 %v1741
        %1886 = vmatprep.subr.bf16.mxu0 %v1746
        %1887 = vmatpush1.bf16.msra.mxu0 %v1745
        %1888 = vmatprep.subr.bf16.mxu0 %v1750
        %1889 = vmatpush1.bf16.msra.mxu0 %v1749
        %1890 = vmatprep.mubr.bf16.mxu0 %v1408
        %1891 = vmatmul.mubr.bf16.gmra.mrb[0].mxu0 %v1407
        %v1892 = vpop.f32.mrb[0].mxu0
        %v1893 = vadd.f32 %v1486, %v1892
        %v1894 = vpop.f32.mrb[0].mxu0
        %v1895 = vadd.f32 %v1490, %v1894
        %v1896 = vpop.f32.mrb[0].mxu0
        %v1897 = vadd.f32 %v1486, %v1896
        %v1898 = vpop.f32.mrb[0].mxu0
        %v1899 = vadd.f32 %v1490, %v1898
        %1900 = vdwg.mxu0
        %v1901 = vmax.f32 %v1850, 0.0
        %v1902 = vmax.f32 %v1852, 0.0
        %v1903 = vmax.f32 %v1893, 0.0
        %v1904 = vmax.f32 %v1895, 0.0
        %v1905 = vmax.f32 %v1854, 0.0
        %v1906 = vmax.f32 %v1856, 0.0
        %v1907 = vmax.f32 %v1897, 0.0
        %v1908 = vmax.f32 %v1899, 0.0
        %v1909 = vadd.f32 %v1901, %v1905
        %v1910 = vrot.slane %v1909, 4
        %v1911 = vadd.f32 %v1909, %v1910
        %v1912 = vrot.slane %v1911, 2
        %v1913 = vadd.f32 %v1911, %v1912
        %v1914 = vrot.slane %v1913, 1
        %v1915 = vadd.f32 %v1913, %v1914
        %v1916 = vadd.f32 %v1902, %v1906
        %v1917 = vrot.slane %v1916, 4
        %v1918 = vadd.f32 %v1916, %v1917
        %v1919 = vrot.slane %v1918, 2
        %v1920 = vadd.f32 %v1918, %v1919
        %v1921 = vrot.slane %v1920, 1
        %v1922 = vadd.f32 %v1920, %v1921
        %v1923 = vadd.f32 %v1903, %v1907
        %v1924 = vrot.slane %v1923, 4
        %v1925 = vadd.f32 %v1923, %v1924
        %v1926 = vrot.slane %v1925, 2
        %v1927 = vadd.f32 %v1925, %v1926
        %v1928 = vrot.slane %v1927, 1
        %v1929 = vadd.f32 %v1927, %v1928
        %v1930 = vadd.f32 %v1904, %v1908
        %v1931 = vrot.slane %v1930, 4
        %v1932 = vadd.f32 %v1930, %v1931
        %v1933 = vrot.slane %v1932, 2
        %v1934 = vadd.f32 %v1932, %v1933
        %v1935 = vrot.slane %v1934, 1
        %v1936 = vadd.f32 %v1934, %v1935
        %v1937 = vrcp.pop 16.0
        %v1938 = vmul.f32 %v1915, %v1937
        %v1939 = vmul.f32 %v1922, %v1937
        %v1940 = vmul.f32 %v1929, %v1937
        %v1941 = vmul.f32 %v1936, %v1937
        %v1942 = vadd.s32 %v755, 256
        %v1943 = vadd.s32 %v755, 384
        %s1944 = sld [smem:[#allocation4 + $0x102]]
        %v1945 = vstv %s1944
        %v1946 = vmul.f32 %v1945, %v1938
        %v1947 = vmul.f32 %v1945, %v1939
        %v1948 = vmul.f32 %v1945, %v1940
        %v1949 = vmul.f32 %v1945, %v1941
        %1950 = vrot.lane.b32.xlu0 %v1938, 2
        %v1951 = vpop.permute.xlu0 %1950
        %1952 = vrot.lane.b32.xlu0 %v1939, 2
        %v1953 = vpop.permute.xlu0 %1952
        %1954 = vrot.lane.b32.xlu0 %v1940, 2
        %v1955 = vpop.permute.xlu0 %1954
        %1956 = vrot.lane.b32.xlu0 %v1941, 2
        %v1957 = vpop.permute.xlu0 %1956
        %v1958 = vsel %vm1205, %v1955, %v1957
        %v1959 = vsel %vm1205, %v1953, %v1955
        %v1960 = vsel %vm1205, %v1951, %v1953
        %v1961 = vsel %vm1205, %v1957, %v1951
        %v1962 = vadd.s32 %v1942, 4294967294
        %v1963 = vadd.s32 %v1943, 4294967294
        %vm1964 = vcmp.ge.s32.totalorder %v1962, 0
        %vm1965 = vcmp.ge.s32.totalorder %v1963, 0
        %vm1966 = vcmp.lt.s32.totalorder %v761, 512
        %vm1967 = vcmp.lt.s32.totalorder %v1208, 512
        %vm1968 = vcmp.lt.s32.totalorder %v1962, 512
        %vm1969 = vcmp.lt.s32.totalorder %v1963, 512
        %vm1970 = vmand %vm762, %vm1966
        %vm1971 = vmand %vm1209, %vm1967
        %vm1972 = vmand %vm1964, %vm1968
        %vm1973 = vmand %vm1965, %vm1969
        %s1974 = sld [smem:[#allocation4 + $0x100]]
        %v1975 = vsel %vm1970, %v1961, 0.0
        %v1976 = vsel %vm1971, %v1960, 0.0
        %v1977 = vsel %vm1972, %v1959, 0.0
        %v1978 = vsel %vm1973, %v1958, 0.0
        %v1979 = vstv %s1974
        %v1980 = vmul.f32 %v1979, %v1975
        %v1981 = vmul.f32 %v1979, %v1976
        %v1982 = vmul.f32 %v1979, %v1977
        %v1983 = vmul.f32 %v1979, %v1978
        %v1984 = vadd.f32 %v1946, %v1980
        %v1985 = vadd.f32 %v1947, %v1981
        %v1986 = vadd.f32 %v1948, %v1982
        %v1987 = vadd.f32 %v1949, %v1983
        %1988 = vrot.lane.b32.xlu0 %v1938, 1
        %v1989 = vpop.permute.xlu0 %1988
        %1990 = vrot.lane.b32.xlu0 %v1939, 1
        %v1991 = vpop.permute.xlu0 %1990
        %1992 = vrot.lane.b32.xlu0 %v1940, 1
        %v1993 = vpop.permute.xlu0 %1992
        %1994 = vrot.lane.b32.xlu0 %v1941, 1
        %v1995 = vpop.permute.xlu0 %1994
        %v1996 = vsel %vm1226, %v1993, %v1995
        %v1997 = vsel %vm1226, %v1991, %v1993
        %v1998 = vsel %vm1226, %v1989, %v1991
        %v1999 = vsel %vm1226, %v1995, %v1989
        %v2000 = vadd.s32 %v1942, 4294967295
        %v2001 = vadd.s32 %v1943, 4294967295
        %vm2002 = vcmp.ge.s32.totalorder %v2000, 0
        %vm2003 = vcmp.ge.s32.totalorder %v2001, 0
        %vm2004 = vcmp.lt.s32.totalorder %v772, 512
        %vm2005 = vcmp.lt.s32.totalorder %v1229, 512
        %vm2006 = vcmp.lt.s32.totalorder %v2000, 512
        %vm2007 = vcmp.lt.s32.totalorder %v2001, 512
        %vm2008 = vmand %vm773, %vm2004
        %vm2009 = vmand %vm1230, %vm2005
        %vm2010 = vmand %vm2002, %vm2006
        %vm2011 = vmand %vm2003, %vm2007
        %s2012 = sld [smem:[#allocation4 + $0x101]]
        %v2013 = vsel %vm2008, %v1999, 0.0
        %v2014 = vsel %vm2009, %v1998, 0.0
        %v2015 = vsel %vm2010, %v1997, 0.0
        %v2016 = vsel %vm2011, %v1996, 0.0
        %v2017 = vstv %s2012
        %v2018 = vmul.f32 %v2017, %v2013
        %v2019 = vmul.f32 %v2017, %v2014
        %v2020 = vmul.f32 %v2017, %v2015
        %v2021 = vmul.f32 %v2017, %v2016
        %v2022 = vadd.f32 %v1984, %v2018
        %v2023 = vadd.f32 %v1985, %v2019
        %v2024 = vadd.f32 %v1986, %v2020
        %v2025 = vadd.f32 %v1987, %v2021
        %2026 = vrot.lane.b32.xlu0 %v1938, 127
        %v2027 = vpop.permute.xlu0 %2026
        %2028 = vrot.lane.b32.xlu0 %v1939, 127
        %v2029 = vpop.permute.xlu0 %2028
        %2030 = vrot.lane.b32.xlu0 %v1940, 127
        %v2031 = vpop.permute.xlu0 %2030
        %2032 = vrot.lane.b32.xlu0 %v1941, 127
        %v2033 = vpop.permute.xlu0 %2032
        %v2034 = vsel %vm1247, %v2031, %v2033
        %v2035 = vsel %vm1247, %v2029, %v2031
        %v2036 = vsel %vm1247, %v2027, %v2029
        %v2037 = vsel %vm1247, %v2033, %v2027
        %v2038 = vadd.s32 %v1942, 1
        %v2039 = vadd.s32 %v1943, 1
        %vm2040 = vcmp.ge.s32.totalorder %v2038, 0
        %vm2041 = vcmp.ge.s32.totalorder %v2039, 0
        %vm2042 = vcmp.lt.s32.totalorder %v783, 512
        %vm2043 = vcmp.lt.s32.totalorder %v1250, 512
        %vm2044 = vcmp.lt.s32.totalorder %v2038, 512
        %vm2045 = vcmp.lt.s32.totalorder %v2039, 512
        %vm2046 = vmand %vm784, %vm2042
        %vm2047 = vmand %vm1251, %vm2043
        %vm2048 = vmand %vm2040, %vm2044
        %vm2049 = vmand %vm2041, %vm2045
        %s2050 = sld [smem:[#allocation4 + $0x103]]
        %v2051 = vsel %vm2046, %v2036, 0.0
        %v2052 = vsel %vm2047, %v2035, 0.0
        %v2053 = vsel %vm2048, %v2034, 0.0
        %v2054 = vsel %vm2049, %v2037, 0.0
        %v2055 = vstv %s2050
        %v2056 = vmul.f32 %v2055, %v2051
        %v2057 = vmul.f32 %v2055, %v2052
        %v2058 = vmul.f32 %v2055, %v2053
        %v2059 = vmul.f32 %v2055, %v2054
        %v2060 = vadd.f32 %v2022, %v2056
        %v2061 = vadd.f32 %v2023, %v2057
        %v2062 = vadd.f32 %v2024, %v2058
        %v2063 = vadd.f32 %v2025, %v2059
        %2064 = vrot.lane.b32.xlu0 %v1938, 126
        %v2065 = vpop.permute.xlu0 %2064
        %2066 = vrot.lane.b32.xlu0 %v1939, 126
        %v2067 = vpop.permute.xlu0 %2066
        %2068 = vrot.lane.b32.xlu0 %v1940, 126
        %v2069 = vpop.permute.xlu0 %2068
        %2070 = vrot.lane.b32.xlu0 %v1941, 126
        %v2071 = vpop.permute.xlu0 %2070
        %v2072 = vsel %vm1268, %v2069, %v2071
        %v2073 = vsel %vm1268, %v2067, %v2069
        %v2074 = vsel %vm1268, %v2065, %v2067
        %v2075 = vsel %vm1268, %v2071, %v2065
        %v2076 = vadd.s32 %v1942, 2
        %v2077 = vadd.s32 %v1943, 2
        %vm2078 = vcmp.ge.s32.totalorder %v2076, 0
        %vm2079 = vcmp.ge.s32.totalorder %v2077, 0
        %vm2080 = vcmp.lt.s32.totalorder %v794, 512
        %vm2081 = vcmp.lt.s32.totalorder %v1271, 512
        %vm2082 = vcmp.lt.s32.totalorder %v2076, 512
        %vm2083 = vcmp.lt.s32.totalorder %v2077, 512
        %vm2084 = vmand %vm795, %vm2080
        %vm2085 = vmand %vm1272, %vm2081
        %vm2086 = vmand %vm2078, %vm2082
        %vm2087 = vmand %vm2079, %vm2083
        %s2088 = sld [smem:[#allocation4 + $0x104]]
        %v2089 = vsel %vm2084, %v2074, 0.0
        %v2090 = vsel %vm2085, %v2073, 0.0
        %v2091 = vsel %vm2086, %v2072, 0.0
        %v2092 = vsel %vm2087, %v2075, 0.0
        %v2093 = vstv %s2088
        %v2094 = vmul.f32 %v2093, %v2089
        %v2095 = vmul.f32 %v2093, %v2090
        %v2096 = vmul.f32 %v2093, %v2091
        %v2097 = vmul.f32 %v2093, %v2092
        %v2098 = vadd.f32 %v2060, %v2094
        %v2099 = vadd.f32 %v2061, %v2095
        %v2100 = vadd.f32 %v2062, %v2096
        %v2101 = vadd.f32 %v2063, %v2097
        %v2102 = vsub.f32 0.0, %v2098
        %v2103 = vsub.f32 0.0, %v2099
        %v2104 = vsub.f32 0.0, %v2100
        %v2105 = vsub.f32 0.0, %v2101
        %v2106 = vmul.f32 %v2102, 1.442695
        %v2107 = vpow.pop %v2106
        %v2108 = vmul.f32 %v2103, 1.442695
        %v2109 = vpow.pop %v2108
        %v2110 = vmul.f32 %v2104, 1.442695
        %v2111 = vpow.pop %v2110
        %v2112 = vmul.f32 %v2105, 1.442695
        %v2113 = vpow.pop %v2112
        %v2114 = vadd.f32 %v2107, 1.0
        %v2115 = vadd.f32 %v2109, 1.0
        %v2116 = vadd.f32 %v2111, 1.0
        %v2117 = vadd.f32 %v2113, 1.0
        %v2118 = vrcp.pop %v2114
        %v2119 = vmul.f32 1.0, %v2118
        %v2120 = vrcp.pop %v2115
        %v2121 = vmul.f32 1.0, %v2120
        %v2122 = vrcp.pop %v2116
        %v2123 = vmul.f32 1.0, %v2122
        %v2124 = vrcp.pop %v2117
        %v2125 = vmul.f32 1.0, %v2124
        %v2126 = vlaneseq
        %v2127 = vshrl.u32 %v2126, 7
        %v2128 = vsub.s32 0, %v2127
        %v2129 = vrot.slane %v2119, %v2128
        %v2130 = vlaneseq
        %v2131 = vshrl.u32 %v2130, 7
        %v2132 = vsub.s32 0, %v2131
        %v2133 = vrot.slane %v2121, %v2132
        %v2134 = vlaneseq
        %v2135 = vshrl.u32 %v2134, 7
        %v2136 = vsub.s32 0, %v2135
        %v2137 = vrot.slane %v2123, %v2136
        %v2138 = vlaneseq
        %v2139 = vshrl.u32 %v2138, 7
        %v2140 = vsub.s32 0, %v2139
        %v2141 = vrot.slane %v2125, %v2140
        %v2142 = vmul.f32 %v1901, %v2129
        %v2143 = vmul.f32 %v1902, %v2133
        %v2144 = vmul.f32 %v1903, %v2137
        %v2145 = vmul.f32 %v1904, %v2141
        %v2146 = vmul.f32 %v1905, %v2129
        %v2147 = vmul.f32 %v1906, %v2133
        %v2148 = vmul.f32 %v1907, %v2137
        %v2149 = vmul.f32 %v1908, %v2141
        %v2150 = vld [vmem:[%s5] sm:$0xf]
        %vm2151 = vcmask 130048
        %v2153 = vsel %vm2151, %v2150, 0
        %2155 = vmatprep.subr.mxu0 %v2143
        %2156 = vmatpush1.msra.mxu0 %v2142
        %2157 = vmatprep.subr.mxu0 %v2147
        %2158 = vmatpush1.msra.mxu0 %v2146
        %2159 = vmatprep.subr.mxu0 0.0
        %2160 = vmatpush1.msra.mxu0 0.0
        %2161 = vmatprep.subr.mxu0 0.0
        %2162 = vmatpush1.msra.mxu0 0.0
        %2163 = vmatprep.subr.mxu0 0.0
        %2164 = vmatpush1.msra.mxu0 0.0
        %2165 = vmatprep.subr.mxu0 0.0
        %2166 = vmatpush1.msra.mxu0 0.0
        %2167 = vmatprep.subr.mxu0 0.0
        %2168 = vmatpush1.msra.mxu0 0.0
        %2169 = vmatprep.subr.mxu0 0.0
        %2170 = vmatpush1.msra.mxu0 0.0
        %2171 = vmatprep.subr.mxu0 0.0
        %2172 = vmatpush1.msra.mxu0 0.0
        %2173 = vmatprep.subr.mxu0 0.0
        %2174 = vmatpush1.msra.mxu0 0.0
        %2175 = vmatprep.subr.mxu0 0.0
        %2176 = vmatpush1.msra.mxu0 0.0
        %2177 = vmatprep.subr.mxu0 0.0
        %2178 = vmatpush1.msra.mxu0 0.0
        %2179 = vmatprep.subr.mxu0 0.0
        %2180 = vmatpush1.msra.mxu0 0.0
        %2181 = vmatprep.subr.mxu0 0.0
        %2182 = vmatpush1.msra.mxu0 0.0
        %2183 = vmatprep.subr.mxu0 0.0
        %2184 = vmatpush1.msra.mxu0 0.0
        %2185 = vmatprep.subr.mxu0 0.0
        %2186 = vmatpush1.msra.mxu0 0.0
        %2187 = vmatprep.subr.mxu0 0.0
        %2188 = vmatpush1.msra.mxu0 0.0
        %2189 = vmatprep.subr.mxu0 0.0
        %2190 = vmatpush1.msra.mxu0 0.0
        %2191 = vmatprep.subr.mxu0 0.0
        %2192 = vmatpush1.msra.mxu0 0.0
        %2193 = vmatprep.subr.mxu0 0.0
        %2194 = vmatpush1.msra.mxu0 0.0
        %2195 = vmatprep.subr.mxu0 0.0
        %2196 = vmatpush1.msra.mxu0 0.0
        %2197 = vmatprep.subr.mxu0 0.0
        %2198 = vmatpush1.msra.mxu0 0.0
        %2199 = vmatprep.subr.mxu0 0.0
        %2200 = vmatpush1.msra.mxu0 0.0
        %2201 = vmatprep.subr.mxu0 0.0
        %2202 = vmatpush1.msra.mxu0 0.0
        %2203 = vmatprep.subr.mxu0 0.0
        %2204 = vmatpush1.msra.mxu0 0.0
        %2205 = vmatprep.subr.mxu0 0.0
        %2206 = vmatpush1.msra.mxu0 0.0
        %2207 = vmatprep.subr.mxu0 0.0
        %2208 = vmatpush1.msra.mxu0 0.0
        %2209 = vmatprep.subr.mxu0 0.0
        %2210 = vmatpush1.msra.mxu0 0.0
        %2211 = vmatprep.subr.mxu0 0.0
        %2212 = vmatpush1.msra.mxu0 0.0
        %2213 = vmatprep.subr.mxu0 0.0
        %2214 = vmatpush1.msra.mxu0 0.0
        %2215 = vmatprep.subr.mxu0 0.0
        %2216 = vmatpush1.msra.mxu0 0.0
        %2217 = vmatprep.subr.mxu0 0.0
        %2218 = vmatpush1.msra.mxu0 0.0
        %2219 = vmatprep.mubr.f32.mxu0 0.0
        %2220 = vmatmul.mubr.f32.gmra.mrb[0].mxu0 %v2153
        %v2221 = vpop.f32.mrb[0].mxu0
        %v2222 = vadd.f32 0.0, %v2221
        %v2223 = vpop.f32.mrb[0].mxu0
        %v2224 = vadd.f32 0.0, %v2223
        %2225 = vdwg.mxu0
        %2226 = vmatprep.subr.mxu0 %v2145
        %2227 = vmatpush1.msra.mxu0 %v2144
        %2228 = vmatprep.subr.mxu0 %v2149
        %2229 = vmatpush1.msra.mxu0 %v2148
        %2230 = vmatprep.subr.mxu0 0.0
        %2231 = vmatpush1.msra.mxu0 0.0
        %2232 = vmatprep.subr.mxu0 0.0
        %2233 = vmatpush1.msra.mxu0 0.0
        %2234 = vmatprep.subr.mxu0 0.0
        %2235 = vmatpush1.msra.mxu0 0.0
        %2236 = vmatprep.subr.mxu0 0.0
        %2237 = vmatpush1.msra.mxu0 0.0
        %2238 = vmatprep.subr.mxu0 0.0
        %2239 = vmatpush1.msra.mxu0 0.0
        %2240 = vmatprep.subr.mxu0 0.0
        %2241 = vmatpush1.msra.mxu0 0.0
        %2242 = vmatprep.subr.mxu0 0.0
        %2243 = vmatpush1.msra.mxu0 0.0
        %2244 = vmatprep.subr.mxu0 0.0
        %2245 = vmatpush1.msra.mxu0 0.0
        %2246 = vmatprep.subr.mxu0 0.0
        %2247 = vmatpush1.msra.mxu0 0.0
        %2248 = vmatprep.subr.mxu0 0.0
        %2249 = vmatpush1.msra.mxu0 0.0
        %2250 = vmatprep.subr.mxu0 0.0
        %2251 = vmatpush1.msra.mxu0 0.0
        %2252 = vmatprep.subr.mxu0 0.0
        %2253 = vmatpush1.msra.mxu0 0.0
        %2254 = vmatprep.subr.mxu0 0.0
        %2255 = vmatpush1.msra.mxu0 0.0
        %2256 = vmatprep.subr.mxu0 0.0
        %2257 = vmatpush1.msra.mxu0 0.0
        %2258 = vmatprep.subr.mxu0 0.0
        %2259 = vmatpush1.msra.mxu0 0.0
        %2260 = vmatprep.subr.mxu0 0.0
        %2261 = vmatpush1.msra.mxu0 0.0
        %2262 = vmatprep.subr.mxu0 0.0
        %2263 = vmatpush1.msra.mxu0 0.0
        %2264 = vmatprep.subr.mxu0 0.0
        %2265 = vmatpush1.msra.mxu0 0.0
        %2266 = vmatprep.subr.mxu0 0.0
        %2267 = vmatpush1.msra.mxu0 0.0
        %2268 = vmatprep.subr.mxu0 0.0
        %2269 = vmatpush1.msra.mxu0 0.0
        %2270 = vmatprep.subr.mxu0 0.0
        %2271 = vmatpush1.msra.mxu0 0.0
        %2272 = vmatprep.subr.mxu0 0.0
        %2273 = vmatpush1.msra.mxu0 0.0
        %2274 = vmatprep.subr.mxu0 0.0
        %2275 = vmatpush1.msra.mxu0 0.0
        %2276 = vmatprep.subr.mxu0 0.0
        %2277 = vmatpush1.msra.mxu0 0.0
        %2278 = vmatprep.subr.mxu0 0.0
        %2279 = vmatpush1.msra.mxu0 0.0
        %2280 = vmatprep.subr.mxu0 0.0
        %2281 = vmatpush1.msra.mxu0 0.0
        %2282 = vmatprep.subr.mxu0 0.0
        %2283 = vmatpush1.msra.mxu0 0.0
        %2284 = vmatprep.subr.mxu0 0.0
        %2285 = vmatpush1.msra.mxu0 0.0
        %2286 = vmatprep.subr.mxu0 0.0
        %2287 = vmatpush1.msra.mxu0 0.0
        %2288 = vmatprep.subr.mxu0 0.0
        %2289 = vmatpush1.msra.mxu0 0.0
        %2290 = vmatprep.mubr.f32.mxu0 0.0
        %2291 = vmatmul.mubr.f32.gmra.mrb[0].mxu0 %v2153
        %v2292 = vpop.f32.mrb[0].mxu0
        %v2293 = vadd.f32 0.0, %v2292
        %v2294 = vpop.f32.mrb[0].mxu0
        %v2295 = vadd.f32 0.0, %v2294
        %2296 = vdwg.mxu0
        %v2297 = vpack.c.bf16 %v2222, %v2222
        %v2298 = vpack.c.bf16 %v2224, %v2224
        %v2299 = vpack.c.bf16 %v2293, %v2293
        %v2300 = vpack.c.bf16 %v2295, %v2295
        %v2301 = vld [vmem:[%s10] sm:$0xff]
        %v2302 = vld [vmem:[%s10 + $0x8] sm:$0xff]
        %v2303 = vld [vmem:[%s10 + $0x10] sm:$0xff]
        %v2304 = vld [vmem:[%s10 + $0x18] sm:$0xff]
        %v2305 = vld [vmem:[%s10 + $0x20] sm:$0xff]
        %v2306 = vld [vmem:[%s10 + $0x28] sm:$0xff]
        %v2307 = vld [vmem:[%s10 + $0x30] sm:$0xff]
        %v2308 = vld [vmem:[%s10 + $0x38] sm:$0xff]
        %v2309 = vld [vmem:[%s10 + $0x40] sm:$0xff]
        %v2310 = vld [vmem:[%s10 + $0x48] sm:$0xff]
        %v2311 = vld [vmem:[%s10 + $0x50] sm:$0xff]
        %v2312 = vld [vmem:[%s10 + $0x58] sm:$0xff]
        %v2313 = vld [vmem:[%s10 + $0x60] sm:$0xff]
        %v2314 = vld [vmem:[%s10 + $0x68] sm:$0xff]
        %v2315 = vld [vmem:[%s10 + $0x70] sm:$0xff]
        %v2316 = vld [vmem:[%s10 + $0x78] sm:$0xff]
        %v2317 = vld [vmem:[%s10 + $0x80] sm:$0xff]
        %v2318 = vld [vmem:[%s10 + $0x88] sm:$0xff]
        %v2319 = vld [vmem:[%s10 + $0x90] sm:$0xff]
        %v2320 = vld [vmem:[%s10 + $0x98] sm:$0xff]
        %v2321 = vld [vmem:[%s10 + $0xa0] sm:$0xff]
        %v2322 = vld [vmem:[%s10 + $0xa8] sm:$0xff]
        %v2323 = vld [vmem:[%s10 + $0xb0] sm:$0xff]
        %v2324 = vld [vmem:[%s10 + $0xb8] sm:$0xff]
        %v2325 = vld [vmem:[%s10 + $0xc0] sm:$0xff]
        %v2326 = vld [vmem:[%s10 + $0xc8] sm:$0xff]
        %v2327 = vld [vmem:[%s10 + $0xd0] sm:$0xff]
        %v2328 = vld [vmem:[%s10 + $0xd8] sm:$0xff]
        %v2329 = vld [vmem:[%s10 + $0xe0] sm:$0xff]
        %v2330 = vld [vmem:[%s10 + $0xe8] sm:$0xff]
        %v2331 = vld [vmem:[%s10 + $0xf0] sm:$0xff]
        %v2332 = vld [vmem:[%s10 + $0xf8] sm:$0xff]
        %v2333 = vld [vmem:[%s10 + $0x100] sm:$0xff]
        %v2334 = vld [vmem:[%s10 + $0x108] sm:$0xff]
        %v2335 = vld [vmem:[%s10 + $0x110] sm:$0xff]
        %v2336 = vld [vmem:[%s10 + $0x118] sm:$0xff]
        %v2337 = vld [vmem:[%s10 + $0x120] sm:$0xff]
        %v2338 = vld [vmem:[%s10 + $0x128] sm:$0xff]
        %v2339 = vld [vmem:[%s10 + $0x130] sm:$0xff]
        %v2340 = vld [vmem:[%s10 + $0x138] sm:$0xff]
        %v2341 = vld [vmem:[%s10 + $0x140] sm:$0xff]
        %v2342 = vld [vmem:[%s10 + $0x148] sm:$0xff]
        %v2343 = vld [vmem:[%s10 + $0x150] sm:$0xff]
        %v2344 = vld [vmem:[%s10 + $0x158] sm:$0xff]
        %v2345 = vld [vmem:[%s10 + $0x160] sm:$0xff]
        %v2346 = vld [vmem:[%s10 + $0x168] sm:$0xff]
        %v2347 = vld [vmem:[%s10 + $0x170] sm:$0xff]
        %v2348 = vld [vmem:[%s10 + $0x178] sm:$0xff]
        %v2349 = vld [vmem:[%s10 + $0x180] sm:$0xff]
        %v2350 = vld [vmem:[%s10 + $0x188] sm:$0xff]
        %v2351 = vld [vmem:[%s10 + $0x190] sm:$0xff]
        %v2352 = vld [vmem:[%s10 + $0x198] sm:$0xff]
        %v2353 = vld [vmem:[%s10 + $0x1a0] sm:$0xff]
        %v2354 = vld [vmem:[%s10 + $0x1a8] sm:$0xff]
        %v2355 = vld [vmem:[%s10 + $0x1b0] sm:$0xff]
        %v2356 = vld [vmem:[%s10 + $0x1b8] sm:$0xff]
        %v2357 = vld [vmem:[%s10 + $0x1c0] sm:$0xff]
        %v2358 = vld [vmem:[%s10 + $0x1c8] sm:$0xff]
        %v2359 = vld [vmem:[%s10 + $0x1d0] sm:$0xff]
        %v2360 = vld [vmem:[%s10 + $0x1d8] sm:$0xff]
        %v2361 = vld [vmem:[%s10 + $0x1e0] sm:$0xff]
        %v2362 = vld [vmem:[%s10 + $0x1e8] sm:$0xff]
        %v2363 = vld [vmem:[%s10 + $0x1f0] sm:$0xff]
        %v2364 = vld [vmem:[%s10 + $0x1f8] sm:$0xff]
        %v2365 = vld [vmem:[%s10 + $0x200] sm:$0xff]
        %v2366 = vld [vmem:[%s10 + $0x208] sm:$0xff]
        %v2367 = vld [vmem:[%s10 + $0x210] sm:$0xff]
        %v2368 = vld [vmem:[%s10 + $0x218] sm:$0xff]
        %v2369 = vld [vmem:[%s10 + $0x220] sm:$0xff]
        %v2370 = vld [vmem:[%s10 + $0x228] sm:$0xff]
        %v2371 = vld [vmem:[%s10 + $0x230] sm:$0xff]
        %v2372 = vld [vmem:[%s10 + $0x238] sm:$0xff]
        %v2373 = vld [vmem:[%s10 + $0x240] sm:$0xff]
        %v2374 = vld [vmem:[%s10 + $0x248] sm:$0xff]
        %v2375 = vld [vmem:[%s10 + $0x250] sm:$0xff]
        %v2376 = vld [vmem:[%s10 + $0x258] sm:$0xff]
        %v2377 = vld [vmem:[%s10 + $0x260] sm:$0xff]
        %v2378 = vld [vmem:[%s10 + $0x268] sm:$0xff]
        %v2379 = vld [vmem:[%s10 + $0x270] sm:$0xff]
        %v2380 = vld [vmem:[%s10 + $0x278] sm:$0xff]
        %v2381 = vld [vmem:[%s10 + $0x280] sm:$0xff]
        %v2382 = vld [vmem:[%s10 + $0x288] sm:$0xff]
        %v2383 = vld [vmem:[%s10 + $0x290] sm:$0xff]
        %v2384 = vld [vmem:[%s10 + $0x298] sm:$0xff]
        %v2385 = vld [vmem:[%s10 + $0x2a0] sm:$0xff]
        %v2386 = vld [vmem:[%s10 + $0x2a8] sm:$0xff]
        %v2387 = vld [vmem:[%s10 + $0x2b0] sm:$0xff]
        %v2388 = vld [vmem:[%s10 + $0x2b8] sm:$0xff]
        %v2389 = vld [vmem:[%s10 + $0x2c0] sm:$0xff]
        %v2390 = vld [vmem:[%s10 + $0x2c8] sm:$0xff]
        %v2391 = vld [vmem:[%s10 + $0x2d0] sm:$0xff]
        %v2392 = vld [vmem:[%s10 + $0x2d8] sm:$0xff]
        %v2393 = vld [vmem:[%s10 + $0x2e0] sm:$0xff]
        %v2394 = vld [vmem:[%s10 + $0x2e8] sm:$0xff]
        %v2395 = vld [vmem:[%s10 + $0x2f0] sm:$0xff]
        %v2396 = vld [vmem:[%s10 + $0x2f8] sm:$0xff]
        %v2397 = vld [vmem:[%s10 + $0x300] sm:$0xff]
        %v2398 = vld [vmem:[%s10 + $0x308] sm:$0xff]
        %v2399 = vld [vmem:[%s10 + $0x310] sm:$0xff]
        %v2400 = vld [vmem:[%s10 + $0x318] sm:$0xff]
        %v2401 = vld [vmem:[%s10 + $0x320] sm:$0xff]
        %v2402 = vld [vmem:[%s10 + $0x328] sm:$0xff]
        %v2403 = vld [vmem:[%s10 + $0x330] sm:$0xff]
        %v2404 = vld [vmem:[%s10 + $0x338] sm:$0xff]
        %v2405 = vld [vmem:[%s10 + $0x340] sm:$0xff]
        %v2406 = vld [vmem:[%s10 + $0x348] sm:$0xff]
        %v2407 = vld [vmem:[%s10 + $0x350] sm:$0xff]
        %v2408 = vld [vmem:[%s10 + $0x358] sm:$0xff]
        %v2409 = vld [vmem:[%s10 + $0x360] sm:$0xff]
        %v2410 = vld [vmem:[%s10 + $0x368] sm:$0xff]
        %v2411 = vld [vmem:[%s10 + $0x370] sm:$0xff]
        %v2412 = vld [vmem:[%s10 + $0x378] sm:$0xff]
        %v2413 = vld [vmem:[%s10 + $0x380] sm:$0xff]
        %v2414 = vld [vmem:[%s10 + $0x388] sm:$0xff]
        %v2415 = vld [vmem:[%s10 + $0x390] sm:$0xff]
        %v2416 = vld [vmem:[%s10 + $0x398] sm:$0xff]
        %v2417 = vld [vmem:[%s10 + $0x3a0] sm:$0xff]
        %v2418 = vld [vmem:[%s10 + $0x3a8] sm:$0xff]
        %v2419 = vld [vmem:[%s10 + $0x3b0] sm:$0xff]
        %v2420 = vld [vmem:[%s10 + $0x3b8] sm:$0xff]
        %v2421 = vld [vmem:[%s10 + $0x3c0] sm:$0xff]
        %v2422 = vld [vmem:[%s10 + $0x3c8] sm:$0xff]
        %v2423 = vld [vmem:[%s10 + $0x3d0] sm:$0xff]
        %v2424 = vld [vmem:[%s10 + $0x3d8] sm:$0xff]
        %v2425 = vld [vmem:[%s10 + $0x3e0] sm:$0xff]
        %v2426 = vld [vmem:[%s10 + $0x3e8] sm:$0xff]
        %v2427 = vld [vmem:[%s10 + $0x3f0] sm:$0xff]
        %v2428 = vld [vmem:[%s10 + $0x3f8] sm:$0xff]
        %v2429 = vld [vmem:[%s10 + $0x400] sm:$0xff]
        %v2430 = vld [vmem:[%s10 + $0x408] sm:$0xff]
        %v2431 = vld [vmem:[%s10 + $0x410] sm:$0xff]
        %v2432 = vld [vmem:[%s10 + $0x418] sm:$0xff]
        %v2433 = vld [vmem:[%s10 + $0x420] sm:$0xff]
        %v2434 = vld [vmem:[%s10 + $0x428] sm:$0xff]
        %v2435 = vld [vmem:[%s10 + $0x430] sm:$0xff]
        %v2436 = vld [vmem:[%s10 + $0x438] sm:$0xff]
        %v2437 = vld [vmem:[%s10 + $0x440] sm:$0xff]
        %v2438 = vld [vmem:[%s10 + $0x448] sm:$0xff]
        %v2439 = vld [vmem:[%s10 + $0x450] sm:$0xff]
        %v2440 = vld [vmem:[%s10 + $0x458] sm:$0xff]
        %v2441 = vld [vmem:[%s10 + $0x460] sm:$0xff]
        %v2442 = vld [vmem:[%s10 + $0x468] sm:$0xff]
        %v2443 = vld [vmem:[%s10 + $0x470] sm:$0xff]
        %v2444 = vld [vmem:[%s10 + $0x478] sm:$0xff]
        %v2445 = vld [vmem:[%s10 + $0x480] sm:$0xff]
        %v2446 = vld [vmem:[%s10 + $0x488] sm:$0xff]
        %v2447 = vld [vmem:[%s10 + $0x490] sm:$0xff]
        %v2448 = vld [vmem:[%s10 + $0x498] sm:$0xff]
        %v2449 = vld [vmem:[%s10 + $0x4a0] sm:$0xff]
        %v2450 = vld [vmem:[%s10 + $0x4a8] sm:$0xff]
        %v2451 = vld [vmem:[%s10 + $0x4b0] sm:$0xff]
        %v2452 = vld [vmem:[%s10 + $0x4b8] sm:$0xff]
        %v2453 = vld [vmem:[%s10 + $0x4c0] sm:$0xff]
        %v2454 = vld [vmem:[%s10 + $0x4c8] sm:$0xff]
        %v2455 = vld [vmem:[%s10 + $0x4d0] sm:$0xff]
        %v2456 = vld [vmem:[%s10 + $0x4d8] sm:$0xff]
        %v2457 = vld [vmem:[%s10 + $0x4e0] sm:$0xff]
        %v2458 = vld [vmem:[%s10 + $0x4e8] sm:$0xff]
        %v2459 = vld [vmem:[%s10 + $0x4f0] sm:$0xff]
        %v2460 = vld [vmem:[%s10 + $0x4f8] sm:$0xff]
        %v2461 = vld [vmem:[%s10 + $0x500] sm:$0xff]
        %v2462 = vld [vmem:[%s10 + $0x508] sm:$0xff]
        %v2463 = vld [vmem:[%s10 + $0x510] sm:$0xff]
        %v2464 = vld [vmem:[%s10 + $0x518] sm:$0xff]
        %v2465 = vld [vmem:[%s10 + $0x520] sm:$0xff]
        %v2466 = vld [vmem:[%s10 + $0x528] sm:$0xff]
        %v2467 = vld [vmem:[%s10 + $0x530] sm:$0xff]
        %v2468 = vld [vmem:[%s10 + $0x538] sm:$0xff]
        %v2469 = vld [vmem:[%s10 + $0x540] sm:$0xff]
        %v2470 = vld [vmem:[%s10 + $0x548] sm:$0xff]
        %v2471 = vld [vmem:[%s10 + $0x550] sm:$0xff]
        %v2472 = vld [vmem:[%s10 + $0x558] sm:$0xff]
        %v2473 = vld [vmem:[%s10 + $0x560] sm:$0xff]
        %v2474 = vld [vmem:[%s10 + $0x568] sm:$0xff]
        %v2475 = vld [vmem:[%s10 + $0x570] sm:$0xff]
        %v2476 = vld [vmem:[%s10 + $0x578] sm:$0xff]
        %v2477 = vld [vmem:[%s10 + $0x580] sm:$0xff]
        %v2478 = vld [vmem:[%s10 + $0x588] sm:$0xff]
        %v2479 = vld [vmem:[%s10 + $0x590] sm:$0xff]
        %v2480 = vld [vmem:[%s10 + $0x598] sm:$0xff]
        %v2481 = vld [vmem:[%s10 + $0x5a0] sm:$0xff]
        %v2482 = vld [vmem:[%s10 + $0x5a8] sm:$0xff]
        %v2483 = vld [vmem:[%s10 + $0x5b0] sm:$0xff]
        %v2484 = vld [vmem:[%s10 + $0x5b8] sm:$0xff]
        %v2485 = vld [vmem:[%s10 + $0x5c0] sm:$0xff]
        %v2486 = vld [vmem:[%s10 + $0x5c8] sm:$0xff]
        %v2487 = vld [vmem:[%s10 + $0x5d0] sm:$0xff]
        %v2488 = vld [vmem:[%s10 + $0x5d8] sm:$0xff]
        %v2489 = vld [vmem:[%s10 + $0x5e0] sm:$0xff]
        %v2490 = vld [vmem:[%s10 + $0x5e8] sm:$0xff]
        %v2491 = vld [vmem:[%s10 + $0x5f0] sm:$0xff]
        %v2492 = vld [vmem:[%s10 + $0x5f8] sm:$0xff]
        %v2493 = vld [vmem:[%s10 + $0x600] sm:$0xff]
        %v2494 = vld [vmem:[%s10 + $0x608] sm:$0xff]
        %v2495 = vld [vmem:[%s10 + $0x610] sm:$0xff]
        %v2496 = vld [vmem:[%s10 + $0x618] sm:$0xff]
        %v2497 = vld [vmem:[%s10 + $0x620] sm:$0xff]
        %v2498 = vld [vmem:[%s10 + $0x628] sm:$0xff]
        %v2499 = vld [vmem:[%s10 + $0x630] sm:$0xff]
        %v2500 = vld [vmem:[%s10 + $0x638] sm:$0xff]
        %v2501 = vld [vmem:[%s10 + $0x640] sm:$0xff]
        %v2502 = vld [vmem:[%s10 + $0x648] sm:$0xff]
        %v2503 = vld [vmem:[%s10 + $0x650] sm:$0xff]
        %v2504 = vld [vmem:[%s10 + $0x658] sm:$0xff]
        %v2505 = vld [vmem:[%s10 + $0x660] sm:$0xff]
        %v2506 = vld [vmem:[%s10 + $0x668] sm:$0xff]
        %v2507 = vld [vmem:[%s10 + $0x670] sm:$0xff]
        %v2508 = vld [vmem:[%s10 + $0x678] sm:$0xff]
        %v2509 = vld [vmem:[%s10 + $0x680] sm:$0xff]
        %v2510 = vld [vmem:[%s10 + $0x688] sm:$0xff]
        %v2511 = vld [vmem:[%s10 + $0x690] sm:$0xff]
        %v2512 = vld [vmem:[%s10 + $0x698] sm:$0xff]
        %v2513 = vld [vmem:[%s10 + $0x6a0] sm:$0xff]
        %v2514 = vld [vmem:[%s10 + $0x6a8] sm:$0xff]
        %v2515 = vld [vmem:[%s10 + $0x6b0] sm:$0xff]
        %v2516 = vld [vmem:[%s10 + $0x6b8] sm:$0xff]
        %v2517 = vld [vmem:[%s10 + $0x6c0] sm:$0xff]
        %v2518 = vld [vmem:[%s10 + $0x6c8] sm:$0xff]
        %v2519 = vld [vmem:[%s10 + $0x6d0] sm:$0xff]
        %v2520 = vld [vmem:[%s10 + $0x6d8] sm:$0xff]
        %v2521 = vld [vmem:[%s10 + $0x6e0] sm:$0xff]
        %v2522 = vld [vmem:[%s10 + $0x6e8] sm:$0xff]
        %v2523 = vld [vmem:[%s10 + $0x6f0] sm:$0xff]
        %v2524 = vld [vmem:[%s10 + $0x6f8] sm:$0xff]
        %v2525 = vld [vmem:[%s10 + $0x700] sm:$0xff]
        %v2526 = vld [vmem:[%s10 + $0x708] sm:$0xff]
        %v2527 = vld [vmem:[%s10 + $0x710] sm:$0xff]
        %v2528 = vld [vmem:[%s10 + $0x718] sm:$0xff]
        %v2529 = vld [vmem:[%s10 + $0x720] sm:$0xff]
        %v2530 = vld [vmem:[%s10 + $0x728] sm:$0xff]
        %v2531 = vld [vmem:[%s10 + $0x730] sm:$0xff]
        %v2532 = vld [vmem:[%s10 + $0x738] sm:$0xff]
        %v2533 = vld [vmem:[%s10 + $0x740] sm:$0xff]
        %v2534 = vld [vmem:[%s10 + $0x748] sm:$0xff]
        %v2535 = vld [vmem:[%s10 + $0x750] sm:$0xff]
        %v2536 = vld [vmem:[%s10 + $0x758] sm:$0xff]
        %v2537 = vld [vmem:[%s10 + $0x760] sm:$0xff]
        %v2538 = vld [vmem:[%s10 + $0x768] sm:$0xff]
        %v2539 = vld [vmem:[%s10 + $0x770] sm:$0xff]
        %v2540 = vld [vmem:[%s10 + $0x778] sm:$0xff]
        %v2541 = vld [vmem:[%s10 + $0x780] sm:$0xff]
        %v2542 = vld [vmem:[%s10 + $0x788] sm:$0xff]
        %v2543 = vld [vmem:[%s10 + $0x790] sm:$0xff]
        %v2544 = vld [vmem:[%s10 + $0x798] sm:$0xff]
        %v2545 = vld [vmem:[%s10 + $0x7a0] sm:$0xff]
        %v2546 = vld [vmem:[%s10 + $0x7a8] sm:$0xff]
        %v2547 = vld [vmem:[%s10 + $0x7b0] sm:$0xff]
        %v2548 = vld [vmem:[%s10 + $0x7b8] sm:$0xff]
        %v2549 = vld [vmem:[%s10 + $0x7c0] sm:$0xff]
        %v2550 = vld [vmem:[%s10 + $0x7c8] sm:$0xff]
        %v2551 = vld [vmem:[%s10 + $0x7d0] sm:$0xff]
        %v2552 = vld [vmem:[%s10 + $0x7d8] sm:$0xff]
        %v2553 = vld [vmem:[%s10 + $0x7e0] sm:$0xff]
        %v2554 = vld [vmem:[%s10 + $0x7e8] sm:$0xff]
        %v2555 = vld [vmem:[%s10 + $0x7f0] sm:$0xff]
        %v2556 = vld [vmem:[%s10 + $0x7f8] sm:$0xff]
        %v2557 = vld [vmem:[%s11] sm:$0xff]
        %v2559 = vlaneseq
        %v2560 = vshrl.u32 %v2559, 7
        %v2561 = vsub.s32 0, %v2560
        %v2562 = vrot.slane %v2557, %v2561
        %v2563 = vlaneseq
        %v2564 = vshrl.u32 %v2563, 7
        %v2565 = vsub.s32 1, %v2564
        %v2566 = vrot.slane %v2557, %v2565
        %v2567 = vlaneseq
        %v2568 = vshrl.u32 %v2567, 7
        %v2569 = vsub.s32 2, %v2568
        %v2570 = vrot.slane %v2557, %v2569
        %v2571 = vlaneseq
        %v2572 = vshrl.u32 %v2571, 7
        %v2573 = vsub.s32 3, %v2572
        %v2574 = vrot.slane %v2557, %v2573
        %v2575 = vlaneseq
        %v2576 = vshrl.u32 %v2575, 7
        %v2577 = vsub.s32 4, %v2576
        %v2578 = vrot.slane %v2557, %v2577
        %v2579 = vlaneseq
        %v2580 = vshrl.u32 %v2579, 7
        %v2581 = vsub.s32 5, %v2580
        %v2582 = vrot.slane %v2557, %v2581
        %v2583 = vlaneseq
        %v2584 = vshrl.u32 %v2583, 7
        %v2585 = vsub.s32 6, %v2584
        %v2586 = vrot.slane %v2557, %v2585
        %v2587 = vlaneseq
        %v2588 = vshrl.u32 %v2587, 7
        %v2589 = vsub.s32 7, %v2588
        %v2590 = vrot.slane %v2557, %v2589
        %v2855 = vunpack.c.l.b16 %v2301
        %v2856 = vunpack.c.h.b16 %v2301
        %v2857 = vunpack.c.l.b16 %v2302
        %v2858 = vunpack.c.h.b16 %v2302
        %v2859 = vunpack.c.l.b16 %v2303
        %v2860 = vunpack.c.h.b16 %v2303
        %v2861 = vunpack.c.l.b16 %v2304
        %v2862 = vunpack.c.h.b16 %v2304
        %v2863 = vunpack.c.l.b16 %v2305
        %v2864 = vunpack.c.h.b16 %v2305
        %v2865 = vunpack.c.l.b16 %v2306
        %v2866 = vunpack.c.h.b16 %v2306
        %v2867 = vunpack.c.l.b16 %v2307
        %v2868 = vunpack.c.h.b16 %v2307
        %v2869 = vunpack.c.l.b16 %v2308
        %v2870 = vunpack.c.h.b16 %v2308
        %v2871 = vunpack.c.l.b16 %v2309
        %v2872 = vunpack.c.h.b16 %v2309
        %v2873 = vunpack.c.l.b16 %v2310
        %v2874 = vunpack.c.h.b16 %v2310
        %v2875 = vunpack.c.l.b16 %v2311
        %v2876 = vunpack.c.h.b16 %v2311
        %v2877 = vunpack.c.l.b16 %v2312
        %v2878 = vunpack.c.h.b16 %v2312
        %v2879 = vunpack.c.l.b16 %v2313
        %v2880 = vunpack.c.h.b16 %v2313
        %v2881 = vunpack.c.l.b16 %v2314
        %v2882 = vunpack.c.h.b16 %v2314
        %v2883 = vunpack.c.l.b16 %v2315
        %v2884 = vunpack.c.h.b16 %v2315
        %v2885 = vunpack.c.l.b16 %v2316
        %v2886 = vunpack.c.h.b16 %v2316
        %v2887 = vunpack.c.l.b16 %v2317
        %v2888 = vunpack.c.h.b16 %v2317
        %v2889 = vunpack.c.l.b16 %v2318
        %v2890 = vunpack.c.h.b16 %v2318
        %v2891 = vunpack.c.l.b16 %v2319
        %v2892 = vunpack.c.h.b16 %v2319
        %v2893 = vunpack.c.l.b16 %v2320
        %v2894 = vunpack.c.h.b16 %v2320
        %v2895 = vunpack.c.l.b16 %v2321
        %v2896 = vunpack.c.h.b16 %v2321
        %v2897 = vunpack.c.l.b16 %v2322
        %v2898 = vunpack.c.h.b16 %v2322
        %v2899 = vunpack.c.l.b16 %v2323
        %v2900 = vunpack.c.h.b16 %v2323
        %v2901 = vunpack.c.l.b16 %v2324
        %v2902 = vunpack.c.h.b16 %v2324
        %v2903 = vunpack.c.l.b16 %v2325
        %v2904 = vunpack.c.h.b16 %v2325
        %v2905 = vunpack.c.l.b16 %v2326
        %v2906 = vunpack.c.h.b16 %v2326
        %v2907 = vunpack.c.l.b16 %v2327
        %v2908 = vunpack.c.h.b16 %v2327
        %v2909 = vunpack.c.l.b16 %v2328
        %v2910 = vunpack.c.h.b16 %v2328
        %v2911 = vunpack.c.l.b16 %v2329
        %v2912 = vunpack.c.h.b16 %v2329
        %v2913 = vunpack.c.l.b16 %v2330
        %v2914 = vunpack.c.h.b16 %v2330
        %v2915 = vunpack.c.l.b16 %v2331
        %v2916 = vunpack.c.h.b16 %v2331
        %v2917 = vunpack.c.l.b16 %v2332
        %v2918 = vunpack.c.h.b16 %v2332
        %v2919 = vunpack.c.l.b16 %v2333
        %v2920 = vunpack.c.h.b16 %v2333
        %v2921 = vunpack.c.l.b16 %v2334
        %v2922 = vunpack.c.h.b16 %v2334
        %v2923 = vunpack.c.l.b16 %v2335
        %v2924 = vunpack.c.h.b16 %v2335
        %v2925 = vunpack.c.l.b16 %v2336
        %v2926 = vunpack.c.h.b16 %v2336
        %v2927 = vunpack.c.l.b16 %v2337
        %v2928 = vunpack.c.h.b16 %v2337
        %v2929 = vunpack.c.l.b16 %v2338
        %v2930 = vunpack.c.h.b16 %v2338
        %v2931 = vunpack.c.l.b16 %v2339
        %v2932 = vunpack.c.h.b16 %v2339
        %v2933 = vunpack.c.l.b16 %v2340
        %v2934 = vunpack.c.h.b16 %v2340
        %v2935 = vunpack.c.l.b16 %v2341
        %v2936 = vunpack.c.h.b16 %v2341
        %v2937 = vunpack.c.l.b16 %v2342
        %v2938 = vunpack.c.h.b16 %v2342
        %v2939 = vunpack.c.l.b16 %v2343
        %v2940 = vunpack.c.h.b16 %v2343
        %v2941 = vunpack.c.l.b16 %v2344
        %v2942 = vunpack.c.h.b16 %v2344
        %v2943 = vunpack.c.l.b16 %v2345
        %v2944 = vunpack.c.h.b16 %v2345
        %v2945 = vunpack.c.l.b16 %v2346
        %v2946 = vunpack.c.h.b16 %v2346
        %v2947 = vunpack.c.l.b16 %v2347
        %v2948 = vunpack.c.h.b16 %v2347
        %v2949 = vunpack.c.l.b16 %v2348
        %v2950 = vunpack.c.h.b16 %v2348
        %v2951 = vunpack.c.l.b16 %v2349
        %v2952 = vunpack.c.h.b16 %v2349
        %v2953 = vunpack.c.l.b16 %v2350
        %v2954 = vunpack.c.h.b16 %v2350
        %v2955 = vunpack.c.l.b16 %v2351
        %v2956 = vunpack.c.h.b16 %v2351
        %v2957 = vunpack.c.l.b16 %v2352
        %v2958 = vunpack.c.h.b16 %v2352
        %v2959 = vunpack.c.l.b16 %v2353
        %v2960 = vunpack.c.h.b16 %v2353
        %v2961 = vunpack.c.l.b16 %v2354
        %v2962 = vunpack.c.h.b16 %v2354
        %v2963 = vunpack.c.l.b16 %v2355
        %v2964 = vunpack.c.h.b16 %v2355
        %v2965 = vunpack.c.l.b16 %v2356
        %v2966 = vunpack.c.h.b16 %v2356
        %v2967 = vunpack.c.l.b16 %v2357
        %v2968 = vunpack.c.h.b16 %v2357
        %v2969 = vunpack.c.l.b16 %v2358
        %v2970 = vunpack.c.h.b16 %v2358
        %v2971 = vunpack.c.l.b16 %v2359
        %v2972 = vunpack.c.h.b16 %v2359
        %v2973 = vunpack.c.l.b16 %v2360
        %v2974 = vunpack.c.h.b16 %v2360
        %v2975 = vunpack.c.l.b16 %v2361
        %v2976 = vunpack.c.h.b16 %v2361
        %v2977 = vunpack.c.l.b16 %v2362
        %v2978 = vunpack.c.h.b16 %v2362
        %v2979 = vunpack.c.l.b16 %v2363
        %v2980 = vunpack.c.h.b16 %v2363
        %v2981 = vunpack.c.l.b16 %v2364
        %v2982 = vunpack.c.h.b16 %v2364
        %v2983 = vunpack.c.l.b16 %v2365
        %v2984 = vunpack.c.h.b16 %v2365
        %v2985 = vunpack.c.l.b16 %v2366
        %v2986 = vunpack.c.h.b16 %v2366
        %v2987 = vunpack.c.l.b16 %v2367
        %v2988 = vunpack.c.h.b16 %v2367
        %v2989 = vunpack.c.l.b16 %v2368
        %v2990 = vunpack.c.h.b16 %v2368
        %v2991 = vunpack.c.l.b16 %v2369
        %v2992 = vunpack.c.h.b16 %v2369
        %v2993 = vunpack.c.l.b16 %v2370
        %v2994 = vunpack.c.h.b16 %v2370
        %v2995 = vunpack.c.l.b16 %v2371
        %v2996 = vunpack.c.h.b16 %v2371
        %v2997 = vunpack.c.l.b16 %v2372
        %v2998 = vunpack.c.h.b16 %v2372
        %v2999 = vunpack.c.l.b16 %v2373
        %v3000 = vunpack.c.h.b16 %v2373
        %v3001 = vunpack.c.l.b16 %v2374
        %v3002 = vunpack.c.h.b16 %v2374
        %v3003 = vunpack.c.l.b16 %v2375
        %v3004 = vunpack.c.h.b16 %v2375
        %v3005 = vunpack.c.l.b16 %v2376
        %v3006 = vunpack.c.h.b16 %v2376
        %v3007 = vunpack.c.l.b16 %v2377
        %v3008 = vunpack.c.h.b16 %v2377
        %v3009 = vunpack.c.l.b16 %v2378
        %v3010 = vunpack.c.h.b16 %v2378
        %v3011 = vunpack.c.l.b16 %v2379
        %v3012 = vunpack.c.h.b16 %v2379
        %v3013 = vunpack.c.l.b16 %v2380
        %v3014 = vunpack.c.h.b16 %v2380
        %v3015 = vunpack.c.l.b16 %v2381
        %v3016 = vunpack.c.h.b16 %v2381
        %v3017 = vunpack.c.l.b16 %v2382
        %v3018 = vunpack.c.h.b16 %v2382
        %v3019 = vunpack.c.l.b16 %v2383
        %v3020 = vunpack.c.h.b16 %v2383
        %v3021 = vunpack.c.l.b16 %v2384
        %v3022 = vunpack.c.h.b16 %v2384
        %v3023 = vunpack.c.l.b16 %v2385
        %v3024 = vunpack.c.h.b16 %v2385
        %v3025 = vunpack.c.l.b16 %v2386
        %v3026 = vunpack.c.h.b16 %v2386
        %v3027 = vunpack.c.l.b16 %v2387
        %v3028 = vunpack.c.h.b16 %v2387
        %v3029 = vunpack.c.l.b16 %v2388
        %v3030 = vunpack.c.h.b16 %v2388
        %v3031 = vunpack.c.l.b16 %v2389
        %v3032 = vunpack.c.h.b16 %v2389
        %v3033 = vunpack.c.l.b16 %v2390
        %v3034 = vunpack.c.h.b16 %v2390
        %v3035 = vunpack.c.l.b16 %v2391
        %v3036 = vunpack.c.h.b16 %v2391
        %v3037 = vunpack.c.l.b16 %v2392
        %v3038 = vunpack.c.h.b16 %v2392
        %v3039 = vunpack.c.l.b16 %v2393
        %v3040 = vunpack.c.h.b16 %v2393
        %v3041 = vunpack.c.l.b16 %v2394
        %v3042 = vunpack.c.h.b16 %v2394
        %v3043 = vunpack.c.l.b16 %v2395
        %v3044 = vunpack.c.h.b16 %v2395
        %v3045 = vunpack.c.l.b16 %v2396
        %v3046 = vunpack.c.h.b16 %v2396
        %v3047 = vunpack.c.l.b16 %v2397
        %v3048 = vunpack.c.h.b16 %v2397
        %v3049 = vunpack.c.l.b16 %v2398
        %v3050 = vunpack.c.h.b16 %v2398
        %v3051 = vunpack.c.l.b16 %v2399
        %v3052 = vunpack.c.h.b16 %v2399
        %v3053 = vunpack.c.l.b16 %v2400
        %v3054 = vunpack.c.h.b16 %v2400
        %v3055 = vunpack.c.l.b16 %v2401
        %v3056 = vunpack.c.h.b16 %v2401
        %v3057 = vunpack.c.l.b16 %v2402
        %v3058 = vunpack.c.h.b16 %v2402
        %v3059 = vunpack.c.l.b16 %v2403
        %v3060 = vunpack.c.h.b16 %v2403
        %v3061 = vunpack.c.l.b16 %v2404
        %v3062 = vunpack.c.h.b16 %v2404
        %v3063 = vunpack.c.l.b16 %v2405
        %v3064 = vunpack.c.h.b16 %v2405
        %v3065 = vunpack.c.l.b16 %v2406
        %v3066 = vunpack.c.h.b16 %v2406
        %v3067 = vunpack.c.l.b16 %v2407
        %v3068 = vunpack.c.h.b16 %v2407
        %v3069 = vunpack.c.l.b16 %v2408
        %v3070 = vunpack.c.h.b16 %v2408
        %v3071 = vunpack.c.l.b16 %v2409
        %v3072 = vunpack.c.h.b16 %v2409
        %v3073 = vunpack.c.l.b16 %v2410
        %v3074 = vunpack.c.h.b16 %v2410
        %v3075 = vunpack.c.l.b16 %v2411
        %v3076 = vunpack.c.h.b16 %v2411
        %v3077 = vunpack.c.l.b16 %v2412
        %v3078 = vunpack.c.h.b16 %v2412
        %v3079 = vunpack.c.l.b16 %v2413
        %v3080 = vunpack.c.h.b16 %v2413
        %v3081 = vunpack.c.l.b16 %v2414
        %v3082 = vunpack.c.h.b16 %v2414
        %v3083 = vunpack.c.l.b16 %v2415
        %v3084 = vunpack.c.h.b16 %v2415
        %v3085 = vunpack.c.l.b16 %v2416
        %v3086 = vunpack.c.h.b16 %v2416
        %v3087 = vunpack.c.l.b16 %v2417
        %v3088 = vunpack.c.h.b16 %v2417
        %v3089 = vunpack.c.l.b16 %v2418
        %v3090 = vunpack.c.h.b16 %v2418
        %v3091 = vunpack.c.l.b16 %v2419
        %v3092 = vunpack.c.h.b16 %v2419
        %v3093 = vunpack.c.l.b16 %v2420
        %v3094 = vunpack.c.h.b16 %v2420
        %v3095 = vunpack.c.l.b16 %v2421
        %v3096 = vunpack.c.h.b16 %v2421
        %v3097 = vunpack.c.l.b16 %v2422
        %v3098 = vunpack.c.h.b16 %v2422
        %v3099 = vunpack.c.l.b16 %v2423
        %v3100 = vunpack.c.h.b16 %v2423
        %v3101 = vunpack.c.l.b16 %v2424
        %v3102 = vunpack.c.h.b16 %v2424
        %v3103 = vunpack.c.l.b16 %v2425
        %v3104 = vunpack.c.h.b16 %v2425
        %v3105 = vunpack.c.l.b16 %v2426
        %v3106 = vunpack.c.h.b16 %v2426
        %v3107 = vunpack.c.l.b16 %v2427
        %v3108 = vunpack.c.h.b16 %v2427
        %v3109 = vunpack.c.l.b16 %v2428
        %v3110 = vunpack.c.h.b16 %v2428
        %v3111 = vunpack.c.l.b16 %v2429
        %v3112 = vunpack.c.h.b16 %v2429
        %v3113 = vunpack.c.l.b16 %v2430
        %v3114 = vunpack.c.h.b16 %v2430
        %v3115 = vunpack.c.l.b16 %v2431
        %v3116 = vunpack.c.h.b16 %v2431
        %v3117 = vunpack.c.l.b16 %v2432
        %v3118 = vunpack.c.h.b16 %v2432
        %v3119 = vunpack.c.l.b16 %v2433
        %v3120 = vunpack.c.h.b16 %v2433
        %v3121 = vunpack.c.l.b16 %v2434
        %v3122 = vunpack.c.h.b16 %v2434
        %v3123 = vunpack.c.l.b16 %v2435
        %v3124 = vunpack.c.h.b16 %v2435
        %v3125 = vunpack.c.l.b16 %v2436
        %v3126 = vunpack.c.h.b16 %v2436
        %v3127 = vunpack.c.l.b16 %v2437
        %v3128 = vunpack.c.h.b16 %v2437
        %v3129 = vunpack.c.l.b16 %v2438
        %v3130 = vunpack.c.h.b16 %v2438
        %v3131 = vunpack.c.l.b16 %v2439
        %v3132 = vunpack.c.h.b16 %v2439
        %v3133 = vunpack.c.l.b16 %v2440
        %v3134 = vunpack.c.h.b16 %v2440
        %v3135 = vunpack.c.l.b16 %v2441
        %v3136 = vunpack.c.h.b16 %v2441
        %v3137 = vunpack.c.l.b16 %v2442
        %v3138 = vunpack.c.h.b16 %v2442
        %v3139 = vunpack.c.l.b16 %v2443
        %v3140 = vunpack.c.h.b16 %v2443
        %v3141 = vunpack.c.l.b16 %v2444
        %v3142 = vunpack.c.h.b16 %v2444
        %v3143 = vunpack.c.l.b16 %v2445
        %v3144 = vunpack.c.h.b16 %v2445
        %v3145 = vunpack.c.l.b16 %v2446
        %v3146 = vunpack.c.h.b16 %v2446
        %v3147 = vunpack.c.l.b16 %v2447
        %v3148 = vunpack.c.h.b16 %v2447
        %v3149 = vunpack.c.l.b16 %v2448
        %v3150 = vunpack.c.h.b16 %v2448
        %v3151 = vunpack.c.l.b16 %v2449
        %v3152 = vunpack.c.h.b16 %v2449
        %v3153 = vunpack.c.l.b16 %v2450
        %v3154 = vunpack.c.h.b16 %v2450
        %v3155 = vunpack.c.l.b16 %v2451
        %v3156 = vunpack.c.h.b16 %v2451
        %v3157 = vunpack.c.l.b16 %v2452
        %v3158 = vunpack.c.h.b16 %v2452
        %v3159 = vunpack.c.l.b16 %v2453
        %v3160 = vunpack.c.h.b16 %v2453
        %v3161 = vunpack.c.l.b16 %v2454
        %v3162 = vunpack.c.h.b16 %v2454
        %v3163 = vunpack.c.l.b16 %v2455
        %v3164 = vunpack.c.h.b16 %v2455
        %v3165 = vunpack.c.l.b16 %v2456
        %v3166 = vunpack.c.h.b16 %v2456
        %v3167 = vunpack.c.l.b16 %v2457
        %v3168 = vunpack.c.h.b16 %v2457
        %v3169 = vunpack.c.l.b16 %v2458
        %v3170 = vunpack.c.h.b16 %v2458
        %v3171 = vunpack.c.l.b16 %v2459
        %v3172 = vunpack.c.h.b16 %v2459
        %v3173 = vunpack.c.l.b16 %v2460
        %v3174 = vunpack.c.h.b16 %v2460
        %v3175 = vunpack.c.l.b16 %v2461
        %v3176 = vunpack.c.h.b16 %v2461
        %v3177 = vunpack.c.l.b16 %v2462
        %v3178 = vunpack.c.h.b16 %v2462
        %v3179 = vunpack.c.l.b16 %v2463
        %v3180 = vunpack.c.h.b16 %v2463
        %v3181 = vunpack.c.l.b16 %v2464
        %v3182 = vunpack.c.h.b16 %v2464
        %v3183 = vunpack.c.l.b16 %v2465
        %v3184 = vunpack.c.h.b16 %v2465
        %v3185 = vunpack.c.l.b16 %v2466
        %v3186 = vunpack.c.h.b16 %v2466
        %v3187 = vunpack.c.l.b16 %v2467
        %v3188 = vunpack.c.h.b16 %v2467
        %v3189 = vunpack.c.l.b16 %v2468
        %v3190 = vunpack.c.h.b16 %v2468
        %v3191 = vunpack.c.l.b16 %v2469
        %v3192 = vunpack.c.h.b16 %v2469
        %v3193 = vunpack.c.l.b16 %v2470
        %v3194 = vunpack.c.h.b16 %v2470
        %v3195 = vunpack.c.l.b16 %v2471
        %v3196 = vunpack.c.h.b16 %v2471
        %v3197 = vunpack.c.l.b16 %v2472
        %v3198 = vunpack.c.h.b16 %v2472
        %v3199 = vunpack.c.l.b16 %v2473
        %v3200 = vunpack.c.h.b16 %v2473
        %v3201 = vunpack.c.l.b16 %v2474
        %v3202 = vunpack.c.h.b16 %v2474
        %v3203 = vunpack.c.l.b16 %v2475
        %v3204 = vunpack.c.h.b16 %v2475
        %v3205 = vunpack.c.l.b16 %v2476
        %v3206 = vunpack.c.h.b16 %v2476
        %v3207 = vunpack.c.l.b16 %v2477
        %v3208 = vunpack.c.h.b16 %v2477
        %v3209 = vunpack.c.l.b16 %v2478
        %v3210 = vunpack.c.h.b16 %v2478
        %v3211 = vunpack.c.l.b16 %v2479
        %v3212 = vunpack.c.h.b16 %v2479
        %v3213 = vunpack.c.l.b16 %v2480
        %v3214 = vunpack.c.h.b16 %v2480
        %v3215 = vunpack.c.l.b16 %v2481
        %v3216 = vunpack.c.h.b16 %v2481
        %v3217 = vunpack.c.l.b16 %v2482
        %v3218 = vunpack.c.h.b16 %v2482
        %v3219 = vunpack.c.l.b16 %v2483
        %v3220 = vunpack.c.h.b16 %v2483
        %v3221 = vunpack.c.l.b16 %v2484
        %v3222 = vunpack.c.h.b16 %v2484
        %v3223 = vunpack.c.l.b16 %v2485
        %v3224 = vunpack.c.h.b16 %v2485
        %v3225 = vunpack.c.l.b16 %v2486
        %v3226 = vunpack.c.h.b16 %v2486
        %v3227 = vunpack.c.l.b16 %v2487
        %v3228 = vunpack.c.h.b16 %v2487
        %v3229 = vunpack.c.l.b16 %v2488
        %v3230 = vunpack.c.h.b16 %v2488
        %v3231 = vunpack.c.l.b16 %v2489
        %v3232 = vunpack.c.h.b16 %v2489
        %v3233 = vunpack.c.l.b16 %v2490
        %v3234 = vunpack.c.h.b16 %v2490
        %v3235 = vunpack.c.l.b16 %v2491
        %v3236 = vunpack.c.h.b16 %v2491
        %v3237 = vunpack.c.l.b16 %v2492
        %v3238 = vunpack.c.h.b16 %v2492
        %v3239 = vunpack.c.l.b16 %v2493
        %v3240 = vunpack.c.h.b16 %v2493
        %v3241 = vunpack.c.l.b16 %v2494
        %v3242 = vunpack.c.h.b16 %v2494
        %v3243 = vunpack.c.l.b16 %v2495
        %v3244 = vunpack.c.h.b16 %v2495
        %v3245 = vunpack.c.l.b16 %v2496
        %v3246 = vunpack.c.h.b16 %v2496
        %v3247 = vunpack.c.l.b16 %v2497
        %v3248 = vunpack.c.h.b16 %v2497
        %v3249 = vunpack.c.l.b16 %v2498
        %v3250 = vunpack.c.h.b16 %v2498
        %v3251 = vunpack.c.l.b16 %v2499
        %v3252 = vunpack.c.h.b16 %v2499
        %v3253 = vunpack.c.l.b16 %v2500
        %v3254 = vunpack.c.h.b16 %v2500
        %v3255 = vunpack.c.l.b16 %v2501
        %v3256 = vunpack.c.h.b16 %v2501
        %v3257 = vunpack.c.l.b16 %v2502
        %v3258 = vunpack.c.h.b16 %v2502
        %v3259 = vunpack.c.l.b16 %v2503
        %v3260 = vunpack.c.h.b16 %v2503
        %v3261 = vunpack.c.l.b16 %v2504
        %v3262 = vunpack.c.h.b16 %v2504
        %v3263 = vunpack.c.l.b16 %v2505
        %v3264 = vunpack.c.h.b16 %v2505
        %v3265 = vunpack.c.l.b16 %v2506
        %v3266 = vunpack.c.h.b16 %v2506
        %v3267 = vunpack.c.l.b16 %v2507
        %v3268 = vunpack.c.h.b16 %v2507
        %v3269 = vunpack.c.l.b16 %v2508
        %v3270 = vunpack.c.h.b16 %v2508
        %v3271 = vunpack.c.l.b16 %v2509
        %v3272 = vunpack.c.h.b16 %v2509
        %v3273 = vunpack.c.l.b16 %v2510
        %v3274 = vunpack.c.h.b16 %v2510
        %v3275 = vunpack.c.l.b16 %v2511
        %v3276 = vunpack.c.h.b16 %v2511
        %v3277 = vunpack.c.l.b16 %v2512
        %v3278 = vunpack.c.h.b16 %v2512
        %v3279 = vunpack.c.l.b16 %v2513
        %v3280 = vunpack.c.h.b16 %v2513
        %v3281 = vunpack.c.l.b16 %v2514
        %v3282 = vunpack.c.h.b16 %v2514
        %v3283 = vunpack.c.l.b16 %v2515
        %v3284 = vunpack.c.h.b16 %v2515
        %v3285 = vunpack.c.l.b16 %v2516
        %v3286 = vunpack.c.h.b16 %v2516
        %v3287 = vunpack.c.l.b16 %v2517
        %v3288 = vunpack.c.h.b16 %v2517
        %v3289 = vunpack.c.l.b16 %v2518
        %v3290 = vunpack.c.h.b16 %v2518
        %v3291 = vunpack.c.l.b16 %v2519
        %v3292 = vunpack.c.h.b16 %v2519
        %v3293 = vunpack.c.l.b16 %v2520
        %v3294 = vunpack.c.h.b16 %v2520
        %v3295 = vunpack.c.l.b16 %v2521
        %v3296 = vunpack.c.h.b16 %v2521
        %v3297 = vunpack.c.l.b16 %v2522
        %v3298 = vunpack.c.h.b16 %v2522
        %v3299 = vunpack.c.l.b16 %v2523
        %v3300 = vunpack.c.h.b16 %v2523
        %v3301 = vunpack.c.l.b16 %v2524
        %v3302 = vunpack.c.h.b16 %v2524
        %v3303 = vunpack.c.l.b16 %v2525
        %v3304 = vunpack.c.h.b16 %v2525
        %v3305 = vunpack.c.l.b16 %v2526
        %v3306 = vunpack.c.h.b16 %v2526
        %v3307 = vunpack.c.l.b16 %v2527
        %v3308 = vunpack.c.h.b16 %v2527
        %v3309 = vunpack.c.l.b16 %v2528
        %v3310 = vunpack.c.h.b16 %v2528
        %v3311 = vunpack.c.l.b16 %v2529
        %v3312 = vunpack.c.h.b16 %v2529
        %v3313 = vunpack.c.l.b16 %v2530
        %v3314 = vunpack.c.h.b16 %v2530
        %v3315 = vunpack.c.l.b16 %v2531
        %v3316 = vunpack.c.h.b16 %v2531
        %v3317 = vunpack.c.l.b16 %v2532
        %v3318 = vunpack.c.h.b16 %v2532
        %v3319 = vunpack.c.l.b16 %v2533
        %v3320 = vunpack.c.h.b16 %v2533
        %v3321 = vunpack.c.l.b16 %v2534
        %v3322 = vunpack.c.h.b16 %v2534
        %v3323 = vunpack.c.l.b16 %v2535
        %v3324 = vunpack.c.h.b16 %v2535
        %v3325 = vunpack.c.l.b16 %v2536
        %v3326 = vunpack.c.h.b16 %v2536
        %v3327 = vunpack.c.l.b16 %v2537
        %v3328 = vunpack.c.h.b16 %v2537
        %v3329 = vunpack.c.l.b16 %v2538
        %v3330 = vunpack.c.h.b16 %v2538
        %v3331 = vunpack.c.l.b16 %v2539
        %v3332 = vunpack.c.h.b16 %v2539
        %v3333 = vunpack.c.l.b16 %v2540
        %v3334 = vunpack.c.h.b16 %v2540
        %v3335 = vunpack.c.l.b16 %v2541
        %v3336 = vunpack.c.h.b16 %v2541
        %v3337 = vunpack.c.l.b16 %v2542
        %v3338 = vunpack.c.h.b16 %v2542
        %v3339 = vunpack.c.l.b16 %v2543
        %v3340 = vunpack.c.h.b16 %v2543
        %v3341 = vunpack.c.l.b16 %v2544
        %v3342 = vunpack.c.h.b16 %v2544
        %v3343 = vunpack.c.l.b16 %v2545
        %v3344 = vunpack.c.h.b16 %v2545
        %v3345 = vunpack.c.l.b16 %v2546
        %v3346 = vunpack.c.h.b16 %v2546
        %v3347 = vunpack.c.l.b16 %v2547
        %v3348 = vunpack.c.h.b16 %v2547
        %v3349 = vunpack.c.l.b16 %v2548
        %v3350 = vunpack.c.h.b16 %v2548
        %v3351 = vunpack.c.l.b16 %v2549
        %v3352 = vunpack.c.h.b16 %v2549
        %v3353 = vunpack.c.l.b16 %v2550
        %v3354 = vunpack.c.h.b16 %v2550
        %v3355 = vunpack.c.l.b16 %v2551
        %v3356 = vunpack.c.h.b16 %v2551
        %v3357 = vunpack.c.l.b16 %v2552
        %v3358 = vunpack.c.h.b16 %v2552
        %v3359 = vunpack.c.l.b16 %v2553
        %v3360 = vunpack.c.h.b16 %v2553
        %v3361 = vunpack.c.l.b16 %v2554
        %v3362 = vunpack.c.h.b16 %v2554
        %v3363 = vunpack.c.l.b16 %v2555
        %v3364 = vunpack.c.h.b16 %v2555
        %v3365 = vunpack.c.l.b16 %v2556
        %v3366 = vunpack.c.h.b16 %v2556
        %v3367 = vpack.c.b16 %v2863, %v2855
        %v3368 = vpack.c.b16 %v2864, %v2856
        %v3369 = vpack.c.b16 %v2865, %v2857
        %v3370 = vpack.c.b16 %v2866, %v2858
        %v3371 = vpack.c.b16 %v2867, %v2859
        %v3372 = vpack.c.b16 %v2868, %v2860
        %v3373 = vpack.c.b16 %v2869, %v2861
        %v3374 = vpack.c.b16 %v2870, %v2862
        %v3375 = vpack.c.b16 %v2879, %v2871
        %v3376 = vpack.c.b16 %v2880, %v2872
        %v3377 = vpack.c.b16 %v2881, %v2873
        %v3378 = vpack.c.b16 %v2882, %v2874
        %v3379 = vpack.c.b16 %v2883, %v2875
        %v3380 = vpack.c.b16 %v2884, %v2876
        %v3381 = vpack.c.b16 %v2885, %v2877
        %v3382 = vpack.c.b16 %v2886, %v2878
        %v3383 = vpack.c.b16 %v2895, %v2887
        %v3384 = vpack.c.b16 %v2896, %v2888
        %v3385 = vpack.c.b16 %v2897, %v2889
        %v3386 = vpack.c.b16 %v2898, %v2890
        %v3387 = vpack.c.b16 %v2899, %v2891
        %v3388 = vpack.c.b16 %v2900, %v2892
        %v3389 = vpack.c.b16 %v2901, %v2893
        %v3390 = vpack.c.b16 %v2902, %v2894
        %v3391 = vpack.c.b16 %v2911, %v2903
        %v3392 = vpack.c.b16 %v2912, %v2904
        %v3393 = vpack.c.b16 %v2913, %v2905
        %v3394 = vpack.c.b16 %v2914, %v2906
        %v3395 = vpack.c.b16 %v2915, %v2907
        %v3396 = vpack.c.b16 %v2916, %v2908
        %v3397 = vpack.c.b16 %v2917, %v2909
        %v3398 = vpack.c.b16 %v2918, %v2910
        %v3399 = vpack.c.b16 %v2927, %v2919
        %v3400 = vpack.c.b16 %v2928, %v2920
        %v3401 = vpack.c.b16 %v2929, %v2921
        %v3402 = vpack.c.b16 %v2930, %v2922
        %v3403 = vpack.c.b16 %v2931, %v2923
        %v3404 = vpack.c.b16 %v2932, %v2924
        %v3405 = vpack.c.b16 %v2933, %v2925
        %v3406 = vpack.c.b16 %v2934, %v2926
        %v3407 = vpack.c.b16 %v2943, %v2935
        %v3408 = vpack.c.b16 %v2944, %v2936
        %v3409 = vpack.c.b16 %v2945, %v2937
        %v3410 = vpack.c.b16 %v2946, %v2938
        %v3411 = vpack.c.b16 %v2947, %v2939
        %v3412 = vpack.c.b16 %v2948, %v2940
        %v3413 = vpack.c.b16 %v2949, %v2941
        %v3414 = vpack.c.b16 %v2950, %v2942
        %v3415 = vpack.c.b16 %v2959, %v2951
        %v3416 = vpack.c.b16 %v2960, %v2952
        %v3417 = vpack.c.b16 %v2961, %v2953
        %v3418 = vpack.c.b16 %v2962, %v2954
        %v3419 = vpack.c.b16 %v2963, %v2955
        %v3420 = vpack.c.b16 %v2964, %v2956
        %v3421 = vpack.c.b16 %v2965, %v2957
        %v3422 = vpack.c.b16 %v2966, %v2958
        %v3423 = vpack.c.b16 %v2975, %v2967
        %v3424 = vpack.c.b16 %v2976, %v2968
        %v3425 = vpack.c.b16 %v2977, %v2969
        %v3426 = vpack.c.b16 %v2978, %v2970
        %v3427 = vpack.c.b16 %v2979, %v2971
        %v3428 = vpack.c.b16 %v2980, %v2972
        %v3429 = vpack.c.b16 %v2981, %v2973
        %v3430 = vpack.c.b16 %v2982, %v2974
        %v3431 = vpack.c.b16 %v2991, %v2983
        %v3432 = vpack.c.b16 %v2992, %v2984
        %v3433 = vpack.c.b16 %v2993, %v2985
        %v3434 = vpack.c.b16 %v2994, %v2986
        %v3435 = vpack.c.b16 %v2995, %v2987
        %v3436 = vpack.c.b16 %v2996, %v2988
        %v3437 = vpack.c.b16 %v2997, %v2989
        %v3438 = vpack.c.b16 %v2998, %v2990
        %v3439 = vpack.c.b16 %v3007, %v2999
        %v3440 = vpack.c.b16 %v3008, %v3000
        %v3441 = vpack.c.b16 %v3009, %v3001
        %v3442 = vpack.c.b16 %v3010, %v3002
        %v3443 = vpack.c.b16 %v3011, %v3003
        %v3444 = vpack.c.b16 %v3012, %v3004
        %v3445 = vpack.c.b16 %v3013, %v3005
        %v3446 = vpack.c.b16 %v3014, %v3006
        %v3447 = vpack.c.b16 %v3023, %v3015
        %v3448 = vpack.c.b16 %v3024, %v3016
        %v3449 = vpack.c.b16 %v3025, %v3017
        %v3450 = vpack.c.b16 %v3026, %v3018
        %v3451 = vpack.c.b16 %v3027, %v3019
        %v3452 = vpack.c.b16 %v3028, %v3020
        %v3453 = vpack.c.b16 %v3029, %v3021
        %v3454 = vpack.c.b16 %v3030, %v3022
        %v3455 = vpack.c.b16 %v3039, %v3031
        %v3456 = vpack.c.b16 %v3040, %v3032
        %v3457 = vpack.c.b16 %v3041, %v3033
        %v3458 = vpack.c.b16 %v3042, %v3034
        %v3459 = vpack.c.b16 %v3043, %v3035
        %v3460 = vpack.c.b16 %v3044, %v3036
        %v3461 = vpack.c.b16 %v3045, %v3037
        %v3462 = vpack.c.b16 %v3046, %v3038
        %v3463 = vpack.c.b16 %v3055, %v3047
        %v3464 = vpack.c.b16 %v3056, %v3048
        %v3465 = vpack.c.b16 %v3057, %v3049
        %v3466 = vpack.c.b16 %v3058, %v3050
        %v3467 = vpack.c.b16 %v3059, %v3051
        %v3468 = vpack.c.b16 %v3060, %v3052
        %v3469 = vpack.c.b16 %v3061, %v3053
        %v3470 = vpack.c.b16 %v3062, %v3054
        %v3471 = vpack.c.b16 %v3071, %v3063
        %v3472 = vpack.c.b16 %v3072, %v3064
        %v3473 = vpack.c.b16 %v3073, %v3065
        %v3474 = vpack.c.b16 %v3074, %v3066
        %v3475 = vpack.c.b16 %v3075, %v3067
        %v3476 = vpack.c.b16 %v3076, %v3068
        %v3477 = vpack.c.b16 %v3077, %v3069
        %v3478 = vpack.c.b16 %v3078, %v3070
        %v3479 = vpack.c.b16 %v3087, %v3079
        %v3480 = vpack.c.b16 %v3088, %v3080
        %v3481 = vpack.c.b16 %v3089, %v3081
        %v3482 = vpack.c.b16 %v3090, %v3082
        %v3483 = vpack.c.b16 %v3091, %v3083
        %v3484 = vpack.c.b16 %v3092, %v3084
        %v3485 = vpack.c.b16 %v3093, %v3085
        %v3486 = vpack.c.b16 %v3094, %v3086
        %v3487 = vpack.c.b16 %v3103, %v3095
        %v3488 = vpack.c.b16 %v3104, %v3096
        %v3489 = vpack.c.b16 %v3105, %v3097
        %v3490 = vpack.c.b16 %v3106, %v3098
        %v3491 = vpack.c.b16 %v3107, %v3099
        %v3492 = vpack.c.b16 %v3108, %v3100
        %v3493 = vpack.c.b16 %v3109, %v3101
        %v3494 = vpack.c.b16 %v3110, %v3102
        %v3495 = vpack.c.b16 %v3119, %v3111
        %v3496 = vpack.c.b16 %v3120, %v3112
        %v3497 = vpack.c.b16 %v3121, %v3113
        %v3498 = vpack.c.b16 %v3122, %v3114
        %v3499 = vpack.c.b16 %v3123, %v3115
        %v3500 = vpack.c.b16 %v3124, %v3116
        %v3501 = vpack.c.b16 %v3125, %v3117
        %v3502 = vpack.c.b16 %v3126, %v3118
        %v3503 = vpack.c.b16 %v3135, %v3127
        %v3504 = vpack.c.b16 %v3136, %v3128
        %v3505 = vpack.c.b16 %v3137, %v3129
        %v3506 = vpack.c.b16 %v3138, %v3130
        %v3507 = vpack.c.b16 %v3139, %v3131
        %v3508 = vpack.c.b16 %v3140, %v3132
        %v3509 = vpack.c.b16 %v3141, %v3133
        %v3510 = vpack.c.b16 %v3142, %v3134
        %v3511 = vpack.c.b16 %v3151, %v3143
        %v3512 = vpack.c.b16 %v3152, %v3144
        %v3513 = vpack.c.b16 %v3153, %v3145
        %v3514 = vpack.c.b16 %v3154, %v3146
        %v3515 = vpack.c.b16 %v3155, %v3147
        %v3516 = vpack.c.b16 %v3156, %v3148
        %v3517 = vpack.c.b16 %v3157, %v3149
        %v3518 = vpack.c.b16 %v3158, %v3150
        %v3519 = vpack.c.b16 %v3167, %v3159
        %v3520 = vpack.c.b16 %v3168, %v3160
        %v3521 = vpack.c.b16 %v3169, %v3161
        %v3522 = vpack.c.b16 %v3170, %v3162
        %v3523 = vpack.c.b16 %v3171, %v3163
        %v3524 = vpack.c.b16 %v3172, %v3164
        %v3525 = vpack.c.b16 %v3173, %v3165
        %v3526 = vpack.c.b16 %v3174, %v3166
        %v3527 = vpack.c.b16 %v3183, %v3175
        %v3528 = vpack.c.b16 %v3184, %v3176
        %v3529 = vpack.c.b16 %v3185, %v3177
        %v3530 = vpack.c.b16 %v3186, %v3178
        %v3531 = vpack.c.b16 %v3187, %v3179
        %v3532 = vpack.c.b16 %v3188, %v3180
        %v3533 = vpack.c.b16 %v3189, %v3181
        %v3534 = vpack.c.b16 %v3190, %v3182
        %v3535 = vpack.c.b16 %v3199, %v3191
        %v3536 = vpack.c.b16 %v3200, %v3192
        %v3537 = vpack.c.b16 %v3201, %v3193
        %v3538 = vpack.c.b16 %v3202, %v3194
        %v3539 = vpack.c.b16 %v3203, %v3195
        %v3540 = vpack.c.b16 %v3204, %v3196
        %v3541 = vpack.c.b16 %v3205, %v3197
        %v3542 = vpack.c.b16 %v3206, %v3198
        %v3543 = vpack.c.b16 %v3215, %v3207
        %v3544 = vpack.c.b16 %v3216, %v3208
        %v3545 = vpack.c.b16 %v3217, %v3209
        %v3546 = vpack.c.b16 %v3218, %v3210
        %v3547 = vpack.c.b16 %v3219, %v3211
        %v3548 = vpack.c.b16 %v3220, %v3212
        %v3549 = vpack.c.b16 %v3221, %v3213
        %v3550 = vpack.c.b16 %v3222, %v3214
        %v3551 = vpack.c.b16 %v3231, %v3223
        %v3552 = vpack.c.b16 %v3232, %v3224
        %v3553 = vpack.c.b16 %v3233, %v3225
        %v3554 = vpack.c.b16 %v3234, %v3226
        %v3555 = vpack.c.b16 %v3235, %v3227
        %v3556 = vpack.c.b16 %v3236, %v3228
        %v3557 = vpack.c.b16 %v3237, %v3229
        %v3558 = vpack.c.b16 %v3238, %v3230
        %v3559 = vpack.c.b16 %v3247, %v3239
        %v3560 = vpack.c.b16 %v3248, %v3240
        %v3561 = vpack.c.b16 %v3249, %v3241
        %v3562 = vpack.c.b16 %v3250, %v3242
        %v3563 = vpack.c.b16 %v3251, %v3243
        %v3564 = vpack.c.b16 %v3252, %v3244
        %v3565 = vpack.c.b16 %v3253, %v3245
        %v3566 = vpack.c.b16 %v3254, %v3246
        %v3567 = vpack.c.b16 %v3263, %v3255
        %v3568 = vpack.c.b16 %v3264, %v3256
        %v3569 = vpack.c.b16 %v3265, %v3257
        %v3570 = vpack.c.b16 %v3266, %v3258
        %v3571 = vpack.c.b16 %v3267, %v3259
        %v3572 = vpack.c.b16 %v3268, %v3260
        %v3573 = vpack.c.b16 %v3269, %v3261
        %v3574 = vpack.c.b16 %v3270, %v3262
        %v3575 = vpack.c.b16 %v3279, %v3271
        %v3576 = vpack.c.b16 %v3280, %v3272
        %v3577 = vpack.c.b16 %v3281, %v3273
        %v3578 = vpack.c.b16 %v3282, %v3274
        %v3579 = vpack.c.b16 %v3283, %v3275
        %v3580 = vpack.c.b16 %v3284, %v3276
        %v3581 = vpack.c.b16 %v3285, %v3277
        %v3582 = vpack.c.b16 %v3286, %v3278
        %v3583 = vpack.c.b16 %v3295, %v3287
        %v3584 = vpack.c.b16 %v3296, %v3288
        %v3585 = vpack.c.b16 %v3297, %v3289
        %v3586 = vpack.c.b16 %v3298, %v3290
        %v3587 = vpack.c.b16 %v3299, %v3291
        %v3588 = vpack.c.b16 %v3300, %v3292
        %v3589 = vpack.c.b16 %v3301, %v3293
        %v3590 = vpack.c.b16 %v3302, %v3294
        %v3591 = vpack.c.b16 %v3311, %v3303
        %v3592 = vpack.c.b16 %v3312, %v3304
        %v3593 = vpack.c.b16 %v3313, %v3305
        %v3594 = vpack.c.b16 %v3314, %v3306
        %v3595 = vpack.c.b16 %v3315, %v3307
        %v3596 = vpack.c.b16 %v3316, %v3308
        %v3597 = vpack.c.b16 %v3317, %v3309
        %v3598 = vpack.c.b16 %v3318, %v3310
        %v3599 = vpack.c.b16 %v3327, %v3319
        %v3600 = vpack.c.b16 %v3328, %v3320
        %v3601 = vpack.c.b16 %v3329, %v3321
        %v3602 = vpack.c.b16 %v3330, %v3322
        %v3603 = vpack.c.b16 %v3331, %v3323
        %v3604 = vpack.c.b16 %v3332, %v3324
        %v3605 = vpack.c.b16 %v3333, %v3325
        %v3606 = vpack.c.b16 %v3334, %v3326
        %v3607 = vpack.c.b16 %v3343, %v3335
        %v3608 = vpack.c.b16 %v3344, %v3336
        %v3609 = vpack.c.b16 %v3345, %v3337
        %v3610 = vpack.c.b16 %v3346, %v3338
        %v3611 = vpack.c.b16 %v3347, %v3339
        %v3612 = vpack.c.b16 %v3348, %v3340
        %v3613 = vpack.c.b16 %v3349, %v3341
        %v3614 = vpack.c.b16 %v3350, %v3342
        %v3615 = vpack.c.b16 %v3359, %v3351
        %v3616 = vpack.c.b16 %v3360, %v3352
        %v3617 = vpack.c.b16 %v3361, %v3353
        %v3618 = vpack.c.b16 %v3362, %v3354
        %v3619 = vpack.c.b16 %v3363, %v3355
        %v3620 = vpack.c.b16 %v3364, %v3356
        %v3621 = vpack.c.b16 %v3365, %v3357
        %v3622 = vpack.c.b16 %v3366, %v3358
        %3879 = vmatprep.subr.bf16.mxu0 %v3368
        %3880 = vmatpush1.bf16.msra.mxu0 %v3367
        %3881 = vmatprep.subr.bf16.mxu0 %v3376
        %3882 = vmatpush1.bf16.msra.mxu0 %v3375
        %3883 = vmatprep.subr.bf16.mxu0 %v3384
        %3884 = vmatpush1.bf16.msra.mxu0 %v3383
        %3885 = vmatprep.subr.bf16.mxu0 %v3392
        %3886 = vmatpush1.bf16.msra.mxu0 %v3391
        %3887 = vmatprep.subr.bf16.mxu0 %v3400
        %3888 = vmatpush1.bf16.msra.mxu0 %v3399
        %3889 = vmatprep.subr.bf16.mxu0 %v3408
        %3890 = vmatpush1.bf16.msra.mxu0 %v3407
        %3891 = vmatprep.subr.bf16.mxu0 %v3416
        %3892 = vmatpush1.bf16.msra.mxu0 %v3415
        %3893 = vmatprep.subr.bf16.mxu0 %v3424
        %3894 = vmatpush1.bf16.msra.mxu0 %v3423
        %3895 = vmatprep.subr.bf16.mxu0 %v3432
        %3896 = vmatpush1.bf16.msra.mxu0 %v3431
        %3897 = vmatprep.subr.bf16.mxu0 %v3440
        %3898 = vmatpush1.bf16.msra.mxu0 %v3439
        %3899 = vmatprep.subr.bf16.mxu0 %v3448
        %3900 = vmatpush1.bf16.msra.mxu0 %v3447
        %3901 = vmatprep.subr.bf16.mxu0 %v3456
        %3902 = vmatpush1.bf16.msra.mxu0 %v3455
        %3903 = vmatprep.subr.bf16.mxu0 %v3464
        %3904 = vmatpush1.bf16.msra.mxu0 %v3463
        %3905 = vmatprep.subr.bf16.mxu0 %v3472
        %3906 = vmatpush1.bf16.msra.mxu0 %v3471
        %3907 = vmatprep.subr.bf16.mxu0 %v3480
        %3908 = vmatpush1.bf16.msra.mxu0 %v3479
        %3909 = vmatprep.subr.bf16.mxu0 %v3488
        %3910 = vmatpush1.bf16.msra.mxu0 %v3487
        %3911 = vmatprep.mubr.bf16.mxu0 %v2298
        %3912 = vmatmul.mubr.bf16.gmra.mrb[0].mxu0 %v2297
        %v3913 = vpop.f32.mrb[0].mxu0
        %v3914 = vadd.f32 %v2562, %v3913
        %v3915 = vpop.f32.mrb[0].mxu0
        %v3916 = vadd.f32 %v2566, %v3915
        %v3917 = vpop.f32.mrb[0].mxu0
        %v3918 = vpop.f32.mrb[0].mxu0
        %3919 = vdwg.mxu0
        %3920 = vmatprep.subr.bf16.mxu0 %v3496
        %3921 = vmatpush1.bf16.msra.mxu0 %v3495
        %3922 = vmatprep.subr.bf16.mxu0 %v3504
        %3923 = vmatpush1.bf16.msra.mxu0 %v3503
        %3924 = vmatprep.subr.bf16.mxu0 %v3512
        %3925 = vmatpush1.bf16.msra.mxu0 %v3511
        %3926 = vmatprep.subr.bf16.mxu0 %v3520
        %3927 = vmatpush1.bf16.msra.mxu0 %v3519
        %3928 = vmatprep.subr.bf16.mxu0 %v3528
        %3929 = vmatpush1.bf16.msra.mxu0 %v3527
        %3930 = vmatprep.subr.bf16.mxu0 %v3536
        %3931 = vmatpush1.bf16.msra.mxu0 %v3535
        %3932 = vmatprep.subr.bf16.mxu0 %v3544
        %3933 = vmatpush1.bf16.msra.mxu0 %v3543
        %3934 = vmatprep.subr.bf16.mxu0 %v3552
        %3935 = vmatpush1.bf16.msra.mxu0 %v3551
        %3936 = vmatprep.subr.bf16.mxu0 %v3560
        %3937 = vmatpush1.bf16.msra.mxu0 %v3559
        %3938 = vmatprep.subr.bf16.mxu0 %v3568
        %3939 = vmatpush1.bf16.msra.mxu0 %v3567
        %3940 = vmatprep.subr.bf16.mxu0 %v3576
        %3941 = vmatpush1.bf16.msra.mxu0 %v3575
        %3942 = vmatprep.subr.bf16.mxu0 %v3584
        %3943 = vmatpush1.bf16.msra.mxu0 %v3583
        %3944 = vmatprep.subr.bf16.mxu0 %v3592
        %3945 = vmatpush1.bf16.msra.mxu0 %v3591
        %3946 = vmatprep.subr.bf16.mxu0 %v3600
        %3947 = vmatpush1.bf16.msra.mxu0 %v3599
        %3948 = vmatprep.subr.bf16.mxu0 %v3608
        %3949 = vmatpush1.bf16.msra.mxu0 %v3607
        %3950 = vmatprep.subr.bf16.mxu0 %v3616
        %3951 = vmatpush1.bf16.msra.mxu0 %v3615
        %3952 = vmatprep.mubr.bf16.mxu0 %v2300
        %3953 = vmatmul.mubr.bf16.gmra.mrb[0].mxu0 %v2299
        %v3954 = vpop.f32.mrb[0].mxu0
        %v3955 = vadd.f32 %v3914, %v3954
        %v3956 = vpop.f32.mrb[0].mxu0
        %v3957 = vadd.f32 %v3916, %v3956
        %v3958 = vpop.f32.mrb[0].mxu0
        %v3959 = vpop.f32.mrb[0].mxu0
        %3960 = vdwg.mxu0
        %3961 = vmatprep.subr.bf16.mxu0 %v3370
        %3962 = vmatpush1.bf16.msra.mxu0 %v3369
        %3963 = vmatprep.subr.bf16.mxu0 %v3378
        %3964 = vmatpush1.bf16.msra.mxu0 %v3377
        %3965 = vmatprep.subr.bf16.mxu0 %v3386
        %3966 = vmatpush1.bf16.msra.mxu0 %v3385
        %3967 = vmatprep.subr.bf16.mxu0 %v3394
        %3968 = vmatpush1.bf16.msra.mxu0 %v3393
        %3969 = vmatprep.subr.bf16.mxu0 %v3402
        %3970 = vmatpush1.bf16.msra.mxu0 %v3401
        %3971 = vmatprep.subr.bf16.mxu0 %v3410
        %3972 = vmatpush1.bf16.msra.mxu0 %v3409
        %3973 = vmatprep.subr.bf16.mxu0 %v3418
        %3974 = vmatpush1.bf16.msra.mxu0 %v3417
        %3975 = vmatprep.subr.bf16.mxu0 %v3426
        %3976 = vmatpush1.bf16.msra.mxu0 %v3425
        %3977 = vmatprep.subr.bf16.mxu0 %v3434
        %3978 = vmatpush1.bf16.msra.mxu0 %v3433
        %3979 = vmatprep.subr.bf16.mxu0 %v3442
        %3980 = vmatpush1.bf16.msra.mxu0 %v3441
        %3981 = vmatprep.subr.bf16.mxu0 %v3450
        %3982 = vmatpush1.bf16.msra.mxu0 %v3449
        %3983 = vmatprep.subr.bf16.mxu0 %v3458
        %3984 = vmatpush1.bf16.msra.mxu0 %v3457
        %3985 = vmatprep.subr.bf16.mxu0 %v3466
        %3986 = vmatpush1.bf16.msra.mxu0 %v3465
        %3987 = vmatprep.subr.bf16.mxu0 %v3474
        %3988 = vmatpush1.bf16.msra.mxu0 %v3473
        %3989 = vmatprep.subr.bf16.mxu0 %v3482
        %3990 = vmatpush1.bf16.msra.mxu0 %v3481
        %3991 = vmatprep.subr.bf16.mxu0 %v3490
        %3992 = vmatpush1.bf16.msra.mxu0 %v3489
        %3993 = vmatprep.mubr.bf16.mxu0 %v2298
        %3994 = vmatmul.mubr.bf16.gmra.mrb[0].mxu0 %v2297
        %v3995 = vpop.f32.mrb[0].mxu0
        %v3996 = vadd.f32 %v2570, %v3995
        %v3997 = vpop.f32.mrb[0].mxu0
        %v3998 = vadd.f32 %v2574, %v3997
        %v3999 = vpop.f32.mrb[0].mxu0
        %v4000 = vpop.f32.mrb[0].mxu0
        %4001 = vdwg.mxu0
        %4002 = vmatprep.subr.bf16.mxu0 %v3498
        %4003 = vmatpush1.bf16.msra.mxu0 %v3497
        %4004 = vmatprep.subr.bf16.mxu0 %v3506
        %4005 = vmatpush1.bf16.msra.mxu0 %v3505
        %4006 = vmatprep.subr.bf16.mxu0 %v3514
        %4007 = vmatpush1.bf16.msra.mxu0 %v3513
        %4008 = vmatprep.subr.bf16.mxu0 %v3522
        %4009 = vmatpush1.bf16.msra.mxu0 %v3521
        %4010 = vmatprep.subr.bf16.mxu0 %v3530
        %4011 = vmatpush1.bf16.msra.mxu0 %v3529
        %4012 = vmatprep.subr.bf16.mxu0 %v3538
        %4013 = vmatpush1.bf16.msra.mxu0 %v3537
        %4014 = vmatprep.subr.bf16.mxu0 %v3546
        %4015 = vmatpush1.bf16.msra.mxu0 %v3545
        %4016 = vmatprep.subr.bf16.mxu0 %v3554
        %4017 = vmatpush1.bf16.msra.mxu0 %v3553
        %4018 = vmatprep.subr.bf16.mxu0 %v3562
        %4019 = vmatpush1.bf16.msra.mxu0 %v3561
        %4020 = vmatprep.subr.bf16.mxu0 %v3570
        %4021 = vmatpush1.bf16.msra.mxu0 %v3569
        %4022 = vmatprep.subr.bf16.mxu0 %v3578
        %4023 = vmatpush1.bf16.msra.mxu0 %v3577
        %4024 = vmatprep.subr.bf16.mxu0 %v3586
        %4025 = vmatpush1.bf16.msra.mxu0 %v3585
        %4026 = vmatprep.subr.bf16.mxu0 %v3594
        %4027 = vmatpush1.bf16.msra.mxu0 %v3593
        %4028 = vmatprep.subr.bf16.mxu0 %v3602
        %4029 = vmatpush1.bf16.msra.mxu0 %v3601
        %4030 = vmatprep.subr.bf16.mxu0 %v3610
        %4031 = vmatpush1.bf16.msra.mxu0 %v3609
        %4032 = vmatprep.subr.bf16.mxu0 %v3618
        %4033 = vmatpush1.bf16.msra.mxu0 %v3617
        %4034 = vmatprep.mubr.bf16.mxu0 %v2300
        %4035 = vmatmul.mubr.bf16.gmra.mrb[0].mxu0 %v2299
        %v4036 = vpop.f32.mrb[0].mxu0
        %v4037 = vadd.f32 %v3996, %v4036
        %v4038 = vpop.f32.mrb[0].mxu0
        %v4039 = vadd.f32 %v3998, %v4038
        %v4040 = vpop.f32.mrb[0].mxu0
        %v4041 = vpop.f32.mrb[0].mxu0
        %4042 = vdwg.mxu0
        %4043 = vmatprep.subr.bf16.mxu0 %v3372
        %4044 = vmatpush1.bf16.msra.mxu0 %v3371
        %4045 = vmatprep.subr.bf16.mxu0 %v3380
        %4046 = vmatpush1.bf16.msra.mxu0 %v3379
        %4047 = vmatprep.subr.bf16.mxu0 %v3388
        %4048 = vmatpush1.bf16.msra.mxu0 %v3387
        %4049 = vmatprep.subr.bf16.mxu0 %v3396
        %4050 = vmatpush1.bf16.msra.mxu0 %v3395
        %4051 = vmatprep.subr.bf16.mxu0 %v3404
        %4052 = vmatpush1.bf16.msra.mxu0 %v3403
        %4053 = vmatprep.subr.bf16.mxu0 %v3412
        %4054 = vmatpush1.bf16.msra.mxu0 %v3411
        %4055 = vmatprep.subr.bf16.mxu0 %v3420
        %4056 = vmatpush1.bf16.msra.mxu0 %v3419
        %4057 = vmatprep.subr.bf16.mxu0 %v3428
        %4058 = vmatpush1.bf16.msra.mxu0 %v3427
        %4059 = vmatprep.subr.bf16.mxu0 %v3436
        %4060 = vmatpush1.bf16.msra.mxu0 %v3435
        %4061 = vmatprep.subr.bf16.mxu0 %v3444
        %4062 = vmatpush1.bf16.msra.mxu0 %v3443
        %4063 = vmatprep.subr.bf16.mxu0 %v3452
        %4064 = vmatpush1.bf16.msra.mxu0 %v3451
        %4065 = vmatprep.subr.bf16.mxu0 %v3460
        %4066 = vmatpush1.bf16.msra.mxu0 %v3459
        %4067 = vmatprep.subr.bf16.mxu0 %v3468
        %4068 = vmatpush1.bf16.msra.mxu0 %v3467
        %4069 = vmatprep.subr.bf16.mxu0 %v3476
        %4070 = vmatpush1.bf16.msra.mxu0 %v3475
        %4071 = vmatprep.subr.bf16.mxu0 %v3484
        %4072 = vmatpush1.bf16.msra.mxu0 %v3483
        %4073 = vmatprep.subr.bf16.mxu0 %v3492
        %4074 = vmatpush1.bf16.msra.mxu0 %v3491
        %4075 = vmatprep.mubr.bf16.mxu0 %v2298
        %4076 = vmatmul.mubr.bf16.gmra.mrb[0].mxu0 %v2297
        %v4077 = vpop.f32.mrb[0].mxu0
        %v4078 = vadd.f32 %v2578, %v4077
        %v4079 = vpop.f32.mrb[0].mxu0
        %v4080 = vadd.f32 %v2582, %v4079
        %v4081 = vpop.f32.mrb[0].mxu0
        %v4082 = vpop.f32.mrb[0].mxu0
        %4083 = vdwg.mxu0
        %4084 = vmatprep.subr.bf16.mxu0 %v3500
        %4085 = vmatpush1.bf16.msra.mxu0 %v3499
        %4086 = vmatprep.subr.bf16.mxu0 %v3508
        %4087 = vmatpush1.bf16.msra.mxu0 %v3507
        %4088 = vmatprep.subr.bf16.mxu0 %v3516
        %4089 = vmatpush1.bf16.msra.mxu0 %v3515
        %4090 = vmatprep.subr.bf16.mxu0 %v3524
        %4091 = vmatpush1.bf16.msra.mxu0 %v3523
        %4092 = vmatprep.subr.bf16.mxu0 %v3532
        %4093 = vmatpush1.bf16.msra.mxu0 %v3531
        %4094 = vmatprep.subr.bf16.mxu0 %v3540
        %4095 = vmatpush1.bf16.msra.mxu0 %v3539
        %4096 = vmatprep.subr.bf16.mxu0 %v3548
        %4097 = vmatpush1.bf16.msra.mxu0 %v3547
        %4098 = vmatprep.subr.bf16.mxu0 %v3556
        %4099 = vmatpush1.bf16.msra.mxu0 %v3555
        %4100 = vmatprep.subr.bf16.mxu0 %v3564
        %4101 = vmatpush1.bf16.msra.mxu0 %v3563
        %4102 = vmatprep.subr.bf16.mxu0 %v3572
        %4103 = vmatpush1.bf16.msra.mxu0 %v3571
        %4104 = vmatprep.subr.bf16.mxu0 %v3580
        %4105 = vmatpush1.bf16.msra.mxu0 %v3579
        %4106 = vmatprep.subr.bf16.mxu0 %v3588
        %4107 = vmatpush1.bf16.msra.mxu0 %v3587
        %4108 = vmatprep.subr.bf16.mxu0 %v3596
        %4109 = vmatpush1.bf16.msra.mxu0 %v3595
        %4110 = vmatprep.subr.bf16.mxu0 %v3604
        %4111 = vmatpush1.bf16.msra.mxu0 %v3603
        %4112 = vmatprep.subr.bf16.mxu0 %v3612
        %4113 = vmatpush1.bf16.msra.mxu0 %v3611
        %4114 = vmatprep.subr.bf16.mxu0 %v3620
        %4115 = vmatpush1.bf16.msra.mxu0 %v3619
        %4116 = vmatprep.mubr.bf16.mxu0 %v2300
        %4117 = vmatmul.mubr.bf16.gmra.mrb[0].mxu0 %v2299
        %v4118 = vpop.f32.mrb[0].mxu0
        %v4119 = vadd.f32 %v4078, %v4118
        %v4120 = vpop.f32.mrb[0].mxu0
        %v4121 = vadd.f32 %v4080, %v4120
        %v4122 = vpop.f32.mrb[0].mxu0
        %v4123 = vpop.f32.mrb[0].mxu0
        %4124 = vdwg.mxu0
        %4125 = vmatprep.subr.bf16.mxu0 %v3374
        %4126 = vmatpush1.bf16.msra.mxu0 %v3373
        %4127 = vmatprep.subr.bf16.mxu0 %v3382
        %4128 = vmatpush1.bf16.msra.mxu0 %v3381
        %4129 = vmatprep.subr.bf16.mxu0 %v3390
        %4130 = vmatpush1.bf16.msra.mxu0 %v3389
        %4131 = vmatprep.subr.bf16.mxu0 %v3398
        %4132 = vmatpush1.bf16.msra.mxu0 %v3397
        %4133 = vmatprep.subr.bf16.mxu0 %v3406
        %4134 = vmatpush1.bf16.msra.mxu0 %v3405
        %4135 = vmatprep.subr.bf16.mxu0 %v3414
        %4136 = vmatpush1.bf16.msra.mxu0 %v3413
        %4137 = vmatprep.subr.bf16.mxu0 %v3422
        %4138 = vmatpush1.bf16.msra.mxu0 %v3421
        %4139 = vmatprep.subr.bf16.mxu0 %v3430
        %4140 = vmatpush1.bf16.msra.mxu0 %v3429
        %4141 = vmatprep.subr.bf16.mxu0 %v3438
        %4142 = vmatpush1.bf16.msra.mxu0 %v3437
        %4143 = vmatprep.subr.bf16.mxu0 %v3446
        %4144 = vmatpush1.bf16.msra.mxu0 %v3445
        %4145 = vmatprep.subr.bf16.mxu0 %v3454
        %4146 = vmatpush1.bf16.msra.mxu0 %v3453
        %4147 = vmatprep.subr.bf16.mxu0 %v3462
        %4148 = vmatpush1.bf16.msra.mxu0 %v3461
        %4149 = vmatprep.subr.bf16.mxu0 %v3470
        %4150 = vmatpush1.bf16.msra.mxu0 %v3469
        %4151 = vmatprep.subr.bf16.mxu0 %v3478
        %4152 = vmatpush1.bf16.msra.mxu0 %v3477
        %4153 = vmatprep.subr.bf16.mxu0 %v3486
        %4154 = vmatpush1.bf16.msra.mxu0 %v3485
        %4155 = vmatprep.subr.bf16.mxu0 %v3494
        %4156 = vmatpush1.bf16.msra.mxu0 %v3493
        %4157 = vmatprep.mubr.bf16.mxu0 %v2298
        %4158 = vmatmul.mubr.bf16.gmra.mrb[0].mxu0 %v2297
        %v4159 = vpop.f32.mrb[0].mxu0
        %v4160 = vadd.f32 %v2586, %v4159
        %v4161 = vpop.f32.mrb[0].mxu0
        %v4162 = vadd.f32 %v2590, %v4161
        %v4163 = vpop.f32.mrb[0].mxu0
        %v4164 = vpop.f32.mrb[0].mxu0
        %4165 = vdwg.mxu0
        %4166 = vmatprep.subr.bf16.mxu0 %v3502
        %4167 = vmatpush1.bf16.msra.mxu0 %v3501
        %4168 = vmatprep.subr.bf16.mxu0 %v3510
        %4169 = vmatpush1.bf16.msra.mxu0 %v3509
        %4170 = vmatprep.subr.bf16.mxu0 %v3518
        %4171 = vmatpush1.bf16.msra.mxu0 %v3517
        %4172 = vmatprep.subr.bf16.mxu0 %v3526
        %4173 = vmatpush1.bf16.msra.mxu0 %v3525
        %4174 = vmatprep.subr.bf16.mxu0 %v3534
        %4175 = vmatpush1.bf16.msra.mxu0 %v3533
        %4176 = vmatprep.subr.bf16.mxu0 %v3542
        %4177 = vmatpush1.bf16.msra.mxu0 %v3541
        %4178 = vmatprep.subr.bf16.mxu0 %v3550
        %4179 = vmatpush1.bf16.msra.mxu0 %v3549
        %4180 = vmatprep.subr.bf16.mxu0 %v3558
        %4181 = vmatpush1.bf16.msra.mxu0 %v3557
        %4182 = vmatprep.subr.bf16.mxu0 %v3566
        %4183 = vmatpush1.bf16.msra.mxu0 %v3565
        %4184 = vmatprep.subr.bf16.mxu0 %v3574
        %4185 = vmatpush1.bf16.msra.mxu0 %v3573
        %4186 = vmatprep.subr.bf16.mxu0 %v3582
        %4187 = vmatpush1.bf16.msra.mxu0 %v3581
        %4188 = vmatprep.subr.bf16.mxu0 %v3590
        %4189 = vmatpush1.bf16.msra.mxu0 %v3589
        %4190 = vmatprep.subr.bf16.mxu0 %v3598
        %4191 = vmatpush1.bf16.msra.mxu0 %v3597
        %4192 = vmatprep.subr.bf16.mxu0 %v3606
        %4193 = vmatpush1.bf16.msra.mxu0 %v3605
        %4194 = vmatprep.subr.bf16.mxu0 %v3614
        %4195 = vmatpush1.bf16.msra.mxu0 %v3613
        %4196 = vmatprep.subr.bf16.mxu0 %v3622
        %4197 = vmatpush1.bf16.msra.mxu0 %v3621
        %4198 = vmatprep.mubr.bf16.mxu0 %v2300
        %4199 = vmatmul.mubr.bf16.gmra.mrb[0].mxu0 %v2299
        %v4200 = vpop.f32.mrb[0].mxu0
        %v4201 = vadd.f32 %v4160, %v4200
        %v4202 = vpop.f32.mrb[0].mxu0
        %v4203 = vadd.f32 %v4162, %v4202
        %v4204 = vpop.f32.mrb[0].mxu0
        %v4205 = vpop.f32.mrb[0].mxu0
        %4206 = vdwg.mxu0
        %v4207 = vmax.f32 %v3955, 0.0
        %v4208 = vmax.f32 %v3957, 0.0
        %v4209 = vmax.f32 %v4037, 0.0
        %v4210 = vmax.f32 %v4039, 0.0
        %v4211 = vmax.f32 %v4119, 0.0
        %v4212 = vmax.f32 %v4121, 0.0
        %v4213 = vmax.f32 %v4201, 0.0
        %v4214 = vmax.f32 %v4203, 0.0
        %vm4215 = vcmask 1043456
        %v4216 = vsel %vm4215, %v4207, 0.0
        %v4217 = vrot.slane %v4216, 4
        %v4218 = vadd.f32 %v4216, %v4217
        %v4219 = vrot.slane %v4218, 2
        %v4220 = vadd.f32 %v4218, %v4219
        %v4221 = vrot.slane %v4220, 1
        %v4222 = vadd.f32 %v4220, %v4221
        %v4223 = vsel %vm4215, %v4208, 0.0
        %v4224 = vrot.slane %v4223, 4
        %v4225 = vadd.f32 %v4223, %v4224
        %v4226 = vrot.slane %v4225, 2
        %v4227 = vadd.f32 %v4225, %v4226
        %v4228 = vrot.slane %v4227, 1
        %v4229 = vadd.f32 %v4227, %v4228
        %v4230 = vsel %vm4215, %v4209, 0.0
        %v4231 = vrot.slane %v4230, 4
        %v4232 = vadd.f32 %v4230, %v4231
        %v4233 = vrot.slane %v4232, 2
        %v4234 = vadd.f32 %v4232, %v4233
        %v4235 = vrot.slane %v4234, 1
        %v4236 = vadd.f32 %v4234, %v4235
        %v4237 = vsel %vm4215, %v4210, 0.0
        %v4238 = vrot.slane %v4237, 4
        %v4239 = vadd.f32 %v4237, %v4238
        %v4240 = vrot.slane %v4239, 2
        %v4241 = vadd.f32 %v4239, %v4240
        %v4242 = vrot.slane %v4241, 1
        %v4243 = vadd.f32 %v4241, %v4242
        %v4244 = vsel %vm4215, %v4211, 0.0
        %v4245 = vrot.slane %v4244, 4
        %v4246 = vadd.f32 %v4244, %v4245
        %v4247 = vrot.slane %v4246, 2
        %v4248 = vadd.f32 %v4246, %v4247
        %v4249 = vrot.slane %v4248, 1
        %v4250 = vadd.f32 %v4248, %v4249
        %v4251 = vsel %vm4215, %v4212, 0.0
        %v4252 = vrot.slane %v4251, 4
        %v4253 = vadd.f32 %v4251, %v4252
        %v4254 = vrot.slane %v4253, 2
        %v4255 = vadd.f32 %v4253, %v4254
        %v4256 = vrot.slane %v4255, 1
        %v4257 = vadd.f32 %v4255, %v4256
        %v4258 = vsel %vm4215, %v4213, 0.0
        %v4259 = vrot.slane %v4258, 4
        %v4260 = vadd.f32 %v4258, %v4259
        %v4261 = vrot.slane %v4260, 2
        %v4262 = vadd.f32 %v4260, %v4261
        %v4263 = vrot.slane %v4262, 1
        %v4264 = vadd.f32 %v4262, %v4263
        %v4265 = vsel %vm4215, %v4214, 0.0
        %v4266 = vrot.slane %v4265, 4
        %v4267 = vadd.f32 %v4265, %v4266
        %v4268 = vrot.slane %v4267, 2
        %v4269 = vadd.f32 %v4267, %v4268
        %v4270 = vrot.slane %v4269, 1
        %v4271 = vadd.f32 %v4269, %v4270
        %v4272 = vrcp.pop 4.0
        %v4273 = vmul.f32 %v4222, %v4272
        %v4274 = vmul.f32 %v4229, %v4272
        %v4275 = vmul.f32 %v4236, %v4272
        %v4276 = vmul.f32 %v4243, %v4272
        %v4277 = vmul.f32 %v4250, %v4272
        %v4278 = vmul.f32 %v4257, %v4272
        %v4279 = vmul.f32 %v4264, %v4272
        %v4280 = vmul.f32 %v4271, %v4272
        %v4281 = vadd.s32 %v755, 512
        %v4282 = vadd.s32 %v755, 640
        %v4283 = vadd.s32 %v755, 768
        %v4284 = vadd.s32 %v755, 896
        %s4285 = sld [smem:[#allocation4 + $0x182]]
        %v4286 = vstv %s4285
        %v4287 = vmul.f32 %v4286, %v4273
        %v4288 = vmul.f32 %v4286, %v4274
        %v4289 = vmul.f32 %v4286, %v4275
        %v4290 = vmul.f32 %v4286, %v4276
        %v4291 = vmul.f32 %v4286, %v4277
        %v4292 = vmul.f32 %v4286, %v4278
        %v4293 = vmul.f32 %v4286, %v4279
        %v4294 = vmul.f32 %v4286, %v4280
        %4295 = vrot.lane.b32.xlu0 %v4273, 2
        %v4296 = vpop.permute.xlu0 %4295
        %4297 = vrot.lane.b32.xlu0 %v4274, 2
        %v4298 = vpop.permute.xlu0 %4297
        %4299 = vrot.lane.b32.xlu0 %v4275, 2
        %v4300 = vpop.permute.xlu0 %4299
        %4301 = vrot.lane.b32.xlu0 %v4276, 2
        %v4302 = vpop.permute.xlu0 %4301
        %4303 = vrot.lane.b32.xlu0 %v4277, 2
        %v4304 = vpop.permute.xlu0 %4303
        %4305 = vrot.lane.b32.xlu0 %v4278, 2
        %v4306 = vpop.permute.xlu0 %4305
        %4307 = vrot.lane.b32.xlu0 %v4279, 2
        %v4308 = vpop.permute.xlu0 %4307
        %4309 = vrot.lane.b32.xlu0 %v4280, 2
        %v4310 = vpop.permute.xlu0 %4309
        %v4311 = vsel %vm1205, %v4308, %v4310
        %v4312 = vsel %vm1205, %v4306, %v4308
        %v4313 = vsel %vm1205, %v4304, %v4306
        %v4314 = vsel %vm1205, %v4302, %v4304
        %v4315 = vsel %vm1205, %v4300, %v4302
        %v4316 = vsel %vm1205, %v4298, %v4300
        %v4317 = vsel %vm1205, %v4296, %v4298
        %v4318 = vsel %vm1205, %v4310, %v4296
        %v4319 = vadd.s32 %v4281, 4294967294
        %v4320 = vadd.s32 %v4282, 4294967294
        %v4321 = vadd.s32 %v4283, 4294967294
        %v4322 = vadd.s32 %v4284, 4294967294
        %vm4323 = vcmp.ge.s32.totalorder %v4319, 0
        %vm4324 = vcmp.ge.s32.totalorder %v4320, 0
        %vm4325 = vcmp.ge.s32.totalorder %v4321, 0
        %vm4326 = vcmp.ge.s32.totalorder %v4322, 0
        %vm4327 = vcmp.lt.s32.totalorder %v761, 1024
        %vm4328 = vcmp.lt.s32.totalorder %v1208, 1024
        %vm4329 = vcmp.lt.s32.totalorder %v1962, 1024
        %vm4330 = vcmp.lt.s32.totalorder %v1963, 1024
        %vm4331 = vcmp.lt.s32.totalorder %v4319, 1024
        %vm4332 = vcmp.lt.s32.totalorder %v4320, 1024
        %vm4333 = vcmp.lt.s32.totalorder %v4321, 1024
        %vm4334 = vcmp.lt.s32.totalorder %v4322, 1024
        %vm4335 = vmand %vm762, %vm4327
        %vm4336 = vmand %vm1209, %vm4328
        %vm4337 = vmand %vm1964, %vm4329
        %vm4338 = vmand %vm1965, %vm4330
        %vm4339 = vmand %vm4323, %vm4331
        %vm4340 = vmand %vm4324, %vm4332
        %vm4341 = vmand %vm4325, %vm4333
        %vm4342 = vmand %vm4326, %vm4334
        %s4343 = sld [smem:[#allocation4 + $0x180]]
        %v4344 = vsel %vm4335, %v4318, 0.0
        %v4345 = vsel %vm4336, %v4317, 0.0
        %v4346 = vsel %vm4337, %v4316, 0.0
        %v4347 = vsel %vm4338, %v4315, 0.0
        %v4348 = vsel %vm4339, %v4314, 0.0
        %v4349 = vsel %vm4340, %v4313, 0.0
        %v4350 = vsel %vm4341, %v4312, 0.0
        %v4351 = vsel %vm4342, %v4311, 0.0
        %v4352 = vstv %s4343
        %v4353 = vmul.f32 %v4352, %v4344
        %v4354 = vmul.f32 %v4352, %v4345
        %v4355 = vmul.f32 %v4352, %v4346
        %v4356 = vmul.f32 %v4352, %v4347
        %v4357 = vmul.f32 %v4352, %v4348
        %v4358 = vmul.f32 %v4352, %v4349
        %v4359 = vmul.f32 %v4352, %v4350
        %v4360 = vmul.f32 %v4352, %v4351
        %v4361 = vadd.f32 %v4287, %v4353
        %v4362 = vadd.f32 %v4288, %v4354
        %v4363 = vadd.f32 %v4289, %v4355
        %v4364 = vadd.f32 %v4290, %v4356
        %v4365 = vadd.f32 %v4291, %v4357
        %v4366 = vadd.f32 %v4292, %v4358
        %v4367 = vadd.f32 %v4293, %v4359
        %v4368 = vadd.f32 %v4294, %v4360
        %4369 = vrot.lane.b32.xlu0 %v4273, 1
        %v4370 = vpop.permute.xlu0 %4369
        %4371 = vrot.lane.b32.xlu0 %v4274, 1
        %v4372 = vpop.permute.xlu0 %4371
        %4373 = vrot.lane.b32.xlu0 %v4275, 1
        %v4374 = vpop.permute.xlu0 %4373
        %4375 = vrot.lane.b32.xlu0 %v4276, 1
        %v4376 = vpop.permute.xlu0 %4375
        %4377 = vrot.lane.b32.xlu0 %v4277, 1
        %v4378 = vpop.permute.xlu0 %4377
        %4379 = vrot.lane.b32.xlu0 %v4278, 1
        %v4380 = vpop.permute.xlu0 %4379
        %4381 = vrot.lane.b32.xlu0 %v4279, 1
        %v4382 = vpop.permute.xlu0 %4381
        %4383 = vrot.lane.b32.xlu0 %v4280, 1
        %v4384 = vpop.permute.xlu0 %4383
        %v4385 = vsel %vm1226, %v4382, %v4384
        %v4386 = vsel %vm1226, %v4380, %v4382
        %v4387 = vsel %vm1226, %v4378, %v4380
        %v4388 = vsel %vm1226, %v4376, %v4378
        %v4389 = vsel %vm1226, %v4374, %v4376
        %v4390 = vsel %vm1226, %v4372, %v4374
        %v4391 = vsel %vm1226, %v4370, %v4372
        %v4392 = vsel %vm1226, %v4384, %v4370
        %v4393 = vadd.s32 %v4281, 4294967295
        %v4394 = vadd.s32 %v4282, 4294967295
        %v4395 = vadd.s32 %v4283, 4294967295
        %v4396 = vadd.s32 %v4284, 4294967295
        %vm4397 = vcmp.ge.s32.totalorder %v4393, 0
        %vm4398 = vcmp.ge.s32.totalorder %v4394, 0
        %vm4399 = vcmp.ge.s32.totalorder %v4395, 0
        %vm4400 = vcmp.ge.s32.totalorder %v4396, 0
        %vm4401 = vcmp.lt.s32.totalorder %v772, 1024
        %vm4402 = vcmp.lt.s32.totalorder %v1229, 1024
        %vm4403 = vcmp.lt.s32.totalorder %v2000, 1024
        %vm4404 = vcmp.lt.s32.totalorder %v2001, 1024
        %vm4405 = vcmp.lt.s32.totalorder %v4393, 1024
        %vm4406 = vcmp.lt.s32.totalorder %v4394, 1024
        %vm4407 = vcmp.lt.s32.totalorder %v4395, 1024
        %vm4408 = vcmp.lt.s32.totalorder %v4396, 1024
        %vm4409 = vmand %vm773, %vm4401
        %vm4410 = vmand %vm1230, %vm4402
        %vm4411 = vmand %vm2002, %vm4403
        %vm4412 = vmand %vm2003, %vm4404
        %vm4413 = vmand %vm4397, %vm4405
        %vm4414 = vmand %vm4398, %vm4406
        %vm4415 = vmand %vm4399, %vm4407
        %vm4416 = vmand %vm4400, %vm4408
        %s4417 = sld [smem:[#allocation4 + $0x181]]
        %v4418 = vsel %vm4409, %v4392, 0.0
        %v4419 = vsel %vm4410, %v4391, 0.0
        %v4420 = vsel %vm4411, %v4390, 0.0
        %v4421 = vsel %vm4412, %v4389, 0.0
        %v4422 = vsel %vm4413, %v4388, 0.0
        %v4423 = vsel %vm4414, %v4387, 0.0
        %v4424 = vsel %vm4415, %v4386, 0.0
        %v4425 = vsel %vm4416, %v4385, 0.0
        %v4426 = vstv %s4417
        %v4427 = vmul.f32 %v4426, %v4418
        %v4428 = vmul.f32 %v4426, %v4419
        %v4429 = vmul.f32 %v4426, %v4420
        %v4430 = vmul.f32 %v4426, %v4421
        %v4431 = vmul.f32 %v4426, %v4422
        %v4432 = vmul.f32 %v4426, %v4423
        %v4433 = vmul.f32 %v4426, %v4424
        %v4434 = vmul.f32 %v4426, %v4425
        %v4435 = vadd.f32 %v4361, %v4427
        %v4436 = vadd.f32 %v4362, %v4428
        %v4437 = vadd.f32 %v4363, %v4429
        %v4438 = vadd.f32 %v4364, %v4430
        %v4439 = vadd.f32 %v4365, %v4431
        %v4440 = vadd.f32 %v4366, %v4432
        %v4441 = vadd.f32 %v4367, %v4433
        %v4442 = vadd.f32 %v4368, %v4434
        %4443 = vrot.lane.b32.xlu0 %v4273, 127
        %v4444 = vpop.permute.xlu0 %4443
        %4445 = vrot.lane.b32.xlu0 %v4274, 127
        %v4446 = vpop.permute.xlu0 %4445
        %4447 = vrot.lane.b32.xlu0 %v4275, 127
        %v4448 = vpop.permute.xlu0 %4447
        %4449 = vrot.lane.b32.xlu0 %v4276, 127
        %v4450 = vpop.permute.xlu0 %4449
        %4451 = vrot.lane.b32.xlu0 %v4277, 127
        %v4452 = vpop.permute.xlu0 %4451
        %4453 = vrot.lane.b32.xlu0 %v4278, 127
        %v4454 = vpop.permute.xlu0 %4453
        %4455 = vrot.lane.b32.xlu0 %v4279, 127
        %v4456 = vpop.permute.xlu0 %4455
        %4457 = vrot.lane.b32.xlu0 %v4280, 127
        %v4458 = vpop.permute.xlu0 %4457
        %v4459 = vsel %vm1247, %v4456, %v4458
        %v4460 = vsel %vm1247, %v4454, %v4456
        %v4461 = vsel %vm1247, %v4452, %v4454
        %v4462 = vsel %vm1247, %v4450, %v4452
        %v4463 = vsel %vm1247, %v4448, %v4450
        %v4464 = vsel %vm1247, %v4446, %v4448
        %v4465 = vsel %vm1247, %v4444, %v4446
        %v4466 = vsel %vm1247, %v4458, %v4444
        %v4467 = vadd.s32 %v4281, 1
        %v4468 = vadd.s32 %v4282, 1
        %v4469 = vadd.s32 %v4283, 1
        %v4470 = vadd.s32 %v4284, 1
        %vm4471 = vcmp.ge.s32.totalorder %v4467, 0
        %vm4472 = vcmp.ge.s32.totalorder %v4468, 0
        %vm4473 = vcmp.ge.s32.totalorder %v4469, 0
        %vm4474 = vcmp.ge.s32.totalorder %v4470, 0
        %vm4475 = vcmp.lt.s32.totalorder %v783, 1024
        %vm4476 = vcmp.lt.s32.totalorder %v1250, 1024
        %vm4477 = vcmp.lt.s32.totalorder %v2038, 1024
        %vm4478 = vcmp.lt.s32.totalorder %v2039, 1024
        %vm4479 = vcmp.lt.s32.totalorder %v4467, 1024
        %vm4480 = vcmp.lt.s32.totalorder %v4468, 1024
        %vm4481 = vcmp.lt.s32.totalorder %v4469, 1024
        %vm4482 = vcmp.lt.s32.totalorder %v4470, 1024
        %vm4483 = vmand %vm784, %vm4475
        %vm4484 = vmand %vm1251, %vm4476
        %vm4485 = vmand %vm2040, %vm4477
        %vm4486 = vmand %vm2041, %vm4478
        %vm4487 = vmand %vm4471, %vm4479
        %vm4488 = vmand %vm4472, %vm4480
        %vm4489 = vmand %vm4473, %vm4481
        %vm4490 = vmand %vm4474, %vm4482
        %s4491 = sld [smem:[#allocation4 + $0x183]]
        %v4492 = vsel %vm4483, %v4465, 0.0
        %v4493 = vsel %vm4484, %v4464, 0.0
        %v4494 = vsel %vm4485, %v4463, 0.0
        %v4495 = vsel %vm4486, %v4462, 0.0
        %v4496 = vsel %vm4487, %v4461, 0.0
        %v4497 = vsel %vm4488, %v4460, 0.0
        %v4498 = vsel %vm4489, %v4459, 0.0
        %v4499 = vsel %vm4490, %v4466, 0.0
        %v4500 = vstv %s4491
        %v4501 = vmul.f32 %v4500, %v4492
        %v4502 = vmul.f32 %v4500, %v4493
        %v4503 = vmul.f32 %v4500, %v4494
        %v4504 = vmul.f32 %v4500, %v4495
        %v4505 = vmul.f32 %v4500, %v4496
        %v4506 = vmul.f32 %v4500, %v4497
        %v4507 = vmul.f32 %v4500, %v4498
        %v4508 = vmul.f32 %v4500, %v4499
        %v4509 = vadd.f32 %v4435, %v4501
        %v4510 = vadd.f32 %v4436, %v4502
        %v4511 = vadd.f32 %v4437, %v4503
        %v4512 = vadd.f32 %v4438, %v4504
        %v4513 = vadd.f32 %v4439, %v4505
        %v4514 = vadd.f32 %v4440, %v4506
        %v4515 = vadd.f32 %v4441, %v4507
        %v4516 = vadd.f32 %v4442, %v4508
        %4517 = vrot.lane.b32.xlu0 %v4273, 126
        %v4518 = vpop.permute.xlu0 %4517
        %4519 = vrot.lane.b32.xlu0 %v4274, 126
        %v4520 = vpop.permute.xlu0 %4519
        %4521 = vrot.lane.b32.xlu0 %v4275, 126
        %v4522 = vpop.permute.xlu0 %4521
        %4523 = vrot.lane.b32.xlu0 %v4276, 126
        %v4524 = vpop.permute.xlu0 %4523
        %4525 = vrot.lane.b32.xlu0 %v4277, 126
        %v4526 = vpop.permute.xlu0 %4525
        %4527 = vrot.lane.b32.xlu0 %v4278, 126
        %v4528 = vpop.permute.xlu0 %4527
        %4529 = vrot.lane.b32.xlu0 %v4279, 126
        %v4530 = vpop.permute.xlu0 %4529
        %4531 = vrot.lane.b32.xlu0 %v4280, 126
        %v4532 = vpop.permute.xlu0 %4531
        %v4533 = vsel %vm1268, %v4530, %v4532
        %v4534 = vsel %vm1268, %v4528, %v4530
        %v4535 = vsel %vm1268, %v4526, %v4528
        %v4536 = vsel %vm1268, %v4524, %v4526
        %v4537 = vsel %vm1268, %v4522, %v4524
        %v4538 = vsel %vm1268, %v4520, %v4522
        %v4539 = vsel %vm1268, %v4518, %v4520
        %v4540 = vsel %vm1268, %v4532, %v4518
        %v4541 = vadd.s32 %v4281, 2
        %v4542 = vadd.s32 %v4282, 2
        %v4543 = vadd.s32 %v4283, 2
        %v4544 = vadd.s32 %v4284, 2
        %vm4545 = vcmp.ge.s32.totalorder %v4541, 0
        %vm4546 = vcmp.ge.s32.totalorder %v4542, 0
        %vm4547 = vcmp.ge.s32.totalorder %v4543, 0
        %vm4548 = vcmp.ge.s32.totalorder %v4544, 0
        %vm4549 = vcmp.lt.s32.totalorder %v794, 1024
        %vm4550 = vcmp.lt.s32.totalorder %v1271, 1024
        %vm4551 = vcmp.lt.s32.totalorder %v2076, 1024
        %vm4552 = vcmp.lt.s32.totalorder %v2077, 1024
        %vm4553 = vcmp.lt.s32.totalorder %v4541, 1024
        %vm4554 = vcmp.lt.s32.totalorder %v4542, 1024
        %vm4555 = vcmp.lt.s32.totalorder %v4543, 1024
        %vm4556 = vcmp.lt.s32.totalorder %v4544, 1024
        %vm4557 = vmand %vm795, %vm4549
        %vm4558 = vmand %vm1272, %vm4550
        %vm4559 = vmand %vm2078, %vm4551
        %vm4560 = vmand %vm2079, %vm4552
        %vm4561 = vmand %vm4545, %vm4553
        %vm4562 = vmand %vm4546, %vm4554
        %vm4563 = vmand %vm4547, %vm4555
        %vm4564 = vmand %vm4548, %vm4556
        %s4565 = sld [smem:[#allocation4 + $0x184]]
        %v4566 = vsel %vm4557, %v4539, 0.0
        %v4567 = vsel %vm4558, %v4538, 0.0
        %v4568 = vsel %vm4559, %v4537, 0.0
        %v4569 = vsel %vm4560, %v4536, 0.0
        %v4570 = vsel %vm4561, %v4535, 0.0
        %v4571 = vsel %vm4562, %v4534, 0.0
        %v4572 = vsel %vm4563, %v4533, 0.0
        %v4573 = vsel %vm4564, %v4540, 0.0
        %v4574 = vstv %s4565
        %v4575 = vmul.f32 %v4574, %v4566
        %v4576 = vmul.f32 %v4574, %v4567
        %v4577 = vmul.f32 %v4574, %v4568
        %v4578 = vmul.f32 %v4574, %v4569
        %v4579 = vmul.f32 %v4574, %v4570
        %v4580 = vmul.f32 %v4574, %v4571
        %v4581 = vmul.f32 %v4574, %v4572
        %v4582 = vmul.f32 %v4574, %v4573
        %v4583 = vadd.f32 %v4509, %v4575
        %v4584 = vadd.f32 %v4510, %v4576
        %v4585 = vadd.f32 %v4511, %v4577
        %v4586 = vadd.f32 %v4512, %v4578
        %v4587 = vadd.f32 %v4513, %v4579
        %v4588 = vadd.f32 %v4514, %v4580
        %v4589 = vadd.f32 %v4515, %v4581
        %v4590 = vadd.f32 %v4516, %v4582
        %v4591 = vsub.f32 0.0, %v4583
        %v4592 = vsub.f32 0.0, %v4584
        %v4593 = vsub.f32 0.0, %v4585
        %v4594 = vsub.f32 0.0, %v4586
        %v4595 = vsub.f32 0.0, %v4587
        %v4596 = vsub.f32 0.0, %v4588
        %v4597 = vsub.f32 0.0, %v4589
        %v4598 = vsub.f32 0.0, %v4590
        %v4599 = vmul.f32 %v4591, 1.442695
        %v4600 = vpow.pop %v4599
        %v4601 = vmul.f32 %v4592, 1.442695
        %v4602 = vpow.pop %v4601
        %v4603 = vmul.f32 %v4593, 1.442695
        %v4604 = vpow.pop %v4603
        %v4605 = vmul.f32 %v4594, 1.442695
        %v4606 = vpow.pop %v4605
        %v4607 = vmul.f32 %v4595, 1.442695
        %v4608 = vpow.pop %v4607
        %v4609 = vmul.f32 %v4596, 1.442695
        %v4610 = vpow.pop %v4609
        %v4611 = vmul.f32 %v4597, 1.442695
        %v4612 = vpow.pop %v4611
        %v4613 = vmul.f32 %v4598, 1.442695
        %v4614 = vpow.pop %v4613
        %v4615 = vadd.f32 %v4600, 1.0
        %v4616 = vadd.f32 %v4602, 1.0
        %v4617 = vadd.f32 %v4604, 1.0
        %v4618 = vadd.f32 %v4606, 1.0
        %v4619 = vadd.f32 %v4608, 1.0
        %v4620 = vadd.f32 %v4610, 1.0
        %v4621 = vadd.f32 %v4612, 1.0
        %v4622 = vadd.f32 %v4614, 1.0
        %v4623 = vrcp.pop %v4615
        %v4624 = vmul.f32 1.0, %v4623
        %v4625 = vrcp.pop %v4616
        %v4626 = vmul.f32 1.0, %v4625
        %v4627 = vrcp.pop %v4617
        %v4628 = vmul.f32 1.0, %v4627
        %v4629 = vrcp.pop %v4618
        %v4630 = vmul.f32 1.0, %v4629
        %v4631 = vrcp.pop %v4619
        %v4632 = vmul.f32 1.0, %v4631
        %v4633 = vrcp.pop %v4620
        %v4634 = vmul.f32 1.0, %v4633
        %v4635 = vrcp.pop %v4621
        %v4636 = vmul.f32 1.0, %v4635
        %v4637 = vrcp.pop %v4622
        %v4638 = vmul.f32 1.0, %v4637
        %v4639 = vmul.f32 %v4273, %v4624
        %v4640 = vmul.f32 %v4274, %v4626
        %v4641 = vmul.f32 %v4275, %v4628
        %v4642 = vmul.f32 %v4276, %v4630
        %v4643 = vmul.f32 %v4277, %v4632
        %v4644 = vmul.f32 %v4278, %v4634
        %v4645 = vmul.f32 %v4279, %v4636
        %v4646 = vmul.f32 %v4280, %v4638
        %s4647 = smul.u32 %s34, 128
        %s4648 = sld [smem:[#allocation2 + %s4647]]
        %v4649 = vld [vmem:[%s12] sm:$0x1]
        %v4650 = vstv %s4648
        %v4651 = vmul.f32 %v4650, %v4649
        %v4652 = vld [vmem:[%s13] sm:$0x1]
        %v4653 = vadd.f32 %v4651, %v4652
        %v4654 = vmax.f32 %v4653, 0.0
        %v4655 = vpack.c.bf16 %v4639, %v4639
        %v4656 = vpack.c.bf16 %v4640, %v4640
        %v4657 = vpack.c.bf16 %v4641, %v4641
        %v4658 = vpack.c.bf16 %v4642, %v4642
        %v4659 = vpack.c.bf16 %v4643, %v4643
        %v4660 = vpack.c.bf16 %v4644, %v4644
        %v4661 = vpack.c.bf16 %v4645, %v4645
        %v4662 = vpack.c.bf16 %v4646, %v4646
        %v4663 = vld [vmem:[%s14] sm:$0xff]
        %v4664 = vld [vmem:[%s14 + $0x8] sm:$0xff]
        %v4665 = vld [vmem:[%s14 + $0x10] sm:$0xff]
        %v4666 = vld [vmem:[%s14 + $0x18] sm:$0xff]
        %v4667 = vld [vmem:[%s14 + $0x20] sm:$0xff]
        %v4668 = vld [vmem:[%s14 + $0x28] sm:$0xff]
        %v4669 = vld [vmem:[%s14 + $0x30] sm:$0xff]
        %v4670 = vld [vmem:[%s14 + $0x38] sm:$0xff]
        %v4671 = vld [vmem:[%s14 + $0x40] sm:$0xff]
        %v4672 = vld [vmem:[%s14 + $0x48] sm:$0xff]
        %v4673 = vld [vmem:[%s14 + $0x50] sm:$0xff]
        %v4674 = vld [vmem:[%s14 + $0x58] sm:$0xff]
        %v4675 = vld [vmem:[%s14 + $0x60] sm:$0xff]
        %v4676 = vld [vmem:[%s14 + $0x68] sm:$0xff]
        %v4677 = vld [vmem:[%s14 + $0x70] sm:$0xff]
        %v4678 = vld [vmem:[%s14 + $0x78] sm:$0xff]
        %v4679 = vld [vmem:[%s14 + $0x80] sm:$0xff]
        %v4680 = vld [vmem:[%s14 + $0x88] sm:$0xff]
        %v4681 = vld [vmem:[%s14 + $0x90] sm:$0xff]
        %v4682 = vld [vmem:[%s14 + $0x98] sm:$0xff]
        %v4683 = vld [vmem:[%s14 + $0xa0] sm:$0xff]
        %v4684 = vld [vmem:[%s14 + $0xa8] sm:$0xff]
        %v4685 = vld [vmem:[%s14 + $0xb0] sm:$0xff]
        %v4686 = vld [vmem:[%s14 + $0xb8] sm:$0xff]
        %v4687 = vld [vmem:[%s14 + $0xc0] sm:$0xff]
        %v4688 = vld [vmem:[%s14 + $0xc8] sm:$0xff]
        %v4689 = vld [vmem:[%s14 + $0xd0] sm:$0xff]
        %v4690 = vld [vmem:[%s14 + $0xd8] sm:$0xff]
        %v4691 = vld [vmem:[%s14 + $0xe0] sm:$0xff]
        %v4692 = vld [vmem:[%s14 + $0xe8] sm:$0xff]
        %v4693 = vld [vmem:[%s14 + $0xf0] sm:$0xff]
        %v4694 = vld [vmem:[%s14 + $0xf8] sm:$0xff]
        %v4695 = vld [vmem:[%s14 + $0x100] sm:$0xff]
        %v4696 = vld [vmem:[%s14 + $0x108] sm:$0xff]
        %v4697 = vld [vmem:[%s14 + $0x110] sm:$0xff]
        %v4698 = vld [vmem:[%s14 + $0x118] sm:$0xff]
        %v4699 = vld [vmem:[%s14 + $0x120] sm:$0xff]
        %v4700 = vld [vmem:[%s14 + $0x128] sm:$0xff]
        %v4701 = vld [vmem:[%s14 + $0x130] sm:$0xff]
        %v4702 = vld [vmem:[%s14 + $0x138] sm:$0xff]
        %v4703 = vld [vmem:[%s14 + $0x140] sm:$0xff]
        %v4704 = vld [vmem:[%s14 + $0x148] sm:$0xff]
        %v4705 = vld [vmem:[%s14 + $0x150] sm:$0xff]
        %v4706 = vld [vmem:[%s14 + $0x158] sm:$0xff]
        %v4707 = vld [vmem:[%s14 + $0x160] sm:$0xff]
        %v4708 = vld [vmem:[%s14 + $0x168] sm:$0xff]
        %v4709 = vld [vmem:[%s14 + $0x170] sm:$0xff]
        %v4710 = vld [vmem:[%s14 + $0x178] sm:$0xff]
        %v4711 = vld [vmem:[%s14 + $0x180] sm:$0xff]
        %v4712 = vld [vmem:[%s14 + $0x188] sm:$0xff]
        %v4713 = vld [vmem:[%s14 + $0x190] sm:$0xff]
        %v4714 = vld [vmem:[%s14 + $0x198] sm:$0xff]
        %v4715 = vld [vmem:[%s14 + $0x1a0] sm:$0xff]
        %v4716 = vld [vmem:[%s14 + $0x1a8] sm:$0xff]
        %v4717 = vld [vmem:[%s14 + $0x1b0] sm:$0xff]
        %v4718 = vld [vmem:[%s14 + $0x1b8] sm:$0xff]
        %v4719 = vld [vmem:[%s14 + $0x1c0] sm:$0xff]
        %v4720 = vld [vmem:[%s14 + $0x1c8] sm:$0xff]
        %v4721 = vld [vmem:[%s14 + $0x1d0] sm:$0xff]
        %v4722 = vld [vmem:[%s14 + $0x1d8] sm:$0xff]
        %v4723 = vld [vmem:[%s14 + $0x1e0] sm:$0xff]
        %v4724 = vld [vmem:[%s14 + $0x1e8] sm:$0xff]
        %v4725 = vld [vmem:[%s14 + $0x1f0] sm:$0xff]
        %v4726 = vld [vmem:[%s14 + $0x1f8] sm:$0xff]
        %v4727 = vld [vmem:[%s14 + $0x200] sm:$0xff]
        %v4728 = vld [vmem:[%s14 + $0x208] sm:$0xff]
        %v4729 = vld [vmem:[%s14 + $0x210] sm:$0xff]
        %v4730 = vld [vmem:[%s14 + $0x218] sm:$0xff]
        %v4731 = vld [vmem:[%s14 + $0x220] sm:$0xff]
        %v4732 = vld [vmem:[%s14 + $0x228] sm:$0xff]
        %v4733 = vld [vmem:[%s14 + $0x230] sm:$0xff]
        %v4734 = vld [vmem:[%s14 + $0x238] sm:$0xff]
        %v4735 = vld [vmem:[%s14 + $0x240] sm:$0xff]
        %v4736 = vld [vmem:[%s14 + $0x248] sm:$0xff]
        %v4737 = vld [vmem:[%s14 + $0x250] sm:$0xff]
        %v4738 = vld [vmem:[%s14 + $0x258] sm:$0xff]
        %v4739 = vld [vmem:[%s14 + $0x260] sm:$0xff]
        %v4740 = vld [vmem:[%s14 + $0x268] sm:$0xff]
        %v4741 = vld [vmem:[%s14 + $0x270] sm:$0xff]
        %v4742 = vld [vmem:[%s14 + $0x278] sm:$0xff]
        %v4743 = vld [vmem:[%s14 + $0x280] sm:$0xff]
        %v4744 = vld [vmem:[%s14 + $0x288] sm:$0xff]
        %v4745 = vld [vmem:[%s14 + $0x290] sm:$0xff]
        %v4746 = vld [vmem:[%s14 + $0x298] sm:$0xff]
        %v4747 = vld [vmem:[%s14 + $0x2a0] sm:$0xff]
        %v4748 = vld [vmem:[%s14 + $0x2a8] sm:$0xff]
        %v4749 = vld [vmem:[%s14 + $0x2b0] sm:$0xff]
        %v4750 = vld [vmem:[%s14 + $0x2b8] sm:$0xff]
        %v4751 = vld [vmem:[%s14 + $0x2c0] sm:$0xff]
        %v4752 = vld [vmem:[%s14 + $0x2c8] sm:$0xff]
        %v4753 = vld [vmem:[%s14 + $0x2d0] sm:$0xff]
        %v4754 = vld [vmem:[%s14 + $0x2d8] sm:$0xff]
        %v4755 = vld [vmem:[%s14 + $0x2e0] sm:$0xff]
        %v4756 = vld [vmem:[%s14 + $0x2e8] sm:$0xff]
        %v4757 = vld [vmem:[%s14 + $0x2f0] sm:$0xff]
        %v4758 = vld [vmem:[%s14 + $0x2f8] sm:$0xff]
        %v4759 = vld [vmem:[%s14 + $0x300] sm:$0xff]
        %v4760 = vld [vmem:[%s14 + $0x308] sm:$0xff]
        %v4761 = vld [vmem:[%s14 + $0x310] sm:$0xff]
        %v4762 = vld [vmem:[%s14 + $0x318] sm:$0xff]
        %v4763 = vld [vmem:[%s14 + $0x320] sm:$0xff]
        %v4764 = vld [vmem:[%s14 + $0x328] sm:$0xff]
        %v4765 = vld [vmem:[%s14 + $0x330] sm:$0xff]
        %v4766 = vld [vmem:[%s14 + $0x338] sm:$0xff]
        %v4767 = vld [vmem:[%s14 + $0x340] sm:$0xff]
        %v4768 = vld [vmem:[%s14 + $0x348] sm:$0xff]
        %v4769 = vld [vmem:[%s14 + $0x350] sm:$0xff]
        %v4770 = vld [vmem:[%s14 + $0x358] sm:$0xff]
        %v4771 = vld [vmem:[%s14 + $0x360] sm:$0xff]
        %v4772 = vld [vmem:[%s14 + $0x368] sm:$0xff]
        %v4773 = vld [vmem:[%s14 + $0x370] sm:$0xff]
        %v4774 = vld [vmem:[%s14 + $0x378] sm:$0xff]
        %v4775 = vld [vmem:[%s14 + $0x380] sm:$0xff]
        %v4776 = vld [vmem:[%s14 + $0x388] sm:$0xff]
        %v4777 = vld [vmem:[%s14 + $0x390] sm:$0xff]
        %v4778 = vld [vmem:[%s14 + $0x398] sm:$0xff]
        %v4779 = vld [vmem:[%s14 + $0x3a0] sm:$0xff]
        %v4780 = vld [vmem:[%s14 + $0x3a8] sm:$0xff]
        %v4781 = vld [vmem:[%s14 + $0x3b0] sm:$0xff]
        %v4782 = vld [vmem:[%s14 + $0x3b8] sm:$0xff]
        %v4783 = vld [vmem:[%s14 + $0x3c0] sm:$0xff]
        %v4784 = vld [vmem:[%s14 + $0x3c8] sm:$0xff]
        %v4785 = vld [vmem:[%s14 + $0x3d0] sm:$0xff]
        %v4786 = vld [vmem:[%s14 + $0x3d8] sm:$0xff]
        %v4787 = vld [vmem:[%s14 + $0x3e0] sm:$0xff]
        %v4788 = vld [vmem:[%s14 + $0x3e8] sm:$0xff]
        %v4789 = vld [vmem:[%s14 + $0x3f0] sm:$0xff]
        %v4790 = vld [vmem:[%s14 + $0x3f8] sm:$0xff]
        %v4791 = vld [vmem:[%s14 + $0x400] sm:$0xff]
        %v4792 = vld [vmem:[%s14 + $0x408] sm:$0xff]
        %v4793 = vld [vmem:[%s14 + $0x410] sm:$0xff]
        %v4794 = vld [vmem:[%s14 + $0x418] sm:$0xff]
        %v4795 = vld [vmem:[%s14 + $0x420] sm:$0xff]
        %v4796 = vld [vmem:[%s14 + $0x428] sm:$0xff]
        %v4797 = vld [vmem:[%s14 + $0x430] sm:$0xff]
        %v4798 = vld [vmem:[%s14 + $0x438] sm:$0xff]
        %v4799 = vld [vmem:[%s14 + $0x440] sm:$0xff]
        %v4800 = vld [vmem:[%s14 + $0x448] sm:$0xff]
        %v4801 = vld [vmem:[%s14 + $0x450] sm:$0xff]
        %v4802 = vld [vmem:[%s14 + $0x458] sm:$0xff]
        %v4803 = vld [vmem:[%s14 + $0x460] sm:$0xff]
        %v4804 = vld [vmem:[%s14 + $0x468] sm:$0xff]
        %v4805 = vld [vmem:[%s14 + $0x470] sm:$0xff]
        %v4806 = vld [vmem:[%s14 + $0x478] sm:$0xff]
        %v4807 = vld [vmem:[%s14 + $0x480] sm:$0xff]
        %v4808 = vld [vmem:[%s14 + $0x488] sm:$0xff]
        %v4809 = vld [vmem:[%s14 + $0x490] sm:$0xff]
        %v4810 = vld [vmem:[%s14 + $0x498] sm:$0xff]
        %v4811 = vld [vmem:[%s14 + $0x4a0] sm:$0xff]
        %v4812 = vld [vmem:[%s14 + $0x4a8] sm:$0xff]
        %v4813 = vld [vmem:[%s14 + $0x4b0] sm:$0xff]
        %v4814 = vld [vmem:[%s14 + $0x4b8] sm:$0xff]
        %v4815 = vld [vmem:[%s14 + $0x4c0] sm:$0xff]
        %v4816 = vld [vmem:[%s14 + $0x4c8] sm:$0xff]
        %v4817 = vld [vmem:[%s14 + $0x4d0] sm:$0xff]
        %v4818 = vld [vmem:[%s14 + $0x4d8] sm:$0xff]
        %v4819 = vld [vmem:[%s14 + $0x4e0] sm:$0xff]
        %v4820 = vld [vmem:[%s14 + $0x4e8] sm:$0xff]
        %v4821 = vld [vmem:[%s14 + $0x4f0] sm:$0xff]
        %v4822 = vld [vmem:[%s14 + $0x4f8] sm:$0xff]
        %v4823 = vld [vmem:[%s14 + $0x500] sm:$0xff]
        %v4824 = vld [vmem:[%s14 + $0x508] sm:$0xff]
        %v4825 = vld [vmem:[%s14 + $0x510] sm:$0xff]
        %v4826 = vld [vmem:[%s14 + $0x518] sm:$0xff]
        %v4827 = vld [vmem:[%s14 + $0x520] sm:$0xff]
        %v4828 = vld [vmem:[%s14 + $0x528] sm:$0xff]
        %v4829 = vld [vmem:[%s14 + $0x530] sm:$0xff]
        %v4830 = vld [vmem:[%s14 + $0x538] sm:$0xff]
        %v4831 = vld [vmem:[%s14 + $0x540] sm:$0xff]
        %v4832 = vld [vmem:[%s14 + $0x548] sm:$0xff]
        %v4833 = vld [vmem:[%s14 + $0x550] sm:$0xff]
        %v4834 = vld [vmem:[%s14 + $0x558] sm:$0xff]
        %v4835 = vld [vmem:[%s14 + $0x560] sm:$0xff]
        %v4836 = vld [vmem:[%s14 + $0x568] sm:$0xff]
        %v4837 = vld [vmem:[%s14 + $0x570] sm:$0xff]
        %v4838 = vld [vmem:[%s14 + $0x578] sm:$0xff]
        %v4839 = vld [vmem:[%s14 + $0x580] sm:$0xff]
        %v4840 = vld [vmem:[%s14 + $0x588] sm:$0xff]
        %v4841 = vld [vmem:[%s14 + $0x590] sm:$0xff]
        %v4842 = vld [vmem:[%s14 + $0x598] sm:$0xff]
        %v4843 = vld [vmem:[%s14 + $0x5a0] sm:$0xff]
        %v4844 = vld [vmem:[%s14 + $0x5a8] sm:$0xff]
        %v4845 = vld [vmem:[%s14 + $0x5b0] sm:$0xff]
        %v4846 = vld [vmem:[%s14 + $0x5b8] sm:$0xff]
        %v4847 = vld [vmem:[%s14 + $0x5c0] sm:$0xff]
        %v4848 = vld [vmem:[%s14 + $0x5c8] sm:$0xff]
        %v4849 = vld [vmem:[%s14 + $0x5d0] sm:$0xff]
        %v4850 = vld [vmem:[%s14 + $0x5d8] sm:$0xff]
        %v4851 = vld [vmem:[%s14 + $0x5e0] sm:$0xff]
        %v4852 = vld [vmem:[%s14 + $0x5e8] sm:$0xff]
        %v4853 = vld [vmem:[%s14 + $0x5f0] sm:$0xff]
        %v4854 = vld [vmem:[%s14 + $0x5f8] sm:$0xff]
        %v4855 = vld [vmem:[%s14 + $0x600] sm:$0xff]
        %v4856 = vld [vmem:[%s14 + $0x608] sm:$0xff]
        %v4857 = vld [vmem:[%s14 + $0x610] sm:$0xff]
        %v4858 = vld [vmem:[%s14 + $0x618] sm:$0xff]
        %v4859 = vld [vmem:[%s14 + $0x620] sm:$0xff]
        %v4860 = vld [vmem:[%s14 + $0x628] sm:$0xff]
        %v4861 = vld [vmem:[%s14 + $0x630] sm:$0xff]
        %v4862 = vld [vmem:[%s14 + $0x638] sm:$0xff]
        %v4863 = vld [vmem:[%s14 + $0x640] sm:$0xff]
        %v4864 = vld [vmem:[%s14 + $0x648] sm:$0xff]
        %v4865 = vld [vmem:[%s14 + $0x650] sm:$0xff]
        %v4866 = vld [vmem:[%s14 + $0x658] sm:$0xff]
        %v4867 = vld [vmem:[%s14 + $0x660] sm:$0xff]
        %v4868 = vld [vmem:[%s14 + $0x668] sm:$0xff]
        %v4869 = vld [vmem:[%s14 + $0x670] sm:$0xff]
        %v4870 = vld [vmem:[%s14 + $0x678] sm:$0xff]
        %v4871 = vld [vmem:[%s14 + $0x680] sm:$0xff]
        %v4872 = vld [vmem:[%s14 + $0x688] sm:$0xff]
        %v4873 = vld [vmem:[%s14 + $0x690] sm:$0xff]
        %v4874 = vld [vmem:[%s14 + $0x698] sm:$0xff]
        %v4875 = vld [vmem:[%s14 + $0x6a0] sm:$0xff]
        %v4876 = vld [vmem:[%s14 + $0x6a8] sm:$0xff]
        %v4877 = vld [vmem:[%s14 + $0x6b0] sm:$0xff]
        %v4878 = vld [vmem:[%s14 + $0x6b8] sm:$0xff]
        %v4879 = vld [vmem:[%s14 + $0x6c0] sm:$0xff]
        %v4880 = vld [vmem:[%s14 + $0x6c8] sm:$0xff]
        %v4881 = vld [vmem:[%s14 + $0x6d0] sm:$0xff]
        %v4882 = vld [vmem:[%s14 + $0x6d8] sm:$0xff]
        %v4883 = vld [vmem:[%s14 + $0x6e0] sm:$0xff]
        %v4884 = vld [vmem:[%s14 + $0x6e8] sm:$0xff]
        %v4885 = vld [vmem:[%s14 + $0x6f0] sm:$0xff]
        %v4886 = vld [vmem:[%s14 + $0x6f8] sm:$0xff]
        %v4887 = vld [vmem:[%s14 + $0x700] sm:$0xff]
        %v4888 = vld [vmem:[%s14 + $0x708] sm:$0xff]
        %v4889 = vld [vmem:[%s14 + $0x710] sm:$0xff]
        %v4890 = vld [vmem:[%s14 + $0x718] sm:$0xff]
        %v4891 = vld [vmem:[%s14 + $0x720] sm:$0xff]
        %v4892 = vld [vmem:[%s14 + $0x728] sm:$0xff]
        %v4893 = vld [vmem:[%s14 + $0x730] sm:$0xff]
        %v4894 = vld [vmem:[%s14 + $0x738] sm:$0xff]
        %v4895 = vld [vmem:[%s14 + $0x740] sm:$0xff]
        %v4896 = vld [vmem:[%s14 + $0x748] sm:$0xff]
        %v4897 = vld [vmem:[%s14 + $0x750] sm:$0xff]
        %v4898 = vld [vmem:[%s14 + $0x758] sm:$0xff]
        %v4899 = vld [vmem:[%s14 + $0x760] sm:$0xff]
        %v4900 = vld [vmem:[%s14 + $0x768] sm:$0xff]
        %v4901 = vld [vmem:[%s14 + $0x770] sm:$0xff]
        %v4902 = vld [vmem:[%s14 + $0x778] sm:$0xff]
        %v4903 = vld [vmem:[%s14 + $0x780] sm:$0xff]
        %v4904 = vld [vmem:[%s14 + $0x788] sm:$0xff]
        %v4905 = vld [vmem:[%s14 + $0x790] sm:$0xff]
        %v4906 = vld [vmem:[%s14 + $0x798] sm:$0xff]
        %v4907 = vld [vmem:[%s14 + $0x7a0] sm:$0xff]
        %v4908 = vld [vmem:[%s14 + $0x7a8] sm:$0xff]
        %v4909 = vld [vmem:[%s14 + $0x7b0] sm:$0xff]
        %v4910 = vld [vmem:[%s14 + $0x7b8] sm:$0xff]
        %v4911 = vld [vmem:[%s14 + $0x7c0] sm:$0xff]
        %v4912 = vld [vmem:[%s14 + $0x7c8] sm:$0xff]
        %v4913 = vld [vmem:[%s14 + $0x7d0] sm:$0xff]
        %v4914 = vld [vmem:[%s14 + $0x7d8] sm:$0xff]
        %v4915 = vld [vmem:[%s14 + $0x7e0] sm:$0xff]
        %v4916 = vld [vmem:[%s14 + $0x7e8] sm:$0xff]
        %v4917 = vld [vmem:[%s14 + $0x7f0] sm:$0xff]
        %v4918 = vld [vmem:[%s14 + $0x7f8] sm:$0xff]
        %v4919 = vld [vmem:[%s14 + $0x800] sm:$0xff]
        %v4920 = vld [vmem:[%s14 + $0x808] sm:$0xff]
        %v4921 = vld [vmem:[%s14 + $0x810] sm:$0xff]
        %v4922 = vld [vmem:[%s14 + $0x818] sm:$0xff]
        %v4923 = vld [vmem:[%s14 + $0x820] sm:$0xff]
        %v4924 = vld [vmem:[%s14 + $0x828] sm:$0xff]
        %v4925 = vld [vmem:[%s14 + $0x830] sm:$0xff]
        %v4926 = vld [vmem:[%s14 + $0x838] sm:$0xff]
        %v4927 = vld [vmem:[%s14 + $0x840] sm:$0xff]
        %v4928 = vld [vmem:[%s14 + $0x848] sm:$0xff]
        %v4929 = vld [vmem:[%s14 + $0x850] sm:$0xff]
        %v4930 = vld [vmem:[%s14 + $0x858] sm:$0xff]
        %v4931 = vld [vmem:[%s14 + $0x860] sm:$0xff]
        %v4932 = vld [vmem:[%s14 + $0x868] sm:$0xff]
        %v4933 = vld [vmem:[%s14 + $0x870] sm:$0xff]
        %v4934 = vld [vmem:[%s14 + $0x878] sm:$0xff]
        %v4935 = vld [vmem:[%s14 + $0x880] sm:$0xff]
        %v4936 = vld [vmem:[%s14 + $0x888] sm:$0xff]
        %v4937 = vld [vmem:[%s14 + $0x890] sm:$0xff]
        %v4938 = vld [vmem:[%s14 + $0x898] sm:$0xff]
        %v4939 = vld [vmem:[%s14 + $0x8a0] sm:$0xff]
        %v4940 = vld [vmem:[%s14 + $0x8a8] sm:$0xff]
        %v4941 = vld [vmem:[%s14 + $0x8b0] sm:$0xff]
        %v4942 = vld [vmem:[%s14 + $0x8b8] sm:$0xff]
        %v4943 = vld [vmem:[%s14 + $0x8c0] sm:$0xff]
        %v4944 = vld [vmem:[%s14 + $0x8c8] sm:$0xff]
        %v4945 = vld [vmem:[%s14 + $0x8d0] sm:$0xff]
        %v4946 = vld [vmem:[%s14 + $0x8d8] sm:$0xff]
        %v4947 = vld [vmem:[%s14 + $0x8e0] sm:$0xff]
        %v4948 = vld [vmem:[%s14 + $0x8e8] sm:$0xff]
        %v4949 = vld [vmem:[%s14 + $0x8f0] sm:$0xff]
        %v4950 = vld [vmem:[%s14 + $0x8f8] sm:$0xff]
        %v4951 = vld [vmem:[%s14 + $0x900] sm:$0xff]
        %v4952 = vld [vmem:[%s14 + $0x908] sm:$0xff]
        %v4953 = vld [vmem:[%s14 + $0x910] sm:$0xff]
        %v4954 = vld [vmem:[%s14 + $0x918] sm:$0xff]
        %v4955 = vld [vmem:[%s14 + $0x920] sm:$0xff]
        %v4956 = vld [vmem:[%s14 + $0x928] sm:$0xff]
        %v4957 = vld [vmem:[%s14 + $0x930] sm:$0xff]
        %v4958 = vld [vmem:[%s14 + $0x938] sm:$0xff]
        %v4959 = vld [vmem:[%s14 + $0x940] sm:$0xff]
        %v4960 = vld [vmem:[%s14 + $0x948] sm:$0xff]
        %v4961 = vld [vmem:[%s14 + $0x950] sm:$0xff]
        %v4962 = vld [vmem:[%s14 + $0x958] sm:$0xff]
        %v4963 = vld [vmem:[%s14 + $0x960] sm:$0xff]
        %v4964 = vld [vmem:[%s14 + $0x968] sm:$0xff]
        %v4965 = vld [vmem:[%s14 + $0x970] sm:$0xff]
        %v4966 = vld [vmem:[%s14 + $0x978] sm:$0xff]
        %v4967 = vld [vmem:[%s14 + $0x980] sm:$0xff]
        %v4968 = vld [vmem:[%s14 + $0x988] sm:$0xff]
        %v4969 = vld [vmem:[%s14 + $0x990] sm:$0xff]
        %v4970 = vld [vmem:[%s14 + $0x998] sm:$0xff]
        %v4971 = vld [vmem:[%s14 + $0x9a0] sm:$0xff]
        %v4972 = vld [vmem:[%s14 + $0x9a8] sm:$0xff]
        %v4973 = vld [vmem:[%s14 + $0x9b0] sm:$0xff]
        %v4974 = vld [vmem:[%s14 + $0x9b8] sm:$0xff]
        %v4975 = vld [vmem:[%s14 + $0x9c0] sm:$0xff]
        %v4976 = vld [vmem:[%s14 + $0x9c8] sm:$0xff]
        %v4977 = vld [vmem:[%s14 + $0x9d0] sm:$0xff]
        %v4978 = vld [vmem:[%s14 + $0x9d8] sm:$0xff]
        %v4979 = vld [vmem:[%s14 + $0x9e0] sm:$0xff]
        %v4980 = vld [vmem:[%s14 + $0x9e8] sm:$0xff]
        %v4981 = vld [vmem:[%s14 + $0x9f0] sm:$0xff]
        %v4982 = vld [vmem:[%s14 + $0x9f8] sm:$0xff]
        %v4983 = vld [vmem:[%s14 + $0xa00] sm:$0xff]
        %v4984 = vld [vmem:[%s14 + $0xa08] sm:$0xff]
        %v4985 = vld [vmem:[%s14 + $0xa10] sm:$0xff]
        %v4986 = vld [vmem:[%s14 + $0xa18] sm:$0xff]
        %v4987 = vld [vmem:[%s14 + $0xa20] sm:$0xff]
        %v4988 = vld [vmem:[%s14 + $0xa28] sm:$0xff]
        %v4989 = vld [vmem:[%s14 + $0xa30] sm:$0xff]
        %v4990 = vld [vmem:[%s14 + $0xa38] sm:$0xff]
        %v4991 = vld [vmem:[%s14 + $0xa40] sm:$0xff]
        %v4992 = vld [vmem:[%s14 + $0xa48] sm:$0xff]
        %v4993 = vld [vmem:[%s14 + $0xa50] sm:$0xff]
        %v4994 = vld [vmem:[%s14 + $0xa58] sm:$0xff]
        %v4995 = vld [vmem:[%s14 + $0xa60] sm:$0xff]
        %v4996 = vld [vmem:[%s14 + $0xa68] sm:$0xff]
        %v4997 = vld [vmem:[%s14 + $0xa70] sm:$0xff]
        %v4998 = vld [vmem:[%s14 + $0xa78] sm:$0xff]
        %v4999 = vld [vmem:[%s14 + $0xa80] sm:$0xff]
        %v5000 = vld [vmem:[%s14 + $0xa88] sm:$0xff]
        %v5001 = vld [vmem:[%s14 + $0xa90] sm:$0xff]
        %v5002 = vld [vmem:[%s14 + $0xa98] sm:$0xff]
        %v5003 = vld [vmem:[%s14 + $0xaa0] sm:$0xff]
        %v5004 = vld [vmem:[%s14 + $0xaa8] sm:$0xff]
        %v5005 = vld [vmem:[%s14 + $0xab0] sm:$0xff]
        %v5006 = vld [vmem:[%s14 + $0xab8] sm:$0xff]
        %v5007 = vld [vmem:[%s14 + $0xac0] sm:$0xff]
        %v5008 = vld [vmem:[%s14 + $0xac8] sm:$0xff]
        %v5009 = vld [vmem:[%s14 + $0xad0] sm:$0xff]
        %v5010 = vld [vmem:[%s14 + $0xad8] sm:$0xff]
        %v5011 = vld [vmem:[%s14 + $0xae0] sm:$0xff]
        %v5012 = vld [vmem:[%s14 + $0xae8] sm:$0xff]
        %v5013 = vld [vmem:[%s14 + $0xaf0] sm:$0xff]
        %v5014 = vld [vmem:[%s14 + $0xaf8] sm:$0xff]
        %v5015 = vld [vmem:[%s14 + $0xb00] sm:$0xff]
        %v5016 = vld [vmem:[%s14 + $0xb08] sm:$0xff]
        %v5017 = vld [vmem:[%s14 + $0xb10] sm:$0xff]
        %v5018 = vld [vmem:[%s14 + $0xb18] sm:$0xff]
        %v5019 = vld [vmem:[%s14 + $0xb20] sm:$0xff]
        %v5020 = vld [vmem:[%s14 + $0xb28] sm:$0xff]
        %v5021 = vld [vmem:[%s14 + $0xb30] sm:$0xff]
        %v5022 = vld [vmem:[%s14 + $0xb38] sm:$0xff]
        %v5023 = vld [vmem:[%s14 + $0xb40] sm:$0xff]
        %v5024 = vld [vmem:[%s14 + $0xb48] sm:$0xff]
        %v5025 = vld [vmem:[%s14 + $0xb50] sm:$0xff]
        %v5026 = vld [vmem:[%s14 + $0xb58] sm:$0xff]
        %v5027 = vld [vmem:[%s14 + $0xb60] sm:$0xff]
        %v5028 = vld [vmem:[%s14 + $0xb68] sm:$0xff]
        %v5029 = vld [vmem:[%s14 + $0xb70] sm:$0xff]
        %v5030 = vld [vmem:[%s14 + $0xb78] sm:$0xff]
        %v5031 = vld [vmem:[%s14 + $0xb80] sm:$0xff]
        %v5032 = vld [vmem:[%s14 + $0xb88] sm:$0xff]
        %v5033 = vld [vmem:[%s14 + $0xb90] sm:$0xff]
        %v5034 = vld [vmem:[%s14 + $0xb98] sm:$0xff]
        %v5035 = vld [vmem:[%s14 + $0xba0] sm:$0xff]
        %v5036 = vld [vmem:[%s14 + $0xba8] sm:$0xff]
        %v5037 = vld [vmem:[%s14 + $0xbb0] sm:$0xff]
        %v5038 = vld [vmem:[%s14 + $0xbb8] sm:$0xff]
        %v5039 = vld [vmem:[%s14 + $0xbc0] sm:$0xff]
        %v5040 = vld [vmem:[%s14 + $0xbc8] sm:$0xff]
        %v5041 = vld [vmem:[%s14 + $0xbd0] sm:$0xff]
        %v5042 = vld [vmem:[%s14 + $0xbd8] sm:$0xff]
        %v5043 = vld [vmem:[%s14 + $0xbe0] sm:$0xff]
        %v5044 = vld [vmem:[%s14 + $0xbe8] sm:$0xff]
        %v5045 = vld [vmem:[%s14 + $0xbf0] sm:$0xff]
        %v5046 = vld [vmem:[%s14 + $0xbf8] sm:$0xff]
        %v5047 = vld [vmem:[%s14 + $0xc00] sm:$0xff]
        %v5048 = vld [vmem:[%s14 + $0xc08] sm:$0xff]
        %v5049 = vld [vmem:[%s14 + $0xc10] sm:$0xff]
        %v5050 = vld [vmem:[%s14 + $0xc18] sm:$0xff]
        %v5051 = vld [vmem:[%s14 + $0xc20] sm:$0xff]
        %v5052 = vld [vmem:[%s14 + $0xc28] sm:$0xff]
        %v5053 = vld [vmem:[%s14 + $0xc30] sm:$0xff]
        %v5054 = vld [vmem:[%s14 + $0xc38] sm:$0xff]
        %v5055 = vld [vmem:[%s14 + $0xc40] sm:$0xff]
        %v5056 = vld [vmem:[%s14 + $0xc48] sm:$0xff]
        %v5057 = vld [vmem:[%s14 + $0xc50] sm:$0xff]
        %v5058 = vld [vmem:[%s14 + $0xc58] sm:$0xff]
        %v5059 = vld [vmem:[%s14 + $0xc60] sm:$0xff]
        %v5060 = vld [vmem:[%s14 + $0xc68] sm:$0xff]
        %v5061 = vld [vmem:[%s14 + $0xc70] sm:$0xff]
        %v5062 = vld [vmem:[%s14 + $0xc78] sm:$0xff]
        %v5063 = vld [vmem:[%s14 + $0xc80] sm:$0xff]
        %v5064 = vld [vmem:[%s14 + $0xc88] sm:$0xff]
        %v5065 = vld [vmem:[%s14 + $0xc90] sm:$0xff]
        %v5066 = vld [vmem:[%s14 + $0xc98] sm:$0xff]
        %v5067 = vld [vmem:[%s14 + $0xca0] sm:$0xff]
        %v5068 = vld [vmem:[%s14 + $0xca8] sm:$0xff]
        %v5069 = vld [vmem:[%s14 + $0xcb0] sm:$0xff]
        %v5070 = vld [vmem:[%s14 + $0xcb8] sm:$0xff]
        %v5071 = vld [vmem:[%s14 + $0xcc0] sm:$0xff]
        %v5072 = vld [vmem:[%s14 + $0xcc8] sm:$0xff]
        %v5073 = vld [vmem:[%s14 + $0xcd0] sm:$0xff]
        %v5074 = vld [vmem:[%s14 + $0xcd8] sm:$0xff]
        %v5075 = vld [vmem:[%s14 + $0xce0] sm:$0xff]
        %v5076 = vld [vmem:[%s14 + $0xce8] sm:$0xff]
        %v5077 = vld [vmem:[%s14 + $0xcf0] sm:$0xff]
        %v5078 = vld [vmem:[%s14 + $0xcf8] sm:$0xff]
        %v5079 = vld [vmem:[%s14 + $0xd00] sm:$0xff]
        %v5080 = vld [vmem:[%s14 + $0xd08] sm:$0xff]
        %v5081 = vld [vmem:[%s14 + $0xd10] sm:$0xff]
        %v5082 = vld [vmem:[%s14 + $0xd18] sm:$0xff]
        %v5083 = vld [vmem:[%s14 + $0xd20] sm:$0xff]
        %v5084 = vld [vmem:[%s14 + $0xd28] sm:$0xff]
        %v5085 = vld [vmem:[%s14 + $0xd30] sm:$0xff]
        %v5086 = vld [vmem:[%s14 + $0xd38] sm:$0xff]
        %v5087 = vld [vmem:[%s14 + $0xd40] sm:$0xff]
        %v5088 = vld [vmem:[%s14 + $0xd48] sm:$0xff]
        %v5089 = vld [vmem:[%s14 + $0xd50] sm:$0xff]
        %v5090 = vld [vmem:[%s14 + $0xd58] sm:$0xff]
        %v5091 = vld [vmem:[%s14 + $0xd60] sm:$0xff]
        %v5092 = vld [vmem:[%s14 + $0xd68] sm:$0xff]
        %v5093 = vld [vmem:[%s14 + $0xd70] sm:$0xff]
        %v5094 = vld [vmem:[%s14 + $0xd78] sm:$0xff]
        %v5095 = vld [vmem:[%s14 + $0xd80] sm:$0xff]
        %v5096 = vld [vmem:[%s14 + $0xd88] sm:$0xff]
        %v5097 = vld [vmem:[%s14 + $0xd90] sm:$0xff]
        %v5098 = vld [vmem:[%s14 + $0xd98] sm:$0xff]
        %v5099 = vld [vmem:[%s14 + $0xda0] sm:$0xff]
        %v5100 = vld [vmem:[%s14 + $0xda8] sm:$0xff]
        %v5101 = vld [vmem:[%s14 + $0xdb0] sm:$0xff]
        %v5102 = vld [vmem:[%s14 + $0xdb8] sm:$0xff]
        %v5103 = vld [vmem:[%s14 + $0xdc0] sm:$0xff]
        %v5104 = vld [vmem:[%s14 + $0xdc8] sm:$0xff]
        %v5105 = vld [vmem:[%s14 + $0xdd0] sm:$0xff]
        %v5106 = vld [vmem:[%s14 + $0xdd8] sm:$0xff]
        %v5107 = vld [vmem:[%s14 + $0xde0] sm:$0xff]
        %v5108 = vld [vmem:[%s14 + $0xde8] sm:$0xff]
        %v5109 = vld [vmem:[%s14 + $0xdf0] sm:$0xff]
        %v5110 = vld [vmem:[%s14 + $0xdf8] sm:$0xff]
        %v5111 = vld [vmem:[%s14 + $0xe00] sm:$0xff]
        %v5112 = vld [vmem:[%s14 + $0xe08] sm:$0xff]
        %v5113 = vld [vmem:[%s14 + $0xe10] sm:$0xff]
        %v5114 = vld [vmem:[%s14 + $0xe18] sm:$0xff]
        %v5115 = vld [vmem:[%s14 + $0xe20] sm:$0xff]
        %v5116 = vld [vmem:[%s14 + $0xe28] sm:$0xff]
        %v5117 = vld [vmem:[%s14 + $0xe30] sm:$0xff]
        %v5118 = vld [vmem:[%s14 + $0xe38] sm:$0xff]
        %v5119 = vld [vmem:[%s14 + $0xe40] sm:$0xff]
        %v5120 = vld [vmem:[%s14 + $0xe48] sm:$0xff]
        %v5121 = vld [vmem:[%s14 + $0xe50] sm:$0xff]
        %v5122 = vld [vmem:[%s14 + $0xe58] sm:$0xff]
        %v5123 = vld [vmem:[%s14 + $0xe60] sm:$0xff]
        %v5124 = vld [vmem:[%s14 + $0xe68] sm:$0xff]
        %v5125 = vld [vmem:[%s14 + $0xe70] sm:$0xff]
        %v5126 = vld [vmem:[%s14 + $0xe78] sm:$0xff]
        %v5127 = vld [vmem:[%s14 + $0xe80] sm:$0xff]
        %v5128 = vld [vmem:[%s14 + $0xe88] sm:$0xff]
        %v5129 = vld [vmem:[%s14 + $0xe90] sm:$0xff]
        %v5130 = vld [vmem:[%s14 + $0xe98] sm:$0xff]
        %v5131 = vld [vmem:[%s14 + $0xea0] sm:$0xff]
        %v5132 = vld [vmem:[%s14 + $0xea8] sm:$0xff]
        %v5133 = vld [vmem:[%s14 + $0xeb0] sm:$0xff]
        %v5134 = vld [vmem:[%s14 + $0xeb8] sm:$0xff]
        %v5135 = vld [vmem:[%s14 + $0xec0] sm:$0xff]
        %v5136 = vld [vmem:[%s14 + $0xec8] sm:$0xff]
        %v5137 = vld [vmem:[%s14 + $0xed0] sm:$0xff]
        %v5138 = vld [vmem:[%s14 + $0xed8] sm:$0xff]
        %v5139 = vld [vmem:[%s14 + $0xee0] sm:$0xff]
        %v5140 = vld [vmem:[%s14 + $0xee8] sm:$0xff]
        %v5141 = vld [vmem:[%s14 + $0xef0] sm:$0xff]
        %v5142 = vld [vmem:[%s14 + $0xef8] sm:$0xff]
        %v5143 = vld [vmem:[%s14 + $0xf00] sm:$0xff]
        %v5144 = vld [vmem:[%s14 + $0xf08] sm:$0xff]
        %v5145 = vld [vmem:[%s14 + $0xf10] sm:$0xff]
        %v5146 = vld [vmem:[%s14 + $0xf18] sm:$0xff]
        %v5147 = vld [vmem:[%s14 + $0xf20] sm:$0xff]
        %v5148 = vld [vmem:[%s14 + $0xf28] sm:$0xff]
        %v5149 = vld [vmem:[%s14 + $0xf30] sm:$0xff]
        %v5150 = vld [vmem:[%s14 + $0xf38] sm:$0xff]
        %v5151 = vld [vmem:[%s14 + $0xf40] sm:$0xff]
        %v5152 = vld [vmem:[%s14 + $0xf48] sm:$0xff]
        %v5153 = vld [vmem:[%s14 + $0xf50] sm:$0xff]
        %v5154 = vld [vmem:[%s14 + $0xf58] sm:$0xff]
        %v5155 = vld [vmem:[%s14 + $0xf60] sm:$0xff]
        %v5156 = vld [vmem:[%s14 + $0xf68] sm:$0xff]
        %v5157 = vld [vmem:[%s14 + $0xf70] sm:$0xff]
        %v5158 = vld [vmem:[%s14 + $0xf78] sm:$0xff]
        %v5159 = vld [vmem:[%s14 + $0xf80] sm:$0xff]
        %v5160 = vld [vmem:[%s14 + $0xf88] sm:$0xff]
        %v5161 = vld [vmem:[%s14 + $0xf90] sm:$0xff]
        %v5162 = vld [vmem:[%s14 + $0xf98] sm:$0xff]
        %v5163 = vld [vmem:[%s14 + $0xfa0] sm:$0xff]
        %v5164 = vld [vmem:[%s14 + $0xfa8] sm:$0xff]
        %v5165 = vld [vmem:[%s14 + $0xfb0] sm:$0xff]
        %v5166 = vld [vmem:[%s14 + $0xfb8] sm:$0xff]
        %v5167 = vld [vmem:[%s14 + $0xfc0] sm:$0xff]
        %v5168 = vld [vmem:[%s14 + $0xfc8] sm:$0xff]
        %v5169 = vld [vmem:[%s14 + $0xfd0] sm:$0xff]
        %v5170 = vld [vmem:[%s14 + $0xfd8] sm:$0xff]
        %v5171 = vld [vmem:[%s14 + $0xfe0] sm:$0xff]
        %v5172 = vld [vmem:[%s14 + $0xfe8] sm:$0xff]
        %v5173 = vld [vmem:[%s14 + $0xff0] sm:$0xff]
        %v5174 = vld [vmem:[%s14 + $0xff8] sm:$0xff]
        %v5175 = vpack.c.bf16 %v4654, %v4654
        %v5176 = vld [vmem:[%s15] sm:$0xff]
        %v5177 = vld [vmem:[%s15 + $0x8] sm:$0xff]
        %v5178 = vld [vmem:[%s15 + $0x10] sm:$0xff]
        %v5179 = vld [vmem:[%s15 + $0x18] sm:$0xff]
        %v5180 = vld [vmem:[%s15 + $0x20] sm:$0xff]
        %v5181 = vld [vmem:[%s15 + $0x28] sm:$0xff]
        %v5182 = vld [vmem:[%s15 + $0x30] sm:$0xff]
        %v5183 = vld [vmem:[%s15 + $0x38] sm:$0xff]
        %v5184 = vld [vmem:[%s15 + $0x40] sm:$0xff]
        %v5185 = vld [vmem:[%s15 + $0x48] sm:$0xff]
        %v5186 = vld [vmem:[%s15 + $0x50] sm:$0xff]
        %v5187 = vld [vmem:[%s15 + $0x58] sm:$0xff]
        %v5188 = vld [vmem:[%s15 + $0x60] sm:$0xff]
        %v5189 = vld [vmem:[%s15 + $0x68] sm:$0xff]
        %v5190 = vld [vmem:[%s15 + $0x70] sm:$0xff]
        %v5191 = vld [vmem:[%s15 + $0x78] sm:$0xff]
        %v5208 = vunpack.c.l.b16 %v5176
        %v5209 = vunpack.c.h.b16 %v5176
        %v5210 = vunpack.c.l.b16 %v5177
        %v5211 = vunpack.c.h.b16 %v5177
        %v5212 = vunpack.c.l.b16 %v5178
        %v5213 = vunpack.c.h.b16 %v5178
        %v5214 = vunpack.c.l.b16 %v5179
        %v5215 = vunpack.c.h.b16 %v5179
        %v5216 = vunpack.c.l.b16 %v5180
        %v5217 = vunpack.c.h.b16 %v5180
        %v5218 = vunpack.c.l.b16 %v5181
        %v5219 = vunpack.c.h.b16 %v5181
        %v5220 = vunpack.c.l.b16 %v5182
        %v5221 = vunpack.c.h.b16 %v5182
        %v5222 = vunpack.c.l.b16 %v5183
        %v5223 = vunpack.c.h.b16 %v5183
        %v5224 = vunpack.c.l.b16 %v5184
        %v5225 = vunpack.c.h.b16 %v5184
        %v5226 = vunpack.c.l.b16 %v5185
        %v5227 = vunpack.c.h.b16 %v5185
        %v5228 = vunpack.c.l.b16 %v5186
        %v5229 = vunpack.c.h.b16 %v5186
        %v5230 = vunpack.c.l.b16 %v5187
        %v5231 = vunpack.c.h.b16 %v5187
        %v5232 = vunpack.c.l.b16 %v5188
        %v5233 = vunpack.c.h.b16 %v5188
        %v5234 = vunpack.c.l.b16 %v5189
        %v5235 = vunpack.c.h.b16 %v5189
        %v5236 = vunpack.c.l.b16 %v5190
        %v5237 = vunpack.c.h.b16 %v5190
        %v5238 = vunpack.c.l.b16 %v5191
        %v5239 = vunpack.c.h.b16 %v5191
        %v5240 = vpack.c.b16 %v5216, %v5208
        %v5241 = vpack.c.b16 %v5217, %v5209
        %v5242 = vpack.c.b16 %v5218, %v5210
        %v5243 = vpack.c.b16 %v5219, %v5211
        %v5244 = vpack.c.b16 %v5220, %v5212
        %v5245 = vpack.c.b16 %v5221, %v5213
        %v5246 = vpack.c.b16 %v5222, %v5214
        %v5247 = vpack.c.b16 %v5223, %v5215
        %v5248 = vpack.c.b16 %v5232, %v5224
        %v5249 = vpack.c.b16 %v5233, %v5225
        %v5250 = vpack.c.b16 %v5234, %v5226
        %v5251 = vpack.c.b16 %v5235, %v5227
        %v5252 = vpack.c.b16 %v5236, %v5228
        %v5253 = vpack.c.b16 %v5237, %v5229
        %v5254 = vpack.c.b16 %v5238, %v5230
        %v5255 = vpack.c.b16 %v5239, %v5231
        %vm5272 = vcmask 261120
        %v5274 = vsel %vm5272, %v5175, 0
        %5276 = vmatprep.subr.bf16.mxu0 %v5241
        %5277 = vmatpush1.bf16.msra.mxu0 %v5240
        %5278 = vmatprep.subr.bf16.mxu0 %v5249
        %5279 = vmatpush1.bf16.msra.mxu0 %v5248
        %5280 = vmatprep.subr.bf16.mxu0 0
        %5281 = vmatpush1.bf16.msra.mxu0 0
        %5282 = vmatprep.subr.bf16.mxu0 0
        %5283 = vmatpush1.bf16.msra.mxu0 0
        %5284 = vmatprep.subr.bf16.mxu0 0
        %5285 = vmatpush1.bf16.msra.mxu0 0
        %5286 = vmatprep.subr.bf16.mxu0 0
        %5287 = vmatpush1.bf16.msra.mxu0 0
        %5288 = vmatprep.subr.bf16.mxu0 0
        %5289 = vmatpush1.bf16.msra.mxu0 0
        %5290 = vmatprep.subr.bf16.mxu0 0
        %5291 = vmatpush1.bf16.msra.mxu0 0
        %5292 = vmatprep.subr.bf16.mxu0 0
        %5293 = vmatpush1.bf16.msra.mxu0 0
        %5294 = vmatprep.subr.bf16.mxu0 0
        %5295 = vmatpush1.bf16.msra.mxu0 0
        %5296 = vmatprep.subr.bf16.mxu0 0
        %5297 = vmatpush1.bf16.msra.mxu0 0
        %5298 = vmatprep.subr.bf16.mxu0 0
        %5299 = vmatpush1.bf16.msra.mxu0 0
        %5300 = vmatprep.subr.bf16.mxu0 0
        %5301 = vmatpush1.bf16.msra.mxu0 0
        %5302 = vmatprep.subr.bf16.mxu0 0
        %5303 = vmatpush1.bf16.msra.mxu0 0
        %5304 = vmatprep.subr.bf16.mxu0 0
        %5305 = vmatpush1.bf16.msra.mxu0 0
        %5306 = vmatprep.subr.bf16.mxu0 0
        %5307 = vmatpush1.bf16.msra.mxu0 0
        %5308 = vmatprep.mubr.bf16.mxu0 0
        %5309 = vmatmul.mubr.bf16.gmra.mrb[0].mxu0 %v5274
        %v5310 = vpop.f32.mrb[0].mxu0
        %v5311 = vadd.f32 0.0, %v5310
        %v5312 = vpop.f32.mrb[0].mxu0
        %v5313 = vadd.f32 0.0, %v5312
        %v5314 = vpop.f32.mrb[0].mxu0
        %v5315 = vpop.f32.mrb[0].mxu0
        %5316 = vdwg.mxu0
        %5317 = vmatprep.subr.bf16.mxu0 %v5243
        %5318 = vmatpush1.bf16.msra.mxu0 %v5242
        %5319 = vmatprep.subr.bf16.mxu0 %v5251
        %5320 = vmatpush1.bf16.msra.mxu0 %v5250
        %5321 = vmatprep.subr.bf16.mxu0 0
        %5322 = vmatpush1.bf16.msra.mxu0 0
        %5323 = vmatprep.subr.bf16.mxu0 0
        %5324 = vmatpush1.bf16.msra.mxu0 0
        %5325 = vmatprep.subr.bf16.mxu0 0
        %5326 = vmatpush1.bf16.msra.mxu0 0
        %5327 = vmatprep.subr.bf16.mxu0 0
        %5328 = vmatpush1.bf16.msra.mxu0 0
        %5329 = vmatprep.subr.bf16.mxu0 0
        %5330 = vmatpush1.bf16.msra.mxu0 0
        %5331 = vmatprep.subr.bf16.mxu0 0
        %5332 = vmatpush1.bf16.msra.mxu0 0
        %5333 = vmatprep.subr.bf16.mxu0 0
        %5334 = vmatpush1.bf16.msra.mxu0 0
        %5335 = vmatprep.subr.bf16.mxu0 0
        %5336 = vmatpush1.bf16.msra.mxu0 0
        %5337 = vmatprep.subr.bf16.mxu0 0
        %5338 = vmatpush1.bf16.msra.mxu0 0
        %5339 = vmatprep.subr.bf16.mxu0 0
        %5340 = vmatpush1.bf16.msra.mxu0 0
        %5341 = vmatprep.subr.bf16.mxu0 0
        %5342 = vmatpush1.bf16.msra.mxu0 0
        %5343 = vmatprep.subr.bf16.mxu0 0
        %5344 = vmatpush1.bf16.msra.mxu0 0
        %5345 = vmatprep.subr.bf16.mxu0 0
        %5346 = vmatpush1.bf16.msra.mxu0 0
        %5347 = vmatprep.subr.bf16.mxu0 0
        %5348 = vmatpush1.bf16.msra.mxu0 0
        %5349 = vmatprep.mubr.bf16.mxu0 0
        %5350 = vmatmul.mubr.bf16.gmra.mrb[0].mxu0 %v5274
        %v5351 = vpop.f32.mrb[0].mxu0
        %v5352 = vadd.f32 0.0, %v5351
        %v5353 = vpop.f32.mrb[0].mxu0
        %v5354 = vadd.f32 0.0, %v5353
        %v5355 = vpop.f32.mrb[0].mxu0
        %v5356 = vpop.f32.mrb[0].mxu0
        %5357 = vdwg.mxu0
        %5358 = vmatprep.subr.bf16.mxu0 %v5245
        %5359 = vmatpush1.bf16.msra.mxu0 %v5244
        %5360 = vmatprep.subr.bf16.mxu0 %v5253
        %5361 = vmatpush1.bf16.msra.mxu0 %v5252
        %5362 = vmatprep.subr.bf16.mxu0 0
        %5363 = vmatpush1.bf16.msra.mxu0 0
        %5364 = vmatprep.subr.bf16.mxu0 0
        %5365 = vmatpush1.bf16.msra.mxu0 0
        %5366 = vmatprep.subr.bf16.mxu0 0
        %5367 = vmatpush1.bf16.msra.mxu0 0
        %5368 = vmatprep.subr.bf16.mxu0 0
        %5369 = vmatpush1.bf16.msra.mxu0 0
        %5370 = vmatprep.subr.bf16.mxu0 0
        %5371 = vmatpush1.bf16.msra.mxu0 0
        %5372 = vmatprep.subr.bf16.mxu0 0
        %5373 = vmatpush1.bf16.msra.mxu0 0
        %5374 = vmatprep.subr.bf16.mxu0 0
        %5375 = vmatpush1.bf16.msra.mxu0 0
        %5376 = vmatprep.subr.bf16.mxu0 0
        %5377 = vmatpush1.bf16.msra.mxu0 0
        %5378 = vmatprep.subr.bf16.mxu0 0
        %5379 = vmatpush1.bf16.msra.mxu0 0
        %5380 = vmatprep.subr.bf16.mxu0 0
        %5381 = vmatpush1.bf16.msra.mxu0 0
        %5382 = vmatprep.subr.bf16.mxu0 0
        %5383 = vmatpush1.bf16.msra.mxu0 0
        %5384 = vmatprep.subr.bf16.mxu0 0
        %5385 = vmatpush1.bf16.msra.mxu0 0
        %5386 = vmatprep.subr.bf16.mxu0 0
        %5387 = vmatpush1.bf16.msra.mxu0 0
        %5388 = vmatprep.subr.bf16.mxu0 0
        %5389 = vmatpush1.bf16.msra.mxu0 0
        %5390 = vmatprep.mubr.bf16.mxu0 0
        %5391 = vmatmul.mubr.bf16.gmra.mrb[0].mxu0 %v5274
        %v5392 = vpop.f32.mrb[0].mxu0
        %v5393 = vadd.f32 0.0, %v5392
        %v5394 = vpop.f32.mrb[0].mxu0
        %v5395 = vadd.f32 0.0, %v5394
        %v5396 = vpop.f32.mrb[0].mxu0
        %v5397 = vpop.f32.mrb[0].mxu0
        %5398 = vdwg.mxu0
        %5399 = vmatprep.subr.bf16.mxu0 %v5247
        %5400 = vmatpush1.bf16.msra.mxu0 %v5246
        %5401 = vmatprep.subr.bf16.mxu0 %v5255
        %5402 = vmatpush1.bf16.msra.mxu0 %v5254
        %5403 = vmatprep.subr.bf16.mxu0 0
        %5404 = vmatpush1.bf16.msra.mxu0 0
        %5405 = vmatprep.subr.bf16.mxu0 0
        %5406 = vmatpush1.bf16.msra.mxu0 0
        %5407 = vmatprep.subr.bf16.mxu0 0
        %5408 = vmatpush1.bf16.msra.mxu0 0
        %5409 = vmatprep.subr.bf16.mxu0 0
        %5410 = vmatpush1.bf16.msra.mxu0 0
        %5411 = vmatprep.subr.bf16.mxu0 0
        %5412 = vmatpush1.bf16.msra.mxu0 0
        %5413 = vmatprep.subr.bf16.mxu0 0
        %5414 = vmatpush1.bf16.msra.mxu0 0
        %5415 = vmatprep.subr.bf16.mxu0 0
        %5416 = vmatpush1.bf16.msra.mxu0 0
        %5417 = vmatprep.subr.bf16.mxu0 0
        %5418 = vmatpush1.bf16.msra.mxu0 0
        %5419 = vmatprep.subr.bf16.mxu0 0
        %5420 = vmatpush1.bf16.msra.mxu0 0
        %5421 = vmatprep.subr.bf16.mxu0 0
        %5422 = vmatpush1.bf16.msra.mxu0 0
        %5423 = vmatprep.subr.bf16.mxu0 0
        %5424 = vmatpush1.bf16.msra.mxu0 0
        %5425 = vmatprep.subr.bf16.mxu0 0
        %5426 = vmatpush1.bf16.msra.mxu0 0
        %5427 = vmatprep.subr.bf16.mxu0 0
        %5428 = vmatpush1.bf16.msra.mxu0 0
        %5429 = vmatprep.subr.bf16.mxu0 0
        %5430 = vmatpush1.bf16.msra.mxu0 0
        %5431 = vmatprep.mubr.bf16.mxu0 0
        %5432 = vmatmul.mubr.bf16.gmra.mrb[0].mxu0 %v5274
        %v5433 = vpop.f32.mrb[0].mxu0
        %v5434 = vadd.f32 0.0, %v5433
        %v5435 = vpop.f32.mrb[0].mxu0
        %v5436 = vadd.f32 0.0, %v5435
        %v5437 = vpop.f32.mrb[0].mxu0
        %v5438 = vpop.f32.mrb[0].mxu0
        %5439 = vdwg.mxu0
        %v5952 = vunpack.c.l.b16 %v4663
        %v5953 = vunpack.c.h.b16 %v4663
        %v5954 = vunpack.c.l.b16 %v4664
        %v5955 = vunpack.c.h.b16 %v4664
        %v5956 = vunpack.c.l.b16 %v4665
        %v5957 = vunpack.c.h.b16 %v4665
        %v5958 = vunpack.c.l.b16 %v4666
        %v5959 = vunpack.c.h.b16 %v4666
        %v5960 = vunpack.c.l.b16 %v4667
        %v5961 = vunpack.c.h.b16 %v4667
        %v5962 = vunpack.c.l.b16 %v4668
        %v5963 = vunpack.c.h.b16 %v4668
        %v5964 = vunpack.c.l.b16 %v4669
        %v5965 = vunpack.c.h.b16 %v4669
        %v5966 = vunpack.c.l.b16 %v4670
        %v5967 = vunpack.c.h.b16 %v4670
        %v5968 = vunpack.c.l.b16 %v4671
        %v5969 = vunpack.c.h.b16 %v4671
        %v5970 = vunpack.c.l.b16 %v4672
        %v5971 = vunpack.c.h.b16 %v4672
        %v5972 = vunpack.c.l.b16 %v4673
        %v5973 = vunpack.c.h.b16 %v4673
        %v5974 = vunpack.c.l.b16 %v4674
        %v5975 = vunpack.c.h.b16 %v4674
        %v5976 = vunpack.c.l.b16 %v4675
        %v5977 = vunpack.c.h.b16 %v4675
        %v5978 = vunpack.c.l.b16 %v4676
        %v5979 = vunpack.c.h.b16 %v4676
        %v5980 = vunpack.c.l.b16 %v4677
        %v5981 = vunpack.c.h.b16 %v4677
        %v5982 = vunpack.c.l.b16 %v4678
        %v5983 = vunpack.c.h.b16 %v4678
        %v5984 = vunpack.c.l.b16 %v4679
        %v5985 = vunpack.c.h.b16 %v4679
        %v5986 = vunpack.c.l.b16 %v4680
        %v5987 = vunpack.c.h.b16 %v4680
        %v5988 = vunpack.c.l.b16 %v4681
        %v5989 = vunpack.c.h.b16 %v4681
        %v5990 = vunpack.c.l.b16 %v4682
        %v5991 = vunpack.c.h.b16 %v4682
        %v5992 = vunpack.c.l.b16 %v4683
        %v5993 = vunpack.c.h.b16 %v4683
        %v5994 = vunpack.c.l.b16 %v4684
        %v5995 = vunpack.c.h.b16 %v4684
        %v5996 = vunpack.c.l.b16 %v4685
        %v5997 = vunpack.c.h.b16 %v4685
        %v5998 = vunpack.c.l.b16 %v4686
        %v5999 = vunpack.c.h.b16 %v4686
        %v6000 = vunpack.c.l.b16 %v4687
        %v6001 = vunpack.c.h.b16 %v4687
        %v6002 = vunpack.c.l.b16 %v4688
        %v6003 = vunpack.c.h.b16 %v4688
        %v6004 = vunpack.c.l.b16 %v4689
        %v6005 = vunpack.c.h.b16 %v4689
        %v6006 = vunpack.c.l.b16 %v4690
        %v6007 = vunpack.c.h.b16 %v4690
        %v6008 = vunpack.c.l.b16 %v4691
        %v6009 = vunpack.c.h.b16 %v4691
        %v6010 = vunpack.c.l.b16 %v4692
        %v6011 = vunpack.c.h.b16 %v4692
        %v6012 = vunpack.c.l.b16 %v4693
        %v6013 = vunpack.c.h.b16 %v4693
        %v6014 = vunpack.c.l.b16 %v4694
        %v6015 = vunpack.c.h.b16 %v4694
        %v6016 = vunpack.c.l.b16 %v4695
        %v6017 = vunpack.c.h.b16 %v4695
        %v6018 = vunpack.c.l.b16 %v4696
        %v6019 = vunpack.c.h.b16 %v4696
        %v6020 = vunpack.c.l.b16 %v4697
        %v6021 = vunpack.c.h.b16 %v4697
        %v6022 = vunpack.c.l.b16 %v4698
        %v6023 = vunpack.c.h.b16 %v4698
        %v6024 = vunpack.c.l.b16 %v4699
        %v6025 = vunpack.c.h.b16 %v4699
        %v6026 = vunpack.c.l.b16 %v4700
        %v6027 = vunpack.c.h.b16 %v4700
        %v6028 = vunpack.c.l.b16 %v4701
        %v6029 = vunpack.c.h.b16 %v4701
        %v6030 = vunpack.c.l.b16 %v4702
        %v6031 = vunpack.c.h.b16 %v4702
        %v6032 = vunpack.c.l.b16 %v4703
        %v6033 = vunpack.c.h.b16 %v4703
        %v6034 = vunpack.c.l.b16 %v4704
        %v6035 = vunpack.c.h.b16 %v4704
        %v6036 = vunpack.c.l.b16 %v4705
        %v6037 = vunpack.c.h.b16 %v4705
        %v6038 = vunpack.c.l.b16 %v4706
        %v6039 = vunpack.c.h.b16 %v4706
        %v6040 = vunpack.c.l.b16 %v4707
        %v6041 = vunpack.c.h.b16 %v4707
        %v6042 = vunpack.c.l.b16 %v4708
        %v6043 = vunpack.c.h.b16 %v4708
        %v6044 = vunpack.c.l.b16 %v4709
        %v6045 = vunpack.c.h.b16 %v4709
        %v6046 = vunpack.c.l.b16 %v4710
        %v6047 = vunpack.c.h.b16 %v4710
        %v6048 = vunpack.c.l.b16 %v4711
        %v6049 = vunpack.c.h.b16 %v4711
        %v6050 = vunpack.c.l.b16 %v4712
        %v6051 = vunpack.c.h.b16 %v4712
        %v6052 = vunpack.c.l.b16 %v4713
        %v6053 = vunpack.c.h.b16 %v4713
        %v6054 = vunpack.c.l.b16 %v4714
        %v6055 = vunpack.c.h.b16 %v4714
        %v6056 = vunpack.c.l.b16 %v4715
        %v6057 = vunpack.c.h.b16 %v4715
        %v6058 = vunpack.c.l.b16 %v4716
        %v6059 = vunpack.c.h.b16 %v4716
        %v6060 = vunpack.c.l.b16 %v4717
        %v6061 = vunpack.c.h.b16 %v4717
        %v6062 = vunpack.c.l.b16 %v4718
        %v6063 = vunpack.c.h.b16 %v4718
        %v6064 = vunpack.c.l.b16 %v4719
        %v6065 = vunpack.c.h.b16 %v4719
        %v6066 = vunpack.c.l.b16 %v4720
        %v6067 = vunpack.c.h.b16 %v4720
        %v6068 = vunpack.c.l.b16 %v4721
        %v6069 = vunpack.c.h.b16 %v4721
        %v6070 = vunpack.c.l.b16 %v4722
        %v6071 = vunpack.c.h.b16 %v4722
        %v6072 = vunpack.c.l.b16 %v4723
        %v6073 = vunpack.c.h.b16 %v4723
        %v6074 = vunpack.c.l.b16 %v4724
        %v6075 = vunpack.c.h.b16 %v4724
        %v6076 = vunpack.c.l.b16 %v4725
        %v6077 = vunpack.c.h.b16 %v4725
        %v6078 = vunpack.c.l.b16 %v4726
        %v6079 = vunpack.c.h.b16 %v4726
        %v6080 = vunpack.c.l.b16 %v4727
        %v6081 = vunpack.c.h.b16 %v4727
        %v6082 = vunpack.c.l.b16 %v4728
        %v6083 = vunpack.c.h.b16 %v4728
        %v6084 = vunpack.c.l.b16 %v4729
        %v6085 = vunpack.c.h.b16 %v4729
        %v6086 = vunpack.c.l.b16 %v4730
        %v6087 = vunpack.c.h.b16 %v4730
        %v6088 = vunpack.c.l.b16 %v4731
        %v6089 = vunpack.c.h.b16 %v4731
        %v6090 = vunpack.c.l.b16 %v4732
        %v6091 = vunpack.c.h.b16 %v4732
        %v6092 = vunpack.c.l.b16 %v4733
        %v6093 = vunpack.c.h.b16 %v4733
        %v6094 = vunpack.c.l.b16 %v4734
        %v6095 = vunpack.c.h.b16 %v4734
        %v6096 = vunpack.c.l.b16 %v4735
        %v6097 = vunpack.c.h.b16 %v4735
        %v6098 = vunpack.c.l.b16 %v4736
        %v6099 = vunpack.c.h.b16 %v4736
        %v6100 = vunpack.c.l.b16 %v4737
        %v6101 = vunpack.c.h.b16 %v4737
        %v6102 = vunpack.c.l.b16 %v4738
        %v6103 = vunpack.c.h.b16 %v4738
        %v6104 = vunpack.c.l.b16 %v4739
        %v6105 = vunpack.c.h.b16 %v4739
        %v6106 = vunpack.c.l.b16 %v4740
        %v6107 = vunpack.c.h.b16 %v4740
        %v6108 = vunpack.c.l.b16 %v4741
        %v6109 = vunpack.c.h.b16 %v4741
        %v6110 = vunpack.c.l.b16 %v4742
        %v6111 = vunpack.c.h.b16 %v4742
        %v6112 = vunpack.c.l.b16 %v4743
        %v6113 = vunpack.c.h.b16 %v4743
        %v6114 = vunpack.c.l.b16 %v4744
        %v6115 = vunpack.c.h.b16 %v4744
        %v6116 = vunpack.c.l.b16 %v4745
        %v6117 = vunpack.c.h.b16 %v4745
        %v6118 = vunpack.c.l.b16 %v4746
        %v6119 = vunpack.c.h.b16 %v4746
        %v6120 = vunpack.c.l.b16 %v4747
        %v6121 = vunpack.c.h.b16 %v4747
        %v6122 = vunpack.c.l.b16 %v4748
        %v6123 = vunpack.c.h.b16 %v4748
        %v6124 = vunpack.c.l.b16 %v4749
        %v6125 = vunpack.c.h.b16 %v4749
        %v6126 = vunpack.c.l.b16 %v4750
        %v6127 = vunpack.c.h.b16 %v4750
        %v6128 = vunpack.c.l.b16 %v4751
        %v6129 = vunpack.c.h.b16 %v4751
        %v6130 = vunpack.c.l.b16 %v4752
        %v6131 = vunpack.c.h.b16 %v4752
        %v6132 = vunpack.c.l.b16 %v4753
        %v6133 = vunpack.c.h.b16 %v4753
        %v6134 = vunpack.c.l.b16 %v4754
        %v6135 = vunpack.c.h.b16 %v4754
        %v6136 = vunpack.c.l.b16 %v4755
        %v6137 = vunpack.c.h.b16 %v4755
        %v6138 = vunpack.c.l.b16 %v4756
        %v6139 = vunpack.c.h.b16 %v4756
        %v6140 = vunpack.c.l.b16 %v4757
        %v6141 = vunpack.c.h.b16 %v4757
        %v6142 = vunpack.c.l.b16 %v4758
        %v6143 = vunpack.c.h.b16 %v4758
        %v6144 = vunpack.c.l.b16 %v4759
        %v6145 = vunpack.c.h.b16 %v4759
        %v6146 = vunpack.c.l.b16 %v4760
        %v6147 = vunpack.c.h.b16 %v4760
        %v6148 = vunpack.c.l.b16 %v4761
        %v6149 = vunpack.c.h.b16 %v4761
        %v6150 = vunpack.c.l.b16 %v4762
        %v6151 = vunpack.c.h.b16 %v4762
        %v6152 = vunpack.c.l.b16 %v4763
        %v6153 = vunpack.c.h.b16 %v4763
        %v6154 = vunpack.c.l.b16 %v4764
        %v6155 = vunpack.c.h.b16 %v4764
        %v6156 = vunpack.c.l.b16 %v4765
        %v6157 = vunpack.c.h.b16 %v4765
        %v6158 = vunpack.c.l.b16 %v4766
        %v6159 = vunpack.c.h.b16 %v4766
        %v6160 = vunpack.c.l.b16 %v4767
        %v6161 = vunpack.c.h.b16 %v4767
        %v6162 = vunpack.c.l.b16 %v4768
        %v6163 = vunpack.c.h.b16 %v4768
        %v6164 = vunpack.c.l.b16 %v4769
        %v6165 = vunpack.c.h.b16 %v4769
        %v6166 = vunpack.c.l.b16 %v4770
        %v6167 = vunpack.c.h.b16 %v4770
        %v6168 = vunpack.c.l.b16 %v4771
        %v6169 = vunpack.c.h.b16 %v4771
        %v6170 = vunpack.c.l.b16 %v4772
        %v6171 = vunpack.c.h.b16 %v4772
        %v6172 = vunpack.c.l.b16 %v4773
        %v6173 = vunpack.c.h.b16 %v4773
        %v6174 = vunpack.c.l.b16 %v4774
        %v6175 = vunpack.c.h.b16 %v4774
        %v6176 = vunpack.c.l.b16 %v4775
        %v6177 = vunpack.c.h.b16 %v4775
        %v6178 = vunpack.c.l.b16 %v4776
        %v6179 = vunpack.c.h.b16 %v4776
        %v6180 = vunpack.c.l.b16 %v4777
        %v6181 = vunpack.c.h.b16 %v4777
        %v6182 = vunpack.c.l.b16 %v4778
        %v6183 = vunpack.c.h.b16 %v4778
        %v6184 = vunpack.c.l.b16 %v4779
        %v6185 = vunpack.c.h.b16 %v4779
        %v6186 = vunpack.c.l.b16 %v4780
        %v6187 = vunpack.c.h.b16 %v4780
        %v6188 = vunpack.c.l.b16 %v4781
        %v6189 = vunpack.c.h.b16 %v4781
        %v6190 = vunpack.c.l.b16 %v4782
        %v6191 = vunpack.c.h.b16 %v4782
        %v6192 = vunpack.c.l.b16 %v4783
        %v6193 = vunpack.c.h.b16 %v4783
        %v6194 = vunpack.c.l.b16 %v4784
        %v6195 = vunpack.c.h.b16 %v4784
        %v6196 = vunpack.c.l.b16 %v4785
        %v6197 = vunpack.c.h.b16 %v4785
        %v6198 = vunpack.c.l.b16 %v4786
        %v6199 = vunpack.c.h.b16 %v4786
        %v6200 = vunpack.c.l.b16 %v4787
        %v6201 = vunpack.c.h.b16 %v4787
        %v6202 = vunpack.c.l.b16 %v4788
        %v6203 = vunpack.c.h.b16 %v4788
        %v6204 = vunpack.c.l.b16 %v4789
        %v6205 = vunpack.c.h.b16 %v4789
        %v6206 = vunpack.c.l.b16 %v4790
        %v6207 = vunpack.c.h.b16 %v4790
        %v6208 = vunpack.c.l.b16 %v4791
        %v6209 = vunpack.c.h.b16 %v4791
        %v6210 = vunpack.c.l.b16 %v4792
        %v6211 = vunpack.c.h.b16 %v4792
        %v6212 = vunpack.c.l.b16 %v4793
        %v6213 = vunpack.c.h.b16 %v4793
        %v6214 = vunpack.c.l.b16 %v4794
        %v6215 = vunpack.c.h.b16 %v4794
        %v6216 = vunpack.c.l.b16 %v4795
        %v6217 = vunpack.c.h.b16 %v4795
        %v6218 = vunpack.c.l.b16 %v4796
        %v6219 = vunpack.c.h.b16 %v4796
        %v6220 = vunpack.c.l.b16 %v4797
        %v6221 = vunpack.c.h.b16 %v4797
        %v6222 = vunpack.c.l.b16 %v4798
        %v6223 = vunpack.c.h.b16 %v4798
        %v6224 = vunpack.c.l.b16 %v4799
        %v6225 = vunpack.c.h.b16 %v4799
        %v6226 = vunpack.c.l.b16 %v4800
        %v6227 = vunpack.c.h.b16 %v4800
        %v6228 = vunpack.c.l.b16 %v4801
        %v6229 = vunpack.c.h.b16 %v4801
        %v6230 = vunpack.c.l.b16 %v4802
        %v6231 = vunpack.c.h.b16 %v4802
        %v6232 = vunpack.c.l.b16 %v4803
        %v6233 = vunpack.c.h.b16 %v4803
        %v6234 = vunpack.c.l.b16 %v4804
        %v6235 = vunpack.c.h.b16 %v4804
        %v6236 = vunpack.c.l.b16 %v4805
        %v6237 = vunpack.c.h.b16 %v4805
        %v6238 = vunpack.c.l.b16 %v4806
        %v6239 = vunpack.c.h.b16 %v4806
        %v6240 = vunpack.c.l.b16 %v4807
        %v6241 = vunpack.c.h.b16 %v4807
        %v6242 = vunpack.c.l.b16 %v4808
        %v6243 = vunpack.c.h.b16 %v4808
        %v6244 = vunpack.c.l.b16 %v4809
        %v6245 = vunpack.c.h.b16 %v4809
        %v6246 = vunpack.c.l.b16 %v4810
        %v6247 = vunpack.c.h.b16 %v4810
        %v6248 = vunpack.c.l.b16 %v4811
        %v6249 = vunpack.c.h.b16 %v4811
        %v6250 = vunpack.c.l.b16 %v4812
        %v6251 = vunpack.c.h.b16 %v4812
        %v6252 = vunpack.c.l.b16 %v4813
        %v6253 = vunpack.c.h.b16 %v4813
        %v6254 = vunpack.c.l.b16 %v4814
        %v6255 = vunpack.c.h.b16 %v4814
        %v6256 = vunpack.c.l.b16 %v4815
        %v6257 = vunpack.c.h.b16 %v4815
        %v6258 = vunpack.c.l.b16 %v4816
        %v6259 = vunpack.c.h.b16 %v4816
        %v6260 = vunpack.c.l.b16 %v4817
        %v6261 = vunpack.c.h.b16 %v4817
        %v6262 = vunpack.c.l.b16 %v4818
        %v6263 = vunpack.c.h.b16 %v4818
        %v6264 = vunpack.c.l.b16 %v4819
        %v6265 = vunpack.c.h.b16 %v4819
        %v6266 = vunpack.c.l.b16 %v4820
        %v6267 = vunpack.c.h.b16 %v4820
        %v6268 = vunpack.c.l.b16 %v4821
        %v6269 = vunpack.c.h.b16 %v4821
        %v6270 = vunpack.c.l.b16 %v4822
        %v6271 = vunpack.c.h.b16 %v4822
        %v6272 = vunpack.c.l.b16 %v4823
        %v6273 = vunpack.c.h.b16 %v4823
        %v6274 = vunpack.c.l.b16 %v4824
        %v6275 = vunpack.c.h.b16 %v4824
        %v6276 = vunpack.c.l.b16 %v4825
        %v6277 = vunpack.c.h.b16 %v4825
        %v6278 = vunpack.c.l.b16 %v4826
        %v6279 = vunpack.c.h.b16 %v4826
        %v6280 = vunpack.c.l.b16 %v4827
        %v6281 = vunpack.c.h.b16 %v4827
        %v6282 = vunpack.c.l.b16 %v4828
        %v6283 = vunpack.c.h.b16 %v4828
        %v6284 = vunpack.c.l.b16 %v4829
        %v6285 = vunpack.c.h.b16 %v4829
        %v6286 = vunpack.c.l.b16 %v4830
        %v6287 = vunpack.c.h.b16 %v4830
        %v6288 = vunpack.c.l.b16 %v4831
        %v6289 = vunpack.c.h.b16 %v4831
        %v6290 = vunpack.c.l.b16 %v4832
        %v6291 = vunpack.c.h.b16 %v4832
        %v6292 = vunpack.c.l.b16 %v4833
        %v6293 = vunpack.c.h.b16 %v4833
        %v6294 = vunpack.c.l.b16 %v4834
        %v6295 = vunpack.c.h.b16 %v4834
        %v6296 = vunpack.c.l.b16 %v4835
        %v6297 = vunpack.c.h.b16 %v4835
        %v6298 = vunpack.c.l.b16 %v4836
        %v6299 = vunpack.c.h.b16 %v4836
        %v6300 = vunpack.c.l.b16 %v4837
        %v6301 = vunpack.c.h.b16 %v4837
        %v6302 = vunpack.c.l.b16 %v4838
        %v6303 = vunpack.c.h.b16 %v4838
        %v6304 = vunpack.c.l.b16 %v4839
        %v6305 = vunpack.c.h.b16 %v4839
        %v6306 = vunpack.c.l.b16 %v4840
        %v6307 = vunpack.c.h.b16 %v4840
        %v6308 = vunpack.c.l.b16 %v4841
        %v6309 = vunpack.c.h.b16 %v4841
        %v6310 = vunpack.c.l.b16 %v4842
        %v6311 = vunpack.c.h.b16 %v4842
        %v6312 = vunpack.c.l.b16 %v4843
        %v6313 = vunpack.c.h.b16 %v4843
        %v6314 = vunpack.c.l.b16 %v4844
        %v6315 = vunpack.c.h.b16 %v4844
        %v6316 = vunpack.c.l.b16 %v4845
        %v6317 = vunpack.c.h.b16 %v4845
        %v6318 = vunpack.c.l.b16 %v4846
        %v6319 = vunpack.c.h.b16 %v4846
        %v6320 = vunpack.c.l.b16 %v4847
        %v6321 = vunpack.c.h.b16 %v4847
        %v6322 = vunpack.c.l.b16 %v4848
        %v6323 = vunpack.c.h.b16 %v4848
        %v6324 = vunpack.c.l.b16 %v4849
        %v6325 = vunpack.c.h.b16 %v4849
        %v6326 = vunpack.c.l.b16 %v4850
        %v6327 = vunpack.c.h.b16 %v4850
        %v6328 = vunpack.c.l.b16 %v4851
        %v6329 = vunpack.c.h.b16 %v4851
        %v6330 = vunpack.c.l.b16 %v4852
        %v6331 = vunpack.c.h.b16 %v4852
        %v6332 = vunpack.c.l.b16 %v4853
        %v6333 = vunpack.c.h.b16 %v4853
        %v6334 = vunpack.c.l.b16 %v4854
        %v6335 = vunpack.c.h.b16 %v4854
        %v6336 = vunpack.c.l.b16 %v4855
        %v6337 = vunpack.c.h.b16 %v4855
        %v6338 = vunpack.c.l.b16 %v4856
        %v6339 = vunpack.c.h.b16 %v4856
        %v6340 = vunpack.c.l.b16 %v4857
        %v6341 = vunpack.c.h.b16 %v4857
        %v6342 = vunpack.c.l.b16 %v4858
        %v6343 = vunpack.c.h.b16 %v4858
        %v6344 = vunpack.c.l.b16 %v4859
        %v6345 = vunpack.c.h.b16 %v4859
        %v6346 = vunpack.c.l.b16 %v4860
        %v6347 = vunpack.c.h.b16 %v4860
        %v6348 = vunpack.c.l.b16 %v4861
        %v6349 = vunpack.c.h.b16 %v4861
        %v6350 = vunpack.c.l.b16 %v4862
        %v6351 = vunpack.c.h.b16 %v4862
        %v6352 = vunpack.c.l.b16 %v4863
        %v6353 = vunpack.c.h.b16 %v4863
        %v6354 = vunpack.c.l.b16 %v4864
        %v6355 = vunpack.c.h.b16 %v4864
        %v6356 = vunpack.c.l.b16 %v4865
        %v6357 = vunpack.c.h.b16 %v4865
        %v6358 = vunpack.c.l.b16 %v4866
        %v6359 = vunpack.c.h.b16 %v4866
        %v6360 = vunpack.c.l.b16 %v4867
        %v6361 = vunpack.c.h.b16 %v4867
        %v6362 = vunpack.c.l.b16 %v4868
        %v6363 = vunpack.c.h.b16 %v4868
        %v6364 = vunpack.c.l.b16 %v4869
        %v6365 = vunpack.c.h.b16 %v4869
        %v6366 = vunpack.c.l.b16 %v4870
        %v6367 = vunpack.c.h.b16 %v4870
        %v6368 = vunpack.c.l.b16 %v4871
        %v6369 = vunpack.c.h.b16 %v4871
        %v6370 = vunpack.c.l.b16 %v4872
        %v6371 = vunpack.c.h.b16 %v4872
        %v6372 = vunpack.c.l.b16 %v4873
        %v6373 = vunpack.c.h.b16 %v4873
        %v6374 = vunpack.c.l.b16 %v4874
        %v6375 = vunpack.c.h.b16 %v4874
        %v6376 = vunpack.c.l.b16 %v4875
        %v6377 = vunpack.c.h.b16 %v4875
        %v6378 = vunpack.c.l.b16 %v4876
        %v6379 = vunpack.c.h.b16 %v4876
        %v6380 = vunpack.c.l.b16 %v4877
        %v6381 = vunpack.c.h.b16 %v4877
        %v6382 = vunpack.c.l.b16 %v4878
        %v6383 = vunpack.c.h.b16 %v4878
        %v6384 = vunpack.c.l.b16 %v4879
        %v6385 = vunpack.c.h.b16 %v4879
        %v6386 = vunpack.c.l.b16 %v4880
        %v6387 = vunpack.c.h.b16 %v4880
        %v6388 = vunpack.c.l.b16 %v4881
        %v6389 = vunpack.c.h.b16 %v4881
        %v6390 = vunpack.c.l.b16 %v4882
        %v6391 = vunpack.c.h.b16 %v4882
        %v6392 = vunpack.c.l.b16 %v4883
        %v6393 = vunpack.c.h.b16 %v4883
        %v6394 = vunpack.c.l.b16 %v4884
        %v6395 = vunpack.c.h.b16 %v4884
        %v6396 = vunpack.c.l.b16 %v4885
        %v6397 = vunpack.c.h.b16 %v4885
        %v6398 = vunpack.c.l.b16 %v4886
        %v6399 = vunpack.c.h.b16 %v4886
        %v6400 = vunpack.c.l.b16 %v4887
        %v6401 = vunpack.c.h.b16 %v4887
        %v6402 = vunpack.c.l.b16 %v4888
        %v6403 = vunpack.c.h.b16 %v4888
        %v6404 = vunpack.c.l.b16 %v4889
        %v6405 = vunpack.c.h.b16 %v4889
        %v6406 = vunpack.c.l.b16 %v4890
        %v6407 = vunpack.c.h.b16 %v4890
        %v6408 = vunpack.c.l.b16 %v4891
        %v6409 = vunpack.c.h.b16 %v4891
        %v6410 = vunpack.c.l.b16 %v4892
        %v6411 = vunpack.c.h.b16 %v4892
        %v6412 = vunpack.c.l.b16 %v4893
        %v6413 = vunpack.c.h.b16 %v4893
        %v6414 = vunpack.c.l.b16 %v4894
        %v6415 = vunpack.c.h.b16 %v4894
        %v6416 = vunpack.c.l.b16 %v4895
        %v6417 = vunpack.c.h.b16 %v4895
        %v6418 = vunpack.c.l.b16 %v4896
        %v6419 = vunpack.c.h.b16 %v4896
        %v6420 = vunpack.c.l.b16 %v4897
        %v6421 = vunpack.c.h.b16 %v4897
        %v6422 = vunpack.c.l.b16 %v4898
        %v6423 = vunpack.c.h.b16 %v4898
        %v6424 = vunpack.c.l.b16 %v4899
        %v6425 = vunpack.c.h.b16 %v4899
        %v6426 = vunpack.c.l.b16 %v4900
        %v6427 = vunpack.c.h.b16 %v4900
        %v6428 = vunpack.c.l.b16 %v4901
        %v6429 = vunpack.c.h.b16 %v4901
        %v6430 = vunpack.c.l.b16 %v4902
        %v6431 = vunpack.c.h.b16 %v4902
        %v6432 = vunpack.c.l.b16 %v4903
        %v6433 = vunpack.c.h.b16 %v4903
        %v6434 = vunpack.c.l.b16 %v4904
        %v6435 = vunpack.c.h.b16 %v4904
        %v6436 = vunpack.c.l.b16 %v4905
        %v6437 = vunpack.c.h.b16 %v4905
        %v6438 = vunpack.c.l.b16 %v4906
        %v6439 = vunpack.c.h.b16 %v4906
        %v6440 = vunpack.c.l.b16 %v4907
        %v6441 = vunpack.c.h.b16 %v4907
        %v6442 = vunpack.c.l.b16 %v4908
        %v6443 = vunpack.c.h.b16 %v4908
        %v6444 = vunpack.c.l.b16 %v4909
        %v6445 = vunpack.c.h.b16 %v4909
        %v6446 = vunpack.c.l.b16 %v4910
        %v6447 = vunpack.c.h.b16 %v4910
        %v6448 = vunpack.c.l.b16 %v4911
        %v6449 = vunpack.c.h.b16 %v4911
        %v6450 = vunpack.c.l.b16 %v4912
        %v6451 = vunpack.c.h.b16 %v4912
        %v6452 = vunpack.c.l.b16 %v4913
        %v6453 = vunpack.c.h.b16 %v4913
        %v6454 = vunpack.c.l.b16 %v4914
        %v6455 = vunpack.c.h.b16 %v4914
        %v6456 = vunpack.c.l.b16 %v4915
        %v6457 = vunpack.c.h.b16 %v4915
        %v6458 = vunpack.c.l.b16 %v4916
        %v6459 = vunpack.c.h.b16 %v4916
        %v6460 = vunpack.c.l.b16 %v4917
        %v6461 = vunpack.c.h.b16 %v4917
        %v6462 = vunpack.c.l.b16 %v4918
        %v6463 = vunpack.c.h.b16 %v4918
        %v6464 = vunpack.c.l.b16 %v4919
        %v6465 = vunpack.c.h.b16 %v4919
        %v6466 = vunpack.c.l.b16 %v4920
        %v6467 = vunpack.c.h.b16 %v4920
        %v6468 = vunpack.c.l.b16 %v4921
        %v6469 = vunpack.c.h.b16 %v4921
        %v6470 = vunpack.c.l.b16 %v4922
        %v6471 = vunpack.c.h.b16 %v4922
        %v6472 = vunpack.c.l.b16 %v4923
        %v6473 = vunpack.c.h.b16 %v4923
        %v6474 = vunpack.c.l.b16 %v4924
        %v6475 = vunpack.c.h.b16 %v4924
        %v6476 = vunpack.c.l.b16 %v4925
        %v6477 = vunpack.c.h.b16 %v4925
        %v6478 = vunpack.c.l.b16 %v4926
        %v6479 = vunpack.c.h.b16 %v4926
        %v6480 = vunpack.c.l.b16 %v4927
        %v6481 = vunpack.c.h.b16 %v4927
        %v6482 = vunpack.c.l.b16 %v4928
        %v6483 = vunpack.c.h.b16 %v4928
        %v6484 = vunpack.c.l.b16 %v4929
        %v6485 = vunpack.c.h.b16 %v4929
        %v6486 = vunpack.c.l.b16 %v4930
        %v6487 = vunpack.c.h.b16 %v4930
        %v6488 = vunpack.c.l.b16 %v4931
        %v6489 = vunpack.c.h.b16 %v4931
        %v6490 = vunpack.c.l.b16 %v4932
        %v6491 = vunpack.c.h.b16 %v4932
        %v6492 = vunpack.c.l.b16 %v4933
        %v6493 = vunpack.c.h.b16 %v4933
        %v6494 = vunpack.c.l.b16 %v4934
        %v6495 = vunpack.c.h.b16 %v4934
        %v6496 = vunpack.c.l.b16 %v4935
        %v6497 = vunpack.c.h.b16 %v4935
        %v6498 = vunpack.c.l.b16 %v4936
        %v6499 = vunpack.c.h.b16 %v4936
        %v6500 = vunpack.c.l.b16 %v4937
        %v6501 = vunpack.c.h.b16 %v4937
        %v6502 = vunpack.c.l.b16 %v4938
        %v6503 = vunpack.c.h.b16 %v4938
        %v6504 = vunpack.c.l.b16 %v4939
        %v6505 = vunpack.c.h.b16 %v4939
        %v6506 = vunpack.c.l.b16 %v4940
        %v6507 = vunpack.c.h.b16 %v4940
        %v6508 = vunpack.c.l.b16 %v4941
        %v6509 = vunpack.c.h.b16 %v4941
        %v6510 = vunpack.c.l.b16 %v4942
        %v6511 = vunpack.c.h.b16 %v4942
        %v6512 = vunpack.c.l.b16 %v4943
        %v6513 = vunpack.c.h.b16 %v4943
        %v6514 = vunpack.c.l.b16 %v4944
        %v6515 = vunpack.c.h.b16 %v4944
        %v6516 = vunpack.c.l.b16 %v4945
        %v6517 = vunpack.c.h.b16 %v4945
        %v6518 = vunpack.c.l.b16 %v4946
        %v6519 = vunpack.c.h.b16 %v4946
        %v6520 = vunpack.c.l.b16 %v4947
        %v6521 = vunpack.c.h.b16 %v4947
        %v6522 = vunpack.c.l.b16 %v4948
        %v6523 = vunpack.c.h.b16 %v4948
        %v6524 = vunpack.c.l.b16 %v4949
        %v6525 = vunpack.c.h.b16 %v4949
        %v6526 = vunpack.c.l.b16 %v4950
        %v6527 = vunpack.c.h.b16 %v4950
        %v6528 = vunpack.c.l.b16 %v4951
        %v6529 = vunpack.c.h.b16 %v4951
        %v6530 = vunpack.c.l.b16 %v4952
        %v6531 = vunpack.c.h.b16 %v4952
        %v6532 = vunpack.c.l.b16 %v4953
        %v6533 = vunpack.c.h.b16 %v4953
        %v6534 = vunpack.c.l.b16 %v4954
        %v6535 = vunpack.c.h.b16 %v4954
        %v6536 = vunpack.c.l.b16 %v4955
        %v6537 = vunpack.c.h.b16 %v4955
        %v6538 = vunpack.c.l.b16 %v4956
        %v6539 = vunpack.c.h.b16 %v4956
        %v6540 = vunpack.c.l.b16 %v4957
        %v6541 = vunpack.c.h.b16 %v4957
        %v6542 = vunpack.c.l.b16 %v4958
        %v6543 = vunpack.c.h.b16 %v4958
        %v6544 = vunpack.c.l.b16 %v4959
        %v6545 = vunpack.c.h.b16 %v4959
        %v6546 = vunpack.c.l.b16 %v4960
        %v6547 = vunpack.c.h.b16 %v4960
        %v6548 = vunpack.c.l.b16 %v4961
        %v6549 = vunpack.c.h.b16 %v4961
        %v6550 = vunpack.c.l.b16 %v4962
        %v6551 = vunpack.c.h.b16 %v4962
        %v6552 = vunpack.c.l.b16 %v4963
        %v6553 = vunpack.c.h.b16 %v4963
        %v6554 = vunpack.c.l.b16 %v4964
        %v6555 = vunpack.c.h.b16 %v4964
        %v6556 = vunpack.c.l.b16 %v4965
        %v6557 = vunpack.c.h.b16 %v4965
        %v6558 = vunpack.c.l.b16 %v4966
        %v6559 = vunpack.c.h.b16 %v4966
        %v6560 = vunpack.c.l.b16 %v4967
        %v6561 = vunpack.c.h.b16 %v4967
        %v6562 = vunpack.c.l.b16 %v4968
        %v6563 = vunpack.c.h.b16 %v4968
        %v6564 = vunpack.c.l.b16 %v4969
        %v6565 = vunpack.c.h.b16 %v4969
        %v6566 = vunpack.c.l.b16 %v4970
        %v6567 = vunpack.c.h.b16 %v4970
        %v6568 = vunpack.c.l.b16 %v4971
        %v6569 = vunpack.c.h.b16 %v4971
        %v6570 = vunpack.c.l.b16 %v4972
        %v6571 = vunpack.c.h.b16 %v4972
        %v6572 = vunpack.c.l.b16 %v4973
        %v6573 = vunpack.c.h.b16 %v4973
        %v6574 = vunpack.c.l.b16 %v4974
        %v6575 = vunpack.c.h.b16 %v4974
        %v6576 = vunpack.c.l.b16 %v4975
        %v6577 = vunpack.c.h.b16 %v4975
        %v6578 = vunpack.c.l.b16 %v4976
        %v6579 = vunpack.c.h.b16 %v4976
        %v6580 = vunpack.c.l.b16 %v4977
        %v6581 = vunpack.c.h.b16 %v4977
        %v6582 = vunpack.c.l.b16 %v4978
        %v6583 = vunpack.c.h.b16 %v4978
        %v6584 = vunpack.c.l.b16 %v4979
        %v6585 = vunpack.c.h.b16 %v4979
        %v6586 = vunpack.c.l.b16 %v4980
        %v6587 = vunpack.c.h.b16 %v4980
        %v6588 = vunpack.c.l.b16 %v4981
        %v6589 = vunpack.c.h.b16 %v4981
        %v6590 = vunpack.c.l.b16 %v4982
        %v6591 = vunpack.c.h.b16 %v4982
        %v6592 = vunpack.c.l.b16 %v4983
        %v6593 = vunpack.c.h.b16 %v4983
        %v6594 = vunpack.c.l.b16 %v4984
        %v6595 = vunpack.c.h.b16 %v4984
        %v6596 = vunpack.c.l.b16 %v4985
        %v6597 = vunpack.c.h.b16 %v4985
        %v6598 = vunpack.c.l.b16 %v4986
        %v6599 = vunpack.c.h.b16 %v4986
        %v6600 = vunpack.c.l.b16 %v4987
        %v6601 = vunpack.c.h.b16 %v4987
        %v6602 = vunpack.c.l.b16 %v4988
        %v6603 = vunpack.c.h.b16 %v4988
        %v6604 = vunpack.c.l.b16 %v4989
        %v6605 = vunpack.c.h.b16 %v4989
        %v6606 = vunpack.c.l.b16 %v4990
        %v6607 = vunpack.c.h.b16 %v4990
        %v6608 = vunpack.c.l.b16 %v4991
        %v6609 = vunpack.c.h.b16 %v4991
        %v6610 = vunpack.c.l.b16 %v4992
        %v6611 = vunpack.c.h.b16 %v4992
        %v6612 = vunpack.c.l.b16 %v4993
        %v6613 = vunpack.c.h.b16 %v4993
        %v6614 = vunpack.c.l.b16 %v4994
        %v6615 = vunpack.c.h.b16 %v4994
        %v6616 = vunpack.c.l.b16 %v4995
        %v6617 = vunpack.c.h.b16 %v4995
        %v6618 = vunpack.c.l.b16 %v4996
        %v6619 = vunpack.c.h.b16 %v4996
        %v6620 = vunpack.c.l.b16 %v4997
        %v6621 = vunpack.c.h.b16 %v4997
        %v6622 = vunpack.c.l.b16 %v4998
        %v6623 = vunpack.c.h.b16 %v4998
        %v6624 = vunpack.c.l.b16 %v4999
        %v6625 = vunpack.c.h.b16 %v4999
        %v6626 = vunpack.c.l.b16 %v5000
        %v6627 = vunpack.c.h.b16 %v5000
        %v6628 = vunpack.c.l.b16 %v5001
        %v6629 = vunpack.c.h.b16 %v5001
        %v6630 = vunpack.c.l.b16 %v5002
        %v6631 = vunpack.c.h.b16 %v5002
        %v6632 = vunpack.c.l.b16 %v5003
        %v6633 = vunpack.c.h.b16 %v5003
        %v6634 = vunpack.c.l.b16 %v5004
        %v6635 = vunpack.c.h.b16 %v5004
        %v6636 = vunpack.c.l.b16 %v5005
        %v6637 = vunpack.c.h.b16 %v5005
        %v6638 = vunpack.c.l.b16 %v5006
        %v6639 = vunpack.c.h.b16 %v5006
        %v6640 = vunpack.c.l.b16 %v5007
        %v6641 = vunpack.c.h.b16 %v5007
        %v6642 = vunpack.c.l.b16 %v5008
        %v6643 = vunpack.c.h.b16 %v5008
        %v6644 = vunpack.c.l.b16 %v5009
        %v6645 = vunpack.c.h.b16 %v5009
        %v6646 = vunpack.c.l.b16 %v5010
        %v6647 = vunpack.c.h.b16 %v5010
        %v6648 = vunpack.c.l.b16 %v5011
        %v6649 = vunpack.c.h.b16 %v5011
        %v6650 = vunpack.c.l.b16 %v5012
        %v6651 = vunpack.c.h.b16 %v5012
        %v6652 = vunpack.c.l.b16 %v5013
        %v6653 = vunpack.c.h.b16 %v5013
        %v6654 = vunpack.c.l.b16 %v5014
        %v6655 = vunpack.c.h.b16 %v5014
        %v6656 = vunpack.c.l.b16 %v5015
        %v6657 = vunpack.c.h.b16 %v5015
        %v6658 = vunpack.c.l.b16 %v5016
        %v6659 = vunpack.c.h.b16 %v5016
        %v6660 = vunpack.c.l.b16 %v5017
        %v6661 = vunpack.c.h.b16 %v5017
        %v6662 = vunpack.c.l.b16 %v5018
        %v6663 = vunpack.c.h.b16 %v5018
        %v6664 = vunpack.c.l.b16 %v5019
        %v6665 = vunpack.c.h.b16 %v5019
        %v6666 = vunpack.c.l.b16 %v5020
        %v6667 = vunpack.c.h.b16 %v5020
        %v6668 = vunpack.c.l.b16 %v5021
        %v6669 = vunpack.c.h.b16 %v5021
        %v6670 = vunpack.c.l.b16 %v5022
        %v6671 = vunpack.c.h.b16 %v5022
        %v6672 = vunpack.c.l.b16 %v5023
        %v6673 = vunpack.c.h.b16 %v5023
        %v6674 = vunpack.c.l.b16 %v5024
        %v6675 = vunpack.c.h.b16 %v5024
        %v6676 = vunpack.c.l.b16 %v5025
        %v6677 = vunpack.c.h.b16 %v5025
        %v6678 = vunpack.c.l.b16 %v5026
        %v6679 = vunpack.c.h.b16 %v5026
        %v6680 = vunpack.c.l.b16 %v5027
        %v6681 = vunpack.c.h.b16 %v5027
        %v6682 = vunpack.c.l.b16 %v5028
        %v6683 = vunpack.c.h.b16 %v5028
        %v6684 = vunpack.c.l.b16 %v5029
        %v6685 = vunpack.c.h.b16 %v5029
        %v6686 = vunpack.c.l.b16 %v5030
        %v6687 = vunpack.c.h.b16 %v5030
        %v6688 = vunpack.c.l.b16 %v5031
        %v6689 = vunpack.c.h.b16 %v5031
        %v6690 = vunpack.c.l.b16 %v5032
        %v6691 = vunpack.c.h.b16 %v5032
        %v6692 = vunpack.c.l.b16 %v5033
        %v6693 = vunpack.c.h.b16 %v5033
        %v6694 = vunpack.c.l.b16 %v5034
        %v6695 = vunpack.c.h.b16 %v5034
        %v6696 = vunpack.c.l.b16 %v5035
        %v6697 = vunpack.c.h.b16 %v5035
        %v6698 = vunpack.c.l.b16 %v5036
        %v6699 = vunpack.c.h.b16 %v5036
        %v6700 = vunpack.c.l.b16 %v5037
        %v6701 = vunpack.c.h.b16 %v5037
        %v6702 = vunpack.c.l.b16 %v5038
        %v6703 = vunpack.c.h.b16 %v5038
        %v6704 = vunpack.c.l.b16 %v5039
        %v6705 = vunpack.c.h.b16 %v5039
        %v6706 = vunpack.c.l.b16 %v5040
        %v6707 = vunpack.c.h.b16 %v5040
        %v6708 = vunpack.c.l.b16 %v5041
        %v6709 = vunpack.c.h.b16 %v5041
        %v6710 = vunpack.c.l.b16 %v5042
        %v6711 = vunpack.c.h.b16 %v5042
        %v6712 = vunpack.c.l.b16 %v5043
        %v6713 = vunpack.c.h.b16 %v5043
        %v6714 = vunpack.c.l.b16 %v5044
        %v6715 = vunpack.c.h.b16 %v5044
        %v6716 = vunpack.c.l.b16 %v5045
        %v6717 = vunpack.c.h.b16 %v5045
        %v6718 = vunpack.c.l.b16 %v5046
        %v6719 = vunpack.c.h.b16 %v5046
        %v6720 = vunpack.c.l.b16 %v5047
        %v6721 = vunpack.c.h.b16 %v5047
        %v6722 = vunpack.c.l.b16 %v5048
        %v6723 = vunpack.c.h.b16 %v5048
        %v6724 = vunpack.c.l.b16 %v5049
        %v6725 = vunpack.c.h.b16 %v5049
        %v6726 = vunpack.c.l.b16 %v5050
        %v6727 = vunpack.c.h.b16 %v5050
        %v6728 = vunpack.c.l.b16 %v5051
        %v6729 = vunpack.c.h.b16 %v5051
        %v6730 = vunpack.c.l.b16 %v5052
        %v6731 = vunpack.c.h.b16 %v5052
        %v6732 = vunpack.c.l.b16 %v5053
        %v6733 = vunpack.c.h.b16 %v5053
        %v6734 = vunpack.c.l.b16 %v5054
        %v6735 = vunpack.c.h.b16 %v5054
        %v6736 = vunpack.c.l.b16 %v5055
        %v6737 = vunpack.c.h.b16 %v5055
        %v6738 = vunpack.c.l.b16 %v5056
        %v6739 = vunpack.c.h.b16 %v5056
        %v6740 = vunpack.c.l.b16 %v5057
        %v6741 = vunpack.c.h.b16 %v5057
        %v6742 = vunpack.c.l.b16 %v5058
        %v6743 = vunpack.c.h.b16 %v5058
        %v6744 = vunpack.c.l.b16 %v5059
        %v6745 = vunpack.c.h.b16 %v5059
        %v6746 = vunpack.c.l.b16 %v5060
        %v6747 = vunpack.c.h.b16 %v5060
        %v6748 = vunpack.c.l.b16 %v5061
        %v6749 = vunpack.c.h.b16 %v5061
        %v6750 = vunpack.c.l.b16 %v5062
        %v6751 = vunpack.c.h.b16 %v5062
        %v6752 = vunpack.c.l.b16 %v5063
        %v6753 = vunpack.c.h.b16 %v5063
        %v6754 = vunpack.c.l.b16 %v5064
        %v6755 = vunpack.c.h.b16 %v5064
        %v6756 = vunpack.c.l.b16 %v5065
        %v6757 = vunpack.c.h.b16 %v5065
        %v6758 = vunpack.c.l.b16 %v5066
        %v6759 = vunpack.c.h.b16 %v5066
        %v6760 = vunpack.c.l.b16 %v5067
        %v6761 = vunpack.c.h.b16 %v5067
        %v6762 = vunpack.c.l.b16 %v5068
        %v6763 = vunpack.c.h.b16 %v5068
        %v6764 = vunpack.c.l.b16 %v5069
        %v6765 = vunpack.c.h.b16 %v5069
        %v6766 = vunpack.c.l.b16 %v5070
        %v6767 = vunpack.c.h.b16 %v5070
        %v6768 = vunpack.c.l.b16 %v5071
        %v6769 = vunpack.c.h.b16 %v5071
        %v6770 = vunpack.c.l.b16 %v5072
        %v6771 = vunpack.c.h.b16 %v5072
        %v6772 = vunpack.c.l.b16 %v5073
        %v6773 = vunpack.c.h.b16 %v5073
        %v6774 = vunpack.c.l.b16 %v5074
        %v6775 = vunpack.c.h.b16 %v5074
        %v6776 = vunpack.c.l.b16 %v5075
        %v6777 = vunpack.c.h.b16 %v5075
        %v6778 = vunpack.c.l.b16 %v5076
        %v6779 = vunpack.c.h.b16 %v5076
        %v6780 = vunpack.c.l.b16 %v5077
        %v6781 = vunpack.c.h.b16 %v5077
        %v6782 = vunpack.c.l.b16 %v5078
        %v6783 = vunpack.c.h.b16 %v5078
        %v6784 = vunpack.c.l.b16 %v5079
        %v6785 = vunpack.c.h.b16 %v5079
        %v6786 = vunpack.c.l.b16 %v5080
        %v6787 = vunpack.c.h.b16 %v5080
        %v6788 = vunpack.c.l.b16 %v5081
        %v6789 = vunpack.c.h.b16 %v5081
        %v6790 = vunpack.c.l.b16 %v5082
        %v6791 = vunpack.c.h.b16 %v5082
        %v6792 = vunpack.c.l.b16 %v5083
        %v6793 = vunpack.c.h.b16 %v5083
        %v6794 = vunpack.c.l.b16 %v5084
        %v6795 = vunpack.c.h.b16 %v5084
        %v6796 = vunpack.c.l.b16 %v5085
        %v6797 = vunpack.c.h.b16 %v5085
        %v6798 = vunpack.c.l.b16 %v5086
        %v6799 = vunpack.c.h.b16 %v5086
        %v6800 = vunpack.c.l.b16 %v5087
        %v6801 = vunpack.c.h.b16 %v5087
        %v6802 = vunpack.c.l.b16 %v5088
        %v6803 = vunpack.c.h.b16 %v5088
        %v6804 = vunpack.c.l.b16 %v5089
        %v6805 = vunpack.c.h.b16 %v5089
        %v6806 = vunpack.c.l.b16 %v5090
        %v6807 = vunpack.c.h.b16 %v5090
        %v6808 = vunpack.c.l.b16 %v5091
        %v6809 = vunpack.c.h.b16 %v5091
        %v6810 = vunpack.c.l.b16 %v5092
        %v6811 = vunpack.c.h.b16 %v5092
        %v6812 = vunpack.c.l.b16 %v5093
        %v6813 = vunpack.c.h.b16 %v5093
        %v6814 = vunpack.c.l.b16 %v5094
        %v6815 = vunpack.c.h.b16 %v5094
        %v6816 = vunpack.c.l.b16 %v5095
        %v6817 = vunpack.c.h.b16 %v5095
        %v6818 = vunpack.c.l.b16 %v5096
        %v6819 = vunpack.c.h.b16 %v5096
        %v6820 = vunpack.c.l.b16 %v5097
        %v6821 = vunpack.c.h.b16 %v5097
        %v6822 = vunpack.c.l.b16 %v5098
        %v6823 = vunpack.c.h.b16 %v5098
        %v6824 = vunpack.c.l.b16 %v5099
        %v6825 = vunpack.c.h.b16 %v5099
        %v6826 = vunpack.c.l.b16 %v5100
        %v6827 = vunpack.c.h.b16 %v5100
        %v6828 = vunpack.c.l.b16 %v5101
        %v6829 = vunpack.c.h.b16 %v5101
        %v6830 = vunpack.c.l.b16 %v5102
        %v6831 = vunpack.c.h.b16 %v5102
        %v6832 = vunpack.c.l.b16 %v5103
        %v6833 = vunpack.c.h.b16 %v5103
        %v6834 = vunpack.c.l.b16 %v5104
        %v6835 = vunpack.c.h.b16 %v5104
        %v6836 = vunpack.c.l.b16 %v5105
        %v6837 = vunpack.c.h.b16 %v5105
        %v6838 = vunpack.c.l.b16 %v5106
        %v6839 = vunpack.c.h.b16 %v5106
        %v6840 = vunpack.c.l.b16 %v5107
        %v6841 = vunpack.c.h.b16 %v5107
        %v6842 = vunpack.c.l.b16 %v5108
        %v6843 = vunpack.c.h.b16 %v5108
        %v6844 = vunpack.c.l.b16 %v5109
        %v6845 = vunpack.c.h.b16 %v5109
        %v6846 = vunpack.c.l.b16 %v5110
        %v6847 = vunpack.c.h.b16 %v5110
        %v6848 = vunpack.c.l.b16 %v5111
        %v6849 = vunpack.c.h.b16 %v5111
        %v6850 = vunpack.c.l.b16 %v5112
        %v6851 = vunpack.c.h.b16 %v5112
        %v6852 = vunpack.c.l.b16 %v5113
        %v6853 = vunpack.c.h.b16 %v5113
        %v6854 = vunpack.c.l.b16 %v5114
        %v6855 = vunpack.c.h.b16 %v5114
        %v6856 = vunpack.c.l.b16 %v5115
        %v6857 = vunpack.c.h.b16 %v5115
        %v6858 = vunpack.c.l.b16 %v5116
        %v6859 = vunpack.c.h.b16 %v5116
        %v6860 = vunpack.c.l.b16 %v5117
        %v6861 = vunpack.c.h.b16 %v5117
        %v6862 = vunpack.c.l.b16 %v5118
        %v6863 = vunpack.c.h.b16 %v5118
        %v6864 = vunpack.c.l.b16 %v5119
        %v6865 = vunpack.c.h.b16 %v5119
        %v6866 = vunpack.c.l.b16 %v5120
        %v6867 = vunpack.c.h.b16 %v5120
        %v6868 = vunpack.c.l.b16 %v5121
        %v6869 = vunpack.c.h.b16 %v5121
        %v6870 = vunpack.c.l.b16 %v5122
        %v6871 = vunpack.c.h.b16 %v5122
        %v6872 = vunpack.c.l.b16 %v5123
        %v6873 = vunpack.c.h.b16 %v5123
        %v6874 = vunpack.c.l.b16 %v5124
        %v6875 = vunpack.c.h.b16 %v5124
        %v6876 = vunpack.c.l.b16 %v5125
        %v6877 = vunpack.c.h.b16 %v5125
        %v6878 = vunpack.c.l.b16 %v5126
        %v6879 = vunpack.c.h.b16 %v5126
        %v6880 = vunpack.c.l.b16 %v5127
        %v6881 = vunpack.c.h.b16 %v5127
        %v6882 = vunpack.c.l.b16 %v5128
        %v6883 = vunpack.c.h.b16 %v5128
        %v6884 = vunpack.c.l.b16 %v5129
        %v6885 = vunpack.c.h.b16 %v5129
        %v6886 = vunpack.c.l.b16 %v5130
        %v6887 = vunpack.c.h.b16 %v5130
        %v6888 = vunpack.c.l.b16 %v5131
        %v6889 = vunpack.c.h.b16 %v5131
        %v6890 = vunpack.c.l.b16 %v5132
        %v6891 = vunpack.c.h.b16 %v5132
        %v6892 = vunpack.c.l.b16 %v5133
        %v6893 = vunpack.c.h.b16 %v5133
        %v6894 = vunpack.c.l.b16 %v5134
        %v6895 = vunpack.c.h.b16 %v5134
        %v6896 = vunpack.c.l.b16 %v5135
        %v6897 = vunpack.c.h.b16 %v5135
        %v6898 = vunpack.c.l.b16 %v5136
        %v6899 = vunpack.c.h.b16 %v5136
        %v6900 = vunpack.c.l.b16 %v5137
        %v6901 = vunpack.c.h.b16 %v5137
        %v6902 = vunpack.c.l.b16 %v5138
        %v6903 = vunpack.c.h.b16 %v5138
        %v6904 = vunpack.c.l.b16 %v5139
        %v6905 = vunpack.c.h.b16 %v5139
        %v6906 = vunpack.c.l.b16 %v5140
        %v6907 = vunpack.c.h.b16 %v5140
        %v6908 = vunpack.c.l.b16 %v5141
        %v6909 = vunpack.c.h.b16 %v5141
        %v6910 = vunpack.c.l.b16 %v5142
        %v6911 = vunpack.c.h.b16 %v5142
        %v6912 = vunpack.c.l.b16 %v5143
        %v6913 = vunpack.c.h.b16 %v5143
        %v6914 = vunpack.c.l.b16 %v5144
        %v6915 = vunpack.c.h.b16 %v5144
        %v6916 = vunpack.c.l.b16 %v5145
        %v6917 = vunpack.c.h.b16 %v5145
        %v6918 = vunpack.c.l.b16 %v5146
        %v6919 = vunpack.c.h.b16 %v5146
        %v6920 = vunpack.c.l.b16 %v5147
        %v6921 = vunpack.c.h.b16 %v5147
        %v6922 = vunpack.c.l.b16 %v5148
        %v6923 = vunpack.c.h.b16 %v5148
        %v6924 = vunpack.c.l.b16 %v5149
        %v6925 = vunpack.c.h.b16 %v5149
        %v6926 = vunpack.c.l.b16 %v5150
        %v6927 = vunpack.c.h.b16 %v5150
        %v6928 = vunpack.c.l.b16 %v5151
        %v6929 = vunpack.c.h.b16 %v5151
        %v6930 = vunpack.c.l.b16 %v5152
        %v6931 = vunpack.c.h.b16 %v5152
        %v6932 = vunpack.c.l.b16 %v5153
        %v6933 = vunpack.c.h.b16 %v5153
        %v6934 = vunpack.c.l.b16 %v5154
        %v6935 = vunpack.c.h.b16 %v5154
        %v6936 = vunpack.c.l.b16 %v5155
        %v6937 = vunpack.c.h.b16 %v5155
        %v6938 = vunpack.c.l.b16 %v5156
        %v6939 = vunpack.c.h.b16 %v5156
        %v6940 = vunpack.c.l.b16 %v5157
        %v6941 = vunpack.c.h.b16 %v5157
        %v6942 = vunpack.c.l.b16 %v5158
        %v6943 = vunpack.c.h.b16 %v5158
        %v6944 = vunpack.c.l.b16 %v5159
        %v6945 = vunpack.c.h.b16 %v5159
        %v6946 = vunpack.c.l.b16 %v5160
        %v6947 = vunpack.c.h.b16 %v5160
        %v6948 = vunpack.c.l.b16 %v5161
        %v6949 = vunpack.c.h.b16 %v5161
        %v6950 = vunpack.c.l.b16 %v5162
        %v6951 = vunpack.c.h.b16 %v5162
        %v6952 = vunpack.c.l.b16 %v5163
        %v6953 = vunpack.c.h.b16 %v5163
        %v6954 = vunpack.c.l.b16 %v5164
        %v6955 = vunpack.c.h.b16 %v5164
        %v6956 = vunpack.c.l.b16 %v5165
        %v6957 = vunpack.c.h.b16 %v5165
        %v6958 = vunpack.c.l.b16 %v5166
        %v6959 = vunpack.c.h.b16 %v5166
        %v6960 = vunpack.c.l.b16 %v5167
        %v6961 = vunpack.c.h.b16 %v5167
        %v6962 = vunpack.c.l.b16 %v5168
        %v6963 = vunpack.c.h.b16 %v5168
        %v6964 = vunpack.c.l.b16 %v5169
        %v6965 = vunpack.c.h.b16 %v5169
        %v6966 = vunpack.c.l.b16 %v5170
        %v6967 = vunpack.c.h.b16 %v5170
        %v6968 = vunpack.c.l.b16 %v5171
        %v6969 = vunpack.c.h.b16 %v5171
        %v6970 = vunpack.c.l.b16 %v5172
        %v6971 = vunpack.c.h.b16 %v5172
        %v6972 = vunpack.c.l.b16 %v5173
        %v6973 = vunpack.c.h.b16 %v5173
        %v6974 = vunpack.c.l.b16 %v5174
        %v6975 = vunpack.c.h.b16 %v5174
        %v6976 = vpack.c.b16 %v5960, %v5952
        %v6977 = vpack.c.b16 %v5961, %v5953
        %v6978 = vpack.c.b16 %v5962, %v5954
        %v6979 = vpack.c.b16 %v5963, %v5955
        %v6980 = vpack.c.b16 %v5964, %v5956
        %v6981 = vpack.c.b16 %v5965, %v5957
        %v6982 = vpack.c.b16 %v5966, %v5958
        %v6983 = vpack.c.b16 %v5967, %v5959
        %v6984 = vpack.c.b16 %v5976, %v5968
        %v6985 = vpack.c.b16 %v5977, %v5969
        %v6986 = vpack.c.b16 %v5978, %v5970
        %v6987 = vpack.c.b16 %v5979, %v5971
        %v6988 = vpack.c.b16 %v5980, %v5972
        %v6989 = vpack.c.b16 %v5981, %v5973
        %v6990 = vpack.c.b16 %v5982, %v5974
        %v6991 = vpack.c.b16 %v5983, %v5975
        %v6992 = vpack.c.b16 %v5992, %v5984
        %v6993 = vpack.c.b16 %v5993, %v5985
        %v6994 = vpack.c.b16 %v5994, %v5986
        %v6995 = vpack.c.b16 %v5995, %v5987
        %v6996 = vpack.c.b16 %v5996, %v5988
        %v6997 = vpack.c.b16 %v5997, %v5989
        %v6998 = vpack.c.b16 %v5998, %v5990
        %v6999 = vpack.c.b16 %v5999, %v5991
        %v7000 = vpack.c.b16 %v6008, %v6000
        %v7001 = vpack.c.b16 %v6009, %v6001
        %v7002 = vpack.c.b16 %v6010, %v6002
        %v7003 = vpack.c.b16 %v6011, %v6003
        %v7004 = vpack.c.b16 %v6012, %v6004
        %v7005 = vpack.c.b16 %v6013, %v6005
        %v7006 = vpack.c.b16 %v6014, %v6006
        %v7007 = vpack.c.b16 %v6015, %v6007
        %v7008 = vpack.c.b16 %v6024, %v6016
        %v7009 = vpack.c.b16 %v6025, %v6017
        %v7010 = vpack.c.b16 %v6026, %v6018
        %v7011 = vpack.c.b16 %v6027, %v6019
        %v7012 = vpack.c.b16 %v6028, %v6020
        %v7013 = vpack.c.b16 %v6029, %v6021
        %v7014 = vpack.c.b16 %v6030, %v6022
        %v7015 = vpack.c.b16 %v6031, %v6023
        %v7016 = vpack.c.b16 %v6040, %v6032
        %v7017 = vpack.c.b16 %v6041, %v6033
        %v7018 = vpack.c.b16 %v6042, %v6034
        %v7019 = vpack.c.b16 %v6043, %v6035
        %v7020 = vpack.c.b16 %v6044, %v6036
        %v7021 = vpack.c.b16 %v6045, %v6037
        %v7022 = vpack.c.b16 %v6046, %v6038
        %v7023 = vpack.c.b16 %v6047, %v6039
        %v7024 = vpack.c.b16 %v6056, %v6048
        %v7025 = vpack.c.b16 %v6057, %v6049
        %v7026 = vpack.c.b16 %v6058, %v6050
        %v7027 = vpack.c.b16 %v6059, %v6051
        %v7028 = vpack.c.b16 %v6060, %v6052
        %v7029 = vpack.c.b16 %v6061, %v6053
        %v7030 = vpack.c.b16 %v6062, %v6054
        %v7031 = vpack.c.b16 %v6063, %v6055
        %v7032 = vpack.c.b16 %v6072, %v6064
        %v7033 = vpack.c.b16 %v6073, %v6065
        %v7034 = vpack.c.b16 %v6074, %v6066
        %v7035 = vpack.c.b16 %v6075, %v6067
        %v7036 = vpack.c.b16 %v6076, %v6068
        %v7037 = vpack.c.b16 %v6077, %v6069
        %v7038 = vpack.c.b16 %v6078, %v6070
        %v7039 = vpack.c.b16 %v6079, %v6071
        %v7040 = vpack.c.b16 %v6088, %v6080
        %v7041 = vpack.c.b16 %v6089, %v6081
        %v7042 = vpack.c.b16 %v6090, %v6082
        %v7043 = vpack.c.b16 %v6091, %v6083
        %v7044 = vpack.c.b16 %v6092, %v6084
        %v7045 = vpack.c.b16 %v6093, %v6085
        %v7046 = vpack.c.b16 %v6094, %v6086
        %v7047 = vpack.c.b16 %v6095, %v6087
        %v7048 = vpack.c.b16 %v6104, %v6096
        %v7049 = vpack.c.b16 %v6105, %v6097
        %v7050 = vpack.c.b16 %v6106, %v6098
        %v7051 = vpack.c.b16 %v6107, %v6099
        %v7052 = vpack.c.b16 %v6108, %v6100
        %v7053 = vpack.c.b16 %v6109, %v6101
        %v7054 = vpack.c.b16 %v6110, %v6102
        %v7055 = vpack.c.b16 %v6111, %v6103
        %v7056 = vpack.c.b16 %v6120, %v6112
        %v7057 = vpack.c.b16 %v6121, %v6113
        %v7058 = vpack.c.b16 %v6122, %v6114
        %v7059 = vpack.c.b16 %v6123, %v6115
        %v7060 = vpack.c.b16 %v6124, %v6116
        %v7061 = vpack.c.b16 %v6125, %v6117
        %v7062 = vpack.c.b16 %v6126, %v6118
        %v7063 = vpack.c.b16 %v6127, %v6119
        %v7064 = vpack.c.b16 %v6136, %v6128
        %v7065 = vpack.c.b16 %v6137, %v6129
        %v7066 = vpack.c.b16 %v6138, %v6130
        %v7067 = vpack.c.b16 %v6139, %v6131
        %v7068 = vpack.c.b16 %v6140, %v6132
        %v7069 = vpack.c.b16 %v6141, %v6133
        %v7070 = vpack.c.b16 %v6142, %v6134
        %v7071 = vpack.c.b16 %v6143, %v6135
        %v7072 = vpack.c.b16 %v6152, %v6144
        %v7073 = vpack.c.b16 %v6153, %v6145
        %v7074 = vpack.c.b16 %v6154, %v6146
        %v7075 = vpack.c.b16 %v6155, %v6147
        %v7076 = vpack.c.b16 %v6156, %v6148
        %v7077 = vpack.c.b16 %v6157, %v6149
        %v7078 = vpack.c.b16 %v6158, %v6150
        %v7079 = vpack.c.b16 %v6159, %v6151
        %v7080 = vpack.c.b16 %v6168, %v6160
        %v7081 = vpack.c.b16 %v6169, %v6161
        %v7082 = vpack.c.b16 %v6170, %v6162
        %v7083 = vpack.c.b16 %v6171, %v6163
        %v7084 = vpack.c.b16 %v6172, %v6164
        %v7085 = vpack.c.b16 %v6173, %v6165
        %v7086 = vpack.c.b16 %v6174, %v6166
        %v7087 = vpack.c.b16 %v6175, %v6167
        %v7088 = vpack.c.b16 %v6184, %v6176
        %v7089 = vpack.c.b16 %v6185, %v6177
        %v7090 = vpack.c.b16 %v6186, %v6178
        %v7091 = vpack.c.b16 %v6187, %v6179
        %v7092 = vpack.c.b16 %v6188, %v6180
        %v7093 = vpack.c.b16 %v6189, %v6181
        %v7094 = vpack.c.b16 %v6190, %v6182
        %v7095 = vpack.c.b16 %v6191, %v6183
        %v7096 = vpack.c.b16 %v6200, %v6192
        %v7097 = vpack.c.b16 %v6201, %v6193
        %v7098 = vpack.c.b16 %v6202, %v6194
        %v7099 = vpack.c.b16 %v6203, %v6195
        %v7100 = vpack.c.b16 %v6204, %v6196
        %v7101 = vpack.c.b16 %v6205, %v6197
        %v7102 = vpack.c.b16 %v6206, %v6198
        %v7103 = vpack.c.b16 %v6207, %v6199
        %v7104 = vpack.c.b16 %v6216, %v6208
        %v7105 = vpack.c.b16 %v6217, %v6209
        %v7106 = vpack.c.b16 %v6218, %v6210
        %v7107 = vpack.c.b16 %v6219, %v6211
        %v7108 = vpack.c.b16 %v6220, %v6212
        %v7109 = vpack.c.b16 %v6221, %v6213
        %v7110 = vpack.c.b16 %v6222, %v6214
        %v7111 = vpack.c.b16 %v6223, %v6215
        %v7112 = vpack.c.b16 %v6232, %v6224
        %v7113 = vpack.c.b16 %v6233, %v6225
        %v7114 = vpack.c.b16 %v6234, %v6226
        %v7115 = vpack.c.b16 %v6235, %v6227
        %v7116 = vpack.c.b16 %v6236, %v6228
        %v7117 = vpack.c.b16 %v6237, %v6229
        %v7118 = vpack.c.b16 %v6238, %v6230
        %v7119 = vpack.c.b16 %v6239, %v6231
        %v7120 = vpack.c.b16 %v6248, %v6240
        %v7121 = vpack.c.b16 %v6249, %v6241
        %v7122 = vpack.c.b16 %v6250, %v6242
        %v7123 = vpack.c.b16 %v6251, %v6243
        %v7124 = vpack.c.b16 %v6252, %v6244
        %v7125 = vpack.c.b16 %v6253, %v6245
        %v7126 = vpack.c.b16 %v6254, %v6246
        %v7127 = vpack.c.b16 %v6255, %v6247
        %v7128 = vpack.c.b16 %v6264, %v6256
        %v7129 = vpack.c.b16 %v6265, %v6257
        %v7130 = vpack.c.b16 %v6266, %v6258
        %v7131 = vpack.c.b16 %v6267, %v6259
        %v7132 = vpack.c.b16 %v6268, %v6260
        %v7133 = vpack.c.b16 %v6269, %v6261
        %v7134 = vpack.c.b16 %v6270, %v6262
        %v7135 = vpack.c.b16 %v6271, %v6263
        %v7136 = vpack.c.b16 %v6280, %v6272
        %v7137 = vpack.c.b16 %v6281, %v6273
        %v7138 = vpack.c.b16 %v6282, %v6274
        %v7139 = vpack.c.b16 %v6283, %v6275
        %v7140 = vpack.c.b16 %v6284, %v6276
        %v7141 = vpack.c.b16 %v6285, %v6277
        %v7142 = vpack.c.b16 %v6286, %v6278
        %v7143 = vpack.c.b16 %v6287, %v6279
        %v7144 = vpack.c.b16 %v6296, %v6288
        %v7145 = vpack.c.b16 %v6297, %v6289
        %v7146 = vpack.c.b16 %v6298, %v6290
        %v7147 = vpack.c.b16 %v6299, %v6291
        %v7148 = vpack.c.b16 %v6300, %v6292
        %v7149 = vpack.c.b16 %v6301, %v6293
        %v7150 = vpack.c.b16 %v6302, %v6294
        %v7151 = vpack.c.b16 %v6303, %v6295
        %v7152 = vpack.c.b16 %v6312, %v6304
        %v7153 = vpack.c.b16 %v6313, %v6305
        %v7154 = vpack.c.b16 %v6314, %v6306
        %v7155 = vpack.c.b16 %v6315, %v6307
        %v7156 = vpack.c.b16 %v6316, %v6308
        %v7157 = vpack.c.b16 %v6317, %v6309
        %v7158 = vpack.c.b16 %v6318, %v6310
        %v7159 = vpack.c.b16 %v6319, %v6311
        %v7160 = vpack.c.b16 %v6328, %v6320
        %v7161 = vpack.c.b16 %v6329, %v6321
        %v7162 = vpack.c.b16 %v6330, %v6322
        %v7163 = vpack.c.b16 %v6331, %v6323
        %v7164 = vpack.c.b16 %v6332, %v6324
        %v7165 = vpack.c.b16 %v6333, %v6325
        %v7166 = vpack.c.b16 %v6334, %v6326
        %v7167 = vpack.c.b16 %v6335, %v6327
        %v7168 = vpack.c.b16 %v6344, %v6336
        %v7169 = vpack.c.b16 %v6345, %v6337
        %v7170 = vpack.c.b16 %v6346, %v6338
        %v7171 = vpack.c.b16 %v6347, %v6339
        %v7172 = vpack.c.b16 %v6348, %v6340
        %v7173 = vpack.c.b16 %v6349, %v6341
        %v7174 = vpack.c.b16 %v6350, %v6342
        %v7175 = vpack.c.b16 %v6351, %v6343
        %v7176 = vpack.c.b16 %v6360, %v6352
        %v7177 = vpack.c.b16 %v6361, %v6353
        %v7178 = vpack.c.b16 %v6362, %v6354
        %v7179 = vpack.c.b16 %v6363, %v6355
        %v7180 = vpack.c.b16 %v6364, %v6356
        %v7181 = vpack.c.b16 %v6365, %v6357
        %v7182 = vpack.c.b16 %v6366, %v6358
        %v7183 = vpack.c.b16 %v6367, %v6359
        %v7184 = vpack.c.b16 %v6376, %v6368
        %v7185 = vpack.c.b16 %v6377, %v6369
        %v7186 = vpack.c.b16 %v6378, %v6370
        %v7187 = vpack.c.b16 %v6379, %v6371
        %v7188 = vpack.c.b16 %v6380, %v6372
        %v7189 = vpack.c.b16 %v6381, %v6373
        %v7190 = vpack.c.b16 %v6382, %v6374
        %v7191 = vpack.c.b16 %v6383, %v6375
        %v7192 = vpack.c.b16 %v6392, %v6384
        %v7193 = vpack.c.b16 %v6393, %v6385
        %v7194 = vpack.c.b16 %v6394, %v6386
        %v7195 = vpack.c.b16 %v6395, %v6387
        %v7196 = vpack.c.b16 %v6396, %v6388
        %v7197 = vpack.c.b16 %v6397, %v6389
        %v7198 = vpack.c.b16 %v6398, %v6390
        %v7199 = vpack.c.b16 %v6399, %v6391
        %v7200 = vpack.c.b16 %v6408, %v6400
        %v7201 = vpack.c.b16 %v6409, %v6401
        %v7202 = vpack.c.b16 %v6410, %v6402
        %v7203 = vpack.c.b16 %v6411, %v6403
        %v7204 = vpack.c.b16 %v6412, %v6404
        %v7205 = vpack.c.b16 %v6413, %v6405
        %v7206 = vpack.c.b16 %v6414, %v6406
        %v7207 = vpack.c.b16 %v6415, %v6407
        %v7208 = vpack.c.b16 %v6424, %v6416
        %v7209 = vpack.c.b16 %v6425, %v6417
        %v7210 = vpack.c.b16 %v6426, %v6418
        %v7211 = vpack.c.b16 %v6427, %v6419
        %v7212 = vpack.c.b16 %v6428, %v6420
        %v7213 = vpack.c.b16 %v6429, %v6421
        %v7214 = vpack.c.b16 %v6430, %v6422
        %v7215 = vpack.c.b16 %v6431, %v6423
        %v7216 = vpack.c.b16 %v6440, %v6432
        %v7217 = vpack.c.b16 %v6441, %v6433
        %v7218 = vpack.c.b16 %v6442, %v6434
        %v7219 = vpack.c.b16 %v6443, %v6435
        %v7220 = vpack.c.b16 %v6444, %v6436
        %v7221 = vpack.c.b16 %v6445, %v6437
        %v7222 = vpack.c.b16 %v6446, %v6438
        %v7223 = vpack.c.b16 %v6447, %v6439
        %v7224 = vpack.c.b16 %v6456, %v6448
        %v7225 = vpack.c.b16 %v6457, %v6449
        %v7226 = vpack.c.b16 %v6458, %v6450
        %v7227 = vpack.c.b16 %v6459, %v6451
        %v7228 = vpack.c.b16 %v6460, %v6452
        %v7229 = vpack.c.b16 %v6461, %v6453
        %v7230 = vpack.c.b16 %v6462, %v6454
        %v7231 = vpack.c.b16 %v6463, %v6455
        %v7232 = vpack.c.b16 %v6472, %v6464
        %v7233 = vpack.c.b16 %v6473, %v6465
        %v7234 = vpack.c.b16 %v6474, %v6466
        %v7235 = vpack.c.b16 %v6475, %v6467
        %v7236 = vpack.c.b16 %v6476, %v6468
        %v7237 = vpack.c.b16 %v6477, %v6469
        %v7238 = vpack.c.b16 %v6478, %v6470
        %v7239 = vpack.c.b16 %v6479, %v6471
        %v7240 = vpack.c.b16 %v6488, %v6480
        %v7241 = vpack.c.b16 %v6489, %v6481
        %v7242 = vpack.c.b16 %v6490, %v6482
        %v7243 = vpack.c.b16 %v6491, %v6483
        %v7244 = vpack.c.b16 %v6492, %v6484
        %v7245 = vpack.c.b16 %v6493, %v6485
        %v7246 = vpack.c.b16 %v6494, %v6486
        %v7247 = vpack.c.b16 %v6495, %v6487
        %v7248 = vpack.c.b16 %v6504, %v6496
        %v7249 = vpack.c.b16 %v6505, %v6497
        %v7250 = vpack.c.b16 %v6506, %v6498
        %v7251 = vpack.c.b16 %v6507, %v6499
        %v7252 = vpack.c.b16 %v6508, %v6500
        %v7253 = vpack.c.b16 %v6509, %v6501
        %v7254 = vpack.c.b16 %v6510, %v6502
        %v7255 = vpack.c.b16 %v6511, %v6503
        %v7256 = vpack.c.b16 %v6520, %v6512
        %v7257 = vpack.c.b16 %v6521, %v6513
        %v7258 = vpack.c.b16 %v6522, %v6514
        %v7259 = vpack.c.b16 %v6523, %v6515
        %v7260 = vpack.c.b16 %v6524, %v6516
        %v7261 = vpack.c.b16 %v6525, %v6517
        %v7262 = vpack.c.b16 %v6526, %v6518
        %v7263 = vpack.c.b16 %v6527, %v6519
        %v7264 = vpack.c.b16 %v6536, %v6528
        %v7265 = vpack.c.b16 %v6537, %v6529
        %v7266 = vpack.c.b16 %v6538, %v6530
        %v7267 = vpack.c.b16 %v6539, %v6531
        %v7268 = vpack.c.b16 %v6540, %v6532
        %v7269 = vpack.c.b16 %v6541, %v6533
        %v7270 = vpack.c.b16 %v6542, %v6534
        %v7271 = vpack.c.b16 %v6543, %v6535
        %v7272 = vpack.c.b16 %v6552, %v6544
        %v7273 = vpack.c.b16 %v6553, %v6545
        %v7274 = vpack.c.b16 %v6554, %v6546
        %v7275 = vpack.c.b16 %v6555, %v6547
        %v7276 = vpack.c.b16 %v6556, %v6548
        %v7277 = vpack.c.b16 %v6557, %v6549
        %v7278 = vpack.c.b16 %v6558, %v6550
        %v7279 = vpack.c.b16 %v6559, %v6551
        %v7280 = vpack.c.b16 %v6568, %v6560
        %v7281 = vpack.c.b16 %v6569, %v6561
        %v7282 = vpack.c.b16 %v6570, %v6562
        %v7283 = vpack.c.b16 %v6571, %v6563
        %v7284 = vpack.c.b16 %v6572, %v6564
        %v7285 = vpack.c.b16 %v6573, %v6565
        %v7286 = vpack.c.b16 %v6574, %v6566
        %v7287 = vpack.c.b16 %v6575, %v6567
        %v7288 = vpack.c.b16 %v6584, %v6576
        %v7289 = vpack.c.b16 %v6585, %v6577
        %v7290 = vpack.c.b16 %v6586, %v6578
        %v7291 = vpack.c.b16 %v6587, %v6579
        %v7292 = vpack.c.b16 %v6588, %v6580
        %v7293 = vpack.c.b16 %v6589, %v6581
        %v7294 = vpack.c.b16 %v6590, %v6582
        %v7295 = vpack.c.b16 %v6591, %v6583
        %v7296 = vpack.c.b16 %v6600, %v6592
        %v7297 = vpack.c.b16 %v6601, %v6593
        %v7298 = vpack.c.b16 %v6602, %v6594
        %v7299 = vpack.c.b16 %v6603, %v6595
        %v7300 = vpack.c.b16 %v6604, %v6596
        %v7301 = vpack.c.b16 %v6605, %v6597
        %v7302 = vpack.c.b16 %v6606, %v6598
        %v7303 = vpack.c.b16 %v6607, %v6599
        %v7304 = vpack.c.b16 %v6616, %v6608
        %v7305 = vpack.c.b16 %v6617, %v6609
        %v7306 = vpack.c.b16 %v6618, %v6610
        %v7307 = vpack.c.b16 %v6619, %v6611
        %v7308 = vpack.c.b16 %v6620, %v6612
        %v7309 = vpack.c.b16 %v6621, %v6613
        %v7310 = vpack.c.b16 %v6622, %v6614
        %v7311 = vpack.c.b16 %v6623, %v6615
        %v7312 = vpack.c.b16 %v6632, %v6624
        %v7313 = vpack.c.b16 %v6633, %v6625
        %v7314 = vpack.c.b16 %v6634, %v6626
        %v7315 = vpack.c.b16 %v6635, %v6627
        %v7316 = vpack.c.b16 %v6636, %v6628
        %v7317 = vpack.c.b16 %v6637, %v6629
        %v7318 = vpack.c.b16 %v6638, %v6630
        %v7319 = vpack.c.b16 %v6639, %v6631
        %v7320 = vpack.c.b16 %v6648, %v6640
        %v7321 = vpack.c.b16 %v6649, %v6641
        %v7322 = vpack.c.b16 %v6650, %v6642
        %v7323 = vpack.c.b16 %v6651, %v6643
        %v7324 = vpack.c.b16 %v6652, %v6644
        %v7325 = vpack.c.b16 %v6653, %v6645
        %v7326 = vpack.c.b16 %v6654, %v6646
        %v7327 = vpack.c.b16 %v6655, %v6647
        %v7328 = vpack.c.b16 %v6664, %v6656
        %v7329 = vpack.c.b16 %v6665, %v6657
        %v7330 = vpack.c.b16 %v6666, %v6658
        %v7331 = vpack.c.b16 %v6667, %v6659
        %v7332 = vpack.c.b16 %v6668, %v6660
        %v7333 = vpack.c.b16 %v6669, %v6661
        %v7334 = vpack.c.b16 %v6670, %v6662
        %v7335 = vpack.c.b16 %v6671, %v6663
        %v7336 = vpack.c.b16 %v6680, %v6672
        %v7337 = vpack.c.b16 %v6681, %v6673
        %v7338 = vpack.c.b16 %v6682, %v6674
        %v7339 = vpack.c.b16 %v6683, %v6675
        %v7340 = vpack.c.b16 %v6684, %v6676
        %v7341 = vpack.c.b16 %v6685, %v6677
        %v7342 = vpack.c.b16 %v6686, %v6678
        %v7343 = vpack.c.b16 %v6687, %v6679
        %v7344 = vpack.c.b16 %v6696, %v6688
        %v7345 = vpack.c.b16 %v6697, %v6689
        %v7346 = vpack.c.b16 %v6698, %v6690
        %v7347 = vpack.c.b16 %v6699, %v6691
        %v7348 = vpack.c.b16 %v6700, %v6692
        %v7349 = vpack.c.b16 %v6701, %v6693
        %v7350 = vpack.c.b16 %v6702, %v6694
        %v7351 = vpack.c.b16 %v6703, %v6695
        %v7352 = vpack.c.b16 %v6712, %v6704
        %v7353 = vpack.c.b16 %v6713, %v6705
        %v7354 = vpack.c.b16 %v6714, %v6706
        %v7355 = vpack.c.b16 %v6715, %v6707
        %v7356 = vpack.c.b16 %v6716, %v6708
        %v7357 = vpack.c.b16 %v6717, %v6709
        %v7358 = vpack.c.b16 %v6718, %v6710
        %v7359 = vpack.c.b16 %v6719, %v6711
        %v7360 = vpack.c.b16 %v6728, %v6720
        %v7361 = vpack.c.b16 %v6729, %v6721
        %v7362 = vpack.c.b16 %v6730, %v6722
        %v7363 = vpack.c.b16 %v6731, %v6723
        %v7364 = vpack.c.b16 %v6732, %v6724
        %v7365 = vpack.c.b16 %v6733, %v6725
        %v7366 = vpack.c.b16 %v6734, %v6726
        %v7367 = vpack.c.b16 %v6735, %v6727
        %v7368 = vpack.c.b16 %v6744, %v6736
        %v7369 = vpack.c.b16 %v6745, %v6737
        %v7370 = vpack.c.b16 %v6746, %v6738
        %v7371 = vpack.c.b16 %v6747, %v6739
        %v7372 = vpack.c.b16 %v6748, %v6740
        %v7373 = vpack.c.b16 %v6749, %v6741
        %v7374 = vpack.c.b16 %v6750, %v6742
        %v7375 = vpack.c.b16 %v6751, %v6743
        %v7376 = vpack.c.b16 %v6760, %v6752
        %v7377 = vpack.c.b16 %v6761, %v6753
        %v7378 = vpack.c.b16 %v6762, %v6754
        %v7379 = vpack.c.b16 %v6763, %v6755
        %v7380 = vpack.c.b16 %v6764, %v6756
        %v7381 = vpack.c.b16 %v6765, %v6757
        %v7382 = vpack.c.b16 %v6766, %v6758
        %v7383 = vpack.c.b16 %v6767, %v6759
        %v7384 = vpack.c.b16 %v6776, %v6768
        %v7385 = vpack.c.b16 %v6777, %v6769
        %v7386 = vpack.c.b16 %v6778, %v6770
        %v7387 = vpack.c.b16 %v6779, %v6771
        %v7388 = vpack.c.b16 %v6780, %v6772
        %v7389 = vpack.c.b16 %v6781, %v6773
        %v7390 = vpack.c.b16 %v6782, %v6774
        %v7391 = vpack.c.b16 %v6783, %v6775
        %v7392 = vpack.c.b16 %v6792, %v6784
        %v7393 = vpack.c.b16 %v6793, %v6785
        %v7394 = vpack.c.b16 %v6794, %v6786
        %v7395 = vpack.c.b16 %v6795, %v6787
        %v7396 = vpack.c.b16 %v6796, %v6788
        %v7397 = vpack.c.b16 %v6797, %v6789
        %v7398 = vpack.c.b16 %v6798, %v6790
        %v7399 = vpack.c.b16 %v6799, %v6791
        %v7400 = vpack.c.b16 %v6808, %v6800
        %v7401 = vpack.c.b16 %v6809, %v6801
        %v7402 = vpack.c.b16 %v6810, %v6802
        %v7403 = vpack.c.b16 %v6811, %v6803
        %v7404 = vpack.c.b16 %v6812, %v6804
        %v7405 = vpack.c.b16 %v6813, %v6805
        %v7406 = vpack.c.b16 %v6814, %v6806
        %v7407 = vpack.c.b16 %v6815, %v6807
        %v7408 = vpack.c.b16 %v6824, %v6816
        %v7409 = vpack.c.b16 %v6825, %v6817
        %v7410 = vpack.c.b16 %v6826, %v6818
        %v7411 = vpack.c.b16 %v6827, %v6819
        %v7412 = vpack.c.b16 %v6828, %v6820
        %v7413 = vpack.c.b16 %v6829, %v6821
        %v7414 = vpack.c.b16 %v6830, %v6822
        %v7415 = vpack.c.b16 %v6831, %v6823
        %v7416 = vpack.c.b16 %v6840, %v6832
        %v7417 = vpack.c.b16 %v6841, %v6833
        %v7418 = vpack.c.b16 %v6842, %v6834
        %v7419 = vpack.c.b16 %v6843, %v6835
        %v7420 = vpack.c.b16 %v6844, %v6836
        %v7421 = vpack.c.b16 %v6845, %v6837
        %v7422 = vpack.c.b16 %v6846, %v6838
        %v7423 = vpack.c.b16 %v6847, %v6839
        %v7424 = vpack.c.b16 %v6856, %v6848
        %v7425 = vpack.c.b16 %v6857, %v6849
        %v7426 = vpack.c.b16 %v6858, %v6850
        %v7427 = vpack.c.b16 %v6859, %v6851
        %v7428 = vpack.c.b16 %v6860, %v6852
        %v7429 = vpack.c.b16 %v6861, %v6853
        %v7430 = vpack.c.b16 %v6862, %v6854
        %v7431 = vpack.c.b16 %v6863, %v6855
        %v7432 = vpack.c.b16 %v6872, %v6864
        %v7433 = vpack.c.b16 %v6873, %v6865
        %v7434 = vpack.c.b16 %v6874, %v6866
        %v7435 = vpack.c.b16 %v6875, %v6867
        %v7436 = vpack.c.b16 %v6876, %v6868
        %v7437 = vpack.c.b16 %v6877, %v6869
        %v7438 = vpack.c.b16 %v6878, %v6870
        %v7439 = vpack.c.b16 %v6879, %v6871
        %v7440 = vpack.c.b16 %v6888, %v6880
        %v7441 = vpack.c.b16 %v6889, %v6881
        %v7442 = vpack.c.b16 %v6890, %v6882
        %v7443 = vpack.c.b16 %v6891, %v6883
        %v7444 = vpack.c.b16 %v6892, %v6884
        %v7445 = vpack.c.b16 %v6893, %v6885
        %v7446 = vpack.c.b16 %v6894, %v6886
        %v7447 = vpack.c.b16 %v6895, %v6887
        %v7448 = vpack.c.b16 %v6904, %v6896
        %v7449 = vpack.c.b16 %v6905, %v6897
        %v7450 = vpack.c.b16 %v6906, %v6898
        %v7451 = vpack.c.b16 %v6907, %v6899
        %v7452 = vpack.c.b16 %v6908, %v6900
        %v7453 = vpack.c.b16 %v6909, %v6901
        %v7454 = vpack.c.b16 %v6910, %v6902
        %v7455 = vpack.c.b16 %v6911, %v6903
        %v7456 = vpack.c.b16 %v6920, %v6912
        %v7457 = vpack.c.b16 %v6921, %v6913
        %v7458 = vpack.c.b16 %v6922, %v6914
        %v7459 = vpack.c.b16 %v6923, %v6915
        %v7460 = vpack.c.b16 %v6924, %v6916
        %v7461 = vpack.c.b16 %v6925, %v6917
        %v7462 = vpack.c.b16 %v6926, %v6918
        %v7463 = vpack.c.b16 %v6927, %v6919
        %v7464 = vpack.c.b16 %v6936, %v6928
        %v7465 = vpack.c.b16 %v6937, %v6929
        %v7466 = vpack.c.b16 %v6938, %v6930
        %v7467 = vpack.c.b16 %v6939, %v6931
        %v7468 = vpack.c.b16 %v6940, %v6932
        %v7469 = vpack.c.b16 %v6941, %v6933
        %v7470 = vpack.c.b16 %v6942, %v6934
        %v7471 = vpack.c.b16 %v6943, %v6935
        %v7472 = vpack.c.b16 %v6952, %v6944
        %v7473 = vpack.c.b16 %v6953, %v6945
        %v7474 = vpack.c.b16 %v6954, %v6946
        %v7475 = vpack.c.b16 %v6955, %v6947
        %v7476 = vpack.c.b16 %v6956, %v6948
        %v7477 = vpack.c.b16 %v6957, %v6949
        %v7478 = vpack.c.b16 %v6958, %v6950
        %v7479 = vpack.c.b16 %v6959, %v6951
        %v7480 = vpack.c.b16 %v6968, %v6960
        %v7481 = vpack.c.b16 %v6969, %v6961
        %v7482 = vpack.c.b16 %v6970, %v6962
        %v7483 = vpack.c.b16 %v6971, %v6963
        %v7484 = vpack.c.b16 %v6972, %v6964
        %v7485 = vpack.c.b16 %v6973, %v6965
        %v7486 = vpack.c.b16 %v6974, %v6966
        %v7487 = vpack.c.b16 %v6975, %v6967
        %8000 = vmatprep.subr.bf16.mxu0 %v6977
        %8001 = vmatpush1.bf16.msra.mxu0 %v6976
        %8002 = vmatprep.subr.bf16.mxu0 %v6985
        %8003 = vmatpush1.bf16.msra.mxu0 %v6984
        %8004 = vmatprep.subr.bf16.mxu0 %v6993
        %8005 = vmatpush1.bf16.msra.mxu0 %v6992
        %8006 = vmatprep.subr.bf16.mxu0 %v7001
        %8007 = vmatpush1.bf16.msra.mxu0 %v7000
        %8008 = vmatprep.subr.bf16.mxu0 %v7009
        %8009 = vmatpush1.bf16.msra.mxu0 %v7008
        %8010 = vmatprep.subr.bf16.mxu0 %v7017
        %8011 = vmatpush1.bf16.msra.mxu0 %v7016
        %8012 = vmatprep.subr.bf16.mxu0 %v7025
        %8013 = vmatpush1.bf16.msra.mxu0 %v7024
        %8014 = vmatprep.subr.bf16.mxu0 %v7033
        %8015 = vmatpush1.bf16.msra.mxu0 %v7032
        %8016 = vmatprep.subr.bf16.mxu0 %v7041
        %8017 = vmatpush1.bf16.msra.mxu0 %v7040
        %8018 = vmatprep.subr.bf16.mxu0 %v7049
        %8019 = vmatpush1.bf16.msra.mxu0 %v7048
        %8020 = vmatprep.subr.bf16.mxu0 %v7057
        %8021 = vmatpush1.bf16.msra.mxu0 %v7056
        %8022 = vmatprep.subr.bf16.mxu0 %v7065
        %8023 = vmatpush1.bf16.msra.mxu0 %v7064
        %8024 = vmatprep.subr.bf16.mxu0 %v7073
        %8025 = vmatpush1.bf16.msra.mxu0 %v7072
        %8026 = vmatprep.subr.bf16.mxu0 %v7081
        %8027 = vmatpush1.bf16.msra.mxu0 %v7080
        %8028 = vmatprep.subr.bf16.mxu0 %v7089
        %8029 = vmatpush1.bf16.msra.mxu0 %v7088
        %8030 = vmatprep.subr.bf16.mxu0 %v7097
        %8031 = vmatpush1.bf16.msra.mxu0 %v7096
        %8032 = vmatprep.mubr.bf16.mxu0 %v4656
        %8033 = vmatmul.mubr.bf16.gmra.mrb[0].mxu0 %v4655
        %v8034 = vpop.f32.mrb[0].mxu0
        %v8035 = vadd.f32 %v5311, %v8034
        %v8036 = vpop.f32.mrb[0].mxu0
        %v8037 = vadd.f32 %v5313, %v8036
        %v8038 = vpop.f32.mrb[0].mxu0
        %v8039 = vpop.f32.mrb[0].mxu0
        %8040 = vdwg.mxu0
        %8041 = vmatprep.subr.bf16.mxu0 %v7105
        %8042 = vmatpush1.bf16.msra.mxu0 %v7104
        %8043 = vmatprep.subr.bf16.mxu0 %v7113
        %8044 = vmatpush1.bf16.msra.mxu0 %v7112
        %8045 = vmatprep.subr.bf16.mxu0 %v7121
        %8046 = vmatpush1.bf16.msra.mxu0 %v7120
        %8047 = vmatprep.subr.bf16.mxu0 %v7129
        %8048 = vmatpush1.bf16.msra.mxu0 %v7128
        %8049 = vmatprep.subr.bf16.mxu0 %v7137
        %8050 = vmatpush1.bf16.msra.mxu0 %v7136
        %8051 = vmatprep.subr.bf16.mxu0 %v7145
        %8052 = vmatpush1.bf16.msra.mxu0 %v7144
        %8053 = vmatprep.subr.bf16.mxu0 %v7153
        %8054 = vmatpush1.bf16.msra.mxu0 %v7152
        %8055 = vmatprep.subr.bf16.mxu0 %v7161
        %8056 = vmatpush1.bf16.msra.mxu0 %v7160
        %8057 = vmatprep.subr.bf16.mxu0 %v7169
        %8058 = vmatpush1.bf16.msra.mxu0 %v7168
        %8059 = vmatprep.subr.bf16.mxu0 %v7177
        %8060 = vmatpush1.bf16.msra.mxu0 %v7176
        %8061 = vmatprep.subr.bf16.mxu0 %v7185
        %8062 = vmatpush1.bf16.msra.mxu0 %v7184
        %8063 = vmatprep.subr.bf16.mxu0 %v7193
        %8064 = vmatpush1.bf16.msra.mxu0 %v7192
        %8065 = vmatprep.subr.bf16.mxu0 %v7201
        %8066 = vmatpush1.bf16.msra.mxu0 %v7200
        %8067 = vmatprep.subr.bf16.mxu0 %v7209
        %8068 = vmatpush1.bf16.msra.mxu0 %v7208
        %8069 = vmatprep.subr.bf16.mxu0 %v7217
        %8070 = vmatpush1.bf16.msra.mxu0 %v7216
        %8071 = vmatprep.subr.bf16.mxu0 %v7225
        %8072 = vmatpush1.bf16.msra.mxu0 %v7224
        %8073 = vmatprep.mubr.bf16.mxu0 %v4658
        %8074 = vmatmul.mubr.bf16.gmra.mrb[0].mxu0 %v4657
        %v8075 = vpop.f32.mrb[0].mxu0
        %v8076 = vadd.f32 %v8035, %v8075
        %v8077 = vpop.f32.mrb[0].mxu0
        %v8078 = vadd.f32 %v8037, %v8077
        %v8079 = vpop.f32.mrb[0].mxu0
        %v8080 = vpop.f32.mrb[0].mxu0
        %8081 = vdwg.mxu0
        %8082 = vmatprep.subr.bf16.mxu0 %v7233
        %8083 = vmatpush1.bf16.msra.mxu0 %v7232
        %8084 = vmatprep.subr.bf16.mxu0 %v7241
        %8085 = vmatpush1.bf16.msra.mxu0 %v7240
        %8086 = vmatprep.subr.bf16.mxu0 %v7249
        %8087 = vmatpush1.bf16.msra.mxu0 %v7248
        %8088 = vmatprep.subr.bf16.mxu0 %v7257
        %8089 = vmatpush1.bf16.msra.mxu0 %v7256
        %8090 = vmatprep.subr.bf16.mxu0 %v7265
        %8091 = vmatpush1.bf16.msra.mxu0 %v7264
        %8092 = vmatprep.subr.bf16.mxu0 %v7273
        %8093 = vmatpush1.bf16.msra.mxu0 %v7272
        %8094 = vmatprep.subr.bf16.mxu0 %v7281
        %8095 = vmatpush1.bf16.msra.mxu0 %v7280
        %8096 = vmatprep.subr.bf16.mxu0 %v7289
        %8097 = vmatpush1.bf16.msra.mxu0 %v7288
        %8098 = vmatprep.subr.bf16.mxu0 %v7297
        %8099 = vmatpush1.bf16.msra.mxu0 %v7296
        %8100 = vmatprep.subr.bf16.mxu0 %v7305
        %8101 = vmatpush1.bf16.msra.mxu0 %v7304
        %8102 = vmatprep.subr.bf16.mxu0 %v7313
        %8103 = vmatpush1.bf16.msra.mxu0 %v7312
        %8104 = vmatprep.subr.bf16.mxu0 %v7321
        %8105 = vmatpush1.bf16.msra.mxu0 %v7320
        %8106 = vmatprep.subr.bf16.mxu0 %v7329
        %8107 = vmatpush1.bf16.msra.mxu0 %v7328
        %8108 = vmatprep.subr.bf16.mxu0 %v7337
        %8109 = vmatpush1.bf16.msra.mxu0 %v7336
        %8110 = vmatprep.subr.bf16.mxu0 %v7345
        %8111 = vmatpush1.bf16.msra.mxu0 %v7344
        %8112 = vmatprep.subr.bf16.mxu0 %v7353
        %8113 = vmatpush1.bf16.msra.mxu0 %v7352
        %8114 = vmatprep.mubr.bf16.mxu0 %v4660
        %8115 = vmatmul.mubr.bf16.gmra.mrb[0].mxu0 %v4659
        %v8116 = vpop.f32.mrb[0].mxu0
        %v8117 = vadd.f32 %v8076, %v8116
        %v8118 = vpop.f32.mrb[0].mxu0
        %v8119 = vadd.f32 %v8078, %v8118
        %v8120 = vpop.f32.mrb[0].mxu0
        %v8121 = vpop.f32.mrb[0].mxu0
        %8122 = vdwg.mxu0
        %8123 = vmatprep.subr.bf16.mxu0 %v7361
        %8124 = vmatpush1.bf16.msra.mxu0 %v7360
        %8125 = vmatprep.subr.bf16.mxu0 %v7369
        %8126 = vmatpush1.bf16.msra.mxu0 %v7368
        %8127 = vmatprep.subr.bf16.mxu0 %v7377
        %8128 = vmatpush1.bf16.msra.mxu0 %v7376
        %8129 = vmatprep.subr.bf16.mxu0 %v7385
        %8130 = vmatpush1.bf16.msra.mxu0 %v7384
        %8131 = vmatprep.subr.bf16.mxu0 %v7393
        %8132 = vmatpush1.bf16.msra.mxu0 %v7392
        %8133 = vmatprep.subr.bf16.mxu0 %v7401
        %8134 = vmatpush1.bf16.msra.mxu0 %v7400
        %8135 = vmatprep.subr.bf16.mxu0 %v7409
        %8136 = vmatpush1.bf16.msra.mxu0 %v7408
        %8137 = vmatprep.subr.bf16.mxu0 %v7417
        %8138 = vmatpush1.bf16.msra.mxu0 %v7416
        %8139 = vmatprep.subr.bf16.mxu0 %v7425
        %8140 = vmatpush1.bf16.msra.mxu0 %v7424
        %8141 = vmatprep.subr.bf16.mxu0 %v7433
        %8142 = vmatpush1.bf16.msra.mxu0 %v7432
        %8143 = vmatprep.subr.bf16.mxu0 %v7441
        %8144 = vmatpush1.bf16.msra.mxu0 %v7440
        %8145 = vmatprep.subr.bf16.mxu0 %v7449
        %8146 = vmatpush1.bf16.msra.mxu0 %v7448
        %8147 = vmatprep.subr.bf16.mxu0 %v7457
        %8148 = vmatpush1.bf16.msra.mxu0 %v7456
        %8149 = vmatprep.subr.bf16.mxu0 %v7465
        %8150 = vmatpush1.bf16.msra.mxu0 %v7464
        %8151 = vmatprep.subr.bf16.mxu0 %v7473
        %8152 = vmatpush1.bf16.msra.mxu0 %v7472
        %8153 = vmatprep.subr.bf16.mxu0 %v7481
        %8154 = vmatpush1.bf16.msra.mxu0 %v7480
        %8155 = vmatprep.mubr.bf16.mxu0 %v4662
        %8156 = vmatmul.mubr.bf16.gmra.mrb[0].mxu0 %v4661
        %v8157 = vpop.f32.mrb[0].mxu0
        %v8158 = vadd.f32 %v8117, %v8157
        %v8159 = vpop.f32.mrb[0].mxu0
        %v8160 = vadd.f32 %v8119, %v8159
        %v8161 = vpop.f32.mrb[0].mxu0
        %v8162 = vpop.f32.mrb[0].mxu0
        %8163 = vdwg.mxu0
        %8164 = vmatprep.subr.bf16.mxu0 %v6979
        %8165 = vmatpush1.bf16.msra.mxu0 %v6978
        %8166 = vmatprep.subr.bf16.mxu0 %v6987
        %8167 = vmatpush1.bf16.msra.mxu0 %v6986
        %8168 = vmatprep.subr.bf16.mxu0 %v6995
        %8169 = vmatpush1.bf16.msra.mxu0 %v6994
        %8170 = vmatprep.subr.bf16.mxu0 %v7003
        %8171 = vmatpush1.bf16.msra.mxu0 %v7002
        %8172 = vmatprep.subr.bf16.mxu0 %v7011
        %8173 = vmatpush1.bf16.msra.mxu0 %v7010
        %8174 = vmatprep.subr.bf16.mxu0 %v7019
        %8175 = vmatpush1.bf16.msra.mxu0 %v7018
        %8176 = vmatprep.subr.bf16.mxu0 %v7027
        %8177 = vmatpush1.bf16.msra.mxu0 %v7026
        %8178 = vmatprep.subr.bf16.mxu0 %v7035
        %8179 = vmatpush1.bf16.msra.mxu0 %v7034
        %8180 = vmatprep.subr.bf16.mxu0 %v7043
        %8181 = vmatpush1.bf16.msra.mxu0 %v7042
        %8182 = vmatprep.subr.bf16.mxu0 %v7051
        %8183 = vmatpush1.bf16.msra.mxu0 %v7050
        %8184 = vmatprep.subr.bf16.mxu0 %v7059
        %8185 = vmatpush1.bf16.msra.mxu0 %v7058
        %8186 = vmatprep.subr.bf16.mxu0 %v7067
        %8187 = vmatpush1.bf16.msra.mxu0 %v7066
        %8188 = vmatprep.subr.bf16.mxu0 %v7075
        %8189 = vmatpush1.bf16.msra.mxu0 %v7074
        %8190 = vmatprep.subr.bf16.mxu0 %v7083
        %8191 = vmatpush1.bf16.msra.mxu0 %v7082
        %8192 = vmatprep.subr.bf16.mxu0 %v7091
        %8193 = vmatpush1.bf16.msra.mxu0 %v7090
        %8194 = vmatprep.subr.bf16.mxu0 %v7099
        %8195 = vmatpush1.bf16.msra.mxu0 %v7098
        %8196 = vmatprep.mubr.bf16.mxu0 %v4656
        %8197 = vmatmul.mubr.bf16.gmra.mrb[0].mxu0 %v4655
        %v8198 = vpop.f32.mrb[0].mxu0
        %v8199 = vadd.f32 %v5352, %v8198
        %v8200 = vpop.f32.mrb[0].mxu0
        %v8201 = vadd.f32 %v5354, %v8200
        %v8202 = vpop.f32.mrb[0].mxu0
        %v8203 = vpop.f32.mrb[0].mxu0
        %8204 = vdwg.mxu0
        %8205 = vmatprep.subr.bf16.mxu0 %v7107
        %8206 = vmatpush1.bf16.msra.mxu0 %v7106
        %8207 = vmatprep.subr.bf16.mxu0 %v7115
        %8208 = vmatpush1.bf16.msra.mxu0 %v7114
        %8209 = vmatprep.subr.bf16.mxu0 %v7123
        %8210 = vmatpush1.bf16.msra.mxu0 %v7122
        %8211 = vmatprep.subr.bf16.mxu0 %v7131
        %8212 = vmatpush1.bf16.msra.mxu0 %v7130
        %8213 = vmatprep.subr.bf16.mxu0 %v7139
        %8214 = vmatpush1.bf16.msra.mxu0 %v7138
        %8215 = vmatprep.subr.bf16.mxu0 %v7147
        %8216 = vmatpush1.bf16.msra.mxu0 %v7146
        %8217 = vmatprep.subr.bf16.mxu0 %v7155
        %8218 = vmatpush1.bf16.msra.mxu0 %v7154
        %8219 = vmatprep.subr.bf16.mxu0 %v7163
        %8220 = vmatpush1.bf16.msra.mxu0 %v7162
        %8221 = vmatprep.subr.bf16.mxu0 %v7171
        %8222 = vmatpush1.bf16.msra.mxu0 %v7170
        %8223 = vmatprep.subr.bf16.mxu0 %v7179
        %8224 = vmatpush1.bf16.msra.mxu0 %v7178
        %8225 = vmatprep.subr.bf16.mxu0 %v7187
        %8226 = vmatpush1.bf16.msra.mxu0 %v7186
        %8227 = vmatprep.subr.bf16.mxu0 %v7195
        %8228 = vmatpush1.bf16.msra.mxu0 %v7194
        %8229 = vmatprep.subr.bf16.mxu0 %v7203
        %8230 = vmatpush1.bf16.msra.mxu0 %v7202
        %8231 = vmatprep.subr.bf16.mxu0 %v7211
        %8232 = vmatpush1.bf16.msra.mxu0 %v7210
        %8233 = vmatprep.subr.bf16.mxu0 %v7219
        %8234 = vmatpush1.bf16.msra.mxu0 %v7218
        %8235 = vmatprep.subr.bf16.mxu0 %v7227
        %8236 = vmatpush1.bf16.msra.mxu0 %v7226
        %8237 = vmatprep.mubr.bf16.mxu0 %v4658
        %8238 = vmatmul.mubr.bf16.gmra.mrb[0].mxu0 %v4657
        %v8239 = vpop.f32.mrb[0].mxu0
        %v8240 = vadd.f32 %v8199, %v8239
        %v8241 = vpop.f32.mrb[0].mxu0
        %v8242 = vadd.f32 %v8201, %v8241
        %v8243 = vpop.f32.mrb[0].mxu0
        %v8244 = vpop.f32.mrb[0].mxu0
        %8245 = vdwg.mxu0
        %8246 = vmatprep.subr.bf16.mxu0 %v7235
        %8247 = vmatpush1.bf16.msra.mxu0 %v7234
        %8248 = vmatprep.subr.bf16.mxu0 %v7243
        %8249 = vmatpush1.bf16.msra.mxu0 %v7242
        %8250 = vmatprep.subr.bf16.mxu0 %v7251
        %8251 = vmatpush1.bf16.msra.mxu0 %v7250
        %8252 = vmatprep.subr.bf16.mxu0 %v7259
        %8253 = vmatpush1.bf16.msra.mxu0 %v7258
        %8254 = vmatprep.subr.bf16.mxu0 %v7267
        %8255 = vmatpush1.bf16.msra.mxu0 %v7266
        %8256 = vmatprep.subr.bf16.mxu0 %v7275
        %8257 = vmatpush1.bf16.msra.mxu0 %v7274
        %8258 = vmatprep.subr.bf16.mxu0 %v7283
        %8259 = vmatpush1.bf16.msra.mxu0 %v7282
        %8260 = vmatprep.subr.bf16.mxu0 %v7291
        %8261 = vmatpush1.bf16.msra.mxu0 %v7290
        %8262 = vmatprep.subr.bf16.mxu0 %v7299
        %8263 = vmatpush1.bf16.msra.mxu0 %v7298
        %8264 = vmatprep.subr.bf16.mxu0 %v7307
        %8265 = vmatpush1.bf16.msra.mxu0 %v7306
        %8266 = vmatprep.subr.bf16.mxu0 %v7315
        %8267 = vmatpush1.bf16.msra.mxu0 %v7314
        %8268 = vmatprep.subr.bf16.mxu0 %v7323
        %8269 = vmatpush1.bf16.msra.mxu0 %v7322
        %8270 = vmatprep.subr.bf16.mxu0 %v7331
        %8271 = vmatpush1.bf16.msra.mxu0 %v7330
        %8272 = vmatprep.subr.bf16.mxu0 %v7339
        %8273 = vmatpush1.bf16.msra.mxu0 %v7338
        %8274 = vmatprep.subr.bf16.mxu0 %v7347
        %8275 = vmatpush1.bf16.msra.mxu0 %v7346
        %8276 = vmatprep.subr.bf16.mxu0 %v7355
        %8277 = vmatpush1.bf16.msra.mxu0 %v7354
        %8278 = vmatprep.mubr.bf16.mxu0 %v4660
        %8279 = vmatmul.mubr.bf16.gmra.mrb[0].mxu0 %v4659
        %v8280 = vpop.f32.mrb[0].mxu0
        %v8281 = vadd.f32 %v8240, %v8280
        %v8282 = vpop.f32.mrb[0].mxu0
        %v8283 = vadd.f32 %v8242, %v8282
        %v8284 = vpop.f32.mrb[0].mxu0
        %v8285 = vpop.f32.mrb[0].mxu0
        %8286 = vdwg.mxu0
        %8287 = vmatprep.subr.bf16.mxu0 %v7363
        %8288 = vmatpush1.bf16.msra.mxu0 %v7362
        %8289 = vmatprep.subr.bf16.mxu0 %v7371
        %8290 = vmatpush1.bf16.msra.mxu0 %v7370
        %8291 = vmatprep.subr.bf16.mxu0 %v7379
        %8292 = vmatpush1.bf16.msra.mxu0 %v7378
        %8293 = vmatprep.subr.bf16.mxu0 %v7387
        %8294 = vmatpush1.bf16.msra.mxu0 %v7386
        %8295 = vmatprep.subr.bf16.mxu0 %v7395
        %8296 = vmatpush1.bf16.msra.mxu0 %v7394
        %8297 = vmatprep.subr.bf16.mxu0 %v7403
        %8298 = vmatpush1.bf16.msra.mxu0 %v7402
        %8299 = vmatprep.subr.bf16.mxu0 %v7411
        %8300 = vmatpush1.bf16.msra.mxu0 %v7410
        %8301 = vmatprep.subr.bf16.mxu0 %v7419
        %8302 = vmatpush1.bf16.msra.mxu0 %v7418
        %8303 = vmatprep.subr.bf16.mxu0 %v7427
        %8304 = vmatpush1.bf16.msra.mxu0 %v7426
        %8305 = vmatprep.subr.bf16.mxu0 %v7435
        %8306 = vmatpush1.bf16.msra.mxu0 %v7434
        %8307 = vmatprep.subr.bf16.mxu0 %v7443
        %8308 = vmatpush1.bf16.msra.mxu0 %v7442
        %8309 = vmatprep.subr.bf16.mxu0 %v7451
        %8310 = vmatpush1.bf16.msra.mxu0 %v7450
        %8311 = vmatprep.subr.bf16.mxu0 %v7459
        %8312 = vmatpush1.bf16.msra.mxu0 %v7458
        %8313 = vmatprep.subr.bf16.mxu0 %v7467
        %8314 = vmatpush1.bf16.msra.mxu0 %v7466
        %8315 = vmatprep.subr.bf16.mxu0 %v7475
        %8316 = vmatpush1.bf16.msra.mxu0 %v7474
        %8317 = vmatprep.subr.bf16.mxu0 %v7483
        %8318 = vmatpush1.bf16.msra.mxu0 %v7482
        %8319 = vmatprep.mubr.bf16.mxu0 %v4662
        %8320 = vmatmul.mubr.bf16.gmra.mrb[0].mxu0 %v4661
        %v8321 = vpop.f32.mrb[0].mxu0
        %v8322 = vadd.f32 %v8281, %v8321
        %v8323 = vpop.f32.mrb[0].mxu0
        %v8324 = vadd.f32 %v8283, %v8323
        %v8325 = vpop.f32.mrb[0].mxu0
        %v8326 = vpop.f32.mrb[0].mxu0
        %8327 = vdwg.mxu0
        %8328 = vmatprep.subr.bf16.mxu0 %v6981
        %8329 = vmatpush1.bf16.msra.mxu0 %v6980
        %8330 = vmatprep.subr.bf16.mxu0 %v6989
        %8331 = vmatpush1.bf16.msra.mxu0 %v6988
        %8332 = vmatprep.subr.bf16.mxu0 %v6997
        %8333 = vmatpush1.bf16.msra.mxu0 %v6996
        %8334 = vmatprep.subr.bf16.mxu0 %v7005
        %8335 = vmatpush1.bf16.msra.mxu0 %v7004
        %8336 = vmatprep.subr.bf16.mxu0 %v7013
        %8337 = vmatpush1.bf16.msra.mxu0 %v7012
        %8338 = vmatprep.subr.bf16.mxu0 %v7021
        %8339 = vmatpush1.bf16.msra.mxu0 %v7020
        %8340 = vmatprep.subr.bf16.mxu0 %v7029
        %8341 = vmatpush1.bf16.msra.mxu0 %v7028
        %8342 = vmatprep.subr.bf16.mxu0 %v7037
        %8343 = vmatpush1.bf16.msra.mxu0 %v7036
        %8344 = vmatprep.subr.bf16.mxu0 %v7045
        %8345 = vmatpush1.bf16.msra.mxu0 %v7044
        %8346 = vmatprep.subr.bf16.mxu0 %v7053
        %8347 = vmatpush1.bf16.msra.mxu0 %v7052
        %8348 = vmatprep.subr.bf16.mxu0 %v7061
        %8349 = vmatpush1.bf16.msra.mxu0 %v7060
        %8350 = vmatprep.subr.bf16.mxu0 %v7069
        %8351 = vmatpush1.bf16.msra.mxu0 %v7068
        %8352 = vmatprep.subr.bf16.mxu0 %v7077
        %8353 = vmatpush1.bf16.msra.mxu0 %v7076
        %8354 = vmatprep.subr.bf16.mxu0 %v7085
        %8355 = vmatpush1.bf16.msra.mxu0 %v7084
        %8356 = vmatprep.subr.bf16.mxu0 %v7093
        %8357 = vmatpush1.bf16.msra.mxu0 %v7092
        %8358 = vmatprep.subr.bf16.mxu0 %v7101
        %8359 = vmatpush1.bf16.msra.mxu0 %v7100
        %8360 = vmatprep.mubr.bf16.mxu0 %v4656
        %8361 = vmatmul.mubr.bf16.gmra.mrb[0].mxu0 %v4655
        %v8362 = vpop.f32.mrb[0].mxu0
        %v8363 = vadd.f32 %v5393, %v8362
        %v8364 = vpop.f32.mrb[0].mxu0
        %v8365 = vadd.f32 %v5395, %v8364
        %v8366 = vpop.f32.mrb[0].mxu0
        %v8367 = vpop.f32.mrb[0].mxu0
        %8368 = vdwg.mxu0
        %8369 = vmatprep.subr.bf16.mxu0 %v7109
        %8370 = vmatpush1.bf16.msra.mxu0 %v7108
        %8371 = vmatprep.subr.bf16.mxu0 %v7117
        %8372 = vmatpush1.bf16.msra.mxu0 %v7116
        %8373 = vmatprep.subr.bf16.mxu0 %v7125
        %8374 = vmatpush1.bf16.msra.mxu0 %v7124
        %8375 = vmatprep.subr.bf16.mxu0 %v7133
        %8376 = vmatpush1.bf16.msra.mxu0 %v7132
        %8377 = vmatprep.subr.bf16.mxu0 %v7141
        %8378 = vmatpush1.bf16.msra.mxu0 %v7140
        %8379 = vmatprep.subr.bf16.mxu0 %v7149
        %8380 = vmatpush1.bf16.msra.mxu0 %v7148
        %8381 = vmatprep.subr.bf16.mxu0 %v7157
        %8382 = vmatpush1.bf16.msra.mxu0 %v7156
        %8383 = vmatprep.subr.bf16.mxu0 %v7165
        %8384 = vmatpush1.bf16.msra.mxu0 %v7164
        %8385 = vmatprep.subr.bf16.mxu0 %v7173
        %8386 = vmatpush1.bf16.msra.mxu0 %v7172
        %8387 = vmatprep.subr.bf16.mxu0 %v7181
        %8388 = vmatpush1.bf16.msra.mxu0 %v7180
        %8389 = vmatprep.subr.bf16.mxu0 %v7189
        %8390 = vmatpush1.bf16.msra.mxu0 %v7188
        %8391 = vmatprep.subr.bf16.mxu0 %v7197
        %8392 = vmatpush1.bf16.msra.mxu0 %v7196
        %8393 = vmatprep.subr.bf16.mxu0 %v7205
        %8394 = vmatpush1.bf16.msra.mxu0 %v7204
        %8395 = vmatprep.subr.bf16.mxu0 %v7213
        %8396 = vmatpush1.bf16.msra.mxu0 %v7212
        %8397 = vmatprep.subr.bf16.mxu0 %v7221
        %8398 = vmatpush1.bf16.msra.mxu0 %v7220
        %8399 = vmatprep.subr.bf16.mxu0 %v7229
        %8400 = vmatpush1.bf16.msra.mxu0 %v7228
        %8401 = vmatprep.mubr.bf16.mxu0 %v4658
        %8402 = vmatmul.mubr.bf16.gmra.mrb[0].mxu0 %v4657
        %v8403 = vpop.f32.mrb[0].mxu0
        %v8404 = vadd.f32 %v8363, %v8403
        %v8405 = vpop.f32.mrb[0].mxu0
        %v8406 = vadd.f32 %v8365, %v8405
        %v8407 = vpop.f32.mrb[0].mxu0
        %v8408 = vpop.f32.mrb[0].mxu0
        %8409 = vdwg.mxu0
        %8410 = vmatprep.subr.bf16.mxu0 %v7237
        %8411 = vmatpush1.bf16.msra.mxu0 %v7236
        %8412 = vmatprep.subr.bf16.mxu0 %v7245
        %8413 = vmatpush1.bf16.msra.mxu0 %v7244
        %8414 = vmatprep.subr.bf16.mxu0 %v7253
        %8415 = vmatpush1.bf16.msra.mxu0 %v7252
        %8416 = vmatprep.subr.bf16.mxu0 %v7261
        %8417 = vmatpush1.bf16.msra.mxu0 %v7260
        %8418 = vmatprep.subr.bf16.mxu0 %v7269
        %8419 = vmatpush1.bf16.msra.mxu0 %v7268
        %8420 = vmatprep.subr.bf16.mxu0 %v7277
        %8421 = vmatpush1.bf16.msra.mxu0 %v7276
        %8422 = vmatprep.subr.bf16.mxu0 %v7285
        %8423 = vmatpush1.bf16.msra.mxu0 %v7284
        %8424 = vmatprep.subr.bf16.mxu0 %v7293
        %8425 = vmatpush1.bf16.msra.mxu0 %v7292
        %8426 = vmatprep.subr.bf16.mxu0 %v7301
        %8427 = vmatpush1.bf16.msra.mxu0 %v7300
        %8428 = vmatprep.subr.bf16.mxu0 %v7309
        %8429 = vmatpush1.bf16.msra.mxu0 %v7308
        %8430 = vmatprep.subr.bf16.mxu0 %v7317
        %8431 = vmatpush1.bf16.msra.mxu0 %v7316
        %8432 = vmatprep.subr.bf16.mxu0 %v7325
        %8433 = vmatpush1.bf16.msra.mxu0 %v7324
        %8434 = vmatprep.subr.bf16.mxu0 %v7333
        %8435 = vmatpush1.bf16.msra.mxu0 %v7332
        %8436 = vmatprep.subr.bf16.mxu0 %v7341
        %8437 = vmatpush1.bf16.msra.mxu0 %v7340
        %8438 = vmatprep.subr.bf16.mxu0 %v7349
        %8439 = vmatpush1.bf16.msra.mxu0 %v7348
        %8440 = vmatprep.subr.bf16.mxu0 %v7357
        %8441 = vmatpush1.bf16.msra.mxu0 %v7356
        %8442 = vmatprep.mubr.bf16.mxu0 %v4660
        %8443 = vmatmul.mubr.bf16.gmra.mrb[0].mxu0 %v4659
        %v8444 = vpop.f32.mrb[0].mxu0
        %v8445 = vadd.f32 %v8404, %v8444
        %v8446 = vpop.f32.mrb[0].mxu0
        %v8447 = vadd.f32 %v8406, %v8446
        %v8448 = vpop.f32.mrb[0].mxu0
        %v8449 = vpop.f32.mrb[0].mxu0
        %8450 = vdwg.mxu0
        %8451 = vmatprep.subr.bf16.mxu0 %v7365
        %8452 = vmatpush1.bf16.msra.mxu0 %v7364
        %8453 = vmatprep.subr.bf16.mxu0 %v7373
        %8454 = vmatpush1.bf16.msra.mxu0 %v7372
        %8455 = vmatprep.subr.bf16.mxu0 %v7381
        %8456 = vmatpush1.bf16.msra.mxu0 %v7380
        %8457 = vmatprep.subr.bf16.mxu0 %v7389
        %8458 = vmatpush1.bf16.msra.mxu0 %v7388
        %8459 = vmatprep.subr.bf16.mxu0 %v7397
        %8460 = vmatpush1.bf16.msra.mxu0 %v7396
        %8461 = vmatprep.subr.bf16.mxu0 %v7405
        %8462 = vmatpush1.bf16.msra.mxu0 %v7404
        %8463 = vmatprep.subr.bf16.mxu0 %v7413
        %8464 = vmatpush1.bf16.msra.mxu0 %v7412
        %8465 = vmatprep.subr.bf16.mxu0 %v7421
        %8466 = vmatpush1.bf16.msra.mxu0 %v7420
        %8467 = vmatprep.subr.bf16.mxu0 %v7429
        %8468 = vmatpush1.bf16.msra.mxu0 %v7428
        %8469 = vmatprep.subr.bf16.mxu0 %v7437
        %8470 = vmatpush1.bf16.msra.mxu0 %v7436
        %8471 = vmatprep.subr.bf16.mxu0 %v7445
        %8472 = vmatpush1.bf16.msra.mxu0 %v7444
        %8473 = vmatprep.subr.bf16.mxu0 %v7453
        %8474 = vmatpush1.bf16.msra.mxu0 %v7452
        %8475 = vmatprep.subr.bf16.mxu0 %v7461
        %8476 = vmatpush1.bf16.msra.mxu0 %v7460
        %8477 = vmatprep.subr.bf16.mxu0 %v7469
        %8478 = vmatpush1.bf16.msra.mxu0 %v7468
        %8479 = vmatprep.subr.bf16.mxu0 %v7477
        %8480 = vmatpush1.bf16.msra.mxu0 %v7476
        %8481 = vmatprep.subr.bf16.mxu0 %v7485
        %8482 = vmatpush1.bf16.msra.mxu0 %v7484
        %8483 = vmatprep.mubr.bf16.mxu0 %v4662
        %8484 = vmatmul.mubr.bf16.gmra.mrb[0].mxu0 %v4661
        %v8485 = vpop.f32.mrb[0].mxu0
        %v8486 = vadd.f32 %v8445, %v8485
        %v8487 = vpop.f32.mrb[0].mxu0
        %v8488 = vadd.f32 %v8447, %v8487
        %v8489 = vpop.f32.mrb[0].mxu0
        %v8490 = vpop.f32.mrb[0].mxu0
        %8491 = vdwg.mxu0
        %8492 = vmatprep.subr.bf16.mxu0 %v6983
        %8493 = vmatpush1.bf16.msra.mxu0 %v6982
        %8494 = vmatprep.subr.bf16.mxu0 %v6991
        %8495 = vmatpush1.bf16.msra.mxu0 %v6990
        %8496 = vmatprep.subr.bf16.mxu0 %v6999
        %8497 = vmatpush1.bf16.msra.mxu0 %v6998
        %8498 = vmatprep.subr.bf16.mxu0 %v7007
        %8499 = vmatpush1.bf16.msra.mxu0 %v7006
        %8500 = vmatprep.subr.bf16.mxu0 %v7015
        %8501 = vmatpush1.bf16.msra.mxu0 %v7014
        %8502 = vmatprep.subr.bf16.mxu0 %v7023
        %8503 = vmatpush1.bf16.msra.mxu0 %v7022
        %8504 = vmatprep.subr.bf16.mxu0 %v7031
        %8505 = vmatpush1.bf16.msra.mxu0 %v7030
        %8506 = vmatprep.subr.bf16.mxu0 %v7039
        %8507 = vmatpush1.bf16.msra.mxu0 %v7038
        %8508 = vmatprep.subr.bf16.mxu0 %v7047
        %8509 = vmatpush1.bf16.msra.mxu0 %v7046
        %8510 = vmatprep.subr.bf16.mxu0 %v7055
        %8511 = vmatpush1.bf16.msra.mxu0 %v7054
        %8512 = vmatprep.subr.bf16.mxu0 %v7063
        %8513 = vmatpush1.bf16.msra.mxu0 %v7062
        %8514 = vmatprep.subr.bf16.mxu0 %v7071
        %8515 = vmatpush1.bf16.msra.mxu0 %v7070
        %8516 = vmatprep.subr.bf16.mxu0 %v7079
        %8517 = vmatpush1.bf16.msra.mxu0 %v7078
        %8518 = vmatprep.subr.bf16.mxu0 %v7087
        %8519 = vmatpush1.bf16.msra.mxu0 %v7086
        %8520 = vmatprep.subr.bf16.mxu0 %v7095
        %8521 = vmatpush1.bf16.msra.mxu0 %v7094
        %8522 = vmatprep.subr.bf16.mxu0 %v7103
        %8523 = vmatpush1.bf16.msra.mxu0 %v7102
        %8524 = vmatprep.mubr.bf16.mxu0 %v4656
        %8525 = vmatmul.mubr.bf16.gmra.mrb[0].mxu0 %v4655
        %v8526 = vpop.f32.mrb[0].mxu0
        %v8527 = vadd.f32 %v5434, %v8526
        %v8528 = vpop.f32.mrb[0].mxu0
        %v8529 = vadd.f32 %v5436, %v8528
        %v8530 = vpop.f32.mrb[0].mxu0
        %v8531 = vpop.f32.mrb[0].mxu0
        %8532 = vdwg.mxu0
        %8533 = vmatprep.subr.bf16.mxu0 %v7111
        %8534 = vmatpush1.bf16.msra.mxu0 %v7110
        %8535 = vmatprep.subr.bf16.mxu0 %v7119
        %8536 = vmatpush1.bf16.msra.mxu0 %v7118
        %8537 = vmatprep.subr.bf16.mxu0 %v7127
        %8538 = vmatpush1.bf16.msra.mxu0 %v7126
        %8539 = vmatprep.subr.bf16.mxu0 %v7135
        %8540 = vmatpush1.bf16.msra.mxu0 %v7134
        %8541 = vmatprep.subr.bf16.mxu0 %v7143
        %8542 = vmatpush1.bf16.msra.mxu0 %v7142
        %8543 = vmatprep.subr.bf16.mxu0 %v7151
        %8544 = vmatpush1.bf16.msra.mxu0 %v7150
        %8545 = vmatprep.subr.bf16.mxu0 %v7159
        %8546 = vmatpush1.bf16.msra.mxu0 %v7158
        %8547 = vmatprep.subr.bf16.mxu0 %v7167
        %8548 = vmatpush1.bf16.msra.mxu0 %v7166
        %8549 = vmatprep.subr.bf16.mxu0 %v7175
        %8550 = vmatpush1.bf16.msra.mxu0 %v7174
        %8551 = vmatprep.subr.bf16.mxu0 %v7183
        %8552 = vmatpush1.bf16.msra.mxu0 %v7182
        %8553 = vmatprep.subr.bf16.mxu0 %v7191
        %8554 = vmatpush1.bf16.msra.mxu0 %v7190
        %8555 = vmatprep.subr.bf16.mxu0 %v7199
        %8556 = vmatpush1.bf16.msra.mxu0 %v7198
        %8557 = vmatprep.subr.bf16.mxu0 %v7207
        %8558 = vmatpush1.bf16.msra.mxu0 %v7206
        %8559 = vmatprep.subr.bf16.mxu0 %v7215
        %8560 = vmatpush1.bf16.msra.mxu0 %v7214
        %8561 = vmatprep.subr.bf16.mxu0 %v7223
        %8562 = vmatpush1.bf16.msra.mxu0 %v7222
        %8563 = vmatprep.subr.bf16.mxu0 %v7231
        %8564 = vmatpush1.bf16.msra.mxu0 %v7230
        %8565 = vmatprep.mubr.bf16.mxu0 %v4658
        %8566 = vmatmul.mubr.bf16.gmra.mrb[0].mxu0 %v4657
        %v8567 = vpop.f32.mrb[0].mxu0
        %v8568 = vadd.f32 %v8527, %v8567
        %v8569 = vpop.f32.mrb[0].mxu0
        %v8570 = vadd.f32 %v8529, %v8569
        %v8571 = vpop.f32.mrb[0].mxu0
        %v8572 = vpop.f32.mrb[0].mxu0
        %8573 = vdwg.mxu0
        %8574 = vmatprep.subr.bf16.mxu0 %v7239
        %8575 = vmatpush1.bf16.msra.mxu0 %v7238
        %8576 = vmatprep.subr.bf16.mxu0 %v7247
        %8577 = vmatpush1.bf16.msra.mxu0 %v7246
        %8578 = vmatprep.subr.bf16.mxu0 %v7255
        %8579 = vmatpush1.bf16.msra.mxu0 %v7254
        %8580 = vmatprep.subr.bf16.mxu0 %v7263
        %8581 = vmatpush1.bf16.msra.mxu0 %v7262
        %8582 = vmatprep.subr.bf16.mxu0 %v7271
        %8583 = vmatpush1.bf16.msra.mxu0 %v7270
        %8584 = vmatprep.subr.bf16.mxu0 %v7279
        %8585 = vmatpush1.bf16.msra.mxu0 %v7278
        %8586 = vmatprep.subr.bf16.mxu0 %v7287
        %8587 = vmatpush1.bf16.msra.mxu0 %v7286
        %8588 = vmatprep.subr.bf16.mxu0 %v7295
        %8589 = vmatpush1.bf16.msra.mxu0 %v7294
        %8590 = vmatprep.subr.bf16.mxu0 %v7303
        %8591 = vmatpush1.bf16.msra.mxu0 %v7302
        %8592 = vmatprep.subr.bf16.mxu0 %v7311
        %8593 = vmatpush1.bf16.msra.mxu0 %v7310
        %8594 = vmatprep.subr.bf16.mxu0 %v7319
        %8595 = vmatpush1.bf16.msra.mxu0 %v7318
        %8596 = vmatprep.subr.bf16.mxu0 %v7327
        %8597 = vmatpush1.bf16.msra.mxu0 %v7326
        %8598 = vmatprep.subr.bf16.mxu0 %v7335
        %8599 = vmatpush1.bf16.msra.mxu0 %v7334
        %8600 = vmatprep.subr.bf16.mxu0 %v7343
        %8601 = vmatpush1.bf16.msra.mxu0 %v7342
        %8602 = vmatprep.subr.bf16.mxu0 %v7351
        %8603 = vmatpush1.bf16.msra.mxu0 %v7350
        %8604 = vmatprep.subr.bf16.mxu0 %v7359
        %8605 = vmatpush1.bf16.msra.mxu0 %v7358
        %8606 = vmatprep.mubr.bf16.mxu0 %v4660
        %8607 = vmatmul.mubr.bf16.gmra.mrb[0].mxu0 %v4659
        %v8608 = vpop.f32.mrb[0].mxu0
        %v8609 = vadd.f32 %v8568, %v8608
        %v8610 = vpop.f32.mrb[0].mxu0
        %v8611 = vadd.f32 %v8570, %v8610
        %v8612 = vpop.f32.mrb[0].mxu0
        %v8613 = vpop.f32.mrb[0].mxu0
        %8614 = vdwg.mxu0
        %8615 = vmatprep.subr.bf16.mxu0 %v7367
        %8616 = vmatpush1.bf16.msra.mxu0 %v7366
        %8617 = vmatprep.subr.bf16.mxu0 %v7375
        %8618 = vmatpush1.bf16.msra.mxu0 %v7374
        %8619 = vmatprep.subr.bf16.mxu0 %v7383
        %8620 = vmatpush1.bf16.msra.mxu0 %v7382
        %8621 = vmatprep.subr.bf16.mxu0 %v7391
        %8622 = vmatpush1.bf16.msra.mxu0 %v7390
        %8623 = vmatprep.subr.bf16.mxu0 %v7399
        %8624 = vmatpush1.bf16.msra.mxu0 %v7398
        %8625 = vmatprep.subr.bf16.mxu0 %v7407
        %8626 = vmatpush1.bf16.msra.mxu0 %v7406
        %8627 = vmatprep.subr.bf16.mxu0 %v7415
        %8628 = vmatpush1.bf16.msra.mxu0 %v7414
        %8629 = vmatprep.subr.bf16.mxu0 %v7423
        %8630 = vmatpush1.bf16.msra.mxu0 %v7422
        %8631 = vmatprep.subr.bf16.mxu0 %v7431
        %8632 = vmatpush1.bf16.msra.mxu0 %v7430
        %8633 = vmatprep.subr.bf16.mxu0 %v7439
        %8634 = vmatpush1.bf16.msra.mxu0 %v7438
        %8635 = vmatprep.subr.bf16.mxu0 %v7447
        %8636 = vmatpush1.bf16.msra.mxu0 %v7446
        %8637 = vmatprep.subr.bf16.mxu0 %v7455
        %8638 = vmatpush1.bf16.msra.mxu0 %v7454
        %8639 = vmatprep.subr.bf16.mxu0 %v7463
        %8640 = vmatpush1.bf16.msra.mxu0 %v7462
        %8641 = vmatprep.subr.bf16.mxu0 %v7471
        %8642 = vmatpush1.bf16.msra.mxu0 %v7470
        %8643 = vmatprep.subr.bf16.mxu0 %v7479
        %8644 = vmatpush1.bf16.msra.mxu0 %v7478
        %8645 = vmatprep.subr.bf16.mxu0 %v7487
        %8646 = vmatpush1.bf16.msra.mxu0 %v7486
        %8647 = vmatprep.mubr.bf16.mxu0 %v4662
        %8648 = vmatmul.mubr.bf16.gmra.mrb[0].mxu0 %v4661
        %v8649 = vpop.f32.mrb[0].mxu0
        %v8650 = vadd.f32 %v8609, %v8649
        %v8651 = vpop.f32.mrb[0].mxu0
        %v8652 = vadd.f32 %v8611, %v8651
        %v8653 = vpop.f32.mrb[0].mxu0
        %v8654 = vpop.f32.mrb[0].mxu0
        %8655 = vdwg.mxu0
        %v8656 = vld [vmem:[%s16] sm:$0xff]
        %v8658 = vlaneseq
        %v8659 = vshrl.u32 %v8658, 7
        %v8660 = vsub.s32 0, %v8659
        %v8661 = vrot.slane %v8656, %v8660
        %v8662 = vlaneseq
        %v8663 = vshrl.u32 %v8662, 7
        %v8664 = vsub.s32 1, %v8663
        %v8665 = vrot.slane %v8656, %v8664
        %v8666 = vlaneseq
        %v8667 = vshrl.u32 %v8666, 7
        %v8668 = vsub.s32 2, %v8667
        %v8669 = vrot.slane %v8656, %v8668
        %v8670 = vlaneseq
        %v8671 = vshrl.u32 %v8670, 7
        %v8672 = vsub.s32 3, %v8671
        %v8673 = vrot.slane %v8656, %v8672
        %v8674 = vlaneseq
        %v8675 = vshrl.u32 %v8674, 7
        %v8676 = vsub.s32 4, %v8675
        %v8677 = vrot.slane %v8656, %v8676
        %v8678 = vlaneseq
        %v8679 = vshrl.u32 %v8678, 7
        %v8680 = vsub.s32 5, %v8679
        %v8681 = vrot.slane %v8656, %v8680
        %v8682 = vlaneseq
        %v8683 = vshrl.u32 %v8682, 7
        %v8684 = vsub.s32 6, %v8683
        %v8685 = vrot.slane %v8656, %v8684
        %v8686 = vlaneseq
        %v8687 = vshrl.u32 %v8686, 7
        %v8688 = vsub.s32 7, %v8687
        %v8689 = vrot.slane %v8656, %v8688
        %v8698 = vadd.f32 %v8158, %v8661
        %v8699 = vadd.f32 %v8160, %v8665
        %v8700 = vadd.f32 %v8322, %v8669
        %v8701 = vadd.f32 %v8324, %v8673
        %v8702 = vadd.f32 %v8486, %v8677
        %v8703 = vadd.f32 %v8488, %v8681
        %v8704 = vadd.f32 %v8650, %v8685
        %v8705 = vadd.f32 %v8652, %v8689
        %v8706 = vmax.f32 %v8698, 0.0
        %v8707 = vmax.f32 %v8699, 0.0
        %v8708 = vmax.f32 %v8700, 0.0
        %v8709 = vmax.f32 %v8701, 0.0
        %v8710 = vmax.f32 %v8702, 0.0
        %v8711 = vmax.f32 %v8703, 0.0
        %v8712 = vmax.f32 %v8704, 0.0
        %v8713 = vmax.f32 %v8705, 0.0
        %v8714 = vpack.c.bf16 %v8706, %v8706
        %v8715 = vpack.c.bf16 %v8707, %v8707
        %v8716 = vpack.c.bf16 %v8708, %v8708
        %v8717 = vpack.c.bf16 %v8709, %v8709
        %v8718 = vpack.c.bf16 %v8710, %v8710
        %v8719 = vpack.c.bf16 %v8711, %v8711
        %v8720 = vpack.c.bf16 %v8712, %v8712
        %v8721 = vpack.c.bf16 %v8713, %v8713
        %v8722 = vld [vmem:[%s17] sm:$0xff]
        %v8723 = vld [vmem:[%s17 + $0x8] sm:$0xff]
        %v8724 = vld [vmem:[%s17 + $0x10] sm:$0xff]
        %v8725 = vld [vmem:[%s17 + $0x18] sm:$0xff]
        %v8726 = vld [vmem:[%s17 + $0x20] sm:$0xff]
        %v8727 = vld [vmem:[%s17 + $0x28] sm:$0xff]
        %v8728 = vld [vmem:[%s17 + $0x30] sm:$0xff]
        %v8729 = vld [vmem:[%s17 + $0x38] sm:$0xff]
        %v8730 = vld [vmem:[%s17 + $0x40] sm:$0xff]
        %v8731 = vld [vmem:[%s17 + $0x48] sm:$0xff]
        %v8732 = vld [vmem:[%s17 + $0x50] sm:$0xff]
        %v8733 = vld [vmem:[%s17 + $0x58] sm:$0xff]
        %v8734 = vld [vmem:[%s17 + $0x60] sm:$0xff]
        %v8735 = vld [vmem:[%s17 + $0x68] sm:$0xff]
        %v8736 = vld [vmem:[%s17 + $0x70] sm:$0xff]
        %v8737 = vld [vmem:[%s17 + $0x78] sm:$0xff]
        %v8738 = vld [vmem:[%s17 + $0x80] sm:$0xff]
        %v8739 = vld [vmem:[%s17 + $0x88] sm:$0xff]
        %v8740 = vld [vmem:[%s17 + $0x90] sm:$0xff]
        %v8741 = vld [vmem:[%s17 + $0x98] sm:$0xff]
        %v8742 = vld [vmem:[%s17 + $0xa0] sm:$0xff]
        %v8743 = vld [vmem:[%s17 + $0xa8] sm:$0xff]
        %v8744 = vld [vmem:[%s17 + $0xb0] sm:$0xff]
        %v8745 = vld [vmem:[%s17 + $0xb8] sm:$0xff]
        %v8746 = vld [vmem:[%s17 + $0xc0] sm:$0xff]
        %v8747 = vld [vmem:[%s17 + $0xc8] sm:$0xff]
        %v8748 = vld [vmem:[%s17 + $0xd0] sm:$0xff]
        %v8749 = vld [vmem:[%s17 + $0xd8] sm:$0xff]
        %v8750 = vld [vmem:[%s17 + $0xe0] sm:$0xff]
        %v8751 = vld [vmem:[%s17 + $0xe8] sm:$0xff]
        %v8752 = vld [vmem:[%s17 + $0xf0] sm:$0xff]
        %v8753 = vld [vmem:[%s17 + $0xf8] sm:$0xff]
        %v8754 = vld [vmem:[%s17 + $0x100] sm:$0xff]
        %v8755 = vld [vmem:[%s17 + $0x108] sm:$0xff]
        %v8756 = vld [vmem:[%s17 + $0x110] sm:$0xff]
        %v8757 = vld [vmem:[%s17 + $0x118] sm:$0xff]
        %v8758 = vld [vmem:[%s17 + $0x120] sm:$0xff]
        %v8759 = vld [vmem:[%s17 + $0x128] sm:$0xff]
        %v8760 = vld [vmem:[%s17 + $0x130] sm:$0xff]
        %v8761 = vld [vmem:[%s17 + $0x138] sm:$0xff]
        %v8762 = vld [vmem:[%s17 + $0x140] sm:$0xff]
        %v8763 = vld [vmem:[%s17 + $0x148] sm:$0xff]
        %v8764 = vld [vmem:[%s17 + $0x150] sm:$0xff]
        %v8765 = vld [vmem:[%s17 + $0x158] sm:$0xff]
        %v8766 = vld [vmem:[%s17 + $0x160] sm:$0xff]
        %v8767 = vld [vmem:[%s17 + $0x168] sm:$0xff]
        %v8768 = vld [vmem:[%s17 + $0x170] sm:$0xff]
        %v8769 = vld [vmem:[%s17 + $0x178] sm:$0xff]
        %v8770 = vld [vmem:[%s17 + $0x180] sm:$0xff]
        %v8771 = vld [vmem:[%s17 + $0x188] sm:$0xff]
        %v8772 = vld [vmem:[%s17 + $0x190] sm:$0xff]
        %v8773 = vld [vmem:[%s17 + $0x198] sm:$0xff]
        %v8774 = vld [vmem:[%s17 + $0x1a0] sm:$0xff]
        %v8775 = vld [vmem:[%s17 + $0x1a8] sm:$0xff]
        %v8776 = vld [vmem:[%s17 + $0x1b0] sm:$0xff]
        %v8777 = vld [vmem:[%s17 + $0x1b8] sm:$0xff]
        %v8778 = vld [vmem:[%s17 + $0x1c0] sm:$0xff]
        %v8779 = vld [vmem:[%s17 + $0x1c8] sm:$0xff]
        %v8780 = vld [vmem:[%s17 + $0x1d0] sm:$0xff]
        %v8781 = vld [vmem:[%s17 + $0x1d8] sm:$0xff]
        %v8782 = vld [vmem:[%s17 + $0x1e0] sm:$0xff]
        %v8783 = vld [vmem:[%s17 + $0x1e8] sm:$0xff]
        %v8784 = vld [vmem:[%s17 + $0x1f0] sm:$0xff]
        %v8785 = vld [vmem:[%s17 + $0x1f8] sm:$0xff]
        %v8786 = vld [vmem:[%s17 + $0x200] sm:$0xff]
        %v8787 = vld [vmem:[%s17 + $0x208] sm:$0xff]
        %v8788 = vld [vmem:[%s17 + $0x210] sm:$0xff]
        %v8789 = vld [vmem:[%s17 + $0x218] sm:$0xff]
        %v8790 = vld [vmem:[%s17 + $0x220] sm:$0xff]
        %v8791 = vld [vmem:[%s17 + $0x228] sm:$0xff]
        %v8792 = vld [vmem:[%s17 + $0x230] sm:$0xff]
        %v8793 = vld [vmem:[%s17 + $0x238] sm:$0xff]
        %v8794 = vld [vmem:[%s17 + $0x240] sm:$0xff]
        %v8795 = vld [vmem:[%s17 + $0x248] sm:$0xff]
        %v8796 = vld [vmem:[%s17 + $0x250] sm:$0xff]
        %v8797 = vld [vmem:[%s17 + $0x258] sm:$0xff]
        %v8798 = vld [vmem:[%s17 + $0x260] sm:$0xff]
        %v8799 = vld [vmem:[%s17 + $0x268] sm:$0xff]
        %v8800 = vld [vmem:[%s17 + $0x270] sm:$0xff]
        %v8801 = vld [vmem:[%s17 + $0x278] sm:$0xff]
        %v8802 = vld [vmem:[%s17 + $0x280] sm:$0xff]
        %v8803 = vld [vmem:[%s17 + $0x288] sm:$0xff]
        %v8804 = vld [vmem:[%s17 + $0x290] sm:$0xff]
        %v8805 = vld [vmem:[%s17 + $0x298] sm:$0xff]
        %v8806 = vld [vmem:[%s17 + $0x2a0] sm:$0xff]
        %v8807 = vld [vmem:[%s17 + $0x2a8] sm:$0xff]
        %v8808 = vld [vmem:[%s17 + $0x2b0] sm:$0xff]
        %v8809 = vld [vmem:[%s17 + $0x2b8] sm:$0xff]
        %v8810 = vld [vmem:[%s17 + $0x2c0] sm:$0xff]
        %v8811 = vld [vmem:[%s17 + $0x2c8] sm:$0xff]
        %v8812 = vld [vmem:[%s17 + $0x2d0] sm:$0xff]
        %v8813 = vld [vmem:[%s17 + $0x2d8] sm:$0xff]
        %v8814 = vld [vmem:[%s17 + $0x2e0] sm:$0xff]
        %v8815 = vld [vmem:[%s17 + $0x2e8] sm:$0xff]
        %v8816 = vld [vmem:[%s17 + $0x2f0] sm:$0xff]
        %v8817 = vld [vmem:[%s17 + $0x2f8] sm:$0xff]
        %v8818 = vld [vmem:[%s17 + $0x300] sm:$0xff]
        %v8819 = vld [vmem:[%s17 + $0x308] sm:$0xff]
        %v8820 = vld [vmem:[%s17 + $0x310] sm:$0xff]
        %v8821 = vld [vmem:[%s17 + $0x318] sm:$0xff]
        %v8822 = vld [vmem:[%s17 + $0x320] sm:$0xff]
        %v8823 = vld [vmem:[%s17 + $0x328] sm:$0xff]
        %v8824 = vld [vmem:[%s17 + $0x330] sm:$0xff]
        %v8825 = vld [vmem:[%s17 + $0x338] sm:$0xff]
        %v8826 = vld [vmem:[%s17 + $0x340] sm:$0xff]
        %v8827 = vld [vmem:[%s17 + $0x348] sm:$0xff]
        %v8828 = vld [vmem:[%s17 + $0x350] sm:$0xff]
        %v8829 = vld [vmem:[%s17 + $0x358] sm:$0xff]
        %v8830 = vld [vmem:[%s17 + $0x360] sm:$0xff]
        %v8831 = vld [vmem:[%s17 + $0x368] sm:$0xff]
        %v8832 = vld [vmem:[%s17 + $0x370] sm:$0xff]
        %v8833 = vld [vmem:[%s17 + $0x378] sm:$0xff]
        %v8834 = vld [vmem:[%s17 + $0x380] sm:$0xff]
        %v8835 = vld [vmem:[%s17 + $0x388] sm:$0xff]
        %v8836 = vld [vmem:[%s17 + $0x390] sm:$0xff]
        %v8837 = vld [vmem:[%s17 + $0x398] sm:$0xff]
        %v8838 = vld [vmem:[%s17 + $0x3a0] sm:$0xff]
        %v8839 = vld [vmem:[%s17 + $0x3a8] sm:$0xff]
        %v8840 = vld [vmem:[%s17 + $0x3b0] sm:$0xff]
        %v8841 = vld [vmem:[%s17 + $0x3b8] sm:$0xff]
        %v8842 = vld [vmem:[%s17 + $0x3c0] sm:$0xff]
        %v8843 = vld [vmem:[%s17 + $0x3c8] sm:$0xff]
        %v8844 = vld [vmem:[%s17 + $0x3d0] sm:$0xff]
        %v8845 = vld [vmem:[%s17 + $0x3d8] sm:$0xff]
        %v8846 = vld [vmem:[%s17 + $0x3e0] sm:$0xff]
        %v8847 = vld [vmem:[%s17 + $0x3e8] sm:$0xff]
        %v8848 = vld [vmem:[%s17 + $0x3f0] sm:$0xff]
        %v8849 = vld [vmem:[%s17 + $0x3f8] sm:$0xff]
        %v8850 = vld [vmem:[%s17 + $0x400] sm:$0xff]
        %v8851 = vld [vmem:[%s17 + $0x408] sm:$0xff]
        %v8852 = vld [vmem:[%s17 + $0x410] sm:$0xff]
        %v8853 = vld [vmem:[%s17 + $0x418] sm:$0xff]
        %v8854 = vld [vmem:[%s17 + $0x420] sm:$0xff]
        %v8855 = vld [vmem:[%s17 + $0x428] sm:$0xff]
        %v8856 = vld [vmem:[%s17 + $0x430] sm:$0xff]
        %v8857 = vld [vmem:[%s17 + $0x438] sm:$0xff]
        %v8858 = vld [vmem:[%s17 + $0x440] sm:$0xff]
        %v8859 = vld [vmem:[%s17 + $0x448] sm:$0xff]
        %v8860 = vld [vmem:[%s17 + $0x450] sm:$0xff]
        %v8861 = vld [vmem:[%s17 + $0x458] sm:$0xff]
        %v8862 = vld [vmem:[%s17 + $0x460] sm:$0xff]
        %v8863 = vld [vmem:[%s17 + $0x468] sm:$0xff]
        %v8864 = vld [vmem:[%s17 + $0x470] sm:$0xff]
        %v8865 = vld [vmem:[%s17 + $0x478] sm:$0xff]
        %v8866 = vld [vmem:[%s17 + $0x480] sm:$0xff]
        %v8867 = vld [vmem:[%s17 + $0x488] sm:$0xff]
        %v8868 = vld [vmem:[%s17 + $0x490] sm:$0xff]
        %v8869 = vld [vmem:[%s17 + $0x498] sm:$0xff]
        %v8870 = vld [vmem:[%s17 + $0x4a0] sm:$0xff]
        %v8871 = vld [vmem:[%s17 + $0x4a8] sm:$0xff]
        %v8872 = vld [vmem:[%s17 + $0x4b0] sm:$0xff]
        %v8873 = vld [vmem:[%s17 + $0x4b8] sm:$0xff]
        %v8874 = vld [vmem:[%s17 + $0x4c0] sm:$0xff]
        %v8875 = vld [vmem:[%s17 + $0x4c8] sm:$0xff]
        %v8876 = vld [vmem:[%s17 + $0x4d0] sm:$0xff]
        %v8877 = vld [vmem:[%s17 + $0x4d8] sm:$0xff]
        %v8878 = vld [vmem:[%s17 + $0x4e0] sm:$0xff]
        %v8879 = vld [vmem:[%s17 + $0x4e8] sm:$0xff]
        %v8880 = vld [vmem:[%s17 + $0x4f0] sm:$0xff]
        %v8881 = vld [vmem:[%s17 + $0x4f8] sm:$0xff]
        %v8882 = vld [vmem:[%s17 + $0x500] sm:$0xff]
        %v8883 = vld [vmem:[%s17 + $0x508] sm:$0xff]
        %v8884 = vld [vmem:[%s17 + $0x510] sm:$0xff]
        %v8885 = vld [vmem:[%s17 + $0x518] sm:$0xff]
        %v8886 = vld [vmem:[%s17 + $0x520] sm:$0xff]
        %v8887 = vld [vmem:[%s17 + $0x528] sm:$0xff]
        %v8888 = vld [vmem:[%s17 + $0x530] sm:$0xff]
        %v8889 = vld [vmem:[%s17 + $0x538] sm:$0xff]
        %v8890 = vld [vmem:[%s17 + $0x540] sm:$0xff]
        %v8891 = vld [vmem:[%s17 + $0x548] sm:$0xff]
        %v8892 = vld [vmem:[%s17 + $0x550] sm:$0xff]
        %v8893 = vld [vmem:[%s17 + $0x558] sm:$0xff]
        %v8894 = vld [vmem:[%s17 + $0x560] sm:$0xff]
        %v8895 = vld [vmem:[%s17 + $0x568] sm:$0xff]
        %v8896 = vld [vmem:[%s17 + $0x570] sm:$0xff]
        %v8897 = vld [vmem:[%s17 + $0x578] sm:$0xff]
        %v8898 = vld [vmem:[%s17 + $0x580] sm:$0xff]
        %v8899 = vld [vmem:[%s17 + $0x588] sm:$0xff]
        %v8900 = vld [vmem:[%s17 + $0x590] sm:$0xff]
        %v8901 = vld [vmem:[%s17 + $0x598] sm:$0xff]
        %v8902 = vld [vmem:[%s17 + $0x5a0] sm:$0xff]
        %v8903 = vld [vmem:[%s17 + $0x5a8] sm:$0xff]
        %v8904 = vld [vmem:[%s17 + $0x5b0] sm:$0xff]
        %v8905 = vld [vmem:[%s17 + $0x5b8] sm:$0xff]
        %v8906 = vld [vmem:[%s17 + $0x5c0] sm:$0xff]
        %v8907 = vld [vmem:[%s17 + $0x5c8] sm:$0xff]
        %v8908 = vld [vmem:[%s17 + $0x5d0] sm:$0xff]
        %v8909 = vld [vmem:[%s17 + $0x5d8] sm:$0xff]
        %v8910 = vld [vmem:[%s17 + $0x5e0] sm:$0xff]
        %v8911 = vld [vmem:[%s17 + $0x5e8] sm:$0xff]
        %v8912 = vld [vmem:[%s17 + $0x5f0] sm:$0xff]
        %v8913 = vld [vmem:[%s17 + $0x5f8] sm:$0xff]
        %v8914 = vld [vmem:[%s17 + $0x600] sm:$0xff]
        %v8915 = vld [vmem:[%s17 + $0x608] sm:$0xff]
        %v8916 = vld [vmem:[%s17 + $0x610] sm:$0xff]
        %v8917 = vld [vmem:[%s17 + $0x618] sm:$0xff]
        %v8918 = vld [vmem:[%s17 + $0x620] sm:$0xff]
        %v8919 = vld [vmem:[%s17 + $0x628] sm:$0xff]
        %v8920 = vld [vmem:[%s17 + $0x630] sm:$0xff]
        %v8921 = vld [vmem:[%s17 + $0x638] sm:$0xff]
        %v8922 = vld [vmem:[%s17 + $0x640] sm:$0xff]
        %v8923 = vld [vmem:[%s17 + $0x648] sm:$0xff]
        %v8924 = vld [vmem:[%s17 + $0x650] sm:$0xff]
        %v8925 = vld [vmem:[%s17 + $0x658] sm:$0xff]
        %v8926 = vld [vmem:[%s17 + $0x660] sm:$0xff]
        %v8927 = vld [vmem:[%s17 + $0x668] sm:$0xff]
        %v8928 = vld [vmem:[%s17 + $0x670] sm:$0xff]
        %v8929 = vld [vmem:[%s17 + $0x678] sm:$0xff]
        %v8930 = vld [vmem:[%s17 + $0x680] sm:$0xff]
        %v8931 = vld [vmem:[%s17 + $0x688] sm:$0xff]
        %v8932 = vld [vmem:[%s17 + $0x690] sm:$0xff]
        %v8933 = vld [vmem:[%s17 + $0x698] sm:$0xff]
        %v8934 = vld [vmem:[%s17 + $0x6a0] sm:$0xff]
        %v8935 = vld [vmem:[%s17 + $0x6a8] sm:$0xff]
        %v8936 = vld [vmem:[%s17 + $0x6b0] sm:$0xff]
        %v8937 = vld [vmem:[%s17 + $0x6b8] sm:$0xff]
        %v8938 = vld [vmem:[%s17 + $0x6c0] sm:$0xff]
        %v8939 = vld [vmem:[%s17 + $0x6c8] sm:$0xff]
        %v8940 = vld [vmem:[%s17 + $0x6d0] sm:$0xff]
        %v8941 = vld [vmem:[%s17 + $0x6d8] sm:$0xff]
        %v8942 = vld [vmem:[%s17 + $0x6e0] sm:$0xff]
        %v8943 = vld [vmem:[%s17 + $0x6e8] sm:$0xff]
        %v8944 = vld [vmem:[%s17 + $0x6f0] sm:$0xff]
        %v8945 = vld [vmem:[%s17 + $0x6f8] sm:$0xff]
        %v8946 = vld [vmem:[%s17 + $0x700] sm:$0xff]
        %v8947 = vld [vmem:[%s17 + $0x708] sm:$0xff]
        %v8948 = vld [vmem:[%s17 + $0x710] sm:$0xff]
        %v8949 = vld [vmem:[%s17 + $0x718] sm:$0xff]
        %v8950 = vld [vmem:[%s17 + $0x720] sm:$0xff]
        %v8951 = vld [vmem:[%s17 + $0x728] sm:$0xff]
        %v8952 = vld [vmem:[%s17 + $0x730] sm:$0xff]
        %v8953 = vld [vmem:[%s17 + $0x738] sm:$0xff]
        %v8954 = vld [vmem:[%s17 + $0x740] sm:$0xff]
        %v8955 = vld [vmem:[%s17 + $0x748] sm:$0xff]
        %v8956 = vld [vmem:[%s17 + $0x750] sm:$0xff]
        %v8957 = vld [vmem:[%s17 + $0x758] sm:$0xff]
        %v8958 = vld [vmem:[%s17 + $0x760] sm:$0xff]
        %v8959 = vld [vmem:[%s17 + $0x768] sm:$0xff]
        %v8960 = vld [vmem:[%s17 + $0x770] sm:$0xff]
        %v8961 = vld [vmem:[%s17 + $0x778] sm:$0xff]
        %v8962 = vld [vmem:[%s17 + $0x780] sm:$0xff]
        %v8963 = vld [vmem:[%s17 + $0x788] sm:$0xff]
        %v8964 = vld [vmem:[%s17 + $0x790] sm:$0xff]
        %v8965 = vld [vmem:[%s17 + $0x798] sm:$0xff]
        %v8966 = vld [vmem:[%s17 + $0x7a0] sm:$0xff]
        %v8967 = vld [vmem:[%s17 + $0x7a8] sm:$0xff]
        %v8968 = vld [vmem:[%s17 + $0x7b0] sm:$0xff]
        %v8969 = vld [vmem:[%s17 + $0x7b8] sm:$0xff]
        %v8970 = vld [vmem:[%s17 + $0x7c0] sm:$0xff]
        %v8971 = vld [vmem:[%s17 + $0x7c8] sm:$0xff]
        %v8972 = vld [vmem:[%s17 + $0x7d0] sm:$0xff]
        %v8973 = vld [vmem:[%s17 + $0x7d8] sm:$0xff]
        %v8974 = vld [vmem:[%s17 + $0x7e0] sm:$0xff]
        %v8975 = vld [vmem:[%s17 + $0x7e8] sm:$0xff]
        %v8976 = vld [vmem:[%s17 + $0x7f0] sm:$0xff]
        %v8977 = vld [vmem:[%s17 + $0x7f8] sm:$0xff]
        %v8978 = vld [vmem:[%s18] sm:$0xf]
        %v9235 = vunpack.c.l.b16 %v8722
        %v9236 = vunpack.c.h.b16 %v8722
        %v9237 = vunpack.c.l.b16 %v8723
        %v9238 = vunpack.c.h.b16 %v8723
        %v9239 = vunpack.c.l.b16 %v8724
        %v9240 = vunpack.c.h.b16 %v8724
        %v9241 = vunpack.c.l.b16 %v8725
        %v9242 = vunpack.c.h.b16 %v8725
        %v9243 = vunpack.c.l.b16 %v8726
        %v9244 = vunpack.c.h.b16 %v8726
        %v9245 = vunpack.c.l.b16 %v8727
        %v9246 = vunpack.c.h.b16 %v8727
        %v9247 = vunpack.c.l.b16 %v8728
        %v9248 = vunpack.c.h.b16 %v8728
        %v9249 = vunpack.c.l.b16 %v8729
        %v9250 = vunpack.c.h.b16 %v8729
        %v9251 = vunpack.c.l.b16 %v8730
        %v9252 = vunpack.c.h.b16 %v8730
        %v9253 = vunpack.c.l.b16 %v8731
        %v9254 = vunpack.c.h.b16 %v8731
        %v9255 = vunpack.c.l.b16 %v8732
        %v9256 = vunpack.c.h.b16 %v8732
        %v9257 = vunpack.c.l.b16 %v8733
        %v9258 = vunpack.c.h.b16 %v8733
        %v9259 = vunpack.c.l.b16 %v8734
        %v9260 = vunpack.c.h.b16 %v8734
        %v9261 = vunpack.c.l.b16 %v8735
        %v9262 = vunpack.c.h.b16 %v8735
        %v9263 = vunpack.c.l.b16 %v8736
        %v9264 = vunpack.c.h.b16 %v8736
        %v9265 = vunpack.c.l.b16 %v8737
        %v9266 = vunpack.c.h.b16 %v8737
        %v9267 = vunpack.c.l.b16 %v8738
        %v9268 = vunpack.c.h.b16 %v8738
        %v9269 = vunpack.c.l.b16 %v8739
        %v9270 = vunpack.c.h.b16 %v8739
        %v9271 = vunpack.c.l.b16 %v8740
        %v9272 = vunpack.c.h.b16 %v8740
        %v9273 = vunpack.c.l.b16 %v8741
        %v9274 = vunpack.c.h.b16 %v8741
        %v9275 = vunpack.c.l.b16 %v8742
        %v9276 = vunpack.c.h.b16 %v8742
        %v9277 = vunpack.c.l.b16 %v8743
        %v9278 = vunpack.c.h.b16 %v8743
        %v9279 = vunpack.c.l.b16 %v8744
        %v9280 = vunpack.c.h.b16 %v8744
        %v9281 = vunpack.c.l.b16 %v8745
        %v9282 = vunpack.c.h.b16 %v8745
        %v9283 = vunpack.c.l.b16 %v8746
        %v9284 = vunpack.c.h.b16 %v8746
        %v9285 = vunpack.c.l.b16 %v8747
        %v9286 = vunpack.c.h.b16 %v8747
        %v9287 = vunpack.c.l.b16 %v8748
        %v9288 = vunpack.c.h.b16 %v8748
        %v9289 = vunpack.c.l.b16 %v8749
        %v9290 = vunpack.c.h.b16 %v8749
        %v9291 = vunpack.c.l.b16 %v8750
        %v9292 = vunpack.c.h.b16 %v8750
        %v9293 = vunpack.c.l.b16 %v8751
        %v9294 = vunpack.c.h.b16 %v8751
        %v9295 = vunpack.c.l.b16 %v8752
        %v9296 = vunpack.c.h.b16 %v8752
        %v9297 = vunpack.c.l.b16 %v8753
        %v9298 = vunpack.c.h.b16 %v8753
        %v9299 = vunpack.c.l.b16 %v8754
        %v9300 = vunpack.c.h.b16 %v8754
        %v9301 = vunpack.c.l.b16 %v8755
        %v9302 = vunpack.c.h.b16 %v8755
        %v9303 = vunpack.c.l.b16 %v8756
        %v9304 = vunpack.c.h.b16 %v8756
        %v9305 = vunpack.c.l.b16 %v8757
        %v9306 = vunpack.c.h.b16 %v8757
        %v9307 = vunpack.c.l.b16 %v8758
        %v9308 = vunpack.c.h.b16 %v8758
        %v9309 = vunpack.c.l.b16 %v8759
        %v9310 = vunpack.c.h.b16 %v8759
        %v9311 = vunpack.c.l.b16 %v8760
        %v9312 = vunpack.c.h.b16 %v8760
        %v9313 = vunpack.c.l.b16 %v8761
        %v9314 = vunpack.c.h.b16 %v8761
        %v9315 = vunpack.c.l.b16 %v8762
        %v9316 = vunpack.c.h.b16 %v8762
        %v9317 = vunpack.c.l.b16 %v8763
        %v9318 = vunpack.c.h.b16 %v8763
        %v9319 = vunpack.c.l.b16 %v8764
        %v9320 = vunpack.c.h.b16 %v8764
        %v9321 = vunpack.c.l.b16 %v8765
        %v9322 = vunpack.c.h.b16 %v8765
        %v9323 = vunpack.c.l.b16 %v8766
        %v9324 = vunpack.c.h.b16 %v8766
        %v9325 = vunpack.c.l.b16 %v8767
        %v9326 = vunpack.c.h.b16 %v8767
        %v9327 = vunpack.c.l.b16 %v8768
        %v9328 = vunpack.c.h.b16 %v8768
        %v9329 = vunpack.c.l.b16 %v8769
        %v9330 = vunpack.c.h.b16 %v8769
        %v9331 = vunpack.c.l.b16 %v8770
        %v9332 = vunpack.c.h.b16 %v8770
        %v9333 = vunpack.c.l.b16 %v8771
        %v9334 = vunpack.c.h.b16 %v8771
        %v9335 = vunpack.c.l.b16 %v8772
        %v9336 = vunpack.c.h.b16 %v8772
        %v9337 = vunpack.c.l.b16 %v8773
        %v9338 = vunpack.c.h.b16 %v8773
        %v9339 = vunpack.c.l.b16 %v8774
        %v9340 = vunpack.c.h.b16 %v8774
        %v9341 = vunpack.c.l.b16 %v8775
        %v9342 = vunpack.c.h.b16 %v8775
        %v9343 = vunpack.c.l.b16 %v8776
        %v9344 = vunpack.c.h.b16 %v8776
        %v9345 = vunpack.c.l.b16 %v8777
        %v9346 = vunpack.c.h.b16 %v8777
        %v9347 = vunpack.c.l.b16 %v8778
        %v9348 = vunpack.c.h.b16 %v8778
        %v9349 = vunpack.c.l.b16 %v8779
        %v9350 = vunpack.c.h.b16 %v8779
        %v9351 = vunpack.c.l.b16 %v8780
        %v9352 = vunpack.c.h.b16 %v8780
        %v9353 = vunpack.c.l.b16 %v8781
        %v9354 = vunpack.c.h.b16 %v8781
        %v9355 = vunpack.c.l.b16 %v8782
        %v9356 = vunpack.c.h.b16 %v8782
        %v9357 = vunpack.c.l.b16 %v8783
        %v9358 = vunpack.c.h.b16 %v8783
        %v9359 = vunpack.c.l.b16 %v8784
        %v9360 = vunpack.c.h.b16 %v8784
        %v9361 = vunpack.c.l.b16 %v8785
        %v9362 = vunpack.c.h.b16 %v8785
        %v9363 = vunpack.c.l.b16 %v8786
        %v9364 = vunpack.c.h.b16 %v8786
        %v9365 = vunpack.c.l.b16 %v8787
        %v9366 = vunpack.c.h.b16 %v8787
        %v9367 = vunpack.c.l.b16 %v8788
        %v9368 = vunpack.c.h.b16 %v8788
        %v9369 = vunpack.c.l.b16 %v8789
        %v9370 = vunpack.c.h.b16 %v8789
        %v9371 = vunpack.c.l.b16 %v8790
        %v9372 = vunpack.c.h.b16 %v8790
        %v9373 = vunpack.c.l.b16 %v8791
        %v9374 = vunpack.c.h.b16 %v8791
        %v9375 = vunpack.c.l.b16 %v8792
        %v9376 = vunpack.c.h.b16 %v8792
        %v9377 = vunpack.c.l.b16 %v8793
        %v9378 = vunpack.c.h.b16 %v8793
        %v9379 = vunpack.c.l.b16 %v8794
        %v9380 = vunpack.c.h.b16 %v8794
        %v9381 = vunpack.c.l.b16 %v8795
        %v9382 = vunpack.c.h.b16 %v8795
        %v9383 = vunpack.c.l.b16 %v8796
        %v9384 = vunpack.c.h.b16 %v8796
        %v9385 = vunpack.c.l.b16 %v8797
        %v9386 = vunpack.c.h.b16 %v8797
        %v9387 = vunpack.c.l.b16 %v8798
        %v9388 = vunpack.c.h.b16 %v8798
        %v9389 = vunpack.c.l.b16 %v8799
        %v9390 = vunpack.c.h.b16 %v8799
        %v9391 = vunpack.c.l.b16 %v8800
        %v9392 = vunpack.c.h.b16 %v8800
        %v9393 = vunpack.c.l.b16 %v8801
        %v9394 = vunpack.c.h.b16 %v8801
        %v9395 = vunpack.c.l.b16 %v8802
        %v9396 = vunpack.c.h.b16 %v8802
        %v9397 = vunpack.c.l.b16 %v8803
        %v9398 = vunpack.c.h.b16 %v8803
        %v9399 = vunpack.c.l.b16 %v8804
        %v9400 = vunpack.c.h.b16 %v8804
        %v9401 = vunpack.c.l.b16 %v8805
        %v9402 = vunpack.c.h.b16 %v8805
        %v9403 = vunpack.c.l.b16 %v8806
        %v9404 = vunpack.c.h.b16 %v8806
        %v9405 = vunpack.c.l.b16 %v8807
        %v9406 = vunpack.c.h.b16 %v8807
        %v9407 = vunpack.c.l.b16 %v8808
        %v9408 = vunpack.c.h.b16 %v8808
        %v9409 = vunpack.c.l.b16 %v8809
        %v9410 = vunpack.c.h.b16 %v8809
        %v9411 = vunpack.c.l.b16 %v8810
        %v9412 = vunpack.c.h.b16 %v8810
        %v9413 = vunpack.c.l.b16 %v8811
        %v9414 = vunpack.c.h.b16 %v8811
        %v9415 = vunpack.c.l.b16 %v8812
        %v9416 = vunpack.c.h.b16 %v8812
        %v9417 = vunpack.c.l.b16 %v8813
        %v9418 = vunpack.c.h.b16 %v8813
        %v9419 = vunpack.c.l.b16 %v8814
        %v9420 = vunpack.c.h.b16 %v8814
        %v9421 = vunpack.c.l.b16 %v8815
        %v9422 = vunpack.c.h.b16 %v8815
        %v9423 = vunpack.c.l.b16 %v8816
        %v9424 = vunpack.c.h.b16 %v8816
        %v9425 = vunpack.c.l.b16 %v8817
        %v9426 = vunpack.c.h.b16 %v8817
        %v9427 = vunpack.c.l.b16 %v8818
        %v9428 = vunpack.c.h.b16 %v8818
        %v9429 = vunpack.c.l.b16 %v8819
        %v9430 = vunpack.c.h.b16 %v8819
        %v9431 = vunpack.c.l.b16 %v8820
        %v9432 = vunpack.c.h.b16 %v8820
        %v9433 = vunpack.c.l.b16 %v8821
        %v9434 = vunpack.c.h.b16 %v8821
        %v9435 = vunpack.c.l.b16 %v8822
        %v9436 = vunpack.c.h.b16 %v8822
        %v9437 = vunpack.c.l.b16 %v8823
        %v9438 = vunpack.c.h.b16 %v8823
        %v9439 = vunpack.c.l.b16 %v8824
        %v9440 = vunpack.c.h.b16 %v8824
        %v9441 = vunpack.c.l.b16 %v8825
        %v9442 = vunpack.c.h.b16 %v8825
        %v9443 = vunpack.c.l.b16 %v8826
        %v9444 = vunpack.c.h.b16 %v8826
        %v9445 = vunpack.c.l.b16 %v8827
        %v9446 = vunpack.c.h.b16 %v8827
        %v9447 = vunpack.c.l.b16 %v8828
        %v9448 = vunpack.c.h.b16 %v8828
        %v9449 = vunpack.c.l.b16 %v8829
        %v9450 = vunpack.c.h.b16 %v8829
        %v9451 = vunpack.c.l.b16 %v8830
        %v9452 = vunpack.c.h.b16 %v8830
        %v9453 = vunpack.c.l.b16 %v8831
        %v9454 = vunpack.c.h.b16 %v8831
        %v9455 = vunpack.c.l.b16 %v8832
        %v9456 = vunpack.c.h.b16 %v8832
        %v9457 = vunpack.c.l.b16 %v8833
        %v9458 = vunpack.c.h.b16 %v8833
        %v9459 = vunpack.c.l.b16 %v8834
        %v9460 = vunpack.c.h.b16 %v8834
        %v9461 = vunpack.c.l.b16 %v8835
        %v9462 = vunpack.c.h.b16 %v8835
        %v9463 = vunpack.c.l.b16 %v8836
        %v9464 = vunpack.c.h.b16 %v8836
        %v9465 = vunpack.c.l.b16 %v8837
        %v9466 = vunpack.c.h.b16 %v8837
        %v9467 = vunpack.c.l.b16 %v8838
        %v9468 = vunpack.c.h.b16 %v8838
        %v9469 = vunpack.c.l.b16 %v8839
        %v9470 = vunpack.c.h.b16 %v8839
        %v9471 = vunpack.c.l.b16 %v8840
        %v9472 = vunpack.c.h.b16 %v8840
        %v9473 = vunpack.c.l.b16 %v8841
        %v9474 = vunpack.c.h.b16 %v8841
        %v9475 = vunpack.c.l.b16 %v8842
        %v9476 = vunpack.c.h.b16 %v8842
        %v9477 = vunpack.c.l.b16 %v8843
        %v9478 = vunpack.c.h.b16 %v8843
        %v9479 = vunpack.c.l.b16 %v8844
        %v9480 = vunpack.c.h.b16 %v8844
        %v9481 = vunpack.c.l.b16 %v8845
        %v9482 = vunpack.c.h.b16 %v8845
        %v9483 = vunpack.c.l.b16 %v8846
        %v9484 = vunpack.c.h.b16 %v8846
        %v9485 = vunpack.c.l.b16 %v8847
        %v9486 = vunpack.c.h.b16 %v8847
        %v9487 = vunpack.c.l.b16 %v8848
        %v9488 = vunpack.c.h.b16 %v8848
        %v9489 = vunpack.c.l.b16 %v8849
        %v9490 = vunpack.c.h.b16 %v8849
        %v9491 = vunpack.c.l.b16 %v8850
        %v9492 = vunpack.c.h.b16 %v8850
        %v9493 = vunpack.c.l.b16 %v8851
        %v9494 = vunpack.c.h.b16 %v8851
        %v9495 = vunpack.c.l.b16 %v8852
        %v9496 = vunpack.c.h.b16 %v8852
        %v9497 = vunpack.c.l.b16 %v8853
        %v9498 = vunpack.c.h.b16 %v8853
        %v9499 = vunpack.c.l.b16 %v8854
        %v9500 = vunpack.c.h.b16 %v8854
        %v9501 = vunpack.c.l.b16 %v8855
        %v9502 = vunpack.c.h.b16 %v8855
        %v9503 = vunpack.c.l.b16 %v8856
        %v9504 = vunpack.c.h.b16 %v8856
        %v9505 = vunpack.c.l.b16 %v8857
        %v9506 = vunpack.c.h.b16 %v8857
        %v9507 = vunpack.c.l.b16 %v8858
        %v9508 = vunpack.c.h.b16 %v8858
        %v9509 = vunpack.c.l.b16 %v8859
        %v9510 = vunpack.c.h.b16 %v8859
        %v9511 = vunpack.c.l.b16 %v8860
        %v9512 = vunpack.c.h.b16 %v8860
        %v9513 = vunpack.c.l.b16 %v8861
        %v9514 = vunpack.c.h.b16 %v8861
        %v9515 = vunpack.c.l.b16 %v8862
        %v9516 = vunpack.c.h.b16 %v8862
        %v9517 = vunpack.c.l.b16 %v8863
        %v9518 = vunpack.c.h.b16 %v8863
        %v9519 = vunpack.c.l.b16 %v8864
        %v9520 = vunpack.c.h.b16 %v8864
        %v9521 = vunpack.c.l.b16 %v8865
        %v9522 = vunpack.c.h.b16 %v8865
        %v9523 = vunpack.c.l.b16 %v8866
        %v9524 = vunpack.c.h.b16 %v8866
        %v9525 = vunpack.c.l.b16 %v8867
        %v9526 = vunpack.c.h.b16 %v8867
        %v9527 = vunpack.c.l.b16 %v8868
        %v9528 = vunpack.c.h.b16 %v8868
        %v9529 = vunpack.c.l.b16 %v8869
        %v9530 = vunpack.c.h.b16 %v8869
        %v9531 = vunpack.c.l.b16 %v8870
        %v9532 = vunpack.c.h.b16 %v8870
        %v9533 = vunpack.c.l.b16 %v8871
        %v9534 = vunpack.c.h.b16 %v8871
        %v9535 = vunpack.c.l.b16 %v8872
        %v9536 = vunpack.c.h.b16 %v8872
        %v9537 = vunpack.c.l.b16 %v8873
        %v9538 = vunpack.c.h.b16 %v8873
        %v9539 = vunpack.c.l.b16 %v8874
        %v9540 = vunpack.c.h.b16 %v8874
        %v9541 = vunpack.c.l.b16 %v8875
        %v9542 = vunpack.c.h.b16 %v8875
        %v9543 = vunpack.c.l.b16 %v8876
        %v9544 = vunpack.c.h.b16 %v8876
        %v9545 = vunpack.c.l.b16 %v8877
        %v9546 = vunpack.c.h.b16 %v8877
        %v9547 = vunpack.c.l.b16 %v8878
        %v9548 = vunpack.c.h.b16 %v8878
        %v9549 = vunpack.c.l.b16 %v8879
        %v9550 = vunpack.c.h.b16 %v8879
        %v9551 = vunpack.c.l.b16 %v8880
        %v9552 = vunpack.c.h.b16 %v8880
        %v9553 = vunpack.c.l.b16 %v8881
        %v9554 = vunpack.c.h.b16 %v8881
        %v9555 = vunpack.c.l.b16 %v8882
        %v9556 = vunpack.c.h.b16 %v8882
        %v9557 = vunpack.c.l.b16 %v8883
        %v9558 = vunpack.c.h.b16 %v8883
        %v9559 = vunpack.c.l.b16 %v8884
        %v9560 = vunpack.c.h.b16 %v8884
        %v9561 = vunpack.c.l.b16 %v8885
        %v9562 = vunpack.c.h.b16 %v8885
        %v9563 = vunpack.c.l.b16 %v8886
        %v9564 = vunpack.c.h.b16 %v8886
        %v9565 = vunpack.c.l.b16 %v8887
        %v9566 = vunpack.c.h.b16 %v8887
        %v9567 = vunpack.c.l.b16 %v8888
        %v9568 = vunpack.c.h.b16 %v8888
        %v9569 = vunpack.c.l.b16 %v8889
        %v9570 = vunpack.c.h.b16 %v8889
        %v9571 = vunpack.c.l.b16 %v8890
        %v9572 = vunpack.c.h.b16 %v8890
        %v9573 = vunpack.c.l.b16 %v8891
        %v9574 = vunpack.c.h.b16 %v8891
        %v9575 = vunpack.c.l.b16 %v8892
        %v9576 = vunpack.c.h.b16 %v8892
        %v9577 = vunpack.c.l.b16 %v8893
        %v9578 = vunpack.c.h.b16 %v8893
        %v9579 = vunpack.c.l.b16 %v8894
        %v9580 = vunpack.c.h.b16 %v8894
        %v9581 = vunpack.c.l.b16 %v8895
        %v9582 = vunpack.c.h.b16 %v8895
        %v9583 = vunpack.c.l.b16 %v8896
        %v9584 = vunpack.c.h.b16 %v8896
        %v9585 = vunpack.c.l.b16 %v8897
        %v9586 = vunpack.c.h.b16 %v8897
        %v9587 = vunpack.c.l.b16 %v8898
        %v9588 = vunpack.c.h.b16 %v8898
        %v9589 = vunpack.c.l.b16 %v8899
        %v9590 = vunpack.c.h.b16 %v8899
        %v9591 = vunpack.c.l.b16 %v8900
        %v9592 = vunpack.c.h.b16 %v8900
        %v9593 = vunpack.c.l.b16 %v8901
        %v9594 = vunpack.c.h.b16 %v8901
        %v9595 = vunpack.c.l.b16 %v8902
        %v9596 = vunpack.c.h.b16 %v8902
        %v9597 = vunpack.c.l.b16 %v8903
        %v9598 = vunpack.c.h.b16 %v8903
        %v9599 = vunpack.c.l.b16 %v8904
        %v9600 = vunpack.c.h.b16 %v8904
        %v9601 = vunpack.c.l.b16 %v8905
        %v9602 = vunpack.c.h.b16 %v8905
        %v9603 = vunpack.c.l.b16 %v8906
        %v9604 = vunpack.c.h.b16 %v8906
        %v9605 = vunpack.c.l.b16 %v8907
        %v9606 = vunpack.c.h.b16 %v8907
        %v9607 = vunpack.c.l.b16 %v8908
        %v9608 = vunpack.c.h.b16 %v8908
        %v9609 = vunpack.c.l.b16 %v8909
        %v9610 = vunpack.c.h.b16 %v8909
        %v9611 = vunpack.c.l.b16 %v8910
        %v9612 = vunpack.c.h.b16 %v8910
        %v9613 = vunpack.c.l.b16 %v8911
        %v9614 = vunpack.c.h.b16 %v8911
        %v9615 = vunpack.c.l.b16 %v8912
        %v9616 = vunpack.c.h.b16 %v8912
        %v9617 = vunpack.c.l.b16 %v8913
        %v9618 = vunpack.c.h.b16 %v8913
        %v9619 = vunpack.c.l.b16 %v8914
        %v9620 = vunpack.c.h.b16 %v8914
        %v9621 = vunpack.c.l.b16 %v8915
        %v9622 = vunpack.c.h.b16 %v8915
        %v9623 = vunpack.c.l.b16 %v8916
        %v9624 = vunpack.c.h.b16 %v8916
        %v9625 = vunpack.c.l.b16 %v8917
        %v9626 = vunpack.c.h.b16 %v8917
        %v9627 = vunpack.c.l.b16 %v8918
        %v9628 = vunpack.c.h.b16 %v8918
        %v9629 = vunpack.c.l.b16 %v8919
        %v9630 = vunpack.c.h.b16 %v8919
        %v9631 = vunpack.c.l.b16 %v8920
        %v9632 = vunpack.c.h.b16 %v8920
        %v9633 = vunpack.c.l.b16 %v8921
        %v9634 = vunpack.c.h.b16 %v8921
        %v9635 = vunpack.c.l.b16 %v8922
        %v9636 = vunpack.c.h.b16 %v8922
        %v9637 = vunpack.c.l.b16 %v8923
        %v9638 = vunpack.c.h.b16 %v8923
        %v9639 = vunpack.c.l.b16 %v8924
        %v9640 = vunpack.c.h.b16 %v8924
        %v9641 = vunpack.c.l.b16 %v8925
        %v9642 = vunpack.c.h.b16 %v8925
        %v9643 = vunpack.c.l.b16 %v8926
        %v9644 = vunpack.c.h.b16 %v8926
        %v9645 = vunpack.c.l.b16 %v8927
        %v9646 = vunpack.c.h.b16 %v8927
        %v9647 = vunpack.c.l.b16 %v8928
        %v9648 = vunpack.c.h.b16 %v8928
        %v9649 = vunpack.c.l.b16 %v8929
        %v9650 = vunpack.c.h.b16 %v8929
        %v9651 = vunpack.c.l.b16 %v8930
        %v9652 = vunpack.c.h.b16 %v8930
        %v9653 = vunpack.c.l.b16 %v8931
        %v9654 = vunpack.c.h.b16 %v8931
        %v9655 = vunpack.c.l.b16 %v8932
        %v9656 = vunpack.c.h.b16 %v8932
        %v9657 = vunpack.c.l.b16 %v8933
        %v9658 = vunpack.c.h.b16 %v8933
        %v9659 = vunpack.c.l.b16 %v8934
        %v9660 = vunpack.c.h.b16 %v8934
        %v9661 = vunpack.c.l.b16 %v8935
        %v9662 = vunpack.c.h.b16 %v8935
        %v9663 = vunpack.c.l.b16 %v8936
        %v9664 = vunpack.c.h.b16 %v8936
        %v9665 = vunpack.c.l.b16 %v8937
        %v9666 = vunpack.c.h.b16 %v8937
        %v9667 = vunpack.c.l.b16 %v8938
        %v9668 = vunpack.c.h.b16 %v8938
        %v9669 = vunpack.c.l.b16 %v8939
        %v9670 = vunpack.c.h.b16 %v8939
        %v9671 = vunpack.c.l.b16 %v8940
        %v9672 = vunpack.c.h.b16 %v8940
        %v9673 = vunpack.c.l.b16 %v8941
        %v9674 = vunpack.c.h.b16 %v8941
        %v9675 = vunpack.c.l.b16 %v8942
        %v9676 = vunpack.c.h.b16 %v8942
        %v9677 = vunpack.c.l.b16 %v8943
        %v9678 = vunpack.c.h.b16 %v8943
        %v9679 = vunpack.c.l.b16 %v8944
        %v9680 = vunpack.c.h.b16 %v8944
        %v9681 = vunpack.c.l.b16 %v8945
        %v9682 = vunpack.c.h.b16 %v8945
        %v9683 = vunpack.c.l.b16 %v8946
        %v9684 = vunpack.c.h.b16 %v8946
        %v9685 = vunpack.c.l.b16 %v8947
        %v9686 = vunpack.c.h.b16 %v8947
        %v9687 = vunpack.c.l.b16 %v8948
        %v9688 = vunpack.c.h.b16 %v8948
        %v9689 = vunpack.c.l.b16 %v8949
        %v9690 = vunpack.c.h.b16 %v8949
        %v9691 = vunpack.c.l.b16 %v8950
        %v9692 = vunpack.c.h.b16 %v8950
        %v9693 = vunpack.c.l.b16 %v8951
        %v9694 = vunpack.c.h.b16 %v8951
        %v9695 = vunpack.c.l.b16 %v8952
        %v9696 = vunpack.c.h.b16 %v8952
        %v9697 = vunpack.c.l.b16 %v8953
        %v9698 = vunpack.c.h.b16 %v8953
        %v9699 = vunpack.c.l.b16 %v8954
        %v9700 = vunpack.c.h.b16 %v8954
        %v9701 = vunpack.c.l.b16 %v8955
        %v9702 = vunpack.c.h.b16 %v8955
        %v9703 = vunpack.c.l.b16 %v8956
        %v9704 = vunpack.c.h.b16 %v8956
        %v9705 = vunpack.c.l.b16 %v8957
        %v9706 = vunpack.c.h.b16 %v8957
        %v9707 = vunpack.c.l.b16 %v8958
        %v9708 = vunpack.c.h.b16 %v8958
        %v9709 = vunpack.c.l.b16 %v8959
        %v9710 = vunpack.c.h.b16 %v8959
        %v9711 = vunpack.c.l.b16 %v8960
        %v9712 = vunpack.c.h.b16 %v8960
        %v9713 = vunpack.c.l.b16 %v8961
        %v9714 = vunpack.c.h.b16 %v8961
        %v9715 = vunpack.c.l.b16 %v8962
        %v9716 = vunpack.c.h.b16 %v8962
        %v9717 = vunpack.c.l.b16 %v8963
        %v9718 = vunpack.c.h.b16 %v8963
        %v9719 = vunpack.c.l.b16 %v8964
        %v9720 = vunpack.c.h.b16 %v8964
        %v9721 = vunpack.c.l.b16 %v8965
        %v9722 = vunpack.c.h.b16 %v8965
        %v9723 = vunpack.c.l.b16 %v8966
        %v9724 = vunpack.c.h.b16 %v8966
        %v9725 = vunpack.c.l.b16 %v8967
        %v9726 = vunpack.c.h.b16 %v8967
        %v9727 = vunpack.c.l.b16 %v8968
        %v9728 = vunpack.c.h.b16 %v8968
        %v9729 = vunpack.c.l.b16 %v8969
        %v9730 = vunpack.c.h.b16 %v8969
        %v9731 = vunpack.c.l.b16 %v8970
        %v9732 = vunpack.c.h.b16 %v8970
        %v9733 = vunpack.c.l.b16 %v8971
        %v9734 = vunpack.c.h.b16 %v8971
        %v9735 = vunpack.c.l.b16 %v8972
        %v9736 = vunpack.c.h.b16 %v8972
        %v9737 = vunpack.c.l.b16 %v8973
        %v9738 = vunpack.c.h.b16 %v8973
        %v9739 = vunpack.c.l.b16 %v8974
        %v9740 = vunpack.c.h.b16 %v8974
        %v9741 = vunpack.c.l.b16 %v8975
        %v9742 = vunpack.c.h.b16 %v8975
        %v9743 = vunpack.c.l.b16 %v8976
        %v9744 = vunpack.c.h.b16 %v8976
        %v9745 = vunpack.c.l.b16 %v8977
        %v9746 = vunpack.c.h.b16 %v8977
        %v9747 = vpack.c.b16 %v9239, %v9235
        %v9748 = vpack.c.b16 %v9240, %v9236
        %v9749 = vpack.c.b16 %v9241, %v9237
        %v9750 = vpack.c.b16 %v9242, %v9238
        %v9751 = vpack.c.b16 %v9247, %v9243
        %v9752 = vpack.c.b16 %v9248, %v9244
        %v9753 = vpack.c.b16 %v9249, %v9245
        %v9754 = vpack.c.b16 %v9250, %v9246
        %v9755 = vpack.c.b16 %v9255, %v9251
        %v9756 = vpack.c.b16 %v9256, %v9252
        %v9757 = vpack.c.b16 %v9257, %v9253
        %v9758 = vpack.c.b16 %v9258, %v9254
        %v9759 = vpack.c.b16 %v9263, %v9259
        %v9760 = vpack.c.b16 %v9264, %v9260
        %v9761 = vpack.c.b16 %v9265, %v9261
        %v9762 = vpack.c.b16 %v9266, %v9262
        %v9763 = vpack.c.b16 %v9271, %v9267
        %v9764 = vpack.c.b16 %v9272, %v9268
        %v9765 = vpack.c.b16 %v9273, %v9269
        %v9766 = vpack.c.b16 %v9274, %v9270
        %v9767 = vpack.c.b16 %v9279, %v9275
        %v9768 = vpack.c.b16 %v9280, %v9276
        %v9769 = vpack.c.b16 %v9281, %v9277
        %v9770 = vpack.c.b16 %v9282, %v9278
        %v9771 = vpack.c.b16 %v9287, %v9283
        %v9772 = vpack.c.b16 %v9288, %v9284
        %v9773 = vpack.c.b16 %v9289, %v9285
        %v9774 = vpack.c.b16 %v9290, %v9286
        %v9775 = vpack.c.b16 %v9295, %v9291
        %v9776 = vpack.c.b16 %v9296, %v9292
        %v9777 = vpack.c.b16 %v9297, %v9293
        %v9778 = vpack.c.b16 %v9298, %v9294
        %v9779 = vpack.c.b16 %v9303, %v9299
        %v9780 = vpack.c.b16 %v9304, %v9300
        %v9781 = vpack.c.b16 %v9305, %v9301
        %v9782 = vpack.c.b16 %v9306, %v9302
        %v9783 = vpack.c.b16 %v9311, %v9307
        %v9784 = vpack.c.b16 %v9312, %v9308
        %v9785 = vpack.c.b16 %v9313, %v9309
        %v9786 = vpack.c.b16 %v9314, %v9310
        %v9787 = vpack.c.b16 %v9319, %v9315
        %v9788 = vpack.c.b16 %v9320, %v9316
        %v9789 = vpack.c.b16 %v9321, %v9317
        %v9790 = vpack.c.b16 %v9322, %v9318
        %v9791 = vpack.c.b16 %v9327, %v9323
        %v9792 = vpack.c.b16 %v9328, %v9324
        %v9793 = vpack.c.b16 %v9329, %v9325
        %v9794 = vpack.c.b16 %v9330, %v9326
        %v9795 = vpack.c.b16 %v9335, %v9331
        %v9796 = vpack.c.b16 %v9336, %v9332
        %v9797 = vpack.c.b16 %v9337, %v9333
        %v9798 = vpack.c.b16 %v9338, %v9334
        %v9799 = vpack.c.b16 %v9343, %v9339
        %v9800 = vpack.c.b16 %v9344, %v9340
        %v9801 = vpack.c.b16 %v9345, %v9341
        %v9802 = vpack.c.b16 %v9346, %v9342
        %v9803 = vpack.c.b16 %v9351, %v9347
        %v9804 = vpack.c.b16 %v9352, %v9348
        %v9805 = vpack.c.b16 %v9353, %v9349
        %v9806 = vpack.c.b16 %v9354, %v9350
        %v9807 = vpack.c.b16 %v9359, %v9355
        %v9808 = vpack.c.b16 %v9360, %v9356
        %v9809 = vpack.c.b16 %v9361, %v9357
        %v9810 = vpack.c.b16 %v9362, %v9358
        %v9811 = vpack.c.b16 %v9367, %v9363
        %v9812 = vpack.c.b16 %v9368, %v9364
        %v9813 = vpack.c.b16 %v9369, %v9365
        %v9814 = vpack.c.b16 %v9370, %v9366
        %v9815 = vpack.c.b16 %v9375, %v9371
        %v9816 = vpack.c.b16 %v9376, %v9372
        %v9817 = vpack.c.b16 %v9377, %v9373
        %v9818 = vpack.c.b16 %v9378, %v9374
        %v9819 = vpack.c.b16 %v9383, %v9379
        %v9820 = vpack.c.b16 %v9384, %v9380
        %v9821 = vpack.c.b16 %v9385, %v9381
        %v9822 = vpack.c.b16 %v9386, %v9382
        %v9823 = vpack.c.b16 %v9391, %v9387
        %v9824 = vpack.c.b16 %v9392, %v9388
        %v9825 = vpack.c.b16 %v9393, %v9389
        %v9826 = vpack.c.b16 %v9394, %v9390
        %v9827 = vpack.c.b16 %v9399, %v9395
        %v9828 = vpack.c.b16 %v9400, %v9396
        %v9829 = vpack.c.b16 %v9401, %v9397
        %v9830 = vpack.c.b16 %v9402, %v9398
        %v9831 = vpack.c.b16 %v9407, %v9403
        %v9832 = vpack.c.b16 %v9408, %v9404
        %v9833 = vpack.c.b16 %v9409, %v9405
        %v9834 = vpack.c.b16 %v9410, %v9406
        %v9835 = vpack.c.b16 %v9415, %v9411
        %v9836 = vpack.c.b16 %v9416, %v9412
        %v9837 = vpack.c.b16 %v9417, %v9413
        %v9838 = vpack.c.b16 %v9418, %v9414
        %v9839 = vpack.c.b16 %v9423, %v9419
        %v9840 = vpack.c.b16 %v9424, %v9420
        %v9841 = vpack.c.b16 %v9425, %v9421
        %v9842 = vpack.c.b16 %v9426, %v9422
        %v9843 = vpack.c.b16 %v9431, %v9427
        %v9844 = vpack.c.b16 %v9432, %v9428
        %v9845 = vpack.c.b16 %v9433, %v9429
        %v9846 = vpack.c.b16 %v9434, %v9430
        %v9847 = vpack.c.b16 %v9439, %v9435
        %v9848 = vpack.c.b16 %v9440, %v9436
        %v9849 = vpack.c.b16 %v9441, %v9437
        %v9850 = vpack.c.b16 %v9442, %v9438
        %v9851 = vpack.c.b16 %v9447, %v9443
        %v9852 = vpack.c.b16 %v9448, %v9444
        %v9853 = vpack.c.b16 %v9449, %v9445
        %v9854 = vpack.c.b16 %v9450, %v9446
        %v9855 = vpack.c.b16 %v9455, %v9451
        %v9856 = vpack.c.b16 %v9456, %v9452
        %v9857 = vpack.c.b16 %v9457, %v9453
        %v9858 = vpack.c.b16 %v9458, %v9454
        %v9859 = vpack.c.b16 %v9463, %v9459
        %v9860 = vpack.c.b16 %v9464, %v9460
        %v9861 = vpack.c.b16 %v9465, %v9461
        %v9862 = vpack.c.b16 %v9466, %v9462
        %v9863 = vpack.c.b16 %v9471, %v9467
        %v9864 = vpack.c.b16 %v9472, %v9468
        %v9865 = vpack.c.b16 %v9473, %v9469
        %v9866 = vpack.c.b16 %v9474, %v9470
        %v9867 = vpack.c.b16 %v9479, %v9475
        %v9868 = vpack.c.b16 %v9480, %v9476
        %v9869 = vpack.c.b16 %v9481, %v9477
        %v9870 = vpack.c.b16 %v9482, %v9478
        %v9871 = vpack.c.b16 %v9487, %v9483
        %v9872 = vpack.c.b16 %v9488, %v9484
        %v9873 = vpack.c.b16 %v9489, %v9485
        %v9874 = vpack.c.b16 %v9490, %v9486
        %v9875 = vpack.c.b16 %v9495, %v9491
        %v9876 = vpack.c.b16 %v9496, %v9492
        %v9877 = vpack.c.b16 %v9497, %v9493
        %v9878 = vpack.c.b16 %v9498, %v9494
        %v9879 = vpack.c.b16 %v9503, %v9499
        %v9880 = vpack.c.b16 %v9504, %v9500
        %v9881 = vpack.c.b16 %v9505, %v9501
        %v9882 = vpack.c.b16 %v9506, %v9502
        %v9883 = vpack.c.b16 %v9511, %v9507
        %v9884 = vpack.c.b16 %v9512, %v9508
        %v9885 = vpack.c.b16 %v9513, %v9509
        %v9886 = vpack.c.b16 %v9514, %v9510
        %v9887 = vpack.c.b16 %v9519, %v9515
        %v9888 = vpack.c.b16 %v9520, %v9516
        %v9889 = vpack.c.b16 %v9521, %v9517
        %v9890 = vpack.c.b16 %v9522, %v9518
        %v9891 = vpack.c.b16 %v9527, %v9523
        %v9892 = vpack.c.b16 %v9528, %v9524
        %v9893 = vpack.c.b16 %v9529, %v9525
        %v9894 = vpack.c.b16 %v9530, %v9526
        %v9895 = vpack.c.b16 %v9535, %v9531
        %v9896 = vpack.c.b16 %v9536, %v9532
        %v9897 = vpack.c.b16 %v9537, %v9533
        %v9898 = vpack.c.b16 %v9538, %v9534
        %v9899 = vpack.c.b16 %v9543, %v9539
        %v9900 = vpack.c.b16 %v9544, %v9540
        %v9901 = vpack.c.b16 %v9545, %v9541
        %v9902 = vpack.c.b16 %v9546, %v9542
        %v9903 = vpack.c.b16 %v9551, %v9547
        %v9904 = vpack.c.b16 %v9552, %v9548
        %v9905 = vpack.c.b16 %v9553, %v9549
        %v9906 = vpack.c.b16 %v9554, %v9550
        %v9907 = vpack.c.b16 %v9559, %v9555
        %v9908 = vpack.c.b16 %v9560, %v9556
        %v9909 = vpack.c.b16 %v9561, %v9557
        %v9910 = vpack.c.b16 %v9562, %v9558
        %v9911 = vpack.c.b16 %v9567, %v9563
        %v9912 = vpack.c.b16 %v9568, %v9564
        %v9913 = vpack.c.b16 %v9569, %v9565
        %v9914 = vpack.c.b16 %v9570, %v9566
        %v9915 = vpack.c.b16 %v9575, %v9571
        %v9916 = vpack.c.b16 %v9576, %v9572
        %v9917 = vpack.c.b16 %v9577, %v9573
        %v9918 = vpack.c.b16 %v9578, %v9574
        %v9919 = vpack.c.b16 %v9583, %v9579
        %v9920 = vpack.c.b16 %v9584, %v9580
        %v9921 = vpack.c.b16 %v9585, %v9581
        %v9922 = vpack.c.b16 %v9586, %v9582
        %v9923 = vpack.c.b16 %v9591, %v9587
        %v9924 = vpack.c.b16 %v9592, %v9588
        %v9925 = vpack.c.b16 %v9593, %v9589
        %v9926 = vpack.c.b16 %v9594, %v9590
        %v9927 = vpack.c.b16 %v9599, %v9595
        %v9928 = vpack.c.b16 %v9600, %v9596
        %v9929 = vpack.c.b16 %v9601, %v9597
        %v9930 = vpack.c.b16 %v9602, %v9598
        %v9931 = vpack.c.b16 %v9607, %v9603
        %v9932 = vpack.c.b16 %v9608, %v9604
        %v9933 = vpack.c.b16 %v9609, %v9605
        %v9934 = vpack.c.b16 %v9610, %v9606
        %v9935 = vpack.c.b16 %v9615, %v9611
        %v9936 = vpack.c.b16 %v9616, %v9612
        %v9937 = vpack.c.b16 %v9617, %v9613
        %v9938 = vpack.c.b16 %v9618, %v9614
        %v9939 = vpack.c.b16 %v9623, %v9619
        %v9940 = vpack.c.b16 %v9624, %v9620
        %v9941 = vpack.c.b16 %v9625, %v9621
        %v9942 = vpack.c.b16 %v9626, %v9622
        %v9943 = vpack.c.b16 %v9631, %v9627
        %v9944 = vpack.c.b16 %v9632, %v9628
        %v9945 = vpack.c.b16 %v9633, %v9629
        %v9946 = vpack.c.b16 %v9634, %v9630
        %v9947 = vpack.c.b16 %v9639, %v9635
        %v9948 = vpack.c.b16 %v9640, %v9636
        %v9949 = vpack.c.b16 %v9641, %v9637
        %v9950 = vpack.c.b16 %v9642, %v9638
        %v9951 = vpack.c.b16 %v9647, %v9643
        %v9952 = vpack.c.b16 %v9648, %v9644
        %v9953 = vpack.c.b16 %v9649, %v9645
        %v9954 = vpack.c.b16 %v9650, %v9646
        %v9955 = vpack.c.b16 %v9655, %v9651
        %v9956 = vpack.c.b16 %v9656, %v9652
        %v9957 = vpack.c.b16 %v9657, %v9653
        %v9958 = vpack.c.b16 %v9658, %v9654
        %v9959 = vpack.c.b16 %v9663, %v9659
        %v9960 = vpack.c.b16 %v9664, %v9660
        %v9961 = vpack.c.b16 %v9665, %v9661
        %v9962 = vpack.c.b16 %v9666, %v9662
        %v9963 = vpack.c.b16 %v9671, %v9667
        %v9964 = vpack.c.b16 %v9672, %v9668
        %v9965 = vpack.c.b16 %v9673, %v9669
        %v9966 = vpack.c.b16 %v9674, %v9670
        %v9967 = vpack.c.b16 %v9679, %v9675
        %v9968 = vpack.c.b16 %v9680, %v9676
        %v9969 = vpack.c.b16 %v9681, %v9677
        %v9970 = vpack.c.b16 %v9682, %v9678
        %v9971 = vpack.c.b16 %v9687, %v9683
        %v9972 = vpack.c.b16 %v9688, %v9684
        %v9973 = vpack.c.b16 %v9689, %v9685
        %v9974 = vpack.c.b16 %v9690, %v9686
        %v9975 = vpack.c.b16 %v9695, %v9691
        %v9976 = vpack.c.b16 %v9696, %v9692
        %v9977 = vpack.c.b16 %v9697, %v9693
        %v9978 = vpack.c.b16 %v9698, %v9694
        %v9979 = vpack.c.b16 %v9703, %v9699
        %v9980 = vpack.c.b16 %v9704, %v9700
        %v9981 = vpack.c.b16 %v9705, %v9701
        %v9982 = vpack.c.b16 %v9706, %v9702
        %v9983 = vpack.c.b16 %v9711, %v9707
        %v9984 = vpack.c.b16 %v9712, %v9708
        %v9985 = vpack.c.b16 %v9713, %v9709
        %v9986 = vpack.c.b16 %v9714, %v9710
        %v9987 = vpack.c.b16 %v9719, %v9715
        %v9988 = vpack.c.b16 %v9720, %v9716
        %v9989 = vpack.c.b16 %v9721, %v9717
        %v9990 = vpack.c.b16 %v9722, %v9718
        %v9991 = vpack.c.b16 %v9727, %v9723
        %v9992 = vpack.c.b16 %v9728, %v9724
        %v9993 = vpack.c.b16 %v9729, %v9725
        %v9994 = vpack.c.b16 %v9730, %v9726
        %v9995 = vpack.c.b16 %v9735, %v9731
        %v9996 = vpack.c.b16 %v9736, %v9732
        %v9997 = vpack.c.b16 %v9737, %v9733
        %v9998 = vpack.c.b16 %v9738, %v9734
        %v9999 = vpack.c.b16 %v9743, %v9739
        %v10000 = vpack.c.b16 %v9744, %v9740
        %v10001 = vpack.c.b16 %v9745, %v9741
        %v10002 = vpack.c.b16 %v9746, %v9742
        %v10260 = vlaneseq
        %v10261 = vshrl.u32 %v10260, 7
        %v10262 = vsub.s32 0, %v10261
        %v10263 = vrot.slane %v8978, %v10262
        %v10264 = vlaneseq
        %v10265 = vshrl.u32 %v10264, 7
        %v10266 = vsub.s32 1, %v10265
        %v10267 = vrot.slane %v8978, %v10266
        %v10268 = vlaneseq
        %v10269 = vshrl.u32 %v10268, 7
        %v10270 = vsub.s32 2, %v10269
        %v10271 = vrot.slane %v8978, %v10270
        %v10272 = vlaneseq
        %v10273 = vshrl.u32 %v10272, 7
        %v10274 = vsub.s32 3, %v10273
        %v10275 = vrot.slane %v8978, %v10274
        %10280 = vmatprep.subr.bf16.mxu0 %v9748
        %10281 = vmatpush1.bf16.msra.mxu0 %v9747
        %10282 = vmatprep.subr.bf16.mxu0 %v9752
        %10283 = vmatpush1.bf16.msra.mxu0 %v9751
        %10284 = vmatprep.subr.bf16.mxu0 %v9756
        %10285 = vmatpush1.bf16.msra.mxu0 %v9755
        %10286 = vmatprep.subr.bf16.mxu0 %v9760
        %10287 = vmatpush1.bf16.msra.mxu0 %v9759
        %10288 = vmatprep.subr.bf16.mxu0 %v9764
        %10289 = vmatpush1.bf16.msra.mxu0 %v9763
        %10290 = vmatprep.subr.bf16.mxu0 %v9768
        %10291 = vmatpush1.bf16.msra.mxu0 %v9767
        %10292 = vmatprep.subr.bf16.mxu0 %v9772
        %10293 = vmatpush1.bf16.msra.mxu0 %v9771
        %10294 = vmatprep.subr.bf16.mxu0 %v9776
        %10295 = vmatpush1.bf16.msra.mxu0 %v9775
        %10296 = vmatprep.subr.bf16.mxu0 %v9780
        %10297 = vmatpush1.bf16.msra.mxu0 %v9779
        %10298 = vmatprep.subr.bf16.mxu0 %v9784
        %10299 = vmatpush1.bf16.msra.mxu0 %v9783
        %10300 = vmatprep.subr.bf16.mxu0 %v9788
        %10301 = vmatpush1.bf16.msra.mxu0 %v9787
        %10302 = vmatprep.subr.bf16.mxu0 %v9792
        %10303 = vmatpush1.bf16.msra.mxu0 %v9791
        %10304 = vmatprep.subr.bf16.mxu0 %v9796
        %10305 = vmatpush1.bf16.msra.mxu0 %v9795
        %10306 = vmatprep.subr.bf16.mxu0 %v9800
        %10307 = vmatpush1.bf16.msra.mxu0 %v9799
        %10308 = vmatprep.subr.bf16.mxu0 %v9804
        %10309 = vmatpush1.bf16.msra.mxu0 %v9803
        %10310 = vmatprep.subr.bf16.mxu0 %v9808
        %10311 = vmatpush1.bf16.msra.mxu0 %v9807
        %10312 = vmatprep.mubr.bf16.mxu0 %v8715
        %10313 = vmatmul.mubr.bf16.gmra.mrb[0].mxu0 %v8714
        %v10314 = vpop.f32.mrb[0].mxu0
        %v10315 = vadd.f32 %v10263, %v10314
        %v10316 = vpop.f32.mrb[0].mxu0
        %v10317 = vadd.f32 %v10267, %v10316
        %v10318 = vpop.f32.mrb[0].mxu0
        %v10319 = vpop.f32.mrb[0].mxu0
        %10320 = vdwg.mxu0
        %10321 = vmatprep.subr.bf16.mxu0 %v9812
        %10322 = vmatpush1.bf16.msra.mxu0 %v9811
        %10323 = vmatprep.subr.bf16.mxu0 %v9816
        %10324 = vmatpush1.bf16.msra.mxu0 %v9815
        %10325 = vmatprep.subr.bf16.mxu0 %v9820
        %10326 = vmatpush1.bf16.msra.mxu0 %v9819
        %10327 = vmatprep.subr.bf16.mxu0 %v9824
        %10328 = vmatpush1.bf16.msra.mxu0 %v9823
        %10329 = vmatprep.subr.bf16.mxu0 %v9828
        %10330 = vmatpush1.bf16.msra.mxu0 %v9827
        %10331 = vmatprep.subr.bf16.mxu0 %v9832
        %10332 = vmatpush1.bf16.msra.mxu0 %v9831
        %10333 = vmatprep.subr.bf16.mxu0 %v9836
        %10334 = vmatpush1.bf16.msra.mxu0 %v9835
        %10335 = vmatprep.subr.bf16.mxu0 %v9840
        %10336 = vmatpush1.bf16.msra.mxu0 %v9839
        %10337 = vmatprep.subr.bf16.mxu0 %v9844
        %10338 = vmatpush1.bf16.msra.mxu0 %v9843
        %10339 = vmatprep.subr.bf16.mxu0 %v9848
        %10340 = vmatpush1.bf16.msra.mxu0 %v9847
        %10341 = vmatprep.subr.bf16.mxu0 %v9852
        %10342 = vmatpush1.bf16.msra.mxu0 %v9851
        %10343 = vmatprep.subr.bf16.mxu0 %v9856
        %10344 = vmatpush1.bf16.msra.mxu0 %v9855
        %10345 = vmatprep.subr.bf16.mxu0 %v9860
        %10346 = vmatpush1.bf16.msra.mxu0 %v9859
        %10347 = vmatprep.subr.bf16.mxu0 %v9864
        %10348 = vmatpush1.bf16.msra.mxu0 %v9863
        %10349 = vmatprep.subr.bf16.mxu0 %v9868
        %10350 = vmatpush1.bf16.msra.mxu0 %v9867
        %10351 = vmatprep.subr.bf16.mxu0 %v9872
        %10352 = vmatpush1.bf16.msra.mxu0 %v9871
        %10353 = vmatprep.mubr.bf16.mxu0 %v8717
        %10354 = vmatmul.mubr.bf16.gmra.mrb[0].mxu0 %v8716
        %v10355 = vpop.f32.mrb[0].mxu0
        %v10356 = vadd.f32 %v10315, %v10355
        %v10357 = vpop.f32.mrb[0].mxu0
        %v10358 = vadd.f32 %v10317, %v10357
        %v10359 = vpop.f32.mrb[0].mxu0
        %v10360 = vpop.f32.mrb[0].mxu0
        %10361 = vdwg.mxu0
        %10362 = vmatprep.subr.bf16.mxu0 %v9876
        %10363 = vmatpush1.bf16.msra.mxu0 %v9875
        %10364 = vmatprep.subr.bf16.mxu0 %v9880
        %10365 = vmatpush1.bf16.msra.mxu0 %v9879
        %10366 = vmatprep.subr.bf16.mxu0 %v9884
        %10367 = vmatpush1.bf16.msra.mxu0 %v9883
        %10368 = vmatprep.subr.bf16.mxu0 %v9888
        %10369 = vmatpush1.bf16.msra.mxu0 %v9887
        %10370 = vmatprep.subr.bf16.mxu0 %v9892
        %10371 = vmatpush1.bf16.msra.mxu0 %v9891
        %10372 = vmatprep.subr.bf16.mxu0 %v9896
        %10373 = vmatpush1.bf16.msra.mxu0 %v9895
        %10374 = vmatprep.subr.bf16.mxu0 %v9900
        %10375 = vmatpush1.bf16.msra.mxu0 %v9899
        %10376 = vmatprep.subr.bf16.mxu0 %v9904
        %10377 = vmatpush1.bf16.msra.mxu0 %v9903
        %10378 = vmatprep.subr.bf16.mxu0 %v9908
        %10379 = vmatpush1.bf16.msra.mxu0 %v9907
        %10380 = vmatprep.subr.bf16.mxu0 %v9912
        %10381 = vmatpush1.bf16.msra.mxu0 %v9911
        %10382 = vmatprep.subr.bf16.mxu0 %v9916
        %10383 = vmatpush1.bf16.msra.mxu0 %v9915
        %10384 = vmatprep.subr.bf16.mxu0 %v9920
        %10385 = vmatpush1.bf16.msra.mxu0 %v9919
        %10386 = vmatprep.subr.bf16.mxu0 %v9924
        %10387 = vmatpush1.bf16.msra.mxu0 %v9923
        %10388 = vmatprep.subr.bf16.mxu0 %v9928
        %10389 = vmatpush1.bf16.msra.mxu0 %v9927
        %10390 = vmatprep.subr.bf16.mxu0 %v9932
        %10391 = vmatpush1.bf16.msra.mxu0 %v9931
        %10392 = vmatprep.subr.bf16.mxu0 %v9936
        %10393 = vmatpush1.bf16.msra.mxu0 %v9935
        %10394 = vmatprep.mubr.bf16.mxu0 %v8719
        %10395 = vmatmul.mubr.bf16.gmra.mrb[0].mxu0 %v8718
        %v10396 = vpop.f32.mrb[0].mxu0
        %v10397 = vadd.f32 %v10356, %v10396
        %v10398 = vpop.f32.mrb[0].mxu0
        %v10399 = vadd.f32 %v10358, %v10398
        %v10400 = vpop.f32.mrb[0].mxu0
        %v10401 = vpop.f32.mrb[0].mxu0
        %10402 = vdwg.mxu0
        %10403 = vmatprep.subr.bf16.mxu0 %v9940
        %10404 = vmatpush1.bf16.msra.mxu0 %v9939
        %10405 = vmatprep.subr.bf16.mxu0 %v9944
        %10406 = vmatpush1.bf16.msra.mxu0 %v9943
        %10407 = vmatprep.subr.bf16.mxu0 %v9948
        %10408 = vmatpush1.bf16.msra.mxu0 %v9947
        %10409 = vmatprep.subr.bf16.mxu0 %v9952
        %10410 = vmatpush1.bf16.msra.mxu0 %v9951
        %10411 = vmatprep.subr.bf16.mxu0 %v9956
        %10412 = vmatpush1.bf16.msra.mxu0 %v9955
        %10413 = vmatprep.subr.bf16.mxu0 %v9960
        %10414 = vmatpush1.bf16.msra.mxu0 %v9959
        %10415 = vmatprep.subr.bf16.mxu0 %v9964
        %10416 = vmatpush1.bf16.msra.mxu0 %v9963
        %10417 = vmatprep.subr.bf16.mxu0 %v9968
        %10418 = vmatpush1.bf16.msra.mxu0 %v9967
        %10419 = vmatprep.subr.bf16.mxu0 %v9972
        %10420 = vmatpush1.bf16.msra.mxu0 %v9971
        %10421 = vmatprep.subr.bf16.mxu0 %v9976
        %10422 = vmatpush1.bf16.msra.mxu0 %v9975
        %10423 = vmatprep.subr.bf16.mxu0 %v9980
        %10424 = vmatpush1.bf16.msra.mxu0 %v9979
        %10425 = vmatprep.subr.bf16.mxu0 %v9984
        %10426 = vmatpush1.bf16.msra.mxu0 %v9983
        %10427 = vmatprep.subr.bf16.mxu0 %v9988
        %10428 = vmatpush1.bf16.msra.mxu0 %v9987
        %10429 = vmatprep.subr.bf16.mxu0 %v9992
        %10430 = vmatpush1.bf16.msra.mxu0 %v9991
        %10431 = vmatprep.subr.bf16.mxu0 %v9996
        %10432 = vmatpush1.bf16.msra.mxu0 %v9995
        %10433 = vmatprep.subr.bf16.mxu0 %v10000
        %10434 = vmatpush1.bf16.msra.mxu0 %v9999
        %10435 = vmatprep.mubr.bf16.mxu0 %v8721
        %10436 = vmatmul.mubr.bf16.gmra.mrb[0].mxu0 %v8720
        %v10437 = vpop.f32.mrb[0].mxu0
        %v10438 = vadd.f32 %v10397, %v10437
        %v10439 = vpop.f32.mrb[0].mxu0
        %v10440 = vadd.f32 %v10399, %v10439
        %v10441 = vpop.f32.mrb[0].mxu0
        %v10442 = vpop.f32.mrb[0].mxu0
        %10443 = vdwg.mxu0
        %10444 = vmatprep.subr.bf16.mxu0 %v9750
        %10445 = vmatpush1.bf16.msra.mxu0 %v9749
        %10446 = vmatprep.subr.bf16.mxu0 %v9754
        %10447 = vmatpush1.bf16.msra.mxu0 %v9753
        %10448 = vmatprep.subr.bf16.mxu0 %v9758
        %10449 = vmatpush1.bf16.msra.mxu0 %v9757
        %10450 = vmatprep.subr.bf16.mxu0 %v9762
        %10451 = vmatpush1.bf16.msra.mxu0 %v9761
        %10452 = vmatprep.subr.bf16.mxu0 %v9766
        %10453 = vmatpush1.bf16.msra.mxu0 %v9765
        %10454 = vmatprep.subr.bf16.mxu0 %v9770
        %10455 = vmatpush1.bf16.msra.mxu0 %v9769
        %10456 = vmatprep.subr.bf16.mxu0 %v9774
        %10457 = vmatpush1.bf16.msra.mxu0 %v9773
        %10458 = vmatprep.subr.bf16.mxu0 %v9778
        %10459 = vmatpush1.bf16.msra.mxu0 %v9777
        %10460 = vmatprep.subr.bf16.mxu0 %v9782
        %10461 = vmatpush1.bf16.msra.mxu0 %v9781
        %10462 = vmatprep.subr.bf16.mxu0 %v9786
        %10463 = vmatpush1.bf16.msra.mxu0 %v9785
        %10464 = vmatprep.subr.bf16.mxu0 %v9790
        %10465 = vmatpush1.bf16.msra.mxu0 %v9789
        %10466 = vmatprep.subr.bf16.mxu0 %v9794
        %10467 = vmatpush1.bf16.msra.mxu0 %v9793
        %10468 = vmatprep.subr.bf16.mxu0 %v9798
        %10469 = vmatpush1.bf16.msra.mxu0 %v9797
        %10470 = vmatprep.subr.bf16.mxu0 %v9802
        %10471 = vmatpush1.bf16.msra.mxu0 %v9801
        %10472 = vmatprep.subr.bf16.mxu0 %v9806
        %10473 = vmatpush1.bf16.msra.mxu0 %v9805
        %10474 = vmatprep.subr.bf16.mxu0 %v9810
        %10475 = vmatpush1.bf16.msra.mxu0 %v9809
        %10476 = vmatprep.mubr.bf16.mxu0 %v8715
        %10477 = vmatmul.mubr.bf16.gmra.mrb[0].mxu0 %v8714
        %v10478 = vpop.f32.mrb[0].mxu0
        %v10479 = vadd.f32 %v10271, %v10478
        %v10480 = vpop.f32.mrb[0].mxu0
        %v10481 = vadd.f32 %v10275, %v10480
        %v10482 = vpop.f32.mrb[0].mxu0
        %v10483 = vpop.f32.mrb[0].mxu0
        %10484 = vdwg.mxu0
        %10485 = vmatprep.subr.bf16.mxu0 %v9814
        %10486 = vmatpush1.bf16.msra.mxu0 %v9813
        %10487 = vmatprep.subr.bf16.mxu0 %v9818
        %10488 = vmatpush1.bf16.msra.mxu0 %v9817
        %10489 = vmatprep.subr.bf16.mxu0 %v9822
        %10490 = vmatpush1.bf16.msra.mxu0 %v9821
        %10491 = vmatprep.subr.bf16.mxu0 %v9826
        %10492 = vmatpush1.bf16.msra.mxu0 %v9825
        %10493 = vmatprep.subr.bf16.mxu0 %v9830
        %10494 = vmatpush1.bf16.msra.mxu0 %v9829
        %10495 = vmatprep.subr.bf16.mxu0 %v9834
        %10496 = vmatpush1.bf16.msra.mxu0 %v9833
        %10497 = vmatprep.subr.bf16.mxu0 %v9838
        %10498 = vmatpush1.bf16.msra.mxu0 %v9837
        %10499 = vmatprep.subr.bf16.mxu0 %v9842
        %10500 = vmatpush1.bf16.msra.mxu0 %v9841
        %10501 = vmatprep.subr.bf16.mxu0 %v9846
        %10502 = vmatpush1.bf16.msra.mxu0 %v9845
        %10503 = vmatprep.subr.bf16.mxu0 %v9850
        %10504 = vmatpush1.bf16.msra.mxu0 %v9849
        %10505 = vmatprep.subr.bf16.mxu0 %v9854
        %10506 = vmatpush1.bf16.msra.mxu0 %v9853
        %10507 = vmatprep.subr.bf16.mxu0 %v9858
        %10508 = vmatpush1.bf16.msra.mxu0 %v9857
        %10509 = vmatprep.subr.bf16.mxu0 %v9862
        %10510 = vmatpush1.bf16.msra.mxu0 %v9861
        %10511 = vmatprep.subr.bf16.mxu0 %v9866
        %10512 = vmatpush1.bf16.msra.mxu0 %v9865
        %10513 = vmatprep.subr.bf16.mxu0 %v9870
        %10514 = vmatpush1.bf16.msra.mxu0 %v9869
        %10515 = vmatprep.subr.bf16.mxu0 %v9874
        %10516 = vmatpush1.bf16.msra.mxu0 %v9873
        %10517 = vmatprep.mubr.bf16.mxu0 %v8717
        %10518 = vmatmul.mubr.bf16.gmra.mrb[0].mxu0 %v8716
        %v10519 = vpop.f32.mrb[0].mxu0
        %v10520 = vadd.f32 %v10479, %v10519
        %v10521 = vpop.f32.mrb[0].mxu0
        %v10522 = vadd.f32 %v10481, %v10521
        %v10523 = vpop.f32.mrb[0].mxu0
        %v10524 = vpop.f32.mrb[0].mxu0
        %10525 = vdwg.mxu0
        %10526 = vmatprep.subr.bf16.mxu0 %v9878
        %10527 = vmatpush1.bf16.msra.mxu0 %v9877
        %10528 = vmatprep.subr.bf16.mxu0 %v9882
        %10529 = vmatpush1.bf16.msra.mxu0 %v9881
        %10530 = vmatprep.subr.bf16.mxu0 %v9886
        %10531 = vmatpush1.bf16.msra.mxu0 %v9885
        %10532 = vmatprep.subr.bf16.mxu0 %v9890
        %10533 = vmatpush1.bf16.msra.mxu0 %v9889
        %10534 = vmatprep.subr.bf16.mxu0 %v9894
        %10535 = vmatpush1.bf16.msra.mxu0 %v9893
        %10536 = vmatprep.subr.bf16.mxu0 %v9898
        %10537 = vmatpush1.bf16.msra.mxu0 %v9897
        %10538 = vmatprep.subr.bf16.mxu0 %v9902
        %10539 = vmatpush1.bf16.msra.mxu0 %v9901
        %10540 = vmatprep.subr.bf16.mxu0 %v9906
        %10541 = vmatpush1.bf16.msra.mxu0 %v9905
        %10542 = vmatprep.subr.bf16.mxu0 %v9910
        %10543 = vmatpush1.bf16.msra.mxu0 %v9909
        %10544 = vmatprep.subr.bf16.mxu0 %v9914
        %10545 = vmatpush1.bf16.msra.mxu0 %v9913
        %10546 = vmatprep.subr.bf16.mxu0 %v9918
        %10547 = vmatpush1.bf16.msra.mxu0 %v9917
        %10548 = vmatprep.subr.bf16.mxu0 %v9922
        %10549 = vmatpush1.bf16.msra.mxu0 %v9921
        %10550 = vmatprep.subr.bf16.mxu0 %v9926
        %10551 = vmatpush1.bf16.msra.mxu0 %v9925
        %10552 = vmatprep.subr.bf16.mxu0 %v9930
        %10553 = vmatpush1.bf16.msra.mxu0 %v9929
        %10554 = vmatprep.subr.bf16.mxu0 %v9934
        %10555 = vmatpush1.bf16.msra.mxu0 %v9933
        %10556 = vmatprep.subr.bf16.mxu0 %v9938
        %10557 = vmatpush1.bf16.msra.mxu0 %v9937
        %10558 = vmatprep.mubr.bf16.mxu0 %v8719
        %10559 = vmatmul.mubr.bf16.gmra.mrb[0].mxu0 %v8718
        %v10560 = vpop.f32.mrb[0].mxu0
        %v10561 = vadd.f32 %v10520, %v10560
        %v10562 = vpop.f32.mrb[0].mxu0
        %v10563 = vadd.f32 %v10522, %v10562
        %v10564 = vpop.f32.mrb[0].mxu0
        %v10565 = vpop.f32.mrb[0].mxu0
        %10566 = vdwg.mxu0
        %10567 = vmatprep.subr.bf16.mxu0 %v9942
        %10568 = vmatpush1.bf16.msra.mxu0 %v9941
        %10569 = vmatprep.subr.bf16.mxu0 %v9946
        %10570 = vmatpush1.bf16.msra.mxu0 %v9945
        %10571 = vmatprep.subr.bf16.mxu0 %v9950
        %10572 = vmatpush1.bf16.msra.mxu0 %v9949
        %10573 = vmatprep.subr.bf16.mxu0 %v9954
        %10574 = vmatpush1.bf16.msra.mxu0 %v9953
        %10575 = vmatprep.subr.bf16.mxu0 %v9958
        %10576 = vmatpush1.bf16.msra.mxu0 %v9957
        %10577 = vmatprep.subr.bf16.mxu0 %v9962
        %10578 = vmatpush1.bf16.msra.mxu0 %v9961
        %10579 = vmatprep.subr.bf16.mxu0 %v9966
        %10580 = vmatpush1.bf16.msra.mxu0 %v9965
        %10581 = vmatprep.subr.bf16.mxu0 %v9970
        %10582 = vmatpush1.bf16.msra.mxu0 %v9969
        %10583 = vmatprep.subr.bf16.mxu0 %v9974
        %10584 = vmatpush1.bf16.msra.mxu0 %v9973
        %10585 = vmatprep.subr.bf16.mxu0 %v9978
        %10586 = vmatpush1.bf16.msra.mxu0 %v9977
        %10587 = vmatprep.subr.bf16.mxu0 %v9982
        %10588 = vmatpush1.bf16.msra.mxu0 %v9981
        %10589 = vmatprep.subr.bf16.mxu0 %v9986
        %10590 = vmatpush1.bf16.msra.mxu0 %v9985
        %10591 = vmatprep.subr.bf16.mxu0 %v9990
        %10592 = vmatpush1.bf16.msra.mxu0 %v9989
        %10593 = vmatprep.subr.bf16.mxu0 %v9994
        %10594 = vmatpush1.bf16.msra.mxu0 %v9993
        %10595 = vmatprep.subr.bf16.mxu0 %v9998
        %10596 = vmatpush1.bf16.msra.mxu0 %v9997
        %10597 = vmatprep.subr.bf16.mxu0 %v10002
        %10598 = vmatpush1.bf16.msra.mxu0 %v10001
        %10599 = vmatprep.mubr.bf16.mxu0 %v8721
        %10600 = vmatmul.mubr.bf16.gmra.mrb[0].mxu0 %v8720
        %v10601 = vpop.f32.mrb[0].mxu0
        %v10602 = vadd.f32 %v10561, %v10601
        %v10603 = vpop.f32.mrb[0].mxu0
        %v10604 = vadd.f32 %v10563, %v10603
        %v10605 = vpop.f32.mrb[0].mxu0
        %v10606 = vpop.f32.mrb[0].mxu0
        %10607 = vdwg.mxu0
        %v10608 = vmax.f32 %v10438, 0.0
        %v10609 = vmax.f32 %v10440, 0.0
        %v10610 = vmax.f32 %v10602, 0.0
        %v10611 = vmax.f32 %v10604, 0.0
        %v10612 = vpack.c.bf16 %v10608, %v10608
        %v10613 = vpack.c.bf16 %v10609, %v10609
        %v10614 = vpack.c.bf16 %v10610, %v10610
        %v10615 = vpack.c.bf16 %v10611, %v10611
        %v10616 = vld [vmem:[%s19] sm:$0xff]
        %v10617 = vld [vmem:[%s19 + $0x8] sm:$0xff]
        %v10618 = vld [vmem:[%s19 + $0x10] sm:$0xff]
        %v10619 = vld [vmem:[%s19 + $0x18] sm:$0xff]
        %v10620 = vld [vmem:[%s19 + $0x20] sm:$0xff]
        %v10621 = vld [vmem:[%s19 + $0x28] sm:$0xff]
        %v10622 = vld [vmem:[%s19 + $0x30] sm:$0xff]
        %v10623 = vld [vmem:[%s19 + $0x38] sm:$0xff]
        %v10624 = vld [vmem:[%s19 + $0x40] sm:$0xff]
        %v10625 = vld [vmem:[%s19 + $0x48] sm:$0xff]
        %v10626 = vld [vmem:[%s19 + $0x50] sm:$0xff]
        %v10627 = vld [vmem:[%s19 + $0x58] sm:$0xff]
        %v10628 = vld [vmem:[%s19 + $0x60] sm:$0xff]
        %v10629 = vld [vmem:[%s19 + $0x68] sm:$0xff]
        %v10630 = vld [vmem:[%s19 + $0x70] sm:$0xff]
        %v10631 = vld [vmem:[%s19 + $0x78] sm:$0xff]
        %v10632 = vld [vmem:[%s19 + $0x80] sm:$0xff]
        %v10633 = vld [vmem:[%s19 + $0x88] sm:$0xff]
        %v10634 = vld [vmem:[%s19 + $0x90] sm:$0xff]
        %v10635 = vld [vmem:[%s19 + $0x98] sm:$0xff]
        %v10636 = vld [vmem:[%s19 + $0xa0] sm:$0xff]
        %v10637 = vld [vmem:[%s19 + $0xa8] sm:$0xff]
        %v10638 = vld [vmem:[%s19 + $0xb0] sm:$0xff]
        %v10639 = vld [vmem:[%s19 + $0xb8] sm:$0xff]
        %v10640 = vld [vmem:[%s19 + $0xc0] sm:$0xff]
        %v10641 = vld [vmem:[%s19 + $0xc8] sm:$0xff]
        %v10642 = vld [vmem:[%s19 + $0xd0] sm:$0xff]
        %v10643 = vld [vmem:[%s19 + $0xd8] sm:$0xff]
        %v10644 = vld [vmem:[%s19 + $0xe0] sm:$0xff]
        %v10645 = vld [vmem:[%s19 + $0xe8] sm:$0xff]
        %v10646 = vld [vmem:[%s19 + $0xf0] sm:$0xff]
        %v10647 = vld [vmem:[%s19 + $0xf8] sm:$0xff]
        %v10648 = vld [vmem:[%s19 + $0x100] sm:$0xff]
        %v10649 = vld [vmem:[%s19 + $0x108] sm:$0xff]
        %v10650 = vld [vmem:[%s19 + $0x110] sm:$0xff]
        %v10651 = vld [vmem:[%s19 + $0x118] sm:$0xff]
        %v10652 = vld [vmem:[%s19 + $0x120] sm:$0xff]
        %v10653 = vld [vmem:[%s19 + $0x128] sm:$0xff]
        %v10654 = vld [vmem:[%s19 + $0x130] sm:$0xff]
        %v10655 = vld [vmem:[%s19 + $0x138] sm:$0xff]
        %v10656 = vld [vmem:[%s19 + $0x140] sm:$0xff]
        %v10657 = vld [vmem:[%s19 + $0x148] sm:$0xff]
        %v10658 = vld [vmem:[%s19 + $0x150] sm:$0xff]
        %v10659 = vld [vmem:[%s19 + $0x158] sm:$0xff]
        %v10660 = vld [vmem:[%s19 + $0x160] sm:$0xff]
        %v10661 = vld [vmem:[%s19 + $0x168] sm:$0xff]
        %v10662 = vld [vmem:[%s19 + $0x170] sm:$0xff]
        %v10663 = vld [vmem:[%s19 + $0x178] sm:$0xff]
        %v10664 = vld [vmem:[%s19 + $0x180] sm:$0xff]
        %v10665 = vld [vmem:[%s19 + $0x188] sm:$0xff]
        %v10666 = vld [vmem:[%s19 + $0x190] sm:$0xff]
        %v10667 = vld [vmem:[%s19 + $0x198] sm:$0xff]
        %v10668 = vld [vmem:[%s19 + $0x1a0] sm:$0xff]
        %v10669 = vld [vmem:[%s19 + $0x1a8] sm:$0xff]
        %v10670 = vld [vmem:[%s19 + $0x1b0] sm:$0xff]
        %v10671 = vld [vmem:[%s19 + $0x1b8] sm:$0xff]
        %v10672 = vld [vmem:[%s19 + $0x1c0] sm:$0xff]
        %v10673 = vld [vmem:[%s19 + $0x1c8] sm:$0xff]
        %v10674 = vld [vmem:[%s19 + $0x1d0] sm:$0xff]
        %v10675 = vld [vmem:[%s19 + $0x1d8] sm:$0xff]
        %v10676 = vld [vmem:[%s19 + $0x1e0] sm:$0xff]
        %v10677 = vld [vmem:[%s19 + $0x1e8] sm:$0xff]
        %v10678 = vld [vmem:[%s19 + $0x1f0] sm:$0xff]
        %v10679 = vld [vmem:[%s19 + $0x1f8] sm:$0xff]
        %v10680 = vld [vmem:[%s20] sm:$0x3]
        %v10745 = vunpack.c.l.b16 %v10616
        %v10746 = vunpack.c.h.b16 %v10616
        %v10747 = vunpack.c.l.b16 %v10617
        %v10748 = vunpack.c.h.b16 %v10617
        %v10749 = vunpack.c.l.b16 %v10618
        %v10750 = vunpack.c.h.b16 %v10618
        %v10751 = vunpack.c.l.b16 %v10619
        %v10752 = vunpack.c.h.b16 %v10619
        %v10753 = vunpack.c.l.b16 %v10620
        %v10754 = vunpack.c.h.b16 %v10620
        %v10755 = vunpack.c.l.b16 %v10621
        %v10756 = vunpack.c.h.b16 %v10621
        %v10757 = vunpack.c.l.b16 %v10622
        %v10758 = vunpack.c.h.b16 %v10622
        %v10759 = vunpack.c.l.b16 %v10623
        %v10760 = vunpack.c.h.b16 %v10623
        %v10761 = vunpack.c.l.b16 %v10624
        %v10762 = vunpack.c.h.b16 %v10624
        %v10763 = vunpack.c.l.b16 %v10625
        %v10764 = vunpack.c.h.b16 %v10625
        %v10765 = vunpack.c.l.b16 %v10626
        %v10766 = vunpack.c.h.b16 %v10626
        %v10767 = vunpack.c.l.b16 %v10627
        %v10768 = vunpack.c.h.b16 %v10627
        %v10769 = vunpack.c.l.b16 %v10628
        %v10770 = vunpack.c.h.b16 %v10628
        %v10771 = vunpack.c.l.b16 %v10629
        %v10772 = vunpack.c.h.b16 %v10629
        %v10773 = vunpack.c.l.b16 %v10630
        %v10774 = vunpack.c.h.b16 %v10630
        %v10775 = vunpack.c.l.b16 %v10631
        %v10776 = vunpack.c.h.b16 %v10631
        %v10777 = vunpack.c.l.b16 %v10632
        %v10778 = vunpack.c.h.b16 %v10632
        %v10779 = vunpack.c.l.b16 %v10633
        %v10780 = vunpack.c.h.b16 %v10633
        %v10781 = vunpack.c.l.b16 %v10634
        %v10782 = vunpack.c.h.b16 %v10634
        %v10783 = vunpack.c.l.b16 %v10635
        %v10784 = vunpack.c.h.b16 %v10635
        %v10785 = vunpack.c.l.b16 %v10636
        %v10786 = vunpack.c.h.b16 %v10636
        %v10787 = vunpack.c.l.b16 %v10637
        %v10788 = vunpack.c.h.b16 %v10637
        %v10789 = vunpack.c.l.b16 %v10638
        %v10790 = vunpack.c.h.b16 %v10638
        %v10791 = vunpack.c.l.b16 %v10639
        %v10792 = vunpack.c.h.b16 %v10639
        %v10793 = vunpack.c.l.b16 %v10640
        %v10794 = vunpack.c.h.b16 %v10640
        %v10795 = vunpack.c.l.b16 %v10641
        %v10796 = vunpack.c.h.b16 %v10641
        %v10797 = vunpack.c.l.b16 %v10642
        %v10798 = vunpack.c.h.b16 %v10642
        %v10799 = vunpack.c.l.b16 %v10643
        %v10800 = vunpack.c.h.b16 %v10643
        %v10801 = vunpack.c.l.b16 %v10644
        %v10802 = vunpack.c.h.b16 %v10644
        %v10803 = vunpack.c.l.b16 %v10645
        %v10804 = vunpack.c.h.b16 %v10645
        %v10805 = vunpack.c.l.b16 %v10646
        %v10806 = vunpack.c.h.b16 %v10646
        %v10807 = vunpack.c.l.b16 %v10647
        %v10808 = vunpack.c.h.b16 %v10647
        %v10809 = vunpack.c.l.b16 %v10648
        %v10810 = vunpack.c.h.b16 %v10648
        %v10811 = vunpack.c.l.b16 %v10649
        %v10812 = vunpack.c.h.b16 %v10649
        %v10813 = vunpack.c.l.b16 %v10650
        %v10814 = vunpack.c.h.b16 %v10650
        %v10815 = vunpack.c.l.b16 %v10651
        %v10816 = vunpack.c.h.b16 %v10651
        %v10817 = vunpack.c.l.b16 %v10652
        %v10818 = vunpack.c.h.b16 %v10652
        %v10819 = vunpack.c.l.b16 %v10653
        %v10820 = vunpack.c.h.b16 %v10653
        %v10821 = vunpack.c.l.b16 %v10654
        %v10822 = vunpack.c.h.b16 %v10654
        %v10823 = vunpack.c.l.b16 %v10655
        %v10824 = vunpack.c.h.b16 %v10655
        %v10825 = vunpack.c.l.b16 %v10656
        %v10826 = vunpack.c.h.b16 %v10656
        %v10827 = vunpack.c.l.b16 %v10657
        %v10828 = vunpack.c.h.b16 %v10657
        %v10829 = vunpack.c.l.b16 %v10658
        %v10830 = vunpack.c.h.b16 %v10658
        %v10831 = vunpack.c.l.b16 %v10659
        %v10832 = vunpack.c.h.b16 %v10659
        %v10833 = vunpack.c.l.b16 %v10660
        %v10834 = vunpack.c.h.b16 %v10660
        %v10835 = vunpack.c.l.b16 %v10661
        %v10836 = vunpack.c.h.b16 %v10661
        %v10837 = vunpack.c.l.b16 %v10662
        %v10838 = vunpack.c.h.b16 %v10662
        %v10839 = vunpack.c.l.b16 %v10663
        %v10840 = vunpack.c.h.b16 %v10663
        %v10841 = vunpack.c.l.b16 %v10664
        %v10842 = vunpack.c.h.b16 %v10664
        %v10843 = vunpack.c.l.b16 %v10665
        %v10844 = vunpack.c.h.b16 %v10665
        %v10845 = vunpack.c.l.b16 %v10666
        %v10846 = vunpack.c.h.b16 %v10666
        %v10847 = vunpack.c.l.b16 %v10667
        %v10848 = vunpack.c.h.b16 %v10667
        %v10849 = vunpack.c.l.b16 %v10668
        %v10850 = vunpack.c.h.b16 %v10668
        %v10851 = vunpack.c.l.b16 %v10669
        %v10852 = vunpack.c.h.b16 %v10669
        %v10853 = vunpack.c.l.b16 %v10670
        %v10854 = vunpack.c.h.b16 %v10670
        %v10855 = vunpack.c.l.b16 %v10671
        %v10856 = vunpack.c.h.b16 %v10671
        %v10857 = vunpack.c.l.b16 %v10672
        %v10858 = vunpack.c.h.b16 %v10672
        %v10859 = vunpack.c.l.b16 %v10673
        %v10860 = vunpack.c.h.b16 %v10673
        %v10861 = vunpack.c.l.b16 %v10674
        %v10862 = vunpack.c.h.b16 %v10674
        %v10863 = vunpack.c.l.b16 %v10675
        %v10864 = vunpack.c.h.b16 %v10675
        %v10865 = vunpack.c.l.b16 %v10676
        %v10866 = vunpack.c.h.b16 %v10676
        %v10867 = vunpack.c.l.b16 %v10677
        %v10868 = vunpack.c.h.b16 %v10677
        %v10869 = vunpack.c.l.b16 %v10678
        %v10870 = vunpack.c.h.b16 %v10678
        %v10871 = vunpack.c.l.b16 %v10679
        %v10872 = vunpack.c.h.b16 %v10679
        %v10873 = vpack.c.b16 %v10747, %v10745
        %v10874 = vpack.c.b16 %v10748, %v10746
        %v10875 = vpack.c.b16 %v10751, %v10749
        %v10876 = vpack.c.b16 %v10752, %v10750
        %v10877 = vpack.c.b16 %v10755, %v10753
        %v10878 = vpack.c.b16 %v10756, %v10754
        %v10879 = vpack.c.b16 %v10759, %v10757
        %v10880 = vpack.c.b16 %v10760, %v10758
        %v10881 = vpack.c.b16 %v10763, %v10761
        %v10882 = vpack.c.b16 %v10764, %v10762
        %v10883 = vpack.c.b16 %v10767, %v10765
        %v10884 = vpack.c.b16 %v10768, %v10766
        %v10885 = vpack.c.b16 %v10771, %v10769
        %v10886 = vpack.c.b16 %v10772, %v10770
        %v10887 = vpack.c.b16 %v10775, %v10773
        %v10888 = vpack.c.b16 %v10776, %v10774
        %v10889 = vpack.c.b16 %v10779, %v10777
        %v10890 = vpack.c.b16 %v10780, %v10778
        %v10891 = vpack.c.b16 %v10783, %v10781
        %v10892 = vpack.c.b16 %v10784, %v10782
        %v10893 = vpack.c.b16 %v10787, %v10785
        %v10894 = vpack.c.b16 %v10788, %v10786
        %v10895 = vpack.c.b16 %v10791, %v10789
        %v10896 = vpack.c.b16 %v10792, %v10790
        %v10897 = vpack.c.b16 %v10795, %v10793
        %v10898 = vpack.c.b16 %v10796, %v10794
        %v10899 = vpack.c.b16 %v10799, %v10797
        %v10900 = vpack.c.b16 %v10800, %v10798
        %v10901 = vpack.c.b16 %v10803, %v10801
        %v10902 = vpack.c.b16 %v10804, %v10802
        %v10903 = vpack.c.b16 %v10807, %v10805
        %v10904 = vpack.c.b16 %v10808, %v10806
        %v10905 = vpack.c.b16 %v10811, %v10809
        %v10906 = vpack.c.b16 %v10812, %v10810
        %v10907 = vpack.c.b16 %v10815, %v10813
        %v10908 = vpack.c.b16 %v10816, %v10814
        %v10909 = vpack.c.b16 %v10819, %v10817
        %v10910 = vpack.c.b16 %v10820, %v10818
        %v10911 = vpack.c.b16 %v10823, %v10821
        %v10912 = vpack.c.b16 %v10824, %v10822
        %v10913 = vpack.c.b16 %v10827, %v10825
        %v10914 = vpack.c.b16 %v10828, %v10826
        %v10915 = vpack.c.b16 %v10831, %v10829
        %v10916 = vpack.c.b16 %v10832, %v10830
        %v10917 = vpack.c.b16 %v10835, %v10833
        %v10918 = vpack.c.b16 %v10836, %v10834
        %v10919 = vpack.c.b16 %v10839, %v10837
        %v10920 = vpack.c.b16 %v10840, %v10838
        %v10921 = vpack.c.b16 %v10843, %v10841
        %v10922 = vpack.c.b16 %v10844, %v10842
        %v10923 = vpack.c.b16 %v10847, %v10845
        %v10924 = vpack.c.b16 %v10848, %v10846
        %v10925 = vpack.c.b16 %v10851, %v10849
        %v10926 = vpack.c.b16 %v10852, %v10850
        %v10927 = vpack.c.b16 %v10855, %v10853
        %v10928 = vpack.c.b16 %v10856, %v10854
        %v10929 = vpack.c.b16 %v10859, %v10857
        %v10930 = vpack.c.b16 %v10860, %v10858
        %v10931 = vpack.c.b16 %v10863, %v10861
        %v10932 = vpack.c.b16 %v10864, %v10862
        %v10933 = vpack.c.b16 %v10867, %v10865
        %v10934 = vpack.c.b16 %v10868, %v10866
        %v10935 = vpack.c.b16 %v10871, %v10869
        %v10936 = vpack.c.b16 %v10872, %v10870
        %v11002 = vlaneseq
        %v11003 = vshrl.u32 %v11002, 7
        %v11004 = vsub.s32 0, %v11003
        %v11005 = vrot.slane %v10680, %v11004
        %v11006 = vlaneseq
        %v11007 = vshrl.u32 %v11006, 7
        %v11008 = vsub.s32 1, %v11007
        %v11009 = vrot.slane %v10680, %v11008
        %11012 = vmatprep.subr.bf16.mxu0 %v10874
        %11013 = vmatpush1.bf16.msra.mxu0 %v10873
        %11014 = vmatprep.subr.bf16.mxu0 %v10876
        %11015 = vmatpush1.bf16.msra.mxu0 %v10875
        %11016 = vmatprep.subr.bf16.mxu0 %v10878
        %11017 = vmatpush1.bf16.msra.mxu0 %v10877
        %11018 = vmatprep.subr.bf16.mxu0 %v10880
        %11019 = vmatpush1.bf16.msra.mxu0 %v10879
        %11020 = vmatprep.subr.bf16.mxu0 %v10882
        %11021 = vmatpush1.bf16.msra.mxu0 %v10881
        %11022 = vmatprep.subr.bf16.mxu0 %v10884
        %11023 = vmatpush1.bf16.msra.mxu0 %v10883
        %11024 = vmatprep.subr.bf16.mxu0 %v10886
        %11025 = vmatpush1.bf16.msra.mxu0 %v10885
        %11026 = vmatprep.subr.bf16.mxu0 %v10888
        %11027 = vmatpush1.bf16.msra.mxu0 %v10887
        %11028 = vmatprep.subr.bf16.mxu0 %v10890
        %11029 = vmatpush1.bf16.msra.mxu0 %v10889
        %11030 = vmatprep.subr.bf16.mxu0 %v10892
        %11031 = vmatpush1.bf16.msra.mxu0 %v10891
        %11032 = vmatprep.subr.bf16.mxu0 %v10894
        %11033 = vmatpush1.bf16.msra.mxu0 %v10893
        %11034 = vmatprep.subr.bf16.mxu0 %v10896
        %11035 = vmatpush1.bf16.msra.mxu0 %v10895
        %11036 = vmatprep.subr.bf16.mxu0 %v10898
        %11037 = vmatpush1.bf16.msra.mxu0 %v10897
        %11038 = vmatprep.subr.bf16.mxu0 %v10900
        %11039 = vmatpush1.bf16.msra.mxu0 %v10899
        %11040 = vmatprep.subr.bf16.mxu0 %v10902
        %11041 = vmatpush1.bf16.msra.mxu0 %v10901
        %11042 = vmatprep.subr.bf16.mxu0 %v10904
        %11043 = vmatpush1.bf16.msra.mxu0 %v10903
        %11044 = vmatprep.mubr.bf16.mxu0 %v10613
        %11045 = vmatmul.mubr.bf16.gmra.mrb[0].mxu0 %v10612
        %v11046 = vpop.f32.mrb[0].mxu0
        %v11047 = vadd.f32 %v11005, %v11046
        %v11048 = vpop.f32.mrb[0].mxu0
        %v11049 = vadd.f32 %v11009, %v11048
        %v11050 = vpop.f32.mrb[0].mxu0
        %v11051 = vpop.f32.mrb[0].mxu0
        %11052 = vdwg.mxu0
        %11053 = vmatprep.subr.bf16.mxu0 %v10906
        %11054 = vmatpush1.bf16.msra.mxu0 %v10905
        %11055 = vmatprep.subr.bf16.mxu0 %v10908
        %11056 = vmatpush1.bf16.msra.mxu0 %v10907
        %11057 = vmatprep.subr.bf16.mxu0 %v10910
        %11058 = vmatpush1.bf16.msra.mxu0 %v10909
        %11059 = vmatprep.subr.bf16.mxu0 %v10912
        %11060 = vmatpush1.bf16.msra.mxu0 %v10911
        %11061 = vmatprep.subr.bf16.mxu0 %v10914
        %11062 = vmatpush1.bf16.msra.mxu0 %v10913
        %11063 = vmatprep.subr.bf16.mxu0 %v10916
        %11064 = vmatpush1.bf16.msra.mxu0 %v10915
        %11065 = vmatprep.subr.bf16.mxu0 %v10918
        %11066 = vmatpush1.bf16.msra.mxu0 %v10917
        %11067 = vmatprep.subr.bf16.mxu0 %v10920
        %11068 = vmatpush1.bf16.msra.mxu0 %v10919
        %11069 = vmatprep.subr.bf16.mxu0 %v10922
        %11070 = vmatpush1.bf16.msra.mxu0 %v10921
        %11071 = vmatprep.subr.bf16.mxu0 %v10924
        %11072 = vmatpush1.bf16.msra.mxu0 %v10923
        %11073 = vmatprep.subr.bf16.mxu0 %v10926
        %11074 = vmatpush1.bf16.msra.mxu0 %v10925
        %11075 = vmatprep.subr.bf16.mxu0 %v10928
        %11076 = vmatpush1.bf16.msra.mxu0 %v10927
        %11077 = vmatprep.subr.bf16.mxu0 %v10930
        %11078 = vmatpush1.bf16.msra.mxu0 %v10929
        %11079 = vmatprep.subr.bf16.mxu0 %v10932
        %11080 = vmatpush1.bf16.msra.mxu0 %v10931
        %11081 = vmatprep.subr.bf16.mxu0 %v10934
        %11082 = vmatpush1.bf16.msra.mxu0 %v10933
        %11083 = vmatprep.subr.bf16.mxu0 %v10936
        %11084 = vmatpush1.bf16.msra.mxu0 %v10935
        %11085 = vmatprep.mubr.bf16.mxu0 %v10615
        %11086 = vmatmul.mubr.bf16.gmra.mrb[0].mxu0 %v10614
        %v11087 = vpop.f32.mrb[0].mxu0
        %v11088 = vadd.f32 %v11047, %v11087
        %v11089 = vpop.f32.mrb[0].mxu0
        %v11090 = vadd.f32 %v11049, %v11089
        %v11091 = vpop.f32.mrb[0].mxu0
        %v11092 = vpop.f32.mrb[0].mxu0
        %11093 = vdwg.mxu0
        %v11096 = vcombine.low %v11088, %v11090
        %v11098 = vunpack.c.l.s4 1966171168
        %v11099 = vunpack.c.0.s8 %v11098
        %v11100 = vlaneseq
        %v11101 = vshrl.u32 %v11100, 7
        %v11102 = vsub.s32 %v11099, %v11101
        %v11103 = vrot.slane %v11096, %v11102
        %v11105 = vunpack.c.l.s4 1966171168
        %v11106 = vunpack.c.0.s8 %v11105
        %v11107 = vlaneseq
        %v11108 = vshrl.u32 %v11107, 7
        %v11109 = vsub.s32 %v11106, %v11108
        %v11110 = vrot.slane %v11103, %v11109
        %v11112 = vlaneseq
        %vm11113 = vcmp.ge.s32.totalorder %v11112, 0
        %vm11114 = vcmp.lt.s32.totalorder %v11112, 256
        %vm11115 = vmand %vm11113, %vm11114
        %11116 = vst.msk [vmem:[%s681] sm:$0x3] %vm11115, %v11110
        %p11117 = scmp.lt.s32.totalorder %s34, 1
        %s11118 = scalar_select %p11117, %s34, 1
        %s11119 = smul.addr %s11118, 2
        %s11120 = scalar_lea.vmem %s21, %s11119
        // Predicated region
        $region113: #{a_call__.1} parent=103 // pred_check
          %p11121 = pneg %p498
        $region114: #{a_call__.1} parent=103 // pred_check_branch
          %11123 = sbr.rel (%p11121) target = $region116
        $region115: #{a_call__.1} parent=103 // pred_region
          _
        $region116: #{a_call__.1} parent=103 // pred_fallthru
          _
      $region104: #{a_call__.1} parent=5 // pred_fallthru
        _
      %p11124 = scmp.le.s32.totalorder 2, %s29
      // Predicated region
      $region117: #{a_call__.1} parent=5 // pred_check
        %p11125 = pneg %p11124
      $region118: #{a_call__.1} parent=5 // pred_check_branch
        %11127 = sbr.rel (%p11125) target = $region120
      $region119: #{a_call__.1} parent=5 // pred_region
        %s11128 = ssub.s32 %s29, 2
        // Predicated region
        $region121: #{a_call__.1} parent=119 // pred_check
          %p11129 = pneg %p504
        $region122: #{a_call__.1} parent=119 // pred_check_branch
          %11131 = sbr.rel (%p11129) target = $region124
        $region123: #{a_call__.1} parent=119 // pred_region
          %p11132 = scmp.lt.s32.totalorder %s35, 1
          %s11133 = scalar_select %p11132, %s35, 1
          %s11134 = smul.addr %s11133, 2
          %s11135 = scalar_lea.vmem %s21, %s11134
        $region124: #{a_call__.1} parent=119 // pred_fallthru
          _
      $region120: #{a_call__.1} parent=5 // pred_fallthru
        _
    $region6: #{a_call__.1} parent=1 // loop_footer
      %s33 = sadd.s32 1, %s29
    $region7: #{a_call__.1} parent=1 // loop_footer_branch
      %28 = sbr.rel target = $region3
    $region8: #{a_call__.1} parent=1 // loop_exit
      _
    %11136 = vsyncpa [#allocation3], 1
    %s11137 = scalar_lea.sflag [#allocation3], 1
    %11138 = vsyncpa %s11137, 1
    %11139 = vsyncpa [#allocation5], 1

</llo_original>
